<compile_context>
chip_gen: v5e
topology: v5e:2x2
jax: 0.10.0
libtpu: 0.0.40
codegen_flags: <defaults>
</compile_context>

<pallas_src>
import math

import jax
import jax.numpy as jnp
from jax.experimental import pallas as pl
from jax.experimental.pallas import tpu as pltpu

LSTM_LAYER = 3
LSTM_OUTDIM = 512
FC_HIDDEN = 2048


def _round_up(x, m):
    return ((x + m - 1) // m) * m


def _arr_bytes(a):
    return math.prod(a.shape) * jnp.dtype(a.dtype).itemsize


def _full_spec(shape):
    nd = len(shape)
    return pl.BlockSpec(shape, lambda i, _nd=nd: (0,) * _nd)


# ----------------------------------------------------------------------------
# Pallas kernel: one fused multi-layer LSTM stack, grid=(1,), everything in
# VMEM.  PyTorch gate order: i, f, g, o.  Sequence buffers are kept 2D
# (S*N, feat) so all in-kernel slicing is plain aligned sublane slicing.
# ----------------------------------------------------------------------------
def _lstm_stack_kernel(x_ref, h0_ref, c0_ref, *rest):
    L = h0_ref.shape[0]
    N = h0_ref.shape[1]
    H = h0_ref.shape[2]
    w_refs = rest[: 3 * L]
    y_ref, hn_ref, cn_ref, act_ref, gx_ref = rest[3 * L:]
    SN = y_ref.shape[0]
    S = SN // N
    unroll = True if S <= 16 else 4

    for l in range(L):
        wih_ref = w_refs[3 * l + 0]
        whh_ref = w_refs[3 * l + 1]
        b_ref = w_refs[3 * l + 2]
        src_ref = x_ref if l == 0 else act_ref          # (S*N, Din)
        dst_ref = y_ref if l == L - 1 else act_ref      # (S*N, H)

        # Hoisted input projection: one MXU matmul over the whole sequence.
        gx_ref[...] = (
            jnp.dot(src_ref[...].astype(jnp.bfloat16), wih_ref[...],
                    preferred_element_type=jnp.float32)
            + b_ref[...])

        def step(t, carry, _whh_ref=whh_ref, _dst_ref=dst_ref):
            h, c = carry
            row = pl.multiple_of(t * N, N)
            g = gx_ref[pl.ds(row, N), :] + jnp.dot(
                h.astype(jnp.bfloat16), _whh_ref[...],
                preferred_element_type=jnp.float32)        # (N, 4H)
            i_g = jax.nn.sigmoid(g[:, 0 * H:1 * H])
            f_g = jax.nn.sigmoid(g[:, 1 * H:2 * H])
            g_g = jnp.tanh(g[:, 2 * H:3 * H])
            o_g = jax.nn.sigmoid(g[:, 3 * H:4 * H])
            c_n = f_g * c + i_g * g_g
            h_n = o_g * jnp.tanh(c_n)
            _dst_ref[pl.ds(row, N), :] = h_n
            return (h_n, c_n)

        h_fin, c_fin = jax.lax.fori_loop(
            0, S, step, (h0_ref[l], c0_ref[l]), unroll=unroll)
        hn_ref[l] = h_fin
        cn_ref[l] = c_fin


def lstm_stack(x, layers, h0, c0):
    """x: (S, N, Din) time-major.  layers: [(wih_t bf16, whh_t bf16, b f32)]*L
    with wih_t: (Din_l, 4H), whh_t: (H, 4H), b: (4H,).  h0/c0: (L, N, H).
    Returns y (S, N, H), hn (L, N, H), cn (L, N, H)."""
    S, N, Din = x.shape
    assert S >= 1, "empty sequence not supported"
    L = len(layers)
    H = layers[0][1].shape[0]

    # Pad the batch axis to the 8-sublane width (dense vreg/store occupancy,
    # and makes the (S,N,*) <-> (S*N,*) reshapes layout no-ops).
    Np = _round_up(N, 8)
    if Np != N:
        x = jnp.pad(x, ((0, 0), (0, Np - N), (0, 0)))
        h0 = jnp.pad(h0, ((0, 0), (0, Np - N), (0, 0)))
        c0 = jnp.pad(c0, ((0, 0), (0, Np - N), (0, 0)))

    x2d = x.reshape(S * Np, Din)
    w_args = []
    for (wih_t, whh_t, b) in layers:
        w_args += [wih_t, whh_t, b.reshape(1, 4 * H)]
    inputs = [x2d, h0, c0] + w_args

    out_shape = (jax.ShapeDtypeStruct((S * Np, H), jnp.float32),
                 jax.ShapeDtypeStruct((L, Np, H), jnp.float32),
                 jax.ShapeDtypeStruct((L, Np, H), jnp.float32))
    scratch = [pltpu.VMEM((S * Np, H), jnp.float32),       # current layer output
               pltpu.VMEM((S * Np, 4 * H), jnp.float32)]   # hoisted gate preacts

    in_bytes = sum(_arr_bytes(a) for a in inputs)
    out_bytes = sum(math.prod(s.shape) * 4 for s in out_shape)
    scr_bytes = (S * Np * H + S * Np * 4 * H) * 4
    vmem_limit = max(2 * (in_bytes + out_bytes) + scr_bytes + (8 << 20),
                     32 << 20)

    y, hn, cn = pl.pallas_call(
        _lstm_stack_kernel,
        out_shape=out_shape,
        grid_spec=pltpu.PrefetchScalarGridSpec(
            num_scalar_prefetch=0,
            grid=(1,),
            in_specs=[_full_spec(a.shape) for a in inputs],
            out_specs=[_full_spec(s.shape) for s in out_shape],
            scratch_shapes=scratch),
        compiler_params=pltpu.CompilerParams(
            dimension_semantics=("arbitrary",),
            vmem_limit_bytes=int(vmem_limit)),
    )(*inputs)

    y = y.reshape(S, Np, H)
    if Np != N:
        y = y[:, :N, :]
        hn = hn[:, :N, :]
        cn = cn[:, :N, :]
    return y, hn, cn


# ----------------------------------------------------------------------------
# Pallas kernel: fc head  Linear(512->2048) + Tanh + Linear(2048->vocab),
# tiled over the vocab axis so W2 streams through VMEM (works for big vocabs).
# ----------------------------------------------------------------------------
def _fc_kernel(x_ref, w1_ref, b1_ref, w2_ref, b2_ref, o_ref):
    h = jnp.tanh(jnp.dot(x_ref[...].astype(jnp.bfloat16), w1_ref[...],
                         preferred_element_type=jnp.float32) + b1_ref[...])
    o_ref[...] = (jnp.dot(h.astype(jnp.bfloat16), w2_ref[...],
                          preferred_element_type=jnp.float32) + b2_ref[...])


def _pick_vocab_tile(v):
    if v <= 2048 or v % 128 != 0:
        return v
    for cand in (2048, 1024, 512, 256, 128):
        if v % cand == 0:
            return cand
    return v


def fc_head(x, w1_t, b1, w2_t, b2):
    Nr, D = x.shape
    Dh = w1_t.shape[1]
    V = w2_t.shape[1]
    tn = _pick_vocab_tile(V)
    grid = (pl.cdiv(V, tn),)

    in_bytes = Nr * D * 4 + D * Dh * 2 + Dh * 4 + Dh * tn * 2 + tn * 4
    out_bytes = Nr * tn * 4
    vmem_limit = max(2 * (in_bytes + out_bytes) + (8 << 20), 32 << 20)

    return pl.pallas_call(
        _fc_kernel,
        out_shape=jax.ShapeDtypeStruct((Nr, V), jnp.float32),
        grid_spec=pltpu.PrefetchScalarGridSpec(
            num_scalar_prefetch=0,
            grid=grid,
            in_specs=[
                pl.BlockSpec((Nr, D), lambda j: (0, 0)),
                pl.BlockSpec((D, Dh), lambda j: (0, 0)),
                pl.BlockSpec((1, Dh), lambda j: (0, 0)),
                pl.BlockSpec((Dh, tn), lambda j: (0, j)),
                pl.BlockSpec((1, tn), lambda j: (0, j)),
            ],
            out_specs=pl.BlockSpec((Nr, tn), lambda j: (0, j)),
        ),
        compiler_params=pltpu.CompilerParams(
            dimension_semantics=("parallel",),
            vmem_limit_bytes=int(vmem_limit)),
    )(x, w1_t, b1.reshape(1, Dh), w2_t, b2.reshape(1, V))


# ----------------------------------------------------------------------------
# Parameter init (deterministic, PyTorch-like uniform(-1/sqrt(H), 1/sqrt(H))).
# Matmul weights are stored pre-transposed and in bfloat16 (f32 accumulation
# inside the kernels); biases / embedding / states stay f32.
# ----------------------------------------------------------------------------
def init_params(key, vocab_size, embedding_dim, hidden_dim):
    keys = iter(jax.random.split(key, 64))

    def unif(shape, k):
        return jax.random.uniform(next(keys), shape, jnp.float32, -k, k)

    params = {"hidden_dim": hidden_dim,
              "embedding": jax.random.normal(next(keys),
                                             (vocab_size, embedding_dim),
                                             jnp.float32)}

    def lstm_params(in_dim, h_dim, num_layers):
        k = 1.0 / math.sqrt(h_dim)
        layers = []
        for l in range(num_layers):
            din = in_dim if l == 0 else h_dim
            wih_t = unif((din, 4 * h_dim), k).astype(jnp.bfloat16)   # W_ih^T
            whh_t = unif((h_dim, 4 * h_dim), k).astype(jnp.bfloat16)  # W_hh^T
            b = unif((4 * h_dim,), k) + unif((4 * h_dim,), k)        # b_ih+b_hh
            layers.append((wih_t, whh_t, b))
        return layers

    params["lstm1"] = lstm_params(embedding_dim, hidden_dim, LSTM_LAYER)
    params["lstm2"] = lstm_params(hidden_dim, LSTM_OUTDIM, LSTM_LAYER)

    k1 = 1.0 / math.sqrt(LSTM_OUTDIM)
    k2 = 1.0 / math.sqrt(FC_HIDDEN)
    params["fc_w1_t"] = unif((LSTM_OUTDIM, FC_HIDDEN), k1).astype(jnp.bfloat16)
    params["fc_b1"] = unif((FC_HIDDEN,), k1)
    params["fc_w2_t"] = unif((FC_HIDDEN, vocab_size), k2).astype(jnp.bfloat16)
    params["fc_b2"] = unif((vocab_size,), k2)
    # self.linear is defined in PoetryModel2.__init__ but unused in forward — omitted.
    return params


# ----------------------------------------------------------------------------
# Forward pass (matches PoetryModel2.forward)
# ----------------------------------------------------------------------------
def poetry_model2_forward(params, tokens, hidden1=None, hidden2=None):
    T, B = tokens.shape
    H = params["hidden_dim"]
    O = LSTM_OUTDIM
    if hidden1 is None or hidden2 is None:
        h0 = jnp.zeros((LSTM_LAYER, B, H), jnp.float32)
        c0 = jnp.zeros((LSTM_LAYER, B, H), jnp.float32)
        h1 = jnp.zeros((LSTM_LAYER, T, O), jnp.float32)
        c1 = jnp.zeros((LSTM_LAYER, T, O), jnp.float32)
    else:
        h0, c0 = hidden1
        h1, c1 = hidden2

    embeds = params["embedding"][tokens]                     # (T, B, E)  glue gather

    out1, hn1, cn1 = lstm_stack(embeds, params["lstm1"], h0, c0)       # (T, B, H)

    # lstm2 is batch_first: it sees (T, B, H) as (batch'=T, time'=B, H).
    x2 = jnp.transpose(out1, (1, 0, 2))                      # (B, T, H) time-major
    y2, hn2, cn2 = lstm_stack(x2, params["lstm2"], h1, c1)             # (B, T, O)
    out2 = jnp.transpose(y2, (1, 0, 2))                      # (T, B, O) batch_first output

    # dropout(p=0.6): identity in inference/eval mode.
    # TODO(synk): train-mode dropout could use pltpu.prng_random_bits if needed.

    flat = out2.reshape(T * B, O)
    logits = fc_head(flat, params["fc_w1_t"], params["fc_b1"],
                     params["fc_w2_t"], params["fc_b2"])     # (T*B, vocab)
    return logits, (hn1, cn1), (hn2, cn2)


if __name__ == "__main__":
    vocab_size, embedding_dim, hidden_dim = 256, 64, 128
    seq_len, batch_size = 8, 2

    key = jax.random.PRNGKey(0)
    pkey, tkey = jax.random.split(key)
    params = init_params(pkey, vocab_size, embedding_dim, hidden_dim)
    tokens = jax.random.randint(tkey, (seq_len, batch_size), 0, vocab_size,
                                dtype=jnp.int32)

    logits, hidden1, hidden2 = poetry_model2_forward(params, tokens)
    logits = jax.block_until_ready(logits)
    jax.block_until_ready(hidden1)
    jax.block_until_ready(hidden2)

    assert logits.shape == (seq_len * batch_size, vocab_size)
    assert hidden1[0].shape == (LSTM_LAYER, batch_size, hidden_dim)
    assert hidden1[1].shape == (LSTM_LAYER, batch_size, hidden_dim)
    assert hidden2[0].shape == (LSTM_LAYER, seq_len, LSTM_OUTDIM)
    assert hidden2[1].shape == (LSTM_LAYER, seq_len, LSTM_OUTDIM)
    assert bool(jnp.all(jnp.isfinite(logits)))
    print("KERNEL_OK")
</pallas_src>

<mosaic_0001>
module attributes {stable_mosaic.version = 11 : i64} {
  func.func @_lstm_stack_kernel(%arg0: i32, %arg1: memref<64x64xf32, #tpu.memory_space<vmem>>, %arg2: memref<3x8x128xf32, #tpu.memory_space<vmem>>, %arg3: memref<3x8x128xf32, #tpu.memory_space<vmem>>, %arg4: memref<64x512xbf16, #tpu.memory_space<vmem>>, %arg5: memref<128x512xbf16, #tpu.memory_space<vmem>>, %arg6: memref<1x512xf32, #tpu.memory_space<vmem>>, %arg7: memref<128x512xbf16, #tpu.memory_space<vmem>>, %arg8: memref<128x512xbf16, #tpu.memory_space<vmem>>, %arg9: memref<1x512xf32, #tpu.memory_space<vmem>>, %arg10: memref<128x512xbf16, #tpu.memory_space<vmem>>, %arg11: memref<128x512xbf16, #tpu.memory_space<vmem>>, %arg12: memref<1x512xf32, #tpu.memory_space<vmem>>, %arg13: memref<64x128xf32, #tpu.memory_space<vmem>>, %arg14: memref<3x8x128xf32, #tpu.memory_space<vmem>>, %arg15: memref<3x8x128xf32, #tpu.memory_space<vmem>>, %arg16: memref<64x128xf32, #tpu.memory_space<vmem>>, %arg17: memref<64x512xf32, #tpu.memory_space<vmem>>) attributes {dimension_semantics = [#tpu.dimension_semantics<arbitrary>], iteration_bounds = array<i64: 1>, scalar_prefetch = 0 : i64, scratch_operands = 2 : i64, tpu.core_type = #tpu.core_type<tc>, window_params = [{pipeline_mode = #tpu.pipeline_mode<synchronous>, transform_indices = @transform_0, window_bounds = array<i64: 64, 64>}, {pipeline_mode = #tpu.pipeline_mode<synchronous>, transform_indices = @transform_1, window_bounds = array<i64: 3, 8, 128>}, {pipeline_mode = #tpu.pipeline_mode<synchronous>, transform_indices = @transform_2, window_bounds = array<i64: 3, 8, 128>}, {pipeline_mode = #tpu.pipeline_mode<synchronous>, transform_indices = @transform_3, window_bounds = array<i64: 64, 512>}, {pipeline_mode = #tpu.pipeline_mode<synchronous>, transform_indices = @transform_4, window_bounds = array<i64: 128, 512>}, {pipeline_mode = #tpu.pipeline_mode<synchronous>, transform_indices = @transform_5, window_bounds = array<i64: 1, 512>}, {pipeline_mode = #tpu.pipeline_mode<synchronous>, transform_indices = @transform_6, window_bounds = array<i64: 128, 512>}, {pipeline_mode = #tpu.pipeline_mode<synchronous>, transform_indices = @transform_7, window_bounds = array<i64: 128, 512>}, {pipeline_mode = #tpu.pipeline_mode<synchronous>, transform_indices = @transform_8, window_bounds = array<i64: 1, 512>}, {pipeline_mode = #tpu.pipeline_mode<synchronous>, transform_indices = @transform_9, window_bounds = array<i64: 128, 512>}, {pipeline_mode = #tpu.pipeline_mode<synchronous>, transform_indices = @transform_10, window_bounds = array<i64: 128, 512>}, {pipeline_mode = #tpu.pipeline_mode<synchronous>, transform_indices = @transform_11, window_bounds = array<i64: 1, 512>}, {pipeline_mode = #tpu.pipeline_mode<synchronous>, transform_indices = @transform_12, window_bounds = array<i64: 64, 128>}, {pipeline_mode = #tpu.pipeline_mode<synchronous>, transform_indices = @transform_13, window_bounds = array<i64: 3, 8, 128>}, {pipeline_mode = #tpu.pipeline_mode<synchronous>, transform_indices = @transform_14, window_bounds = array<i64: 3, 8, 128>}]} {
    %c0 = arith.constant 0 : index
    %c0_0 = arith.constant 0 : index
    %0 = vector.load %arg1[%c0, %c0_0] : memref<64x64xf32, #tpu.memory_space<vmem>>, vector<64x64xf32>
    %1 = arith.truncf %0 : vector<64x64xf32> to vector<64x64xbf16>
    %c0_1 = arith.constant 0 : index
    %c0_2 = arith.constant 0 : index
    %2 = vector.load %arg4[%c0_1, %c0_2] : memref<64x512xbf16, #tpu.memory_space<vmem>>, vector<64x512xbf16>
    %cst = arith.constant dense<0.000000e+00> : vector<64x512xf32>
    %3 = tpu.matmul %1, %2, %cst {dimension_numbers = #tpu.dot_dimension_numbers<[1], [0], [0], [1], [0, 0, 1, 1], [], []>} : vector<64x64xbf16>, vector<64x512xbf16>, vector<64x512xf32> -> vector<64x512xf32>
    %c0_3 = arith.constant 0 : index
    %c0_4 = arith.constant 0 : index
    %4 = vector.load %arg6[%c0_3, %c0_4] : memref<1x512xf32, #tpu.memory_space<vmem>>, vector<1x512xf32>
    %5 = vector.broadcast %4 : vector<1x512xf32> to vector<64x512xf32>
    %6 = arith.addf %3, %5 : vector<64x512xf32>
    %c0_5 = arith.constant 0 : index
    %c0_6 = arith.constant 0 : index
    %7 = vector.load %arg17[%c0_5, %c0_6] : memref<64x512xf32, #tpu.memory_space<vmem>>, vector<64x512xf32>
    tpu.vector_store %arg17[%c0_5, %c0_6], %6 {strides = array<i32>} : memref<64x512xf32, #tpu.memory_space<vmem>>, vector<64x512xf32>,
    %c0_7 = arith.constant 0 : index
    %c0_8 = arith.constant 0 : index
    %c0_9 = arith.constant 0 : index
    %8 = vector.load %arg2[%c0_7, %c0_8, %c0_9] : memref<3x8x128xf32, #tpu.memory_space<vmem>>, vector<1x8x128xf32>
    %9 = vector.shape_cast %8 : vector<1x8x128xf32> to vector<8x128xf32>
    %c0_10 = arith.constant 0 : index
    %c0_11 = arith.constant 0 : index
    %c0_12 = arith.constant 0 : index
    %10 = vector.load %arg3[%c0_10, %c0_11, %c0_12] : memref<3x8x128xf32, #tpu.memory_space<vmem>>, vector<1x8x128xf32>
    %11 = vector.shape_cast %10 : vector<1x8x128xf32> to vector<8x128xf32>
    %c0_i32 = arith.constant 0 : i32
    %c8_i32 = arith.constant 8 : i32
    %12 = arith.muli %c0_i32, %c8_i32 : i32
    %13 = tpu.assume_multiple %12, 8 : i32
    %14 = arith.index_cast %13 : i32 to index
    %c0_13 = arith.constant 0 : index
    %15 = vector.load %arg17[%14, %c0_13] : memref<64x512xf32, #tpu.memory_space<vmem>>, vector<8x512xf32>
    %16 = arith.truncf %9 : vector<8x128xf32> to vector<8x128xbf16>
    %c0_14 = arith.constant 0 : index
    %c0_15 = arith.constant 0 : index
    %17 = vector.load %arg5[%c0_14, %c0_15] : memref<128x512xbf16, #tpu.memory_space<vmem>>, vector<128x512xbf16>
    %cst_16 = arith.constant dense<0.000000e+00> : vector<8x512xf32>
    %18 = tpu.matmul %16, %17, %cst_16 {dimension_numbers = #tpu.dot_dimension_numbers<[1], [0], [0], [1], [0, 0, 1, 1], [], []>} : vector<8x128xbf16>, vector<128x512xbf16>, vector<8x512xf32> -> vector<8x512xf32>
    %19 = arith.addf %15, %18 : vector<8x512xf32>
    %20 = vector.extract_strided_slice %19 {offsets = [0, 0], sizes = [8, 128], strides = [1, 1]} : vector<8x512xf32> to vector<8x128xf32>
    %21 = arith.negf %20 : vector<8x128xf32>
    %22 = math.exp %21 : vector<8x128xf32>
    %cst_17 = arith.constant 1.000000e+00 : f32
    %23 = vector.broadcast %cst_17 : f32 to vector<8x128xf32>
    %24 = arith.addf %23, %22 : vector<8x128xf32>
    %25 = arith.divf %23, %24 : vector<8x128xf32>
    %26 = vector.extract_strided_slice %19 {offsets = [0, 128], sizes = [8, 128], strides = [1, 1]} : vector<8x512xf32> to vector<8x128xf32>
    %27 = arith.negf %26 : vector<8x128xf32>
    %28 = math.exp %27 : vector<8x128xf32>
    %cst_18 = arith.constant 1.000000e+00 : f32
    %29 = vector.broadcast %cst_18 : f32 to vector<8x128xf32>
    %30 = arith.addf %29, %28 : vector<8x128xf32>
    %31 = arith.divf %29, %30 : vector<8x128xf32>
    %32 = vector.extract_strided_slice %19 {offsets = [0, 256], sizes = [8, 128], strides = [1, 1]} : vector<8x512xf32> to vector<8x128xf32>
    %33 = math.tanh %32 : vector<8x128xf32>
    %34 = vector.extract_strided_slice %19 {offsets = [0, 384], sizes = [8, 128], strides = [1, 1]} : vector<8x512xf32> to vector<8x128xf32>
    %35 = arith.negf %34 : vector<8x128xf32>
    %36 = math.exp %35 : vector<8x128xf32>
    %cst_19 = arith.constant 1.000000e+00 : f32
    %37 = vector.broadcast %cst_19 : f32 to vector<8x128xf32>
    %38 = arith.addf %37, %36 : vector<8x128xf32>
    %39 = arith.divf %37, %38 : vector<8x128xf32>
    %40 = arith.mulf %31, %11 : vector<8x128xf32>
    %41 = arith.mulf %25, %33 : vector<8x128xf32>
    %42 = arith.addf %40, %41 : vector<8x128xf32>
    %43 = math.tanh %42 : vector<8x128xf32>
    %44 = arith.mulf %39, %43 : vector<8x128xf32>
    %45 = arith.index_cast %13 : i32 to index
    %c0_20 = arith.constant 0 : index
    %46 = vector.load %arg16[%45, %c0_20] : memref<64x128xf32, #tpu.memory_space<vmem>>, vector<8x128xf32>
    tpu.vector_store %arg16[%45, %c0_20], %44 {strides = array<i32>} : memref<64x128xf32, #tpu.memory_space<vmem>>, vector<8x128xf32>,
    %c1_i32 = arith.constant 1 : i32
    %c8_i32_21 = arith.constant 8 : i32
    %47 = arith.muli %c1_i32, %c8_i32_21 : i32
    %48 = tpu.assume_multiple %47, 8 : i32
    %49 = arith.index_cast %48 : i32 to index
    %c0_22 = arith.constant 0 : index
    %50 = vector.load %arg17[%49, %c0_22] : memref<64x512xf32, #tpu.memory_space<vmem>>, vector<8x512xf32>
    %51 = arith.truncf %44 : vector<8x128xf32> to vector<8x128xbf16>
    %c0_23 = arith.constant 0 : index
    %c0_24 = arith.constant 0 : index
    %52 = vector.load %arg5[%c0_23, %c0_24] : memref<128x512xbf16, #tpu.memory_space<vmem>>, vector<128x512xbf16>
    %cst_25 = arith.constant dense<0.000000e+00> : vector<8x512xf32>
    %53 = tpu.matmul %51, %52, %cst_25 {dimension_numbers = #tpu.dot_dimension_numbers<[1], [0], [0], [1], [0, 0, 1, 1], [], []>} : vector<8x128xbf16>, vector<128x512xbf16>, vector<8x512xf32> -> vector<8x512xf32>
    %54 = arith.addf %50, %53 : vector<8x512xf32>
    %55 = vector.extract_strided_slice %54 {offsets = [0, 0], sizes = [8, 128], strides = [1, 1]} : vector<8x512xf32> to vector<8x128xf32>
    %56 = arith.negf %55 : vector<8x128xf32>
    %57 = math.exp %56 : vector<8x128xf32>
    %cst_26 = arith.constant 1.000000e+00 : f32
    %58 = vector.broadcast %cst_26 : f32 to vector<8x128xf32>
    %59 = arith.addf %58, %57 : vector<8x128xf32>
    %60 = arith.divf %58, %59 : vector<8x128xf32>
    %61 = vector.extract_strided_slice %54 {offsets = [0, 128], sizes = [8, 128], strides = [1, 1]} : vector<8x512xf32> to vector<8x128xf32>
    %62 = arith.negf %61 : vector<8x128xf32>
    %63 = math.exp %62 : vector<8x128xf32>
    %cst_27 = arith.constant 1.000000e+00 : f32
    %64 = vector.broadcast %cst_27 : f32 to vector<8x128xf32>
    %65 = arith.addf %64, %63 : vector<8x128xf32>
    %66 = arith.divf %64, %65 : vector<8x128xf32>
    %67 = vector.extract_strided_slice %54 {offsets = [0, 256], sizes = [8, 128], strides = [1, 1]} : vector<8x512xf32> to vector<8x128xf32>
    %68 = math.tanh %67 : vector<8x128xf32>
    %69 = vector.extract_strided_slice %54 {offsets = [0, 384], sizes = [8, 128], strides = [1, 1]} : vector<8x512xf32> to vector<8x128xf32>
    %70 = arith.negf %69 : vector<8x128xf32>
    %71 = math.exp %70 : vector<8x128xf32>
    %cst_28 = arith.constant 1.000000e+00 : f32
    %72 = vector.broadcast %cst_28 : f32 to vector<8x128xf32>
    %73 = arith.addf %72, %71 : vector<8x128xf32>
    %74 = arith.divf %72, %73 : vector<8x128xf32>
    %75 = arith.mulf %66, %42 : vector<8x128xf32>
    %76 = arith.mulf %60, %68 : vector<8x128xf32>
    %77 = arith.addf %75, %76 : vector<8x128xf32>
    %78 = math.tanh %77 : vector<8x128xf32>
    %79 = arith.mulf %74, %78 : vector<8x128xf32>
    %80 = arith.index_cast %48 : i32 to index
    %c0_29 = arith.constant 0 : index
    %81 = vector.load %arg16[%80, %c0_29] : memref<64x128xf32, #tpu.memory_space<vmem>>, vector<8x128xf32>
    tpu.vector_store %arg16[%80, %c0_29], %79 {strides = array<i32>} : memref<64x128xf32, #tpu.memory_space<vmem>>, vector<8x128xf32>,
    %c2_i32 = arith.constant 2 : i32
    %c8_i32_30 = arith.constant 8 : i32
    %82 = arith.muli %c2_i32, %c8_i32_30 : i32
    %83 = tpu.assume_multiple %82, 8 : i32
    %84 = arith.index_cast %83 : i32 to index
    %c0_31 = arith.constant 0 : index
    %85 = vector.load %arg17[%84, %c0_31] : memref<64x512xf32, #tpu.memory_space<vmem>>, vector<8x512xf32>
    %86 = arith.truncf %79 : vector<8x128xf32> to vector<8x128xbf16>
    %c0_32 = arith.constant 0 : index
    %c0_33 = arith.constant 0 : index
    %87 = vector.load %arg5[%c0_32, %c0_33] : memref<128x512xbf16, #tpu.memory_space<vmem>>, vector<128x512xbf16>
    %cst_34 = arith.constant dense<0.000000e+00> : vector<8x512xf32>
    %88 = tpu.matmul %86, %87, %cst_34 {dimension_numbers = #tpu.dot_dimension_numbers<[1], [0], [0], [1], [0, 0, 1, 1], [], []>} : vector<8x128xbf16>, vector<128x512xbf16>, vector<8x512xf32> -> vector<8x512xf32>
    %89 = arith.addf %85, %88 : vector<8x512xf32>
    %90 = vector.extract_strided_slice %89 {offsets = [0, 0], sizes = [8, 128], strides = [1, 1]} : vector<8x512xf32> to vector<8x128xf32>
    %91 = arith.negf %90 : vector<8x128xf32>
    %92 = math.exp %91 : vector<8x128xf32>
    %cst_35 = arith.constant 1.000000e+00 : f32
    %93 = vector.broadcast %cst_35 : f32 to vector<8x128xf32>
    %94 = arith.addf %93, %92 : vector<8x128xf32>
    %95 = arith.divf %93, %94 : vector<8x128xf32>
    %96 = vector.extract_strided_slice %89 {offsets = [0, 128], sizes = [8, 128], strides = [1, 1]} : vector<8x512xf32> to vector<8x128xf32>
    %97 = arith.negf %96 : vector<8x128xf32>
    %98 = math.exp %97 : vector<8x128xf32>
    %cst_36 = arith.constant 1.000000e+00 : f32
    %99 = vector.broadcast %cst_36 : f32 to vector<8x128xf32>
    %100 = arith.addf %99, %98 : vector<8x128xf32>
    %101 = arith.divf %99, %100 : vector<8x128xf32>
    %102 = vector.extract_strided_slice %89 {offsets = [0, 256], sizes = [8, 128], strides = [1, 1]} : vector<8x512xf32> to vector<8x128xf32>
    %103 = math.tanh %102 : vector<8x128xf32>
    %104 = vector.extract_strided_slice %89 {offsets = [0, 384], sizes = [8, 128], strides = [1, 1]} : vector<8x512xf32> to vector<8x128xf32>
    %105 = arith.negf %104 : vector<8x128xf32>
    %106 = math.exp %105 : vector<8x128xf32>
    %cst_37 = arith.constant 1.000000e+00 : f32
    %107 = vector.broadcast %cst_37 : f32 to vector<8x128xf32>
    %108 = arith.addf %107, %106 : vector<8x128xf32>
    %109 = arith.divf %107, %108 : vector<8x128xf32>
    %110 = arith.mulf %101, %77 : vector<8x128xf32>
    %111 = arith.mulf %95, %103 : vector<8x128xf32>
    %112 = arith.addf %110, %111 : vector<8x128xf32>
    %113 = math.tanh %112 : vector<8x128xf32>
    %114 = arith.mulf %109, %113 : vector<8x128xf32>
    %115 = arith.index_cast %83 : i32 to index
    %c0_38 = arith.constant 0 : index
    %116 = vector.load %arg16[%115, %c0_38] : memref<64x128xf32, #tpu.memory_space<vmem>>, vector<8x128xf32>
    tpu.vector_store %arg16[%115, %c0_38], %114 {strides = array<i32>} : memref<64x128xf32, #tpu.memory_space<vmem>>, vector<8x128xf32>,
    %c3_i32 = arith.constant 3 : i32
    %c8_i32_39 = arith.constant 8 : i32
    %117 = arith.muli %c3_i32, %c8_i32_39 : i32
    %118 = tpu.assume_multiple %117, 8 : i32
    %119 = arith.index_cast %118 : i32 to index
    %c0_40 = arith.constant 0 : index
    %120 = vector.load %arg17[%119, %c0_40] : memref<64x512xf32, #tpu.memory_space<vmem>>, vector<8x512xf32>
    %121 = arith.truncf %114 : vector<8x128xf32> to vector<8x128xbf16>
    %c0_41 = arith.constant 0 : index
    %c0_42 = arith.constant 0 : index
    %122 = vector.load %arg5[%c0_41, %c0_42] : memref<128x512xbf16, #tpu.memory_space<vmem>>, vector<128x512xbf16>
    %cst_43 = arith.constant dense<0.000000e+00> : vector<8x512xf32>
    %123 = tpu.matmul %121, %122, %cst_43 {dimension_numbers = #tpu.dot_dimension_numbers<[1], [0], [0], [1], [0, 0, 1, 1], [], []>} : vector<8x128xbf16>, vector<128x512xbf16>, vector<8x512xf32> -> vector<8x512xf32>
    %124 = arith.addf %120, %123 : vector<8x512xf32>
    %125 = vector.extract_strided_slice %124 {offsets = [0, 0], sizes = [8, 128], strides = [1, 1]} : vector<8x512xf32> to vector<8x128xf32>
    %126 = arith.negf %125 : vector<8x128xf32>
    %127 = math.exp %126 : vector<8x128xf32>
    %cst_44 = arith.constant 1.000000e+00 : f32
    %128 = vector.broadcast %cst_44 : f32 to vector<8x128xf32>
    %129 = arith.addf %128, %127 : vector<8x128xf32>
    %130 = arith.divf %128, %129 : vector<8x128xf32>
    %131 = vector.extract_strided_slice %124 {offsets = [0, 128], sizes = [8, 128], strides = [1, 1]} : vector<8x512xf32> to vector<8x128xf32>
    %132 = arith.negf %131 : vector<8x128xf32>
    %133 = math.exp %132 : vector<8x128xf32>
    %cst_45 = arith.constant 1.000000e+00 : f32
    %134 = vector.broadcast %cst_45 : f32 to vector<8x128xf32>
    %135 = arith.addf %134, %133 : vector<8x128xf32>
    %136 = arith.divf %134, %135 : vector<8x128xf32>
    %137 = vector.extract_strided_slice %124 {offsets = [0, 256], sizes = [8, 128], strides = [1, 1]} : vector<8x512xf32> to vector<8x128xf32>
    %138 = math.tanh %137 : vector<8x128xf32>
    %139 = vector.extract_strided_slice %124 {offsets = [0, 384], sizes = [8, 128], strides = [1, 1]} : vector<8x512xf32> to vector<8x128xf32>
    %140 = arith.negf %139 : vector<8x128xf32>
    %141 = math.exp %140 : vector<8x128xf32>
    %cst_46 = arith.constant 1.000000e+00 : f32
    %142 = vector.broadcast %cst_46 : f32 to vector<8x128xf32>
    %143 = arith.addf %142, %141 : vector<8x128xf32>
    %144 = arith.divf %142, %143 : vector<8x128xf32>
    %145 = arith.mulf %136, %112 : vector<8x128xf32>
    %146 = arith.mulf %130, %138 : vector<8x128xf32>
    %147 = arith.addf %145, %146 : vector<8x128xf32>
    %148 = math.tanh %147 : vector<8x128xf32>
    %149 = arith.mulf %144, %148 : vector<8x128xf32>
    %150 = arith.index_cast %118 : i32 to index
    %c0_47 = arith.constant 0 : index
    %151 = vector.load %arg16[%150, %c0_47] : memref<64x128xf32, #tpu.memory_space<vmem>>, vector<8x128xf32>
    tpu.vector_store %arg16[%150, %c0_47], %149 {strides = array<i32>} : memref<64x128xf32, #tpu.memory_space<vmem>>, vector<8x128xf32>,
    %c4_i32 = arith.constant 4 : i32
    %c8_i32_48 = arith.constant 8 : i32
    %152 = arith.muli %c4_i32, %c8_i32_48 : i32
    %153 = tpu.assume_multiple %152, 8 : i32
    %154 = arith.index_cast %153 : i32 to index
    %c0_49 = arith.constant 0 : index
    %155 = vector.load %arg17[%154, %c0_49] : memref<64x512xf32, #tpu.memory_space<vmem>>, vector<8x512xf32>
    %156 = arith.truncf %149 : vector<8x128xf32> to vector<8x128xbf16>
    %c0_50 = arith.constant 0 : index
    %c0_51 = arith.constant 0 : index
    %157 = vector.load %arg5[%c0_50, %c0_51] : memref<128x512xbf16, #tpu.memory_space<vmem>>, vector<128x512xbf16>
    %cst_52 = arith.constant dense<0.000000e+00> : vector<8x512xf32>
    %158 = tpu.matmul %156, %157, %cst_52 {dimension_numbers = #tpu.dot_dimension_numbers<[1], [0], [0], [1], [0, 0, 1, 1], [], []>} : vector<8x128xbf16>, vector<128x512xbf16>, vector<8x512xf32> -> vector<8x512xf32>
    %159 = arith.addf %155, %158 : vector<8x512xf32>
    %160 = vector.extract_strided_slice %159 {offsets = [0, 0], sizes = [8, 128], strides = [1, 1]} : vector<8x512xf32> to vector<8x128xf32>
    %161 = arith.negf %160 : vector<8x128xf32>
    %162 = math.exp %161 : vector<8x128xf32>
    %cst_53 = arith.constant 1.000000e+00 : f32
    %163 = vector.broadcast %cst_53 : f32 to vector<8x128xf32>
    %164 = arith.addf %163, %162 : vector<8x128xf32>
    %165 = arith.divf %163, %164 : vector<8x128xf32>
    %166 = vector.extract_strided_slice %159 {offsets = [0, 128], sizes = [8, 128], strides = [1, 1]} : vector<8x512xf32> to vector<8x128xf32>
    %167 = arith.negf %166 : vector<8x128xf32>
    %168 = math.exp %167 : vector<8x128xf32>
    %cst_54 = arith.constant 1.000000e+00 : f32
    %169 = vector.broadcast %cst_54 : f32 to vector<8x128xf32>
    %170 = arith.addf %169, %168 : vector<8x128xf32>
    %171 = arith.divf %169, %170 : vector<8x128xf32>
    %172 = vector.extract_strided_slice %159 {offsets = [0, 256], sizes = [8, 128], strides = [1, 1]} : vector<8x512xf32> to vector<8x128xf32>
    %173 = math.tanh %172 : vector<8x128xf32>
    %174 = vector.extract_strided_slice %159 {offsets = [0, 384], sizes = [8, 128], strides = [1, 1]} : vector<8x512xf32> to vector<8x128xf32>
    %175 = arith.negf %174 : vector<8x128xf32>
    %176 = math.exp %175 : vector<8x128xf32>
    %cst_55 = arith.constant 1.000000e+00 : f32
    %177 = vector.broadcast %cst_55 : f32 to vector<8x128xf32>
    %178 = arith.addf %177, %176 : vector<8x128xf32>
    %179 = arith.divf %177, %178 : vector<8x128xf32>
    %180 = arith.mulf %171, %147 : vector<8x128xf32>
    %181 = arith.mulf %165, %173 : vector<8x128xf32>
    %182 = arith.addf %180, %181 : vector<8x128xf32>
    %183 = math.tanh %182 : vector<8x128xf32>
    %184 = arith.mulf %179, %183 : vector<8x128xf32>
    %185 = arith.index_cast %153 : i32 to index
    %c0_56 = arith.constant 0 : index
    %186 = vector.load %arg16[%185, %c0_56] : memref<64x128xf32, #tpu.memory_space<vmem>>, vector<8x128xf32>
    tpu.vector_store %arg16[%185, %c0_56], %184 {strides = array<i32>} : memref<64x128xf32, #tpu.memory_space<vmem>>, vector<8x128xf32>,
    %c5_i32 = arith.constant 5 : i32
    %c8_i32_57 = arith.constant 8 : i32
    %187 = arith.muli %c5_i32, %c8_i32_57 : i32
    %188 = tpu.assume_multiple %187, 8 : i32
    %189 = arith.index_cast %188 : i32 to index
    %c0_58 = arith.constant 0 : index
    %190 = vector.load %arg17[%189, %c0_58] : memref<64x512xf32, #tpu.memory_space<vmem>>, vector<8x512xf32>
    %191 = arith.truncf %184 : vector<8x128xf32> to vector<8x128xbf16>
    %c0_59 = arith.constant 0 : index
    %c0_60 = arith.constant 0 : index
    %192 = vector.load %arg5[%c0_59, %c0_60] : memref<128x512xbf16, #tpu.memory_space<vmem>>, vector<128x512xbf16>
    %cst_61 = arith.constant dense<0.000000e+00> : vector<8x512xf32>
    %193 = tpu.matmul %191, %192, %cst_61 {dimension_numbers = #tpu.dot_dimension_numbers<[1], [0], [0], [1], [0, 0, 1, 1], [], []>} : vector<8x128xbf16>, vector<128x512xbf16>, vector<8x512xf32> -> vector<8x512xf32>
    %194 = arith.addf %190, %193 : vector<8x512xf32>
    %195 = vector.extract_strided_slice %194 {offsets = [0, 0], sizes = [8, 128], strides = [1, 1]} : vector<8x512xf32> to vector<8x128xf32>
    %196 = arith.negf %195 : vector<8x128xf32>
    %197 = math.exp %196 : vector<8x128xf32>
    %cst_62 = arith.constant 1.000000e+00 : f32
    %198 = vector.broadcast %cst_62 : f32 to vector<8x128xf32>
    %199 = arith.addf %198, %197 : vector<8x128xf32>
    %200 = arith.divf %198, %199 : vector<8x128xf32>
    %201 = vector.extract_strided_slice %194 {offsets = [0, 128], sizes = [8, 128], strides = [1, 1]} : vector<8x512xf32> to vector<8x128xf32>
    %202 = arith.negf %201 : vector<8x128xf32>
    %203 = math.exp %202 : vector<8x128xf32>
    %cst_63 = arith.constant 1.000000e+00 : f32
    %204 = vector.broadcast %cst_63 : f32 to vector<8x128xf32>
    %205 = arith.addf %204, %203 : vector<8x128xf32>
    %206 = arith.divf %204, %205 : vector<8x128xf32>
    %207 = vector.extract_strided_slice %194 {offsets = [0, 256], sizes = [8, 128], strides = [1, 1]} : vector<8x512xf32> to vector<8x128xf32>
    %208 = math.tanh %207 : vector<8x128xf32>
    %209 = vector.extract_strided_slice %194 {offsets = [0, 384], sizes = [8, 128], strides = [1, 1]} : vector<8x512xf32> to vector<8x128xf32>
    %210 = arith.negf %209 : vector<8x128xf32>
    %211 = math.exp %210 : vector<8x128xf32>
    %cst_64 = arith.constant 1.000000e+00 : f32
    %212 = vector.broadcast %cst_64 : f32 to vector<8x128xf32>
    %213 = arith.addf %212, %211 : vector<8x128xf32>
    %214 = arith.divf %212, %213 : vector<8x128xf32>
    %215 = arith.mulf %206, %182 : vector<8x128xf32>
    %216 = arith.mulf %200, %208 : vector<8x128xf32>
    %217 = arith.addf %215, %216 : vector<8x128xf32>
    %218 = math.tanh %217 : vector<8x128xf32>
    %219 = arith.mulf %214, %218 : vector<8x128xf32>
    %220 = arith.index_cast %188 : i32 to index
    %c0_65 = arith.constant 0 : index
    %221 = vector.load %arg16[%220, %c0_65] : memref<64x128xf32, #tpu.memory_space<vmem>>, vector<8x128xf32>
    tpu.vector_store %arg16[%220, %c0_65], %219 {strides = array<i32>} : memref<64x128xf32, #tpu.memory_space<vmem>>, vector<8x128xf32>,
    %c6_i32 = arith.constant 6 : i32
    %c8_i32_66 = arith.constant 8 : i32
    %222 = arith.muli %c6_i32, %c8_i32_66 : i32
    %223 = tpu.assume_multiple %222, 8 : i32
    %224 = arith.index_cast %223 : i32 to index
    %c0_67 = arith.constant 0 : index
    %225 = vector.load %arg17[%224, %c0_67] : memref<64x512xf32, #tpu.memory_space<vmem>>, vector<8x512xf32>
    %226 = arith.truncf %219 : vector<8x128xf32> to vector<8x128xbf16>
    %c0_68 = arith.constant 0 : index
    %c0_69 = arith.constant 0 : index
    %227 = vector.load %arg5[%c0_68, %c0_69] : memref<128x512xbf16, #tpu.memory_space<vmem>>, vector<128x512xbf16>
    %cst_70 = arith.constant dense<0.000000e+00> : vector<8x512xf32>
    %228 = tpu.matmul %226, %227, %cst_70 {dimension_numbers = #tpu.dot_dimension_numbers<[1], [0], [0], [1], [0, 0, 1, 1], [], []>} : vector<8x128xbf16>, vector<128x512xbf16>, vector<8x512xf32> -> vector<8x512xf32>
    %229 = arith.addf %225, %228 : vector<8x512xf32>
    %230 = vector.extract_strided_slice %229 {offsets = [0, 0], sizes = [8, 128], strides = [1, 1]} : vector<8x512xf32> to vector<8x128xf32>
    %231 = arith.negf %230 : vector<8x128xf32>
    %232 = math.exp %231 : vector<8x128xf32>
    %cst_71 = arith.constant 1.000000e+00 : f32
    %233 = vector.broadcast %cst_71 : f32 to vector<8x128xf32>
    %234 = arith.addf %233, %232 : vector<8x128xf32>
    %235 = arith.divf %233, %234 : vector<8x128xf32>
    %236 = vector.extract_strided_slice %229 {offsets = [0, 128], sizes = [8, 128], strides = [1, 1]} : vector<8x512xf32> to vector<8x128xf32>
    %237 = arith.negf %236 : vector<8x128xf32>
    %238 = math.exp %237 : vector<8x128xf32>
    %cst_72 = arith.constant 1.000000e+00 : f32
    %239 = vector.broadcast %cst_72 : f32 to vector<8x128xf32>
    %240 = arith.addf %239, %238 : vector<8x128xf32>
    %241 = arith.divf %239, %240 : vector<8x128xf32>
    %242 = vector.extract_strided_slice %229 {offsets = [0, 256], sizes = [8, 128], strides = [1, 1]} : vector<8x512xf32> to vector<8x128xf32>
    %243 = math.tanh %242 : vector<8x128xf32>
    %244 = vector.extract_strided_slice %229 {offsets = [0, 384], sizes = [8, 128], strides = [1, 1]} : vector<8x512xf32> to vector<8x128xf32>
    %245 = arith.negf %244 : vector<8x128xf32>
    %246 = math.exp %245 : vector<8x128xf32>
    %cst_73 = arith.constant 1.000000e+00 : f32
    %247 = vector.broadcast %cst_73 : f32 to vector<8x128xf32>
    %248 = arith.addf %247, %246 : vector<8x128xf32>
    %249 = arith.divf %247, %248 : vector<8x128xf32>
    %250 = arith.mulf %241, %217 : vector<8x128xf32>
    %251 = arith.mulf %235, %243 : vector<8x128xf32>
    %252 = arith.addf %250, %251 : vector<8x128xf32>
    %253 = math.tanh %252 : vector<8x128xf32>
    %254 = arith.mulf %249, %253 : vector<8x128xf32>
    %255 = arith.index_cast %223 : i32 to index
    %c0_74 = arith.constant 0 : index
    %256 = vector.load %arg16[%255, %c0_74] : memref<64x128xf32, #tpu.memory_space<vmem>>, vector<8x128xf32>
    tpu.vector_store %arg16[%255, %c0_74], %254 {strides = array<i32>} : memref<64x128xf32, #tpu.memory_space<vmem>>, vector<8x128xf32>,
    %c7_i32 = arith.constant 7 : i32
    %c8_i32_75 = arith.constant 8 : i32
    %257 = arith.muli %c7_i32, %c8_i32_75 : i32
    %258 = tpu.assume_multiple %257, 8 : i32
    %259 = arith.index_cast %258 : i32 to index
    %c0_76 = arith.constant 0 : index
    %260 = vector.load %arg17[%259, %c0_76] : memref<64x512xf32, #tpu.memory_space<vmem>>, vector<8x512xf32>
    %261 = arith.truncf %254 : vector<8x128xf32> to vector<8x128xbf16>
    %c0_77 = arith.constant 0 : index
    %c0_78 = arith.constant 0 : index
    %262 = vector.load %arg5[%c0_77, %c0_78] : memref<128x512xbf16, #tpu.memory_space<vmem>>, vector<128x512xbf16>
    %cst_79 = arith.constant dense<0.000000e+00> : vector<8x512xf32>
    %263 = tpu.matmul %261, %262, %cst_79 {dimension_numbers = #tpu.dot_dimension_numbers<[1], [0], [0], [1], [0, 0, 1, 1], [], []>} : vector<8x128xbf16>, vector<128x512xbf16>, vector<8x512xf32> -> vector<8x512xf32>
    %264 = arith.addf %260, %263 : vector<8x512xf32>
    %265 = vector.extract_strided_slice %264 {offsets = [0, 0], sizes = [8, 128], strides = [1, 1]} : vector<8x512xf32> to vector<8x128xf32>
    %266 = arith.negf %265 : vector<8x128xf32>
    %267 = math.exp %266 : vector<8x128xf32>
    %cst_80 = arith.constant 1.000000e+00 : f32
    %268 = vector.broadcast %cst_80 : f32 to vector<8x128xf32>
    %269 = arith.addf %268, %267 : vector<8x128xf32>
    %270 = arith.divf %268, %269 : vector<8x128xf32>
    %271 = vector.extract_strided_slice %264 {offsets = [0, 128], sizes = [8, 128], strides = [1, 1]} : vector<8x512xf32> to vector<8x128xf32>
    %272 = arith.negf %271 : vector<8x128xf32>
    %273 = math.exp %272 : vector<8x128xf32>
    %cst_81 = arith.constant 1.000000e+00 : f32
    %274 = vector.broadcast %cst_81 : f32 to vector<8x128xf32>
    %275 = arith.addf %274, %273 : vector<8x128xf32>
    %276 = arith.divf %274, %275 : vector<8x128xf32>
    %277 = vector.extract_strided_slice %264 {offsets = [0, 256], sizes = [8, 128], strides = [1, 1]} : vector<8x512xf32> to vector<8x128xf32>
    %278 = math.tanh %277 : vector<8x128xf32>
    %279 = vector.extract_strided_slice %264 {offsets = [0, 384], sizes = [8, 128], strides = [1, 1]} : vector<8x512xf32> to vector<8x128xf32>
    %280 = arith.negf %279 : vector<8x128xf32>
    %281 = math.exp %280 : vector<8x128xf32>
    %cst_82 = arith.constant 1.000000e+00 : f32
    %282 = vector.broadcast %cst_82 : f32 to vector<8x128xf32>
    %283 = arith.addf %282, %281 : vector<8x128xf32>
    %284 = arith.divf %282, %283 : vector<8x128xf32>
    %285 = arith.mulf %276, %252 : vector<8x128xf32>
    %286 = arith.mulf %270, %278 : vector<8x128xf32>
    %287 = arith.addf %285, %286 : vector<8x128xf32>
    %288 = math.tanh %287 : vector<8x128xf32>
    %289 = arith.mulf %284, %288 : vector<8x128xf32>
    %290 = arith.index_cast %258 : i32 to index
    %c0_83 = arith.constant 0 : index
    %291 = vector.load %arg16[%290, %c0_83] : memref<64x128xf32, #tpu.memory_space<vmem>>, vector<8x128xf32>
    tpu.vector_store %arg16[%290, %c0_83], %289 {strides = array<i32>} : memref<64x128xf32, #tpu.memory_space<vmem>>, vector<8x128xf32>,
    %c8_i32_84 = arith.constant 8 : i32
    %c0_85 = arith.constant 0 : index
    %c0_86 = arith.constant 0 : index
    %c0_87 = arith.constant 0 : index
    %292 = vector.load %arg14[%c0_85, %c0_86, %c0_87] : memref<3x8x128xf32, #tpu.memory_space<vmem>>, vector<1x8x128xf32>
    %293 = vector.shape_cast %292 : vector<1x8x128xf32> to vector<8x128xf32>
    %294 = vector.shape_cast %289 : vector<8x128xf32> to vector<1x8x128xf32>
    tpu.vector_store %arg14[%c0_85, %c0_86, %c0_87], %294 {strides = array<i32>} : memref<3x8x128xf32, #tpu.memory_space<vmem>>, vector<1x8x128xf32>,
    %c0_88 = arith.constant 0 : index
    %c0_89 = arith.constant 0 : index
    %c0_90 = arith.constant 0 : index
    %295 = vector.load %arg15[%c0_88, %c0_89, %c0_90] : memref<3x8x128xf32, #tpu.memory_space<vmem>>, vector<1x8x128xf32>
    %296 = vector.shape_cast %295 : vector<1x8x128xf32> to vector<8x128xf32>
    %297 = vector.shape_cast %287 : vector<8x128xf32> to vector<1x8x128xf32>
    tpu.vector_store %arg15[%c0_88, %c0_89, %c0_90], %297 {strides = array<i32>} : memref<3x8x128xf32, #tpu.memory_space<vmem>>, vector<1x8x128xf32>,
    %c0_91 = arith.constant 0 : index
    %c0_92 = arith.constant 0 : index
    %298 = vector.load %arg16[%c0_91, %c0_92] : memref<64x128xf32, #tpu.memory_space<vmem>>, vector<64x128xf32>
    %299 = arith.truncf %298 : vector<64x128xf32> to vector<64x128xbf16>
    %c0_93 = arith.constant 0 : index
    %c0_94 = arith.constant 0 : index
    %300 = vector.load %arg7[%c0_93, %c0_94] : memref<128x512xbf16, #tpu.memory_space<vmem>>, vector<128x512xbf16>
    %cst_95 = arith.constant dense<0.000000e+00> : vector<64x512xf32>
    %301 = tpu.matmul %299, %300, %cst_95 {dimension_numbers = #tpu.dot_dimension_numbers<[1], [0], [0], [1], [0, 0, 1, 1], [], []>} : vector<64x128xbf16>, vector<128x512xbf16>, vector<64x512xf32> -> vector<64x512xf32>
    %c0_96 = arith.constant 0 : index
    %c0_97 = arith.constant 0 : index
    %302 = vector.load %arg9[%c0_96, %c0_97] : memref<1x512xf32, #tpu.memory_space<vmem>>, vector<1x512xf32>
    %303 = vector.broadcast %302 : vector<1x512xf32> to vector<64x512xf32>
    %304 = arith.addf %301, %303 : vector<64x512xf32>
    %c0_98 = arith.constant 0 : index
    %c0_99 = arith.constant 0 : index
    %305 = vector.load %arg17[%c0_98, %c0_99] : memref<64x512xf32, #tpu.memory_space<vmem>>, vector<64x512xf32>
    tpu.vector_store %arg17[%c0_98, %c0_99], %304 {strides = array<i32>} : memref<64x512xf32, #tpu.memory_space<vmem>>, vector<64x512xf32>,
    %c1 = arith.constant 1 : index
    %c0_100 = arith.constant 0 : index
    %c0_101 = arith.constant 0 : index
    %306 = vector.load %arg2[%c1, %c0_100, %c0_101] : memref<3x8x128xf32, #tpu.memory_space<vmem>>, vector<1x8x128xf32>
    %307 = vector.shape_cast %306 : vector<1x8x128xf32> to vector<8x128xf32>
    %c1_102 = arith.constant 1 : index
    %c0_103 = arith.constant 0 : index
    %c0_104 = arith.constant 0 : index
    %308 = vector.load %arg3[%c1_102, %c0_103, %c0_104] : memref<3x8x128xf32, #tpu.memory_space<vmem>>, vector<1x8x128xf32>
    %309 = vector.shape_cast %308 : vector<1x8x128xf32> to vector<8x128xf32>
    %c0_i32_105 = arith.constant 0 : i32
    %c8_i32_106 = arith.constant 8 : i32
    %310 = arith.muli %c0_i32_105, %c8_i32_106 : i32
    %311 = tpu.assume_multiple %310, 8 : i32
    %312 = arith.index_cast %311 : i32 to index
    %c0_107 = arith.constant 0 : index
    %313 = vector.load %arg17[%312, %c0_107] : memref<64x512xf32, #tpu.memory_space<vmem>>, vector<8x512xf32>
    %314 = arith.truncf %307 : vector<8x128xf32> to vector<8x128xbf16>
    %c0_108 = arith.constant 0 : index
    %c0_109 = arith.constant 0 : index
    %315 = vector.load %arg8[%c0_108, %c0_109] : memref<128x512xbf16, #tpu.memory_space<vmem>>, vector<128x512xbf16>
    %cst_110 = arith.constant dense<0.000000e+00> : vector<8x512xf32>
    %316 = tpu.matmul %314, %315, %cst_110 {dimension_numbers = #tpu.dot_dimension_numbers<[1], [0], [0], [1], [0, 0, 1, 1], [], []>} : vector<8x128xbf16>, vector<128x512xbf16>, vector<8x512xf32> -> vector<8x512xf32>
    %317 = arith.addf %313, %316 : vector<8x512xf32>
    %318 = vector.extract_strided_slice %317 {offsets = [0, 0], sizes = [8, 128], strides = [1, 1]} : vector<8x512xf32> to vector<8x128xf32>
    %319 = arith.negf %318 : vector<8x128xf32>
    %320 = math.exp %319 : vector<8x128xf32>
    %cst_111 = arith.constant 1.000000e+00 : f32
    %321 = vector.broadcast %cst_111 : f32 to vector<8x128xf32>
    %322 = arith.addf %321, %320 : vector<8x128xf32>
    %323 = arith.divf %321, %322 : vector<8x128xf32>
    %324 = vector.extract_strided_slice %317 {offsets = [0, 128], sizes = [8, 128], strides = [1, 1]} : vector<8x512xf32> to vector<8x128xf32>
    %325 = arith.negf %324 : vector<8x128xf32>
    %326 = math.exp %325 : vector<8x128xf32>
    %cst_112 = arith.constant 1.000000e+00 : f32
    %327 = vector.broadcast %cst_112 : f32 to vector<8x128xf32>
    %328 = arith.addf %327, %326 : vector<8x128xf32>
    %329 = arith.divf %327, %328 : vector<8x128xf32>
    %330 = vector.extract_strided_slice %317 {offsets = [0, 256], sizes = [8, 128], strides = [1, 1]} : vector<8x512xf32> to vector<8x128xf32>
    %331 = math.tanh %330 : vector<8x128xf32>
    %332 = vector.extract_strided_slice %317 {offsets = [0, 384], sizes = [8, 128], strides = [1, 1]} : vector<8x512xf32> to vector<8x128xf32>
    %333 = arith.negf %332 : vector<8x128xf32>
    %334 = math.exp %333 : vector<8x128xf32>
    %cst_113 = arith.constant 1.000000e+00 : f32
    %335 = vector.broadcast %cst_113 : f32 to vector<8x128xf32>
    %336 = arith.addf %335, %334 : vector<8x128xf32>
    %337 = arith.divf %335, %336 : vector<8x128xf32>
    %338 = arith.mulf %329, %309 : vector<8x128xf32>
    %339 = arith.mulf %323, %331 : vector<8x128xf32>
    %340 = arith.addf %338, %339 : vector<8x128xf32>
    %341 = math.tanh %340 : vector<8x128xf32>
    %342 = arith.mulf %337, %341 : vector<8x128xf32>
    %343 = arith.index_cast %311 : i32 to index
    %c0_114 = arith.constant 0 : index
    %344 = vector.load %arg16[%343, %c0_114] : memref<64x128xf32, #tpu.memory_space<vmem>>, vector<8x128xf32>
    tpu.vector_store %arg16[%343, %c0_114], %342 {strides = array<i32>} : memref<64x128xf32, #tpu.memory_space<vmem>>, vector<8x128xf32>,
    %c1_i32_115 = arith.constant 1 : i32
    %c8_i32_116 = arith.constant 8 : i32
    %345 = arith.muli %c1_i32_115, %c8_i32_116 : i32
    %346 = tpu.assume_multiple %345, 8 : i32
    %347 = arith.index_cast %346 : i32 to index
    %c0_117 = arith.constant 0 : index
    %348 = vector.load %arg17[%347, %c0_117] : memref<64x512xf32, #tpu.memory_space<vmem>>, vector<8x512xf32>
    %349 = arith.truncf %342 : vector<8x128xf32> to vector<8x128xbf16>
    %c0_118 = arith.constant 0 : index
    %c0_119 = arith.constant 0 : index
    %350 = vector.load %arg8[%c0_118, %c0_119] : memref<128x512xbf16, #tpu.memory_space<vmem>>, vector<128x512xbf16>
    %cst_120 = arith.constant dense<0.000000e+00> : vector<8x512xf32>
    %351 = tpu.matmul %349, %350, %cst_120 {dimension_numbers = #tpu.dot_dimension_numbers<[1], [0], [0], [1], [0, 0, 1, 1], [], []>} : vector<8x128xbf16>, vector<128x512xbf16>, vector<8x512xf32> -> vector<8x512xf32>
    %352 = arith.addf %348, %351 : vector<8x512xf32>
    %353 = vector.extract_strided_slice %352 {offsets = [0, 0], sizes = [8, 128], strides = [1, 1]} : vector<8x512xf32> to vector<8x128xf32>
    %354 = arith.negf %353 : vector<8x128xf32>
    %355 = math.exp %354 : vector<8x128xf32>
    %cst_121 = arith.constant 1.000000e+00 : f32
    %356 = vector.broadcast %cst_121 : f32 to vector<8x128xf32>
    %357 = arith.addf %356, %355 : vector<8x128xf32>
    %358 = arith.divf %356, %357 : vector<8x128xf32>
    %359 = vector.extract_strided_slice %352 {offsets = [0, 128], sizes = [8, 128], strides = [1, 1]} : vector<8x512xf32> to vector<8x128xf32>
    %360 = arith.negf %359 : vector<8x128xf32>
    %361 = math.exp %360 : vector<8x128xf32>
    %cst_122 = arith.constant 1.000000e+00 : f32
    %362 = vector.broadcast %cst_122 : f32 to vector<8x128xf32>
    %363 = arith.addf %362, %361 : vector<8x128xf32>
    %364 = arith.divf %362, %363 : vector<8x128xf32>
    %365 = vector.extract_strided_slice %352 {offsets = [0, 256], sizes = [8, 128], strides = [1, 1]} : vector<8x512xf32> to vector<8x128xf32>
    %366 = math.tanh %365 : vector<8x128xf32>
    %367 = vector.extract_strided_slice %352 {offsets = [0, 384], sizes = [8, 128], strides = [1, 1]} : vector<8x512xf32> to vector<8x128xf32>
    %368 = arith.negf %367 : vector<8x128xf32>
    %369 = math.exp %368 : vector<8x128xf32>
    %cst_123 = arith.constant 1.000000e+00 : f32
    %370 = vector.broadcast %cst_123 : f32 to vector<8x128xf32>
    %371 = arith.addf %370, %369 : vector<8x128xf32>
    %372 = arith.divf %370, %371 : vector<8x128xf32>
    %373 = arith.mulf %364, %340 : vector<8x128xf32>
    %374 = arith.mulf %358, %366 : vector<8x128xf32>
    %375 = arith.addf %373, %374 : vector<8x128xf32>
    %376 = math.tanh %375 : vector<8x128xf32>
    %377 = arith.mulf %372, %376 : vector<8x128xf32>
    %378 = arith.index_cast %346 : i32 to index
    %c0_124 = arith.constant 0 : index
    %379 = vector.load %arg16[%378, %c0_124] : memref<64x128xf32, #tpu.memory_space<vmem>>, vector<8x128xf32>
    tpu.vector_store %arg16[%378, %c0_124], %377 {strides = array<i32>} : memref<64x128xf32, #tpu.memory_space<vmem>>, vector<8x128xf32>,
    %c2_i32_125 = arith.constant 2 : i32
    %c8_i32_126 = arith.constant 8 : i32
    %380 = arith.muli %c2_i32_125, %c8_i32_126 : i32
    %381 = tpu.assume_multiple %380, 8 : i32
    %382 = arith.index_cast %381 : i32 to index
    %c0_127 = arith.constant 0 : index
    %383 = vector.load %arg17[%382, %c0_127] : memref<64x512xf32, #tpu.memory_space<vmem>>, vector<8x512xf32>
    %384 = arith.truncf %377 : vector<8x128xf32> to vector<8x128xbf16>
    %c0_128 = arith.constant 0 : index
    %c0_129 = arith.constant 0 : index
    %385 = vector.load %arg8[%c0_128, %c0_129] : memref<128x512xbf16, #tpu.memory_space<vmem>>, vector<128x512xbf16>
    %cst_130 = arith.constant dense<0.000000e+00> : vector<8x512xf32>
    %386 = tpu.matmul %384, %385, %cst_130 {dimension_numbers = #tpu.dot_dimension_numbers<[1], [0], [0], [1], [0, 0, 1, 1], [], []>} : vector<8x128xbf16>, vector<128x512xbf16>, vector<8x512xf32> -> vector<8x512xf32>
    %387 = arith.addf %383, %386 : vector<8x512xf32>
    %388 = vector.extract_strided_slice %387 {offsets = [0, 0], sizes = [8, 128], strides = [1, 1]} : vector<8x512xf32> to vector<8x128xf32>
    %389 = arith.negf %388 : vector<8x128xf32>
    %390 = math.exp %389 : vector<8x128xf32>
    %cst_131 = arith.constant 1.000000e+00 : f32
    %391 = vector.broadcast %cst_131 : f32 to vector<8x128xf32>
    %392 = arith.addf %391, %390 : vector<8x128xf32>
    %393 = arith.divf %391, %392 : vector<8x128xf32>
    %394 = vector.extract_strided_slice %387 {offsets = [0, 128], sizes = [8, 128], strides = [1, 1]} : vector<8x512xf32> to vector<8x128xf32>
    %395 = arith.negf %394 : vector<8x128xf32>
    %396 = math.exp %395 : vector<8x128xf32>
    %cst_132 = arith.constant 1.000000e+00 : f32
    %397 = vector.broadcast %cst_132 : f32 to vector<8x128xf32>
    %398 = arith.addf %397, %396 : vector<8x128xf32>
    %399 = arith.divf %397, %398 : vector<8x128xf32>
    %400 = vector.extract_strided_slice %387 {offsets = [0, 256], sizes = [8, 128], strides = [1, 1]} : vector<8x512xf32> to vector<8x128xf32>
    %401 = math.tanh %400 : vector<8x128xf32>
    %402 = vector.extract_strided_slice %387 {offsets = [0, 384], sizes = [8, 128], strides = [1, 1]} : vector<8x512xf32> to vector<8x128xf32>
    %403 = arith.negf %402 : vector<8x128xf32>
    %404 = math.exp %403 : vector<8x128xf32>
    %cst_133 = arith.constant 1.000000e+00 : f32
    %405 = vector.broadcast %cst_133 : f32 to vector<8x128xf32>
    %406 = arith.addf %405, %404 : vector<8x128xf32>
    %407 = arith.divf %405, %406 : vector<8x128xf32>
    %408 = arith.mulf %399, %375 : vector<8x128xf32>
    %409 = arith.mulf %393, %401 : vector<8x128xf32>
    %410 = arith.addf %408, %409 : vector<8x128xf32>
    %411 = math.tanh %410 : vector<8x128xf32>
    %412 = arith.mulf %407, %411 : vector<8x128xf32>
    %413 = arith.index_cast %381 : i32 to index
    %c0_134 = arith.constant 0 : index
    %414 = vector.load %arg16[%413, %c0_134] : memref<64x128xf32, #tpu.memory_space<vmem>>, vector<8x128xf32>
    tpu.vector_store %arg16[%413, %c0_134], %412 {strides = array<i32>} : memref<64x128xf32, #tpu.memory_space<vmem>>, vector<8x128xf32>,
    %c3_i32_135 = arith.constant 3 : i32
    %c8_i32_136 = arith.constant 8 : i32
    %415 = arith.muli %c3_i32_135, %c8_i32_136 : i32
    %416 = tpu.assume_multiple %415, 8 : i32
    %417 = arith.index_cast %416 : i32 to index
    %c0_137 = arith.constant 0 : index
    %418 = vector.load %arg17[%417, %c0_137] : memref<64x512xf32, #tpu.memory_space<vmem>>, vector<8x512xf32>
    %419 = arith.truncf %412 : vector<8x128xf32> to vector<8x128xbf16>
    %c0_138 = arith.constant 0 : index
    %c0_139 = arith.constant 0 : index
    %420 = vector.load %arg8[%c0_138, %c0_139] : memref<128x512xbf16, #tpu.memory_space<vmem>>, vector<128x512xbf16>
    %cst_140 = arith.constant dense<0.000000e+00> : vector<8x512xf32>
    %421 = tpu.matmul %419, %420, %cst_140 {dimension_numbers = #tpu.dot_dimension_numbers<[1], [0], [0], [1], [0, 0, 1, 1], [], []>} : vector<8x128xbf16>, vector<128x512xbf16>, vector<8x512xf32> -> vector<8x512xf32>
    %422 = arith.addf %418, %421 : vector<8x512xf32>
    %423 = vector.extract_strided_slice %422 {offsets = [0, 0], sizes = [8, 128], strides = [1, 1]} : vector<8x512xf32> to vector<8x128xf32>
    %424 = arith.negf %423 : vector<8x128xf32>
    %425 = math.exp %424 : vector<8x128xf32>
    %cst_141 = arith.constant 1.000000e+00 : f32
    %426 = vector.broadcast %cst_141 : f32 to vector<8x128xf32>
    %427 = arith.addf %426, %425 : vector<8x128xf32>
    %428 = arith.divf %426, %427 : vector<8x128xf32>
    %429 = vector.extract_strided_slice %422 {offsets = [0, 128], sizes = [8, 128], strides = [1, 1]} : vector<8x512xf32> to vector<8x128xf32>
    %430 = arith.negf %429 : vector<8x128xf32>
    %431 = math.exp %430 : vector<8x128xf32>
    %cst_142 = arith.constant 1.000000e+00 : f32
    %432 = vector.broadcast %cst_142 : f32 to vector<8x128xf32>
    %433 = arith.addf %432, %431 : vector<8x128xf32>
    %434 = arith.divf %432, %433 : vector<8x128xf32>
    %435 = vector.extract_strided_slice %422 {offsets = [0, 256], sizes = [8, 128], strides = [1, 1]} : vector<8x512xf32> to vector<8x128xf32>
    %436 = math.tanh %435 : vector<8x128xf32>
    %437 = vector.extract_strided_slice %422 {offsets = [0, 384], sizes = [8, 128], strides = [1, 1]} : vector<8x512xf32> to vector<8x128xf32>
    %438 = arith.negf %437 : vector<8x128xf32>
    %439 = math.exp %438 : vector<8x128xf32>
    %cst_143 = arith.constant 1.000000e+00 : f32
    %440 = vector.broadcast %cst_143 : f32 to vector<8x128xf32>
    %441 = arith.addf %440, %439 : vector<8x128xf32>
    %442 = arith.divf %440, %441 : vector<8x128xf32>
    %443 = arith.mulf %434, %410 : vector<8x128xf32>
    %444 = arith.mulf %428, %436 : vector<8x128xf32>
    %445 = arith.addf %443, %444 : vector<8x128xf32>
    %446 = math.tanh %445 : vector<8x128xf32>
    %447 = arith.mulf %442, %446 : vector<8x128xf32>
    %448 = arith.index_cast %416 : i32 to index
    %c0_144 = arith.constant 0 : index
    %449 = vector.load %arg16[%448, %c0_144] : memref<64x128xf32, #tpu.memory_space<vmem>>, vector<8x128xf32>
    tpu.vector_store %arg16[%448, %c0_144], %447 {strides = array<i32>} : memref<64x128xf32, #tpu.memory_space<vmem>>, vector<8x128xf32>,
    %c4_i32_145 = arith.constant 4 : i32
    %c8_i32_146 = arith.constant 8 : i32
    %450 = arith.muli %c4_i32_145, %c8_i32_146 : i32
    %451 = tpu.assume_multiple %450, 8 : i32
    %452 = arith.index_cast %451 : i32 to index
    %c0_147 = arith.constant 0 : index
    %453 = vector.load %arg17[%452, %c0_147] : memref<64x512xf32, #tpu.memory_space<vmem>>, vector<8x512xf32>
    %454 = arith.truncf %447 : vector<8x128xf32> to vector<8x128xbf16>
    %c0_148 = arith.constant 0 : index
    %c0_149 = arith.constant 0 : index
    %455 = vector.load %arg8[%c0_148, %c0_149] : memref<128x512xbf16, #tpu.memory_space<vmem>>, vector<128x512xbf16>
    %cst_150 = arith.constant dense<0.000000e+00> : vector<8x512xf32>
    %456 = tpu.matmul %454, %455, %cst_150 {dimension_numbers = #tpu.dot_dimension_numbers<[1], [0], [0], [1], [0, 0, 1, 1], [], []>} : vector<8x128xbf16>, vector<128x512xbf16>, vector<8x512xf32> -> vector<8x512xf32>
    %457 = arith.addf %453, %456 : vector<8x512xf32>
    %458 = vector.extract_strided_slice %457 {offsets = [0, 0], sizes = [8, 128], strides = [1, 1]} : vector<8x512xf32> to vector<8x128xf32>
    %459 = arith.negf %458 : vector<8x128xf32>
    %460 = math.exp %459 : vector<8x128xf32>
    %cst_151 = arith.constant 1.000000e+00 : f32
    %461 = vector.broadcast %cst_151 : f32 to vector<8x128xf32>
    %462 = arith.addf %461, %460 : vector<8x128xf32>
    %463 = arith.divf %461, %462 : vector<8x128xf32>
    %464 = vector.extract_strided_slice %457 {offsets = [0, 128], sizes = [8, 128], strides = [1, 1]} : vector<8x512xf32> to vector<8x128xf32>
    %465 = arith.negf %464 : vector<8x128xf32>
    %466 = math.exp %465 : vector<8x128xf32>
    %cst_152 = arith.constant 1.000000e+00 : f32
    %467 = vector.broadcast %cst_152 : f32 to vector<8x128xf32>
    %468 = arith.addf %467, %466 : vector<8x128xf32>
    %469 = arith.divf %467, %468 : vector<8x128xf32>
    %470 = vector.extract_strided_slice %457 {offsets = [0, 256], sizes = [8, 128], strides = [1, 1]} : vector<8x512xf32> to vector<8x128xf32>
    %471 = math.tanh %470 : vector<8x128xf32>
    %472 = vector.extract_strided_slice %457 {offsets = [0, 384], sizes = [8, 128], strides = [1, 1]} : vector<8x512xf32> to vector<8x128xf32>
    %473 = arith.negf %472 : vector<8x128xf32>
    %474 = math.exp %473 : vector<8x128xf32>
    %cst_153 = arith.constant 1.000000e+00 : f32
    %475 = vector.broadcast %cst_153 : f32 to vector<8x128xf32>
    %476 = arith.addf %475, %474 : vector<8x128xf32>
    %477 = arith.divf %475, %476 : vector<8x128xf32>
    %478 = arith.mulf %469, %445 : vector<8x128xf32>
    %479 = arith.mulf %463, %471 : vector<8x128xf32>
    %480 = arith.addf %478, %479 : vector<8x128xf32>
    %481 = math.tanh %480 : vector<8x128xf32>
    %482 = arith.mulf %477, %481 : vector<8x128xf32>
    %483 = arith.index_cast %451 : i32 to index
    %c0_154 = arith.constant 0 : index
    %484 = vector.load %arg16[%483, %c0_154] : memref<64x128xf32, #tpu.memory_space<vmem>>, vector<8x128xf32>
    tpu.vector_store %arg16[%483, %c0_154], %482 {strides = array<i32>} : memref<64x128xf32, #tpu.memory_space<vmem>>, vector<8x128xf32>,
    %c5_i32_155 = arith.constant 5 : i32
    %c8_i32_156 = arith.constant 8 : i32
    %485 = arith.muli %c5_i32_155, %c8_i32_156 : i32
    %486 = tpu.assume_multiple %485, 8 : i32
    %487 = arith.index_cast %486 : i32 to index
    %c0_157 = arith.constant 0 : index
    %488 = vector.load %arg17[%487, %c0_157] : memref<64x512xf32, #tpu.memory_space<vmem>>, vector<8x512xf32>
    %489 = arith.truncf %482 : vector<8x128xf32> to vector<8x128xbf16>
    %c0_158 = arith.constant 0 : index
    %c0_159 = arith.constant 0 : index
    %490 = vector.load %arg8[%c0_158, %c0_159] : memref<128x512xbf16, #tpu.memory_space<vmem>>, vector<128x512xbf16>
    %cst_160 = arith.constant dense<0.000000e+00> : vector<8x512xf32>
    %491 = tpu.matmul %489, %490, %cst_160 {dimension_numbers = #tpu.dot_dimension_numbers<[1], [0], [0], [1], [0, 0, 1, 1], [], []>} : vector<8x128xbf16>, vector<128x512xbf16>, vector<8x512xf32> -> vector<8x512xf32>
    %492 = arith.addf %488, %491 : vector<8x512xf32>
    %493 = vector.extract_strided_slice %492 {offsets = [0, 0], sizes = [8, 128], strides = [1, 1]} : vector<8x512xf32> to vector<8x128xf32>
    %494 = arith.negf %493 : vector<8x128xf32>
    %495 = math.exp %494 : vector<8x128xf32>
    %cst_161 = arith.constant 1.000000e+00 : f32
    %496 = vector.broadcast %cst_161 : f32 to vector<8x128xf32>
    %497 = arith.addf %496, %495 : vector<8x128xf32>
    %498 = arith.divf %496, %497 : vector<8x128xf32>
    %499 = vector.extract_strided_slice %492 {offsets = [0, 128], sizes = [8, 128], strides = [1, 1]} : vector<8x512xf32> to vector<8x128xf32>
    %500 = arith.negf %499 : vector<8x128xf32>
    %501 = math.exp %500 : vector<8x128xf32>
    %cst_162 = arith.constant 1.000000e+00 : f32
    %502 = vector.broadcast %cst_162 : f32 to vector<8x128xf32>
    %503 = arith.addf %502, %501 : vector<8x128xf32>
    %504 = arith.divf %502, %503 : vector<8x128xf32>
    %505 = vector.extract_strided_slice %492 {offsets = [0, 256], sizes = [8, 128], strides = [1, 1]} : vector<8x512xf32> to vector<8x128xf32>
    %506 = math.tanh %505 : vector<8x128xf32>
    %507 = vector.extract_strided_slice %492 {offsets = [0, 384], sizes = [8, 128], strides = [1, 1]} : vector<8x512xf32> to vector<8x128xf32>
    %508 = arith.negf %507 : vector<8x128xf32>
    %509 = math.exp %508 : vector<8x128xf32>
    %cst_163 = arith.constant 1.000000e+00 : f32
    %510 = vector.broadcast %cst_163 : f32 to vector<8x128xf32>
    %511 = arith.addf %510, %509 : vector<8x128xf32>
    %512 = arith.divf %510, %511 : vector<8x128xf32>
    %513 = arith.mulf %504, %480 : vector<8x128xf32>
    %514 = arith.mulf %498, %506 : vector<8x128xf32>
    %515 = arith.addf %513, %514 : vector<8x128xf32>
    %516 = math.tanh %515 : vector<8x128xf32>
    %517 = arith.mulf %512, %516 : vector<8x128xf32>
    %518 = arith.index_cast %486 : i32 to index
    %c0_164 = arith.constant 0 : index
    %519 = vector.load %arg16[%518, %c0_164] : memref<64x128xf32, #tpu.memory_space<vmem>>, vector<8x128xf32>
    tpu.vector_store %arg16[%518, %c0_164], %517 {strides = array<i32>} : memref<64x128xf32, #tpu.memory_space<vmem>>, vector<8x128xf32>,
    %c6_i32_165 = arith.constant 6 : i32
    %c8_i32_166 = arith.constant 8 : i32
    %520 = arith.muli %c6_i32_165, %c8_i32_166 : i32
    %521 = tpu.assume_multiple %520, 8 : i32
    %522 = arith.index_cast %521 : i32 to index
    %c0_167 = arith.constant 0 : index
    %523 = vector.load %arg17[%522, %c0_167] : memref<64x512xf32, #tpu.memory_space<vmem>>, vector<8x512xf32>
    %524 = arith.truncf %517 : vector<8x128xf32> to vector<8x128xbf16>
    %c0_168 = arith.constant 0 : index
    %c0_169 = arith.constant 0 : index
    %525 = vector.load %arg8[%c0_168, %c0_169] : memref<128x512xbf16, #tpu.memory_space<vmem>>, vector<128x512xbf16>
    %cst_170 = arith.constant dense<0.000000e+00> : vector<8x512xf32>
    %526 = tpu.matmul %524, %525, %cst_170 {dimension_numbers = #tpu.dot_dimension_numbers<[1], [0], [0], [1], [0, 0, 1, 1], [], []>} : vector<8x128xbf16>, vector<128x512xbf16>, vector<8x512xf32> -> vector<8x512xf32>
    %527 = arith.addf %523, %526 : vector<8x512xf32>
    %528 = vector.extract_strided_slice %527 {offsets = [0, 0], sizes = [8, 128], strides = [1, 1]} : vector<8x512xf32> to vector<8x128xf32>
    %529 = arith.negf %528 : vector<8x128xf32>
    %530 = math.exp %529 : vector<8x128xf32>
    %cst_171 = arith.constant 1.000000e+00 : f32
    %531 = vector.broadcast %cst_171 : f32 to vector<8x128xf32>
    %532 = arith.addf %531, %530 : vector<8x128xf32>
    %533 = arith.divf %531, %532 : vector<8x128xf32>
    %534 = vector.extract_strided_slice %527 {offsets = [0, 128], sizes = [8, 128], strides = [1, 1]} : vector<8x512xf32> to vector<8x128xf32>
    %535 = arith.negf %534 : vector<8x128xf32>
    %536 = math.exp %535 : vector<8x128xf32>
    %cst_172 = arith.constant 1.000000e+00 : f32
    %537 = vector.broadcast %cst_172 : f32 to vector<8x128xf32>
    %538 = arith.addf %537, %536 : vector<8x128xf32>
    %539 = arith.divf %537, %538 : vector<8x128xf32>
    %540 = vector.extract_strided_slice %527 {offsets = [0, 256], sizes = [8, 128], strides = [1, 1]} : vector<8x512xf32> to vector<8x128xf32>
    %541 = math.tanh %540 : vector<8x128xf32>
    %542 = vector.extract_strided_slice %527 {offsets = [0, 384], sizes = [8, 128], strides = [1, 1]} : vector<8x512xf32> to vector<8x128xf32>
    %543 = arith.negf %542 : vector<8x128xf32>
    %544 = math.exp %543 : vector<8x128xf32>
    %cst_173 = arith.constant 1.000000e+00 : f32
    %545 = vector.broadcast %cst_173 : f32 to vector<8x128xf32>
    %546 = arith.addf %545, %544 : vector<8x128xf32>
    %547 = arith.divf %545, %546 : vector<8x128xf32>
    %548 = arith.mulf %539, %515 : vector<8x128xf32>
    %549 = arith.mulf %533, %541 : vector<8x128xf32>
    %550 = arith.addf %548, %549 : vector<8x128xf32>
    %551 = math.tanh %550 : vector<8x128xf32>
    %552 = arith.mulf %547, %551 : vector<8x128xf32>
    %553 = arith.index_cast %521 : i32 to index
    %c0_174 = arith.constant 0 : index
    %554 = vector.load %arg16[%553, %c0_174] : memref<64x128xf32, #tpu.memory_space<vmem>>, vector<8x128xf32>
    tpu.vector_store %arg16[%553, %c0_174], %552 {strides = array<i32>} : memref<64x128xf32, #tpu.memory_space<vmem>>, vector<8x128xf32>,
    %c7_i32_175 = arith.constant 7 : i32
    %c8_i32_176 = arith.constant 8 : i32
    %555 = arith.muli %c7_i32_175, %c8_i32_176 : i32
    %556 = tpu.assume_multiple %555, 8 : i32
    %557 = arith.index_cast %556 : i32 to index
    %c0_177 = arith.constant 0 : index
    %558 = vector.load %arg17[%557, %c0_177] : memref<64x512xf32, #tpu.memory_space<vmem>>, vector<8x512xf32>
    %559 = arith.truncf %552 : vector<8x128xf32> to vector<8x128xbf16>
    %c0_178 = arith.constant 0 : index
    %c0_179 = arith.constant 0 : index
    %560 = vector.load %arg8[%c0_178, %c0_179] : memref<128x512xbf16, #tpu.memory_space<vmem>>, vector<128x512xbf16>
    %cst_180 = arith.constant dense<0.000000e+00> : vector<8x512xf32>
    %561 = tpu.matmul %559, %560, %cst_180 {dimension_numbers = #tpu.dot_dimension_numbers<[1], [0], [0], [1], [0, 0, 1, 1], [], []>} : vector<8x128xbf16>, vector<128x512xbf16>, vector<8x512xf32> -> vector<8x512xf32>
    %562 = arith.addf %558, %561 : vector<8x512xf32>
    %563 = vector.extract_strided_slice %562 {offsets = [0, 0], sizes = [8, 128], strides = [1, 1]} : vector<8x512xf32> to vector<8x128xf32>
    %564 = arith.negf %563 : vector<8x128xf32>
    %565 = math.exp %564 : vector<8x128xf32>
    %cst_181 = arith.constant 1.000000e+00 : f32
    %566 = vector.broadcast %cst_181 : f32 to vector<8x128xf32>
    %567 = arith.addf %566, %565 : vector<8x128xf32>
    %568 = arith.divf %566, %567 : vector<8x128xf32>
    %569 = vector.extract_strided_slice %562 {offsets = [0, 128], sizes = [8, 128], strides = [1, 1]} : vector<8x512xf32> to vector<8x128xf32>
    %570 = arith.negf %569 : vector<8x128xf32>
    %571 = math.exp %570 : vector<8x128xf32>
    %cst_182 = arith.constant 1.000000e+00 : f32
    %572 = vector.broadcast %cst_182 : f32 to vector<8x128xf32>
    %573 = arith.addf %572, %571 : vector<8x128xf32>
    %574 = arith.divf %572, %573 : vector<8x128xf32>
    %575 = vector.extract_strided_slice %562 {offsets = [0, 256], sizes = [8, 128], strides = [1, 1]} : vector<8x512xf32> to vector<8x128xf32>
    %576 = math.tanh %575 : vector<8x128xf32>
    %577 = vector.extract_strided_slice %562 {offsets = [0, 384], sizes = [8, 128], strides = [1, 1]} : vector<8x512xf32> to vector<8x128xf32>
    %578 = arith.negf %577 : vector<8x128xf32>
    %579 = math.exp %578 : vector<8x128xf32>
    %cst_183 = arith.constant 1.000000e+00 : f32
    %580 = vector.broadcast %cst_183 : f32 to vector<8x128xf32>
    %581 = arith.addf %580, %579 : vector<8x128xf32>
    %582 = arith.divf %580, %581 : vector<8x128xf32>
    %583 = arith.mulf %574, %550 : vector<8x128xf32>
    %584 = arith.mulf %568, %576 : vector<8x128xf32>
    %585 = arith.addf %583, %584 : vector<8x128xf32>
    %586 = math.tanh %585 : vector<8x128xf32>
    %587 = arith.mulf %582, %586 : vector<8x128xf32>
    %588 = arith.index_cast %556 : i32 to index
    %c0_184 = arith.constant 0 : index
    %589 = vector.load %arg16[%588, %c0_184] : memref<64x128xf32, #tpu.memory_space<vmem>>, vector<8x128xf32>
    tpu.vector_store %arg16[%588, %c0_184], %587 {strides = array<i32>} : memref<64x128xf32, #tpu.memory_space<vmem>>, vector<8x128xf32>,
    %c8_i32_185 = arith.constant 8 : i32
    %c1_186 = arith.constant 1 : index
    %c0_187 = arith.constant 0 : index
    %c0_188 = arith.constant 0 : index
    %590 = vector.load %arg14[%c1_186, %c0_187, %c0_188] : memref<3x8x128xf32, #tpu.memory_space<vmem>>, vector<1x8x128xf32>
    %591 = vector.shape_cast %590 : vector<1x8x128xf32> to vector<8x128xf32>
    %592 = vector.shape_cast %587 : vector<8x128xf32> to vector<1x8x128xf32>
    tpu.vector_store %arg14[%c1_186, %c0_187, %c0_188], %592 {strides = array<i32>} : memref<3x8x128xf32, #tpu.memory_space<vmem>>, vector<1x8x128xf32>,
    %c1_189 = arith.constant 1 : index
    %c0_190 = arith.constant 0 : index
    %c0_191 = arith.constant 0 : index
    %593 = vector.load %arg15[%c1_189, %c0_190, %c0_191] : memref<3x8x128xf32, #tpu.memory_space<vmem>>, vector<1x8x128xf32>
    %594 = vector.shape_cast %593 : vector<1x8x128xf32> to vector<8x128xf32>
    %595 = vector.shape_cast %585 : vector<8x128xf32> to vector<1x8x128xf32>
    tpu.vector_store %arg15[%c1_189, %c0_190, %c0_191], %595 {strides = array<i32>} : memref<3x8x128xf32, #tpu.memory_space<vmem>>, vector<1x8x128xf32>,
    %c0_192 = arith.constant 0 : index
    %c0_193 = arith.constant 0 : index
    %596 = vector.load %arg16[%c0_192, %c0_193] : memref<64x128xf32, #tpu.memory_space<vmem>>, vector<64x128xf32>
    %597 = arith.truncf %596 : vector<64x128xf32> to vector<64x128xbf16>
    %c0_194 = arith.constant 0 : index
    %c0_195 = arith.constant 0 : index
    %598 = vector.load %arg10[%c0_194, %c0_195] : memref<128x512xbf16, #tpu.memory_space<vmem>>, vector<128x512xbf16>
    %cst_196 = arith.constant dense<0.000000e+00> : vector<64x512xf32>
    %599 = tpu.matmul %597, %598, %cst_196 {dimension_numbers = #tpu.dot_dimension_numbers<[1], [0], [0], [1], [0, 0, 1, 1], [], []>} : vector<64x128xbf16>, vector<128x512xbf16>, vector<64x512xf32> -> vector<64x512xf32>
    %c0_197 = arith.constant 0 : index
    %c0_198 = arith.constant 0 : index
    %600 = vector.load %arg12[%c0_197, %c0_198] : memref<1x512xf32, #tpu.memory_space<vmem>>, vector<1x512xf32>
    %601 = vector.broadcast %600 : vector<1x512xf32> to vector<64x512xf32>
    %602 = arith.addf %599, %601 : vector<64x512xf32>
    %c0_199 = arith.constant 0 : index
    %c0_200 = arith.constant 0 : index
    %603 = vector.load %arg17[%c0_199, %c0_200] : memref<64x512xf32, #tpu.memory_space<vmem>>, vector<64x512xf32>
    tpu.vector_store %arg17[%c0_199, %c0_200], %602 {strides = array<i32>} : memref<64x512xf32, #tpu.memory_space<vmem>>, vector<64x512xf32>,
    %c2 = arith.constant 2 : index
    %c0_201 = arith.constant 0 : index
    %c0_202 = arith.constant 0 : index
    %604 = vector.load %arg2[%c2, %c0_201, %c0_202] : memref<3x8x128xf32, #tpu.memory_space<vmem>>, vector<1x8x128xf32>
    %605 = vector.shape_cast %604 : vector<1x8x128xf32> to vector<8x128xf32>
    %c2_203 = arith.constant 2 : index
    %c0_204 = arith.constant 0 : index
    %c0_205 = arith.constant 0 : index
    %606 = vector.load %arg3[%c2_203, %c0_204, %c0_205] : memref<3x8x128xf32, #tpu.memory_space<vmem>>, vector<1x8x128xf32>
    %607 = vector.shape_cast %606 : vector<1x8x128xf32> to vector<8x128xf32>
    %c0_i32_206 = arith.constant 0 : i32
    %c8_i32_207 = arith.constant 8 : i32
    %608 = arith.muli %c0_i32_206, %c8_i32_207 : i32
    %609 = tpu.assume_multiple %608, 8 : i32
    %610 = arith.index_cast %609 : i32 to index
    %c0_208 = arith.constant 0 : index
    %611 = vector.load %arg17[%610, %c0_208] : memref<64x512xf32, #tpu.memory_space<vmem>>, vector<8x512xf32>
    %612 = arith.truncf %605 : vector<8x128xf32> to vector<8x128xbf16>
    %c0_209 = arith.constant 0 : index
    %c0_210 = arith.constant 0 : index
    %613 = vector.load %arg11[%c0_209, %c0_210] : memref<128x512xbf16, #tpu.memory_space<vmem>>, vector<128x512xbf16>
    %cst_211 = arith.constant dense<0.000000e+00> : vector<8x512xf32>
    %614 = tpu.matmul %612, %613, %cst_211 {dimension_numbers = #tpu.dot_dimension_numbers<[1], [0], [0], [1], [0, 0, 1, 1], [], []>} : vector<8x128xbf16>, vector<128x512xbf16>, vector<8x512xf32> -> vector<8x512xf32>
    %615 = arith.addf %611, %614 : vector<8x512xf32>
    %616 = vector.extract_strided_slice %615 {offsets = [0, 0], sizes = [8, 128], strides = [1, 1]} : vector<8x512xf32> to vector<8x128xf32>
    %617 = arith.negf %616 : vector<8x128xf32>
    %618 = math.exp %617 : vector<8x128xf32>
    %cst_212 = arith.constant 1.000000e+00 : f32
    %619 = vector.broadcast %cst_212 : f32 to vector<8x128xf32>
    %620 = arith.addf %619, %618 : vector<8x128xf32>
    %621 = arith.divf %619, %620 : vector<8x128xf32>
    %622 = vector.extract_strided_slice %615 {offsets = [0, 128], sizes = [8, 128], strides = [1, 1]} : vector<8x512xf32> to vector<8x128xf32>
    %623 = arith.negf %622 : vector<8x128xf32>
    %624 = math.exp %623 : vector<8x128xf32>
    %cst_213 = arith.constant 1.000000e+00 : f32
    %625 = vector.broadcast %cst_213 : f32 to vector<8x128xf32>
    %626 = arith.addf %625, %624 : vector<8x128xf32>
    %627 = arith.divf %625, %626 : vector<8x128xf32>
    %628 = vector.extract_strided_slice %615 {offsets = [0, 256], sizes = [8, 128], strides = [1, 1]} : vector<8x512xf32> to vector<8x128xf32>
    %629 = math.tanh %628 : vector<8x128xf32>
    %630 = vector.extract_strided_slice %615 {offsets = [0, 384], sizes = [8, 128], strides = [1, 1]} : vector<8x512xf32> to vector<8x128xf32>
    %631 = arith.negf %630 : vector<8x128xf32>
    %632 = math.exp %631 : vector<8x128xf32>
    %cst_214 = arith.constant 1.000000e+00 : f32
    %633 = vector.broadcast %cst_214 : f32 to vector<8x128xf32>
    %634 = arith.addf %633, %632 : vector<8x128xf32>
    %635 = arith.divf %633, %634 : vector<8x128xf32>
    %636 = arith.mulf %627, %607 : vector<8x128xf32>
    %637 = arith.mulf %621, %629 : vector<8x128xf32>
    %638 = arith.addf %636, %637 : vector<8x128xf32>
    %639 = math.tanh %638 : vector<8x128xf32>
    %640 = arith.mulf %635, %639 : vector<8x128xf32>
    %641 = arith.index_cast %609 : i32 to index
    %c0_215 = arith.constant 0 : index
    %642 = vector.load %arg13[%641, %c0_215] : memref<64x128xf32, #tpu.memory_space<vmem>>, vector<8x128xf32>
    tpu.vector_store %arg13[%641, %c0_215], %640 {strides = array<i32>} : memref<64x128xf32, #tpu.memory_space<vmem>>, vector<8x128xf32>,
    %c1_i32_216 = arith.constant 1 : i32
    %c8_i32_217 = arith.constant 8 : i32
    %643 = arith.muli %c1_i32_216, %c8_i32_217 : i32
    %644 = tpu.assume_multiple %643, 8 : i32
    %645 = arith.index_cast %644 : i32 to index
    %c0_218 = arith.constant 0 : index
    %646 = vector.load %arg17[%645, %c0_218] : memref<64x512xf32, #tpu.memory_space<vmem>>, vector<8x512xf32>
    %647 = arith.truncf %640 : vector<8x128xf32> to vector<8x128xbf16>
    %c0_219 = arith.constant 0 : index
    %c0_220 = arith.constant 0 : index
    %648 = vector.load %arg11[%c0_219, %c0_220] : memref<128x512xbf16, #tpu.memory_space<vmem>>, vector<128x512xbf16>
    %cst_221 = arith.constant dense<0.000000e+00> : vector<8x512xf32>
    %649 = tpu.matmul %647, %648, %cst_221 {dimension_numbers = #tpu.dot_dimension_numbers<[1], [0], [0], [1], [0, 0, 1, 1], [], []>} : vector<8x128xbf16>, vector<128x512xbf16>, vector<8x512xf32> -> vector<8x512xf32>
    %650 = arith.addf %646, %649 : vector<8x512xf32>
    %651 = vector.extract_strided_slice %650 {offsets = [0, 0], sizes = [8, 128], strides = [1, 1]} : vector<8x512xf32> to vector<8x128xf32>
    %652 = arith.negf %651 : vector<8x128xf32>
    %653 = math.exp %652 : vector<8x128xf32>
    %cst_222 = arith.constant 1.000000e+00 : f32
    %654 = vector.broadcast %cst_222 : f32 to vector<8x128xf32>
    %655 = arith.addf %654, %653 : vector<8x128xf32>
    %656 = arith.divf %654, %655 : vector<8x128xf32>
    %657 = vector.extract_strided_slice %650 {offsets = [0, 128], sizes = [8, 128], strides = [1, 1]} : vector<8x512xf32> to vector<8x128xf32>
    %658 = arith.negf %657 : vector<8x128xf32>
    %659 = math.exp %658 : vector<8x128xf32>
    %cst_223 = arith.constant 1.000000e+00 : f32
    %660 = vector.broadcast %cst_223 : f32 to vector<8x128xf32>
    %661 = arith.addf %660, %659 : vector<8x128xf32>
    %662 = arith.divf %660, %661 : vector<8x128xf32>
    %663 = vector.extract_strided_slice %650 {offsets = [0, 256], sizes = [8, 128], strides = [1, 1]} : vector<8x512xf32> to vector<8x128xf32>
    %664 = math.tanh %663 : vector<8x128xf32>
    %665 = vector.extract_strided_slice %650 {offsets = [0, 384], sizes = [8, 128], strides = [1, 1]} : vector<8x512xf32> to vector<8x128xf32>
    %666 = arith.negf %665 : vector<8x128xf32>
    %667 = math.exp %666 : vector<8x128xf32>
    %cst_224 = arith.constant 1.000000e+00 : f32
    %668 = vector.broadcast %cst_224 : f32 to vector<8x128xf32>
    %669 = arith.addf %668, %667 : vector<8x128xf32>
    %670 = arith.divf %668, %669 : vector<8x128xf32>
    %671 = arith.mulf %662, %638 : vector<8x128xf32>
    %672 = arith.mulf %656, %664 : vector<8x128xf32>
    %673 = arith.addf %671, %672 : vector<8x128xf32>
    %674 = math.tanh %673 : vector<8x128xf32>
    %675 = arith.mulf %670, %674 : vector<8x128xf32>
    %676 = arith.index_cast %644 : i32 to index
    %c0_225 = arith.constant 0 : index
    %677 = vector.load %arg13[%676, %c0_225] : memref<64x128xf32, #tpu.memory_space<vmem>>, vector<8x128xf32>
    tpu.vector_store %arg13[%676, %c0_225], %675 {strides = array<i32>} : memref<64x128xf32, #tpu.memory_space<vmem>>, vector<8x128xf32>,
    %c2_i32_226 = arith.constant 2 : i32
    %c8_i32_227 = arith.constant 8 : i32
    %678 = arith.muli %c2_i32_226, %c8_i32_227 : i32
    %679 = tpu.assume_multiple %678, 8 : i32
    %680 = arith.index_cast %679 : i32 to index
    %c0_228 = arith.constant 0 : index
    %681 = vector.load %arg17[%680, %c0_228] : memref<64x512xf32, #tpu.memory_space<vmem>>, vector<8x512xf32>
    %682 = arith.truncf %675 : vector<8x128xf32> to vector<8x128xbf16>
    %c0_229 = arith.constant 0 : index
    %c0_230 = arith.constant 0 : index
    %683 = vector.load %arg11[%c0_229, %c0_230] : memref<128x512xbf16, #tpu.memory_space<vmem>>, vector<128x512xbf16>
    %cst_231 = arith.constant dense<0.000000e+00> : vector<8x512xf32>
    %684 = tpu.matmul %682, %683, %cst_231 {dimension_numbers = #tpu.dot_dimension_numbers<[1], [0], [0], [1], [0, 0, 1, 1], [], []>} : vector<8x128xbf16>, vector<128x512xbf16>, vector<8x512xf32> -> vector<8x512xf32>
    %685 = arith.addf %681, %684 : vector<8x512xf32>
    %686 = vector.extract_strided_slice %685 {offsets = [0, 0], sizes = [8, 128], strides = [1, 1]} : vector<8x512xf32> to vector<8x128xf32>
    %687 = arith.negf %686 : vector<8x128xf32>
    %688 = math.exp %687 : vector<8x128xf32>
    %cst_232 = arith.constant 1.000000e+00 : f32
    %689 = vector.broadcast %cst_232 : f32 to vector<8x128xf32>
    %690 = arith.addf %689, %688 : vector<8x128xf32>
    %691 = arith.divf %689, %690 : vector<8x128xf32>
    %692 = vector.extract_strided_slice %685 {offsets = [0, 128], sizes = [8, 128], strides = [1, 1]} : vector<8x512xf32> to vector<8x128xf32>
    %693 = arith.negf %692 : vector<8x128xf32>
    %694 = math.exp %693 : vector<8x128xf32>
    %cst_233 = arith.constant 1.000000e+00 : f32
    %695 = vector.broadcast %cst_233 : f32 to vector<8x128xf32>
    %696 = arith.addf %695, %694 : vector<8x128xf32>
    %697 = arith.divf %695, %696 : vector<8x128xf32>
    %698 = vector.extract_strided_slice %685 {offsets = [0, 256], sizes = [8, 128], strides = [1, 1]} : vector<8x512xf32> to vector<8x128xf32>
    %699 = math.tanh %698 : vector<8x128xf32>
    %700 = vector.extract_strided_slice %685 {offsets = [0, 384], sizes = [8, 128], strides = [1, 1]} : vector<8x512xf32> to vector<8x128xf32>
    %701 = arith.negf %700 : vector<8x128xf32>
    %702 = math.exp %701 : vector<8x128xf32>
    %cst_234 = arith.constant 1.000000e+00 : f32
    %703 = vector.broadcast %cst_234 : f32 to vector<8x128xf32>
    %704 = arith.addf %703, %702 : vector<8x128xf32>
    %705 = arith.divf %703, %704 : vector<8x128xf32>
    %706 = arith.mulf %697, %673 : vector<8x128xf32>
    %707 = arith.mulf %691, %699 : vector<8x128xf32>
    %708 = arith.addf %706, %707 : vector<8x128xf32>
    %709 = math.tanh %708 : vector<8x128xf32>
    %710 = arith.mulf %705, %709 : vector<8x128xf32>
    %711 = arith.index_cast %679 : i32 to index
    %c0_235 = arith.constant 0 : index
    %712 = vector.load %arg13[%711, %c0_235] : memref<64x128xf32, #tpu.memory_space<vmem>>, vector<8x128xf32>
    tpu.vector_store %arg13[%711, %c0_235], %710 {strides = array<i32>} : memref<64x128xf32, #tpu.memory_space<vmem>>, vector<8x128xf32>,
    %c3_i32_236 = arith.constant 3 : i32
    %c8_i32_237 = arith.constant 8 : i32
    %713 = arith.muli %c3_i32_236, %c8_i32_237 : i32
    %714 = tpu.assume_multiple %713, 8 : i32
    %715 = arith.index_cast %714 : i32 to index
    %c0_238 = arith.constant 0 : index
    %716 = vector.load %arg17[%715, %c0_238] : memref<64x512xf32, #tpu.memory_space<vmem>>, vector<8x512xf32>
    %717 = arith.truncf %710 : vector<8x128xf32> to vector<8x128xbf16>
    %c0_239 = arith.constant 0 : index
    %c0_240 = arith.constant 0 : index
    %718 = vector.load %arg11[%c0_239, %c0_240] : memref<128x512xbf16, #tpu.memory_space<vmem>>, vector<128x512xbf16>
    %cst_241 = arith.constant dense<0.000000e+00> : vector<8x512xf32>
    %719 = tpu.matmul %717, %718, %cst_241 {dimension_numbers = #tpu.dot_dimension_numbers<[1], [0], [0], [1], [0, 0, 1, 1], [], []>} : vector<8x128xbf16>, vector<128x512xbf16>, vector<8x512xf32> -> vector<8x512xf32>
    %720 = arith.addf %716, %719 : vector<8x512xf32>
    %721 = vector.extract_strided_slice %720 {offsets = [0, 0], sizes = [8, 128], strides = [1, 1]} : vector<8x512xf32> to vector<8x128xf32>
    %722 = arith.negf %721 : vector<8x128xf32>
    %723 = math.exp %722 : vector<8x128xf32>
    %cst_242 = arith.constant 1.000000e+00 : f32
    %724 = vector.broadcast %cst_242 : f32 to vector<8x128xf32>
    %725 = arith.addf %724, %723 : vector<8x128xf32>
    %726 = arith.divf %724, %725 : vector<8x128xf32>
    %727 = vector.extract_strided_slice %720 {offsets = [0, 128], sizes = [8, 128], strides = [1, 1]} : vector<8x512xf32> to vector<8x128xf32>
    %728 = arith.negf %727 : vector<8x128xf32>
    %729 = math.exp %728 : vector<8x128xf32>
    %cst_243 = arith.constant 1.000000e+00 : f32
    %730 = vector.broadcast %cst_243 : f32 to vector<8x128xf32>
    %731 = arith.addf %730, %729 : vector<8x128xf32>
    %732 = arith.divf %730, %731 : vector<8x128xf32>
    %733 = vector.extract_strided_slice %720 {offsets = [0, 256], sizes = [8, 128], strides = [1, 1]} : vector<8x512xf32> to vector<8x128xf32>
    %734 = math.tanh %733 : vector<8x128xf32>
    %735 = vector.extract_strided_slice %720 {offsets = [0, 384], sizes = [8, 128], strides = [1, 1]} : vector<8x512xf32> to vector<8x128xf32>
    %736 = arith.negf %735 : vector<8x128xf32>
    %737 = math.exp %736 : vector<8x128xf32>
    %cst_244 = arith.constant 1.000000e+00 : f32
    %738 = vector.broadcast %cst_244 : f32 to vector<8x128xf32>
    %739 = arith.addf %738, %737 : vector<8x128xf32>
    %740 = arith.divf %738, %739 : vector<8x128xf32>
    %741 = arith.mulf %732, %708 : vector<8x128xf32>
    %742 = arith.mulf %726, %734 : vector<8x128xf32>
    %743 = arith.addf %741, %742 : vector<8x128xf32>
    %744 = math.tanh %743 : vector<8x128xf32>
    %745 = arith.mulf %740, %744 : vector<8x128xf32>
    %746 = arith.index_cast %714 : i32 to index
    %c0_245 = arith.constant 0 : index
    %747 = vector.load %arg13[%746, %c0_245] : memref<64x128xf32, #tpu.memory_space<vmem>>, vector<8x128xf32>
    tpu.vector_store %arg13[%746, %c0_245], %745 {strides = array<i32>} : memref<64x128xf32, #tpu.memory_space<vmem>>, vector<8x128xf32>,
    %c4_i32_246 = arith.constant 4 : i32
    %c8_i32_247 = arith.constant 8 : i32
    %748 = arith.muli %c4_i32_246, %c8_i32_247 : i32
    %749 = tpu.assume_multiple %748, 8 : i32
    %750 = arith.index_cast %749 : i32 to index
    %c0_248 = arith.constant 0 : index
    %751 = vector.load %arg17[%750, %c0_248] : memref<64x512xf32, #tpu.memory_space<vmem>>, vector<8x512xf32>
    %752 = arith.truncf %745 : vector<8x128xf32> to vector<8x128xbf16>
    %c0_249 = arith.constant 0 : index
    %c0_250 = arith.constant 0 : index
    %753 = vector.load %arg11[%c0_249, %c0_250] : memref<128x512xbf16, #tpu.memory_space<vmem>>, vector<128x512xbf16>
    %cst_251 = arith.constant dense<0.000000e+00> : vector<8x512xf32>
    %754 = tpu.matmul %752, %753, %cst_251 {dimension_numbers = #tpu.dot_dimension_numbers<[1], [0], [0], [1], [0, 0, 1, 1], [], []>} : vector<8x128xbf16>, vector<128x512xbf16>, vector<8x512xf32> -> vector<8x512xf32>
    %755 = arith.addf %751, %754 : vector<8x512xf32>
    %756 = vector.extract_strided_slice %755 {offsets = [0, 0], sizes = [8, 128], strides = [1, 1]} : vector<8x512xf32> to vector<8x128xf32>
    %757 = arith.negf %756 : vector<8x128xf32>
    %758 = math.exp %757 : vector<8x128xf32>
    %cst_252 = arith.constant 1.000000e+00 : f32
    %759 = vector.broadcast %cst_252 : f32 to vector<8x128xf32>
    %760 = arith.addf %759, %758 : vector<8x128xf32>
    %761 = arith.divf %759, %760 : vector<8x128xf32>
    %762 = vector.extract_strided_slice %755 {offsets = [0, 128], sizes = [8, 128], strides = [1, 1]} : vector<8x512xf32> to vector<8x128xf32>
    %763 = arith.negf %762 : vector<8x128xf32>
    %764 = math.exp %763 : vector<8x128xf32>
    %cst_253 = arith.constant 1.000000e+00 : f32
    %765 = vector.broadcast %cst_253 : f32 to vector<8x128xf32>
    %766 = arith.addf %765, %764 : vector<8x128xf32>
    %767 = arith.divf %765, %766 : vector<8x128xf32>
    %768 = vector.extract_strided_slice %755 {offsets = [0, 256], sizes = [8, 128], strides = [1, 1]} : vector<8x512xf32> to vector<8x128xf32>
    %769 = math.tanh %768 : vector<8x128xf32>
    %770 = vector.extract_strided_slice %755 {offsets = [0, 384], sizes = [8, 128], strides = [1, 1]} : vector<8x512xf32> to vector<8x128xf32>
    %771 = arith.negf %770 : vector<8x128xf32>
    %772 = math.exp %771 : vector<8x128xf32>
    %cst_254 = arith.constant 1.000000e+00 : f32
    %773 = vector.broadcast %cst_254 : f32 to vector<8x128xf32>
    %774 = arith.addf %773, %772 : vector<8x128xf32>
    %775 = arith.divf %773, %774 : vector<8x128xf32>
    %776 = arith.mulf %767, %743 : vector<8x128xf32>
    %777 = arith.mulf %761, %769 : vector<8x128xf32>
    %778 = arith.addf %776, %777 : vector<8x128xf32>
    %779 = math.tanh %778 : vector<8x128xf32>
    %780 = arith.mulf %775, %779 : vector<8x128xf32>
    %781 = arith.index_cast %749 : i32 to index
    %c0_255 = arith.constant 0 : index
    %782 = vector.load %arg13[%781, %c0_255] : memref<64x128xf32, #tpu.memory_space<vmem>>, vector<8x128xf32>
    tpu.vector_store %arg13[%781, %c0_255], %780 {strides = array<i32>} : memref<64x128xf32, #tpu.memory_space<vmem>>, vector<8x128xf32>,
    %c5_i32_256 = arith.constant 5 : i32
    %c8_i32_257 = arith.constant 8 : i32
    %783 = arith.muli %c5_i32_256, %c8_i32_257 : i32
    %784 = tpu.assume_multiple %783, 8 : i32
    %785 = arith.index_cast %784 : i32 to index
    %c0_258 = arith.constant 0 : index
    %786 = vector.load %arg17[%785, %c0_258] : memref<64x512xf32, #tpu.memory_space<vmem>>, vector<8x512xf32>
    %787 = arith.truncf %780 : vector<8x128xf32> to vector<8x128xbf16>
    %c0_259 = arith.constant 0 : index
    %c0_260 = arith.constant 0 : index
    %788 = vector.load %arg11[%c0_259, %c0_260] : memref<128x512xbf16, #tpu.memory_space<vmem>>, vector<128x512xbf16>
    %cst_261 = arith.constant dense<0.000000e+00> : vector<8x512xf32>
    %789 = tpu.matmul %787, %788, %cst_261 {dimension_numbers = #tpu.dot_dimension_numbers<[1], [0], [0], [1], [0, 0, 1, 1], [], []>} : vector<8x128xbf16>, vector<128x512xbf16>, vector<8x512xf32> -> vector<8x512xf32>
    %790 = arith.addf %786, %789 : vector<8x512xf32>
    %791 = vector.extract_strided_slice %790 {offsets = [0, 0], sizes = [8, 128], strides = [1, 1]} : vector<8x512xf32> to vector<8x128xf32>
    %792 = arith.negf %791 : vector<8x128xf32>
    %793 = math.exp %792 : vector<8x128xf32>
    %cst_262 = arith.constant 1.000000e+00 : f32
    %794 = vector.broadcast %cst_262 : f32 to vector<8x128xf32>
    %795 = arith.addf %794, %793 : vector<8x128xf32>
    %796 = arith.divf %794, %795 : vector<8x128xf32>
    %797 = vector.extract_strided_slice %790 {offsets = [0, 128], sizes = [8, 128], strides = [1, 1]} : vector<8x512xf32> to vector<8x128xf32>
    %798 = arith.negf %797 : vector<8x128xf32>
    %799 = math.exp %798 : vector<8x128xf32>
    %cst_263 = arith.constant 1.000000e+00 : f32
    %800 = vector.broadcast %cst_263 : f32 to vector<8x128xf32>
    %801 = arith.addf %800, %799 : vector<8x128xf32>
    %802 = arith.divf %800, %801 : vector<8x128xf32>
    %803 = vector.extract_strided_slice %790 {offsets = [0, 256], sizes = [8, 128], strides = [1, 1]} : vector<8x512xf32> to vector<8x128xf32>
    %804 = math.tanh %803 : vector<8x128xf32>
    %805 = vector.extract_strided_slice %790 {offsets = [0, 384], sizes = [8, 128], strides = [1, 1]} : vector<8x512xf32> to vector<8x128xf32>
    %806 = arith.negf %805 : vector<8x128xf32>
    %807 = math.exp %806 : vector<8x128xf32>
    %cst_264 = arith.constant 1.000000e+00 : f32
    %808 = vector.broadcast %cst_264 : f32 to vector<8x128xf32>
    %809 = arith.addf %808, %807 : vector<8x128xf32>
    %810 = arith.divf %808, %809 : vector<8x128xf32>
    %811 = arith.mulf %802, %778 : vector<8x128xf32>
    %812 = arith.mulf %796, %804 : vector<8x128xf32>
    %813 = arith.addf %811, %812 : vector<8x128xf32>
    %814 = math.tanh %813 : vector<8x128xf32>
    %815 = arith.mulf %810, %814 : vector<8x128xf32>
    %816 = arith.index_cast %784 : i32 to index
    %c0_265 = arith.constant 0 : index
    %817 = vector.load %arg13[%816, %c0_265] : memref<64x128xf32, #tpu.memory_space<vmem>>, vector<8x128xf32>
    tpu.vector_store %arg13[%816, %c0_265], %815 {strides = array<i32>} : memref<64x128xf32, #tpu.memory_space<vmem>>, vector<8x128xf32>,
    %c6_i32_266 = arith.constant 6 : i32
    %c8_i32_267 = arith.constant 8 : i32
    %818 = arith.muli %c6_i32_266, %c8_i32_267 : i32
    %819 = tpu.assume_multiple %818, 8 : i32
    %820 = arith.index_cast %819 : i32 to index
    %c0_268 = arith.constant 0 : index
    %821 = vector.load %arg17[%820, %c0_268] : memref<64x512xf32, #tpu.memory_space<vmem>>, vector<8x512xf32>
    %822 = arith.truncf %815 : vector<8x128xf32> to vector<8x128xbf16>
    %c0_269 = arith.constant 0 : index
    %c0_270 = arith.constant 0 : index
    %823 = vector.load %arg11[%c0_269, %c0_270] : memref<128x512xbf16, #tpu.memory_space<vmem>>, vector<128x512xbf16>
    %cst_271 = arith.constant dense<0.000000e+00> : vector<8x512xf32>
    %824 = tpu.matmul %822, %823, %cst_271 {dimension_numbers = #tpu.dot_dimension_numbers<[1], [0], [0], [1], [0, 0, 1, 1], [], []>} : vector<8x128xbf16>, vector<128x512xbf16>, vector<8x512xf32> -> vector<8x512xf32>
    %825 = arith.addf %821, %824 : vector<8x512xf32>
    %826 = vector.extract_strided_slice %825 {offsets = [0, 0], sizes = [8, 128], strides = [1, 1]} : vector<8x512xf32> to vector<8x128xf32>
    %827 = arith.negf %826 : vector<8x128xf32>
    %828 = math.exp %827 : vector<8x128xf32>
    %cst_272 = arith.constant 1.000000e+00 : f32
    %829 = vector.broadcast %cst_272 : f32 to vector<8x128xf32>
    %830 = arith.addf %829, %828 : vector<8x128xf32>
    %831 = arith.divf %829, %830 : vector<8x128xf32>
    %832 = vector.extract_strided_slice %825 {offsets = [0, 128], sizes = [8, 128], strides = [1, 1]} : vector<8x512xf32> to vector<8x128xf32>
    %833 = arith.negf %832 : vector<8x128xf32>
    %834 = math.exp %833 : vector<8x128xf32>
    %cst_273 = arith.constant 1.000000e+00 : f32
    %835 = vector.broadcast %cst_273 : f32 to vector<8x128xf32>
    %836 = arith.addf %835, %834 : vector<8x128xf32>
    %837 = arith.divf %835, %836 : vector<8x128xf32>
    %838 = vector.extract_strided_slice %825 {offsets = [0, 256], sizes = [8, 128], strides = [1, 1]} : vector<8x512xf32> to vector<8x128xf32>
    %839 = math.tanh %838 : vector<8x128xf32>
    %840 = vector.extract_strided_slice %825 {offsets = [0, 384], sizes = [8, 128], strides = [1, 1]} : vector<8x512xf32> to vector<8x128xf32>
    %841 = arith.negf %840 : vector<8x128xf32>
    %842 = math.exp %841 : vector<8x128xf32>
    %cst_274 = arith.constant 1.000000e+00 : f32
    %843 = vector.broadcast %cst_274 : f32 to vector<8x128xf32>
    %844 = arith.addf %843, %842 : vector<8x128xf32>
    %845 = arith.divf %843, %844 : vector<8x128xf32>
    %846 = arith.mulf %837, %813 : vector<8x128xf32>
    %847 = arith.mulf %831, %839 : vector<8x128xf32>
    %848 = arith.addf %846, %847 : vector<8x128xf32>
    %849 = math.tanh %848 : vector<8x128xf32>
    %850 = arith.mulf %845, %849 : vector<8x128xf32>
    %851 = arith.index_cast %819 : i32 to index
    %c0_275 = arith.constant 0 : index
    %852 = vector.load %arg13[%851, %c0_275] : memref<64x128xf32, #tpu.memory_space<vmem>>, vector<8x128xf32>
    tpu.vector_store %arg13[%851, %c0_275], %850 {strides = array<i32>} : memref<64x128xf32, #tpu.memory_space<vmem>>, vector<8x128xf32>,
    %c7_i32_276 = arith.constant 7 : i32
    %c8_i32_277 = arith.constant 8 : i32
    %853 = arith.muli %c7_i32_276, %c8_i32_277 : i32
    %854 = tpu.assume_multiple %853, 8 : i32
    %855 = arith.index_cast %854 : i32 to index
    %c0_278 = arith.constant 0 : index
    %856 = vector.load %arg17[%855, %c0_278] : memref<64x512xf32, #tpu.memory_space<vmem>>, vector<8x512xf32>
    %857 = arith.truncf %850 : vector<8x128xf32> to vector<8x128xbf16>
    %c0_279 = arith.constant 0 : index
    %c0_280 = arith.constant 0 : index
    %858 = vector.load %arg11[%c0_279, %c0_280] : memref<128x512xbf16, #tpu.memory_space<vmem>>, vector<128x512xbf16>
    %cst_281 = arith.constant dense<0.000000e+00> : vector<8x512xf32>
    %859 = tpu.matmul %857, %858, %cst_281 {dimension_numbers = #tpu.dot_dimension_numbers<[1], [0], [0], [1], [0, 0, 1, 1], [], []>} : vector<8x128xbf16>, vector<128x512xbf16>, vector<8x512xf32> -> vector<8x512xf32>
    %860 = arith.addf %856, %859 : vector<8x512xf32>
    %861 = vector.extract_strided_slice %860 {offsets = [0, 0], sizes = [8, 128], strides = [1, 1]} : vector<8x512xf32> to vector<8x128xf32>
    %862 = arith.negf %861 : vector<8x128xf32>
    %863 = math.exp %862 : vector<8x128xf32>
    %cst_282 = arith.constant 1.000000e+00 : f32
    %864 = vector.broadcast %cst_282 : f32 to vector<8x128xf32>
    %865 = arith.addf %864, %863 : vector<8x128xf32>
    %866 = arith.divf %864, %865 : vector<8x128xf32>
    %867 = vector.extract_strided_slice %860 {offsets = [0, 128], sizes = [8, 128], strides = [1, 1]} : vector<8x512xf32> to vector<8x128xf32>
    %868 = arith.negf %867 : vector<8x128xf32>
    %869 = math.exp %868 : vector<8x128xf32>
    %cst_283 = arith.constant 1.000000e+00 : f32
    %870 = vector.broadcast %cst_283 : f32 to vector<8x128xf32>
    %871 = arith.addf %870, %869 : vector<8x128xf32>
    %872 = arith.divf %870, %871 : vector<8x128xf32>
    %873 = vector.extract_strided_slice %860 {offsets = [0, 256], sizes = [8, 128], strides = [1, 1]} : vector<8x512xf32> to vector<8x128xf32>
    %874 = math.tanh %873 : vector<8x128xf32>
    %875 = vector.extract_strided_slice %860 {offsets = [0, 384], sizes = [8, 128], strides = [1, 1]} : vector<8x512xf32> to vector<8x128xf32>
    %876 = arith.negf %875 : vector<8x128xf32>
    %877 = math.exp %876 : vector<8x128xf32>
    %cst_284 = arith.constant 1.000000e+00 : f32
    %878 = vector.broadcast %cst_284 : f32 to vector<8x128xf32>
    %879 = arith.addf %878, %877 : vector<8x128xf32>
    %880 = arith.divf %878, %879 : vector<8x128xf32>
    %881 = arith.mulf %872, %848 : vector<8x128xf32>
    %882 = arith.mulf %866, %874 : vector<8x128xf32>
    %883 = arith.addf %881, %882 : vector<8x128xf32>
    %884 = math.tanh %883 : vector<8x128xf32>
    %885 = arith.mulf %880, %884 : vector<8x128xf32>
    %886 = arith.index_cast %854 : i32 to index
    %c0_285 = arith.constant 0 : index
    %887 = vector.load %arg13[%886, %c0_285] : memref<64x128xf32, #tpu.memory_space<vmem>>, vector<8x128xf32>
    tpu.vector_store %arg13[%886, %c0_285], %885 {strides = array<i32>} : memref<64x128xf32, #tpu.memory_space<vmem>>, vector<8x128xf32>,
    %c8_i32_286 = arith.constant 8 : i32
    %c2_287 = arith.constant 2 : index
    %c0_288 = arith.constant 0 : index
    %c0_289 = arith.constant 0 : index
    %888 = vector.load %arg14[%c2_287, %c0_288, %c0_289] : memref<3x8x128xf32, #tpu.memory_space<vmem>>, vector<1x8x128xf32>
    %889 = vector.shape_cast %888 : vector<1x8x128xf32> to vector<8x128xf32>
    %890 = vector.shape_cast %885 : vector<8x128xf32> to vector<1x8x128xf32>
    tpu.vector_store %arg14[%c2_287, %c0_288, %c0_289], %890 {strides = array<i32>} : memref<3x8x128xf32, #tpu.memory_space<vmem>>, vector<1x8x128xf32>,
    %c2_290 = arith.constant 2 : index
    %c0_291 = arith.constant 0 : index
    %c0_292 = arith.constant 0 : index
    %891 = vector.load %arg15[%c2_290, %c0_291, %c0_292] : memref<3x8x128xf32, #tpu.memory_space<vmem>>, vector<1x8x128xf32>
    %892 = vector.shape_cast %891 : vector<1x8x128xf32> to vector<8x128xf32>
    %893 = vector.shape_cast %883 : vector<8x128xf32> to vector<1x8x128xf32>
    tpu.vector_store %arg15[%c2_290, %c0_291, %c0_292], %893 {strides = array<i32>} : memref<3x8x128xf32, #tpu.memory_space<vmem>>, vector<1x8x128xf32>,
    return
  }
  func.func @transform_0(%arg0: i32) -> (i32, i32) {
    %c0_i32 = arith.constant 0 : i32
    %c0_i32_0 = arith.constant 0 : i32
    %c0_i32_1 = arith.constant 0 : i32
    return %c0_i32, %c0_i32_0 : i32, i32
  }
  func.func @transform_1(%arg0: i32) -> (i32, i32, i32) {
    %c0_i32 = arith.constant 0 : i32
    %c0_i32_0 = arith.constant 0 : i32
    %c0_i32_1 = arith.constant 0 : i32
    %c0_i32_2 = arith.constant 0 : i32
    return %c0_i32, %c0_i32_0, %c0_i32_1 : i32, i32, i32
  }
  func.func @transform_2(%arg0: i32) -> (i32, i32, i32) {
    %c0_i32 = arith.constant 0 : i32
    %c0_i32_0 = arith.constant 0 : i32
    %c0_i32_1 = arith.constant 0 : i32
    %c0_i32_2 = arith.constant 0 : i32
    return %c0_i32, %c0_i32_0, %c0_i32_1 : i32, i32, i32
  }
  func.func @transform_3(%arg0: i32) -> (i32, i32) {
    %c0_i32 = arith.constant 0 : i32
    %c0_i32_0 = arith.constant 0 : i32
    %c0_i32_1 = arith.constant 0 : i32
    return %c0_i32, %c0_i32_0 : i32, i32
  }
  func.func @transform_4(%arg0: i32) -> (i32, i32) {
    %c0_i32 = arith.constant 0 : i32
    %c0_i32_0 = arith.constant 0 : i32
    %c0_i32_1 = arith.constant 0 : i32
    return %c0_i32, %c0_i32_0 : i32, i32
  }
  func.func @transform_5(%arg0: i32) -> (i32, i32) {
    %c0_i32 = arith.constant 0 : i32
    %c0_i32_0 = arith.constant 0 : i32
    %c0_i32_1 = arith.constant 0 : i32
    return %c0_i32, %c0_i32_0 : i32, i32
  }
  func.func @transform_6(%arg0: i32) -> (i32, i32) {
    %c0_i32 = arith.constant 0 : i32
    %c0_i32_0 = arith.constant 0 : i32
    %c0_i32_1 = arith.constant 0 : i32
    return %c0_i32, %c0_i32_0 : i32, i32
  }
  func.func @transform_7(%arg0: i32) -> (i32, i32) {
    %c0_i32 = arith.constant 0 : i32
    %c0_i32_0 = arith.constant 0 : i32
    %c0_i32_1 = arith.constant 0 : i32
    return %c0_i32, %c0_i32_0 : i32, i32
  }
  func.func @transform_8(%arg0: i32) -> (i32, i32) {
    %c0_i32 = arith.constant 0 : i32
    %c0_i32_0 = arith.constant 0 : i32
    %c0_i32_1 = arith.constant 0 : i32
    return %c0_i32, %c0_i32_0 : i32, i32
  }
  func.func @transform_9(%arg0: i32) -> (i32, i32) {
    %c0_i32 = arith.constant 0 : i32
    %c0_i32_0 = arith.constant 0 : i32
    %c0_i32_1 = arith.constant 0 : i32
    return %c0_i32, %c0_i32_0 : i32, i32
  }
  func.func @transform_10(%arg0: i32) -> (i32, i32) {
    %c0_i32 = arith.constant 0 : i32
    %c0_i32_0 = arith.constant 0 : i32
    %c0_i32_1 = arith.constant 0 : i32
    return %c0_i32, %c0_i32_0 : i32, i32
  }
  func.func @transform_11(%arg0: i32) -> (i32, i32) {
    %c0_i32 = arith.constant 0 : i32
    %c0_i32_0 = arith.constant 0 : i32
    %c0_i32_1 = arith.constant 0 : i32
    return %c0_i32, %c0_i32_0 : i32, i32
  }
  func.func @transform_12(%arg0: i32) -> (i32, i32) {
    %c0_i32 = arith.constant 0 : i32
    %c0_i32_0 = arith.constant 0 : i32
    %c0_i32_1 = arith.constant 0 : i32
    return %c0_i32, %c0_i32_0 : i32, i32
  }
  func.func @transform_13(%arg0: i32) -> (i32, i32, i32) {
    %c0_i32 = arith.constant 0 : i32
    %c0_i32_0 = arith.constant 0 : i32
    %c0_i32_1 = arith.constant 0 : i32
    %c0_i32_2 = arith.constant 0 : i32
    return %c0_i32, %c0_i32_0, %c0_i32_1 : i32, i32, i32
  }
  func.func @transform_14(%arg0: i32) -> (i32, i32, i32) {
    %c0_i32 = arith.constant 0 : i32
    %c0_i32_0 = arith.constant 0 : i32
    %c0_i32_1 = arith.constant 0 : i32
    %c0_i32_2 = arith.constant 0 : i32
    return %c0_i32, %c0_i32_0, %c0_i32_1 : i32, i32, i32
  }
}

</mosaic_0001>

<llo_original>
// kernel: tpu_custom_call.1
$region0: #{tpu_custom_call.1}
  #allocation0 [shape = 'u32[]', space=smem, size = 0x4, offset = 0x4, fixed_abs, tag = 'smem constant byte address 0x4 - core index']
  #allocation1 [shape = 'u32[72,128]{1,0:T(1,128)}', space=vmem, size = 0x9000, scoped, tag = 'internal scratch']
  #allocation2 [shape = 'f32[64,128]{1,0:T(8,128)}', space=vmem, size = 0x8000, scoped, tag = 'scratch operand']
  #allocation3 [shape = 'f32[64,512]{1,0:T(8,128)}', space=vmem, size = 0x20000, scoped, tag = 'scratch operand']
  %s0 = inlined_call_operand.hbm [shape: f32[64,64], index: 0, kind: input, shape index: {}]
  %s1 = inlined_call_operand.hbm [shape: f32[3,8,128], index: 1, kind: input, shape index: {}]
  %s2 = inlined_call_operand.hbm [shape: f32[3,8,128], index: 2, kind: input, shape index: {}]
  %s3 = inlined_call_operand.hbm [shape: bf16[64,512], index: 3, kind: input, shape index: {}]
  %s4 = inlined_call_operand.hbm [shape: bf16[128,512], index: 4, kind: input, shape index: {}]
  %s5 = inlined_call_operand.vmem [shape: f32[1,512], index: 5, kind: input, shape index: {}]
  %s6 = inlined_call_operand.hbm [shape: bf16[128,512], index: 6, kind: input, shape index: {}]
  %s7 = inlined_call_operand.hbm [shape: bf16[128,512], index: 7, kind: input, shape index: {}]
  %s8 = inlined_call_operand.hbm [shape: f32[1,512], index: 8, kind: input, shape index: {}]
  %s9 = inlined_call_operand.hbm [shape: bf16[128,512], index: 9, kind: input, shape index: {}]
  %s10 = inlined_call_operand.hbm [shape: bf16[128,512], index: 10, kind: input, shape index: {}]
  %s11 = inlined_call_operand.vmem [shape: f32[1,512], index: 11, kind: input, shape index: {}]
  %s12 = inlined_call_operand.hbm [shape: f32[64,128], index: 12, kind: output, shape index: {0}]
  %s13 = inlined_call_operand.hbm [shape: f32[3,8,128], index: 13, kind: output, shape index: {1}]
  %s14 = inlined_call_operand.hbm [shape: f32[3,8,128], index: 14, kind: output, shape index: {2}]
  %15 = xla_tuple %s12, %s13, %s14
  %s16 = sld [smem:[#allocation0]]
  $region114: #{tpu_custom_call.1} parent=0
    _
  %s18 = ssub.s32 1, %s16
  %s19 = scalar_select 0, %s18, %s16
  $region1: #{tpu_custom_call.1} parent=0
    #allocation4 [shape = 'u8[32768]{0}', space=vmem, size = 0x8000, scoped, tag = 'input window, operand 0, single buffered']
    #allocation5 [shape = 's32[1]{0}', space=sflag, size = 0x4, scoped, tag = 'scoped memory for tpu_custom_call.1']
    #allocation6 [shape = 's32[1]{0}', space=sflag, size = 0x4, scoped, tag = 'scoped memory for tpu_custom_call.1']
    #allocation7 [shape = 'u8[12288]{0}', space=vmem, size = 0x3000, scoped, tag = 'input window, operand 1, single buffered']
    #allocation8 [shape = 's32[1]{0}', space=sflag, size = 0x4, scoped, tag = 'scoped memory for tpu_custom_call.1']
    #allocation9 [shape = 'u8[12288]{0}', space=vmem, size = 0x3000, scoped, tag = 'input window, operand 2, single buffered']
    #allocation10 [shape = 'u8[65536]{0}', space=vmem, size = 0x10000, scoped, tag = 'input window, operand 3, single buffered']
    #allocation11 [shape = 's32[1]{0}', space=sflag, size = 0x4, scoped, tag = 'scoped memory for tpu_custom_call.1']
    #allocation12 [shape = 'u8[131072]{0}', space=vmem, size = 0x20000, scoped, tag = 'input window, operand 4, single buffered']
    #allocation13 [shape = 'u8[131072]{0}', space=vmem, size = 0x20000, scoped, tag = 'input window, operand 6, single buffered']
    #allocation14 [shape = 's32[1]{0}', space=sflag, size = 0x4, scoped, tag = 'scoped memory for tpu_custom_call.1']
    #allocation15 [shape = 'u8[131072]{0}', space=vmem, size = 0x20000, scoped, tag = 'input window, operand 7, single buffered']
    #allocation16 [shape = 'u8[2048]{0}', space=vmem, size = 0x800, scoped, tag = 'input window, operand 8, single buffered']
    #allocation17 [shape = 's32[1]{0}', space=sflag, size = 0x4, scoped, tag = 'scoped memory for tpu_custom_call.1']
    #allocation18 [shape = 'u8[131072]{0}', space=vmem, size = 0x20000, scoped, tag = 'input window, operand 9, single buffered']
    #allocation19 [shape = 'u8[131072]{0}', space=vmem, size = 0x20000, scoped, tag = 'input window, operand 10, single buffered']
    #allocation20 [shape = 's32[1]{0}', space=sflag, size = 0x4, scoped, tag = 'scoped memory for tpu_custom_call.1']
    #allocation21 [shape = 'u8[32768]{0}', space=vmem, size = 0x8000, scoped, tag = 'output window, operand 0, single buffered']
    #allocation22 [shape = 'u8[12288]{0}', space=vmem, size = 0x3000, scoped, tag = 'output window, operand 1, single buffered']
    #allocation23 [shape = 's32[1]{0}', space=sflag, size = 0x4, scoped, tag = 'scoped memory for tpu_custom_call.1']
    #allocation24 [shape = 'u8[12288]{0}', space=vmem, size = 0x3000, scoped, tag = 'output window, operand 2, single buffered']
    %20 = vsyncpa [#allocation5], 0
    %21 = vsyncpa [#allocation8], 0
    %22 = vsyncpa [#allocation11], 0
    %23 = vsyncpa [#allocation14], 0
    %24 = vsyncpa [#allocation17], 0
    %25 = vsyncpa [#allocation20], 0
    %26 = vsyncpa [#allocation6], 0
    %27 = vsyncpa [#allocation23], 0
    // Predicated region
    $region2: #{tpu_custom_call.1} parent=1 // pred_check
      _
    $region3: #{tpu_custom_call.1} parent=1 // pred_check_branch
      %29 = sbr.rel (0) target = $region5
    $region4: #{tpu_custom_call.1} parent=1 // pred_region
      %31 = vsyncadd [#allocation5], 0
      %s32 = sshll.u32 %s0, 4
      %s33 = int_to_ptr.hbm [resolvable:$true] %s32
      %s34 = sshll.u32 [#allocation4], 4
      %s35 = int_to_ptr.vmem [resolvable:$true] %s34
      %40 = dma.hbm_to_vmem [thread:$0]  %s33, 1024, %s35, [#allocation5], 128, 128, 8
    $region5: #{tpu_custom_call.1} parent=1 // pred_fallthru
      _
    // Predicated region
    $region6: #{tpu_custom_call.1} parent=1 // pred_check
      _
    $region7: #{tpu_custom_call.1} parent=1 // pred_check_branch
      %42 = sbr.rel (0) target = $region9
    $region8: #{tpu_custom_call.1} parent=1 // pred_region
      %44 = vsyncadd [#allocation8], 0
      %s45 = sshll.u32 %s1, 4
      %s46 = int_to_ptr.hbm [resolvable:$true] %s45
      %s47 = sshll.u32 [#allocation7], 4
      %s48 = int_to_ptr.vmem [resolvable:$true] %s47
      %53 = dma.hbm_to_vmem [thread:$0]  %s46, 384, %s48, [#allocation8], 128, 128, 8
    $region9: #{tpu_custom_call.1} parent=1 // pred_fallthru
      _
    // Predicated region
    $region10: #{tpu_custom_call.1} parent=1 // pred_check
      _
    $region11: #{tpu_custom_call.1} parent=1 // pred_check_branch
      %55 = sbr.rel (0) target = $region13
    $region12: #{tpu_custom_call.1} parent=1 // pred_region
      %57 = vsyncadd [#allocation8], 0
      %s58 = sshll.u32 %s2, 4
      %s59 = int_to_ptr.hbm [resolvable:$true] %s58
      %s60 = sshll.u32 [#allocation9], 4
      %s61 = int_to_ptr.vmem [resolvable:$true] %s60
      %66 = dma.hbm_to_vmem [thread:$0]  %s59, 384, %s61, [#allocation8], 128, 128, 8
    $region13: #{tpu_custom_call.1} parent=1 // pred_fallthru
      _
    // Predicated region
    $region14: #{tpu_custom_call.1} parent=1 // pred_check
      _
    $region15: #{tpu_custom_call.1} parent=1 // pred_check_branch
      %68 = sbr.rel (0) target = $region17
    $region16: #{tpu_custom_call.1} parent=1 // pred_region
      %70 = vsyncadd [#allocation11], 0
      %s71 = sshll.u32 %s3, 4
      %s72 = int_to_ptr.hbm [resolvable:$true] %s71
      %s73 = sshll.u32 [#allocation10], 4
      %s74 = int_to_ptr.vmem [resolvable:$true] %s73
      %79 = dma.hbm_to_vmem [thread:$0]  %s72, 2048, %s74, [#allocation11], 256, 256, 16
    $region17: #{tpu_custom_call.1} parent=1 // pred_fallthru
      _
    // Predicated region
    $region18: #{tpu_custom_call.1} parent=1 // pred_check
      _
    $region19: #{tpu_custom_call.1} parent=1 // pred_check_branch
      %81 = sbr.rel (0) target = $region21
    $region20: #{tpu_custom_call.1} parent=1 // pred_region
      %83 = vsyncadd [#allocation11], 0
      %s84 = sshll.u32 %s4, 4
      %s85 = int_to_ptr.hbm [resolvable:$true] %s84
      %s86 = sshll.u32 [#allocation12], 4
      %s87 = int_to_ptr.vmem [resolvable:$true] %s86
      %92 = dma.hbm_to_vmem [thread:$0]  %s85, 4096, %s87, [#allocation11], 256, 256, 16
    $region21: #{tpu_custom_call.1} parent=1 // pred_fallthru
      _
    // Predicated region
    $region22: #{tpu_custom_call.1} parent=1 // pred_check
      _
    $region23: #{tpu_custom_call.1} parent=1 // pred_check_branch
      %94 = sbr.rel (0) target = $region25
    $region24: #{tpu_custom_call.1} parent=1 // pred_region
      _
    $region25: #{tpu_custom_call.1} parent=1 // pred_fallthru
      _
    // Predicated region
    $region26: #{tpu_custom_call.1} parent=1 // pred_check
      _
    $region27: #{tpu_custom_call.1} parent=1 // pred_check_branch
      %96 = sbr.rel (0) target = $region29
    $region28: #{tpu_custom_call.1} parent=1 // pred_region
      %98 = vsyncadd [#allocation14], 0
      %s99 = sshll.u32 %s6, 4
      %s100 = int_to_ptr.hbm [resolvable:$true] %s99
      %s101 = sshll.u32 [#allocation13], 4
      %s102 = int_to_ptr.vmem [resolvable:$true] %s101
      %107 = dma.hbm_to_vmem [thread:$0]  %s100, 4096, %s102, [#allocation14], 256, 256, 16
    $region29: #{tpu_custom_call.1} parent=1 // pred_fallthru
      _
    // Predicated region
    $region30: #{tpu_custom_call.1} parent=1 // pred_check
      _
    $region31: #{tpu_custom_call.1} parent=1 // pred_check_branch
      %109 = sbr.rel (0) target = $region33
    $region32: #{tpu_custom_call.1} parent=1 // pred_region
      %111 = vsyncadd [#allocation14], 0
      %s112 = sshll.u32 %s7, 4
      %s113 = int_to_ptr.hbm [resolvable:$true] %s112
      %s114 = sshll.u32 [#allocation15], 4
      %s115 = int_to_ptr.vmem [resolvable:$true] %s114
      %120 = dma.hbm_to_vmem [thread:$0]  %s113, 4096, %s115, [#allocation14], 256, 256, 16
    $region33: #{tpu_custom_call.1} parent=1 // pred_fallthru
      _
    // Predicated region
    $region34: #{tpu_custom_call.1} parent=1 // pred_check
      _
    $region35: #{tpu_custom_call.1} parent=1 // pred_check_branch
      %122 = sbr.rel (0) target = $region37
    $region36: #{tpu_custom_call.1} parent=1 // pred_region
      %124 = vsyncadd [#allocation17], 0
      %s126 = sshll.u32 %s8, 4
      %s127 = int_to_ptr.hbm [resolvable:$true] %s126
      %s128 = sshll.u32 [#allocation16], 4
      %s129 = int_to_ptr.vmem [resolvable:$true] %s128
      %131 = dma.hbm_to_vmem [thread:$0]  %s127, 64, %s129, [#allocation17]
    $region37: #{tpu_custom_call.1} parent=1 // pred_fallthru
      _
    // Predicated region
    $region38: #{tpu_custom_call.1} parent=1 // pred_check
      _
    $region39: #{tpu_custom_call.1} parent=1 // pred_check_branch
      %133 = sbr.rel (0) target = $region41
    $region40: #{tpu_custom_call.1} parent=1 // pred_region
      %135 = vsyncadd [#allocation17], 0
      %s136 = sshll.u32 %s9, 4
      %s137 = int_to_ptr.hbm [resolvable:$true] %s136
      %s138 = sshll.u32 [#allocation18], 4
      %s139 = int_to_ptr.vmem [resolvable:$true] %s138
      %144 = dma.hbm_to_vmem [thread:$0]  %s137, 4096, %s139, [#allocation17], 256, 256, 16
    $region41: #{tpu_custom_call.1} parent=1 // pred_fallthru
      _
    // Predicated region
    $region42: #{tpu_custom_call.1} parent=1 // pred_check
      _
    $region43: #{tpu_custom_call.1} parent=1 // pred_check_branch
      %146 = sbr.rel (0) target = $region45
    $region44: #{tpu_custom_call.1} parent=1 // pred_region
      %148 = vsyncadd [#allocation20], 0
      %s149 = sshll.u32 %s10, 4
      %s150 = int_to_ptr.hbm [resolvable:$true] %s149
      %s151 = sshll.u32 [#allocation19], 4
      %s152 = int_to_ptr.vmem [resolvable:$true] %s151
      %157 = dma.hbm_to_vmem [thread:$0]  %s150, 4096, %s152, [#allocation20], 256, 256, 16
    $region45: #{tpu_custom_call.1} parent=1 // pred_fallthru
      _
    // Predicated region
    $region46: #{tpu_custom_call.1} parent=1 // pred_check
      _
    $region47: #{tpu_custom_call.1} parent=1 // pred_check_branch
      %159 = sbr.rel (0) target = $region49
    $region48: #{tpu_custom_call.1} parent=1 // pred_region
      _
    $region49: #{tpu_custom_call.1} parent=1 // pred_fallthru
      _
    // Predicated region
    $region50: #{tpu_custom_call.1} parent=1 // pred_check
      _
    $region51: #{tpu_custom_call.1} parent=1 // pred_check_branch
      %161 = sbr.rel (0) target = $region53
    $region52: #{tpu_custom_call.1} parent=1 // pred_region
      %163 = dma.done [#allocation5], 1024
    $region53: #{tpu_custom_call.1} parent=1 // pred_fallthru
      _
    // Predicated region
    $region54: #{tpu_custom_call.1} parent=1 // pred_check
      _
    $region55: #{tpu_custom_call.1} parent=1 // pred_check_branch
      %165 = sbr.rel (0) target = $region57
    $region56: #{tpu_custom_call.1} parent=1 // pred_region
      %167 = dma.done [#allocation8], 384
    $region57: #{tpu_custom_call.1} parent=1 // pred_fallthru
      _
    // Predicated region
    $region58: #{tpu_custom_call.1} parent=1 // pred_check
      _
    $region59: #{tpu_custom_call.1} parent=1 // pred_check_branch
      %169 = sbr.rel (0) target = $region61
    $region60: #{tpu_custom_call.1} parent=1 // pred_region
      %171 = dma.done [#allocation8], 384
    $region61: #{tpu_custom_call.1} parent=1 // pred_fallthru
      _
    // Predicated region
    $region62: #{tpu_custom_call.1} parent=1 // pred_check
      _
    $region63: #{tpu_custom_call.1} parent=1 // pred_check_branch
      %173 = sbr.rel (0) target = $region65
    $region64: #{tpu_custom_call.1} parent=1 // pred_region
      %175 = dma.done [#allocation11], 2048
    $region65: #{tpu_custom_call.1} parent=1 // pred_fallthru
      _
    // Predicated region
    $region66: #{tpu_custom_call.1} parent=1 // pred_check
      _
    $region67: #{tpu_custom_call.1} parent=1 // pred_check_branch
      %177 = sbr.rel (0) target = $region69
    $region68: #{tpu_custom_call.1} parent=1 // pred_region
      %179 = dma.done [#allocation11], 4096
    $region69: #{tpu_custom_call.1} parent=1 // pred_fallthru
      _
    // Predicated region
    $region70: #{tpu_custom_call.1} parent=1 // pred_check
      _
    $region71: #{tpu_custom_call.1} parent=1 // pred_check_branch
      %181 = sbr.rel (0) target = $region73
    $region72: #{tpu_custom_call.1} parent=1 // pred_region
      %183 = dma.done [#allocation14], 4096
    $region73: #{tpu_custom_call.1} parent=1 // pred_fallthru
      _
    // Predicated region
    $region74: #{tpu_custom_call.1} parent=1 // pred_check
      _
    $region75: #{tpu_custom_call.1} parent=1 // pred_check_branch
      %185 = sbr.rel (0) target = $region77
    $region76: #{tpu_custom_call.1} parent=1 // pred_region
      %187 = dma.done [#allocation14], 4096
    $region77: #{tpu_custom_call.1} parent=1 // pred_fallthru
      _
    // Predicated region
    $region78: #{tpu_custom_call.1} parent=1 // pred_check
      _
    $region79: #{tpu_custom_call.1} parent=1 // pred_check_branch
      %189 = sbr.rel (0) target = $region81
    $region80: #{tpu_custom_call.1} parent=1 // pred_region
      %191 = dma.done [#allocation17], 64
    $region81: #{tpu_custom_call.1} parent=1 // pred_fallthru
      _
    // Predicated region
    $region82: #{tpu_custom_call.1} parent=1 // pred_check
      _
    $region83: #{tpu_custom_call.1} parent=1 // pred_check_branch
      %193 = sbr.rel (0) target = $region85
    $region84: #{tpu_custom_call.1} parent=1 // pred_region
      %195 = dma.done [#allocation17], 4096
    $region85: #{tpu_custom_call.1} parent=1 // pred_fallthru
      _
    // Predicated region
    $region86: #{tpu_custom_call.1} parent=1 // pred_check
      _
    $region87: #{tpu_custom_call.1} parent=1 // pred_check_branch
      %197 = sbr.rel (0) target = $region89
    $region88: #{tpu_custom_call.1} parent=1 // pred_region
      %199 = dma.done [#allocation20], 4096
    $region89: #{tpu_custom_call.1} parent=1 // pred_fallthru
      _
    %v201 = vld [vmem:[#allocation4] sm:$0xff]
    %v202 = vld [vmem:[#allocation4 + $0x8] sm:$0xff]
    %v203 = vld [vmem:[#allocation4 + $0x10] sm:$0xff]
    %v204 = vld [vmem:[#allocation4 + $0x18] sm:$0xff]
    %v205 = vld [vmem:[#allocation4 + $0x20] sm:$0xff]
    %v206 = vld [vmem:[#allocation4 + $0x28] sm:$0xff]
    %v207 = vld [vmem:[#allocation4 + $0x30] sm:$0xff]
    %v208 = vld [vmem:[#allocation4 + $0x38] sm:$0xff]
    %v209 = vpack.c.bf16 %v202, %v201
    %v210 = vpack.c.bf16 %v204, %v203
    %v211 = vpack.c.bf16 %v206, %v205
    %v212 = vpack.c.bf16 %v208, %v207
    %v213 = vld [vmem:[#allocation10] sm:$0xff]
    %v214 = vld [vmem:[#allocation10 + $0x8] sm:$0xff]
    %v215 = vld [vmem:[#allocation10 + $0x10] sm:$0xff]
    %v216 = vld [vmem:[#allocation10 + $0x18] sm:$0xff]
    %v217 = vld [vmem:[#allocation10 + $0x20] sm:$0xff]
    %v218 = vld [vmem:[#allocation10 + $0x28] sm:$0xff]
    %v219 = vld [vmem:[#allocation10 + $0x30] sm:$0xff]
    %v220 = vld [vmem:[#allocation10 + $0x38] sm:$0xff]
    %v221 = vld [vmem:[#allocation10 + $0x40] sm:$0xff]
    %v222 = vld [vmem:[#allocation10 + $0x48] sm:$0xff]
    %v223 = vld [vmem:[#allocation10 + $0x50] sm:$0xff]
    %v224 = vld [vmem:[#allocation10 + $0x58] sm:$0xff]
    %v225 = vld [vmem:[#allocation10 + $0x60] sm:$0xff]
    %v226 = vld [vmem:[#allocation10 + $0x68] sm:$0xff]
    %v227 = vld [vmem:[#allocation10 + $0x70] sm:$0xff]
    %v228 = vld [vmem:[#allocation10 + $0x78] sm:$0xff]
    %v229 = vld [vmem:[%s5] sm:$0xf]
    %v231 = vperm.slane %v229, 0
    %v232 = vperm.slane %v229, 1
    %v233 = vperm.slane %v229, 2
    %v234 = vperm.slane %v229, 3
    %v255 = vunpack.c.l.b16 %v213
    %v256 = vunpack.c.h.b16 %v213
    %v257 = vunpack.c.l.b16 %v214
    %v258 = vunpack.c.h.b16 %v214
    %v259 = vunpack.c.l.b16 %v215
    %v260 = vunpack.c.h.b16 %v215
    %v261 = vunpack.c.l.b16 %v216
    %v262 = vunpack.c.h.b16 %v216
    %v263 = vunpack.c.l.b16 %v217
    %v264 = vunpack.c.h.b16 %v217
    %v265 = vunpack.c.l.b16 %v218
    %v266 = vunpack.c.h.b16 %v218
    %v267 = vunpack.c.l.b16 %v219
    %v268 = vunpack.c.h.b16 %v219
    %v269 = vunpack.c.l.b16 %v220
    %v270 = vunpack.c.h.b16 %v220
    %v271 = vunpack.c.l.b16 %v221
    %v272 = vunpack.c.h.b16 %v221
    %v273 = vunpack.c.l.b16 %v222
    %v274 = vunpack.c.h.b16 %v222
    %v275 = vunpack.c.l.b16 %v223
    %v276 = vunpack.c.h.b16 %v223
    %v277 = vunpack.c.l.b16 %v224
    %v278 = vunpack.c.h.b16 %v224
    %v279 = vunpack.c.l.b16 %v225
    %v280 = vunpack.c.h.b16 %v225
    %v281 = vunpack.c.l.b16 %v226
    %v282 = vunpack.c.h.b16 %v226
    %v283 = vunpack.c.l.b16 %v227
    %v284 = vunpack.c.h.b16 %v227
    %v285 = vunpack.c.l.b16 %v228
    %v286 = vunpack.c.h.b16 %v228
    %v287 = vpack.c.b16 %v259, %v255
    %v288 = vpack.c.b16 %v260, %v256
    %v289 = vpack.c.b16 %v261, %v257
    %v290 = vpack.c.b16 %v262, %v258
    %v291 = vpack.c.b16 %v267, %v263
    %v292 = vpack.c.b16 %v268, %v264
    %v293 = vpack.c.b16 %v269, %v265
    %v294 = vpack.c.b16 %v270, %v266
    %v295 = vpack.c.b16 %v275, %v271
    %v296 = vpack.c.b16 %v276, %v272
    %v297 = vpack.c.b16 %v277, %v273
    %v298 = vpack.c.b16 %v278, %v274
    %v299 = vpack.c.b16 %v283, %v279
    %v300 = vpack.c.b16 %v284, %v280
    %v301 = vpack.c.b16 %v285, %v281
    %v302 = vpack.c.b16 %v286, %v282
    %vm319 = vcmask 523264
    %v321 = vsel %vm319, %v209, 0
    %v324 = vsel %vm319, %v210, 0
    %v327 = vsel %vm319, %v211, 0
    %v330 = vsel %vm319, %v212, 0
    %332 = vmatpush.bf16.msra.mxu0 0
    %333 = vmatpush.bf16.msra.mxu0 0
    %334 = vmatpush.bf16.msra.mxu0 0
    %335 = vmatpush.bf16.msra.mxu0 0
    %336 = vmatpush.bf16.msra.mxu0 %v299
    %337 = vmatpush.bf16.msra.mxu0 %v295
    %338 = vmatpush.bf16.msra.mxu0 %v291
    %339 = vmatpush.bf16.msra.mxu0 %v287
    %340 = vmatmul.bf16.gmra.mxu0 %v321
    %v341 = vpop.f32.mrf.mxu0
    %v342 = vadd.f32 %v231, %v341
    %v343 = vpop.f32.mrf.mxu0
    %v344 = vadd.f32 %v231, %v343
    %345 = vmatmul.bf16.gmra.mxu0 %v324
    %v346 = vpop.f32.mrf.mxu0
    %v347 = vadd.f32 %v231, %v346
    %v348 = vpop.f32.mrf.mxu0
    %v349 = vadd.f32 %v231, %v348
    %350 = vmatmul.bf16.gmra.mxu0 %v327
    %v351 = vpop.f32.mrf.mxu0
    %v352 = vadd.f32 %v231, %v351
    %v353 = vpop.f32.mrf.mxu0
    %v354 = vadd.f32 %v231, %v353
    %355 = vmatmul.bf16.gmra.mxu0 %v330
    %v356 = vpop.f32.mrf.mxu0
    %v357 = vadd.f32 %v231, %v356
    %v358 = vpop.f32.mrf.mxu0
    %v359 = vadd.f32 %v231, %v358
    %360 = vdwg.mxu0
    %361 = vmatpush.bf16.msra.mxu0 0
    %362 = vmatpush.bf16.msra.mxu0 0
    %363 = vmatpush.bf16.msra.mxu0 0
    %364 = vmatpush.bf16.msra.mxu0 0
    %365 = vmatpush.bf16.msra.mxu0 %v300
    %366 = vmatpush.bf16.msra.mxu0 %v296
    %367 = vmatpush.bf16.msra.mxu0 %v292
    %368 = vmatpush.bf16.msra.mxu0 %v288
    %369 = vmatmul.bf16.gmra.mxu0 %v321
    %v370 = vpop.f32.mrf.mxu0
    %v371 = vadd.f32 %v232, %v370
    %v372 = vpop.f32.mrf.mxu0
    %v373 = vadd.f32 %v232, %v372
    %374 = vmatmul.bf16.gmra.mxu0 %v324
    %v375 = vpop.f32.mrf.mxu0
    %v376 = vadd.f32 %v232, %v375
    %v377 = vpop.f32.mrf.mxu0
    %v378 = vadd.f32 %v232, %v377
    %379 = vmatmul.bf16.gmra.mxu0 %v327
    %v380 = vpop.f32.mrf.mxu0
    %v381 = vadd.f32 %v232, %v380
    %v382 = vpop.f32.mrf.mxu0
    %v383 = vadd.f32 %v232, %v382
    %384 = vmatmul.bf16.gmra.mxu0 %v330
    %v385 = vpop.f32.mrf.mxu0
    %v386 = vadd.f32 %v232, %v385
    %v387 = vpop.f32.mrf.mxu0
    %v388 = vadd.f32 %v232, %v387
    %389 = vdwg.mxu0
    %390 = vmatpush.bf16.msra.mxu0 0
    %391 = vmatpush.bf16.msra.mxu0 0
    %392 = vmatpush.bf16.msra.mxu0 0
    %393 = vmatpush.bf16.msra.mxu0 0
    %394 = vmatpush.bf16.msra.mxu0 %v301
    %395 = vmatpush.bf16.msra.mxu0 %v297
    %396 = vmatpush.bf16.msra.mxu0 %v293
    %397 = vmatpush.bf16.msra.mxu0 %v289
    %398 = vmatmul.bf16.gmra.mxu0 %v321
    %v399 = vpop.f32.mrf.mxu0
    %v400 = vadd.f32 %v233, %v399
    %v401 = vpop.f32.mrf.mxu0
    %v402 = vadd.f32 %v233, %v401
    %403 = vmatmul.bf16.gmra.mxu0 %v324
    %v404 = vpop.f32.mrf.mxu0
    %v405 = vadd.f32 %v233, %v404
    %v406 = vpop.f32.mrf.mxu0
    %v407 = vadd.f32 %v233, %v406
    %408 = vmatmul.bf16.gmra.mxu0 %v327
    %v409 = vpop.f32.mrf.mxu0
    %v410 = vadd.f32 %v233, %v409
    %v411 = vpop.f32.mrf.mxu0
    %v412 = vadd.f32 %v233, %v411
    %413 = vmatmul.bf16.gmra.mxu0 %v330
    %v414 = vpop.f32.mrf.mxu0
    %v415 = vadd.f32 %v233, %v414
    %v416 = vpop.f32.mrf.mxu0
    %v417 = vadd.f32 %v233, %v416
    %418 = vdwg.mxu0
    %419 = vmatpush.bf16.msra.mxu0 0
    %420 = vmatpush.bf16.msra.mxu0 0
    %421 = vmatpush.bf16.msra.mxu0 0
    %422 = vmatpush.bf16.msra.mxu0 0
    %423 = vmatpush.bf16.msra.mxu0 %v302
    %424 = vmatpush.bf16.msra.mxu0 %v298
    %425 = vmatpush.bf16.msra.mxu0 %v294
    %426 = vmatpush.bf16.msra.mxu0 %v290
    %427 = vmatmul.bf16.gmra.mxu0 %v321
    %v428 = vpop.f32.mrf.mxu0
    %v429 = vadd.f32 %v234, %v428
    %v430 = vpop.f32.mrf.mxu0
    %v431 = vadd.f32 %v234, %v430
    %432 = vmatmul.bf16.gmra.mxu0 %v324
    %v433 = vpop.f32.mrf.mxu0
    %v434 = vadd.f32 %v234, %v433
    %v435 = vpop.f32.mrf.mxu0
    %v436 = vadd.f32 %v234, %v435
    %437 = vmatmul.bf16.gmra.mxu0 %v327
    %v438 = vpop.f32.mrf.mxu0
    %v439 = vadd.f32 %v234, %v438
    %v440 = vpop.f32.mrf.mxu0
    %v441 = vadd.f32 %v234, %v440
    %442 = vmatmul.bf16.gmra.mxu0 %v330
    %v443 = vpop.f32.mrf.mxu0
    %v444 = vadd.f32 %v234, %v443
    %v445 = vpop.f32.mrf.mxu0
    %v446 = vadd.f32 %v234, %v445
    %447 = vdwg.mxu0
    %448 = vst [vmem:[#allocation3] sm:$0xff] %v342
    %449 = vst [vmem:[#allocation3 + $0x8] sm:$0xff] %v371
    %450 = vst [vmem:[#allocation3 + $0x10] sm:$0xff] %v400
    %451 = vst [vmem:[#allocation3 + $0x18] sm:$0xff] %v429
    %452 = vst [vmem:[#allocation3 + $0x20] sm:$0xff] %v344
    %453 = vst [vmem:[#allocation3 + $0x28] sm:$0xff] %v373
    %454 = vst [vmem:[#allocation3 + $0x30] sm:$0xff] %v402
    %455 = vst [vmem:[#allocation3 + $0x38] sm:$0xff] %v431
    %456 = vst [vmem:[#allocation3 + $0x40] sm:$0xff] %v347
    %457 = vst [vmem:[#allocation3 + $0x48] sm:$0xff] %v376
    %458 = vst [vmem:[#allocation3 + $0x50] sm:$0xff] %v405
    %459 = vst [vmem:[#allocation3 + $0x58] sm:$0xff] %v434
    %460 = vst [vmem:[#allocation3 + $0x60] sm:$0xff] %v349
    %461 = vst [vmem:[#allocation3 + $0x68] sm:$0xff] %v378
    %462 = vst [vmem:[#allocation3 + $0x70] sm:$0xff] %v407
    %463 = vst [vmem:[#allocation3 + $0x78] sm:$0xff] %v436
    %464 = vst [vmem:[#allocation3 + $0x80] sm:$0xff] %v352
    %465 = vst [vmem:[#allocation3 + $0x88] sm:$0xff] %v381
    %466 = vst [vmem:[#allocation3 + $0x90] sm:$0xff] %v410
    %467 = vst [vmem:[#allocation3 + $0x98] sm:$0xff] %v439
    %468 = vst [vmem:[#allocation3 + $0xa0] sm:$0xff] %v354
    %469 = vst [vmem:[#allocation3 + $0xa8] sm:$0xff] %v383
    %470 = vst [vmem:[#allocation3 + $0xb0] sm:$0xff] %v412
    %471 = vst [vmem:[#allocation3 + $0xb8] sm:$0xff] %v441
    %472 = vst [vmem:[#allocation3 + $0xc0] sm:$0xff] %v357
    %473 = vst [vmem:[#allocation3 + $0xc8] sm:$0xff] %v386
    %474 = vst [vmem:[#allocation3 + $0xd0] sm:$0xff] %v415
    %475 = vst [vmem:[#allocation3 + $0xd8] sm:$0xff] %v444
    %476 = vst [vmem:[#allocation3 + $0xe0] sm:$0xff] %v359
    %477 = vst [vmem:[#allocation3 + $0xe8] sm:$0xff] %v388
    %478 = vst [vmem:[#allocation3 + $0xf0] sm:$0xff] %v417
    %479 = vst [vmem:[#allocation3 + $0xf8] sm:$0xff] %v446
    %v480 = vld [vmem:[#allocation7] sm:$0xff]
    %v481 = vld [vmem:[#allocation9] sm:$0xff]
    %s482 = smul.u32 0, 4
    %s483 = smul.addr %s482, 8
    %s484 = scalar_lea.vmem [#allocation3], %s483
    %v485 = vld [vmem:[%s484] sm:$0xff]
    %v486 = vld [vmem:[%s484 + $0x8] sm:$0xff]
    %v487 = vld [vmem:[%s484 + $0x10] sm:$0xff]
    %v488 = vld [vmem:[%s484 + $0x18] sm:$0xff]
    %v489 = vpack.c.bf16 %v480, %v480
    %v490 = vld [vmem:[#allocation12] sm:$0xff]
    %v491 = vld [vmem:[#allocation12 + $0x8] sm:$0xff]
    %v492 = vld [vmem:[#allocation12 + $0x10] sm:$0xff]
    %v493 = vld [vmem:[#allocation12 + $0x18] sm:$0xff]
    %v494 = vld [vmem:[#allocation12 + $0x20] sm:$0xff]
    %v495 = vld [vmem:[#allocation12 + $0x28] sm:$0xff]
    %v496 = vld [vmem:[#allocation12 + $0x30] sm:$0xff]
    %v497 = vld [vmem:[#allocation12 + $0x38] sm:$0xff]
    %v498 = vld [vmem:[#allocation12 + $0x40] sm:$0xff]
    %v499 = vld [vmem:[#allocation12 + $0x48] sm:$0xff]
    %v500 = vld [vmem:[#allocation12 + $0x50] sm:$0xff]
    %v501 = vld [vmem:[#allocation12 + $0x58] sm:$0xff]
    %v502 = vld [vmem:[#allocation12 + $0x60] sm:$0xff]
    %v503 = vld [vmem:[#allocation12 + $0x68] sm:$0xff]
    %v504 = vld [vmem:[#allocation12 + $0x70] sm:$0xff]
    %v505 = vld [vmem:[#allocation12 + $0x78] sm:$0xff]
    %v506 = vld [vmem:[#allocation12 + $0x80] sm:$0xff]
    %v507 = vld [vmem:[#allocation12 + $0x88] sm:$0xff]
    %v508 = vld [vmem:[#allocation12 + $0x90] sm:$0xff]
    %v509 = vld [vmem:[#allocation12 + $0x98] sm:$0xff]
    %v510 = vld [vmem:[#allocation12 + $0xa0] sm:$0xff]
    %v511 = vld [vmem:[#allocation12 + $0xa8] sm:$0xff]
    %v512 = vld [vmem:[#allocation12 + $0xb0] sm:$0xff]
    %v513 = vld [vmem:[#allocation12 + $0xb8] sm:$0xff]
    %v514 = vld [vmem:[#allocation12 + $0xc0] sm:$0xff]
    %v515 = vld [vmem:[#allocation12 + $0xc8] sm:$0xff]
    %v516 = vld [vmem:[#allocation12 + $0xd0] sm:$0xff]
    %v517 = vld [vmem:[#allocation12 + $0xd8] sm:$0xff]
    %v518 = vld [vmem:[#allocation12 + $0xe0] sm:$0xff]
    %v519 = vld [vmem:[#allocation12 + $0xe8] sm:$0xff]
    %v520 = vld [vmem:[#allocation12 + $0xf0] sm:$0xff]
    %v521 = vld [vmem:[#allocation12 + $0xf8] sm:$0xff]
    %v554 = vunpack.c.l.b16 %v490
    %v555 = vunpack.c.h.b16 %v490
    %v556 = vunpack.c.l.b16 %v491
    %v557 = vunpack.c.h.b16 %v491
    %v558 = vunpack.c.l.b16 %v492
    %v559 = vunpack.c.h.b16 %v492
    %v560 = vunpack.c.l.b16 %v493
    %v561 = vunpack.c.h.b16 %v493
    %v562 = vunpack.c.l.b16 %v494
    %v563 = vunpack.c.h.b16 %v494
    %v564 = vunpack.c.l.b16 %v495
    %v565 = vunpack.c.h.b16 %v495
    %v566 = vunpack.c.l.b16 %v496
    %v567 = vunpack.c.h.b16 %v496
    %v568 = vunpack.c.l.b16 %v497
    %v569 = vunpack.c.h.b16 %v497
    %v570 = vunpack.c.l.b16 %v498
    %v571 = vunpack.c.h.b16 %v498
    %v572 = vunpack.c.l.b16 %v499
    %v573 = vunpack.c.h.b16 %v499
    %v574 = vunpack.c.l.b16 %v500
    %v575 = vunpack.c.h.b16 %v500
    %v576 = vunpack.c.l.b16 %v501
    %v577 = vunpack.c.h.b16 %v501
    %v578 = vunpack.c.l.b16 %v502
    %v579 = vunpack.c.h.b16 %v502
    %v580 = vunpack.c.l.b16 %v503
    %v581 = vunpack.c.h.b16 %v503
    %v582 = vunpack.c.l.b16 %v504
    %v583 = vunpack.c.h.b16 %v504
    %v584 = vunpack.c.l.b16 %v505
    %v585 = vunpack.c.h.b16 %v505
    %v586 = vunpack.c.l.b16 %v506
    %v587 = vunpack.c.h.b16 %v506
    %v588 = vunpack.c.l.b16 %v507
    %v589 = vunpack.c.h.b16 %v507
    %v590 = vunpack.c.l.b16 %v508
    %v591 = vunpack.c.h.b16 %v508
    %v592 = vunpack.c.l.b16 %v509
    %v593 = vunpack.c.h.b16 %v509
    %v594 = vunpack.c.l.b16 %v510
    %v595 = vunpack.c.h.b16 %v510
    %v596 = vunpack.c.l.b16 %v511
    %v597 = vunpack.c.h.b16 %v511
    %v598 = vunpack.c.l.b16 %v512
    %v599 = vunpack.c.h.b16 %v512
    %v600 = vunpack.c.l.b16 %v513
    %v601 = vunpack.c.h.b16 %v513
    %v602 = vunpack.c.l.b16 %v514
    %v603 = vunpack.c.h.b16 %v514
    %v604 = vunpack.c.l.b16 %v515
    %v605 = vunpack.c.h.b16 %v515
    %v606 = vunpack.c.l.b16 %v516
    %v607 = vunpack.c.h.b16 %v516
    %v608 = vunpack.c.l.b16 %v517
    %v609 = vunpack.c.h.b16 %v517
    %v610 = vunpack.c.l.b16 %v518
    %v611 = vunpack.c.h.b16 %v518
    %v612 = vunpack.c.l.b16 %v519
    %v613 = vunpack.c.h.b16 %v519
    %v614 = vunpack.c.l.b16 %v520
    %v615 = vunpack.c.h.b16 %v520
    %v616 = vunpack.c.l.b16 %v521
    %v617 = vunpack.c.h.b16 %v521
    %v618 = vpack.c.b16 %v558, %v554
    %v619 = vpack.c.b16 %v559, %v555
    %v620 = vpack.c.b16 %v560, %v556
    %v621 = vpack.c.b16 %v561, %v557
    %v622 = vpack.c.b16 %v566, %v562
    %v623 = vpack.c.b16 %v567, %v563
    %v624 = vpack.c.b16 %v568, %v564
    %v625 = vpack.c.b16 %v569, %v565
    %v626 = vpack.c.b16 %v574, %v570
    %v627 = vpack.c.b16 %v575, %v571
    %v628 = vpack.c.b16 %v576, %v572
    %v629 = vpack.c.b16 %v577, %v573
    %v630 = vpack.c.b16 %v582, %v578
    %v631 = vpack.c.b16 %v583, %v579
    %v632 = vpack.c.b16 %v584, %v580
    %v633 = vpack.c.b16 %v585, %v581
    %v634 = vpack.c.b16 %v590, %v586
    %v635 = vpack.c.b16 %v591, %v587
    %v636 = vpack.c.b16 %v592, %v588
    %v637 = vpack.c.b16 %v593, %v589
    %v638 = vpack.c.b16 %v598, %v594
    %v639 = vpack.c.b16 %v599, %v595
    %v640 = vpack.c.b16 %v600, %v596
    %v641 = vpack.c.b16 %v601, %v597
    %v642 = vpack.c.b16 %v606, %v602
    %v643 = vpack.c.b16 %v607, %v603
    %v644 = vpack.c.b16 %v608, %v604
    %v645 = vpack.c.b16 %v609, %v605
    %v646 = vpack.c.b16 %v614, %v610
    %v647 = vpack.c.b16 %v615, %v611
    %v648 = vpack.c.b16 %v616, %v612
    %v649 = vpack.c.b16 %v617, %v613
    %682 = vmatpush.bf16.msra.mxu0 %v646
    %683 = vmatpush.bf16.msra.mxu0 %v642
    %684 = vmatpush.bf16.msra.mxu0 %v638
    %685 = vmatpush.bf16.msra.mxu0 %v634
    %686 = vmatpush.bf16.msra.mxu0 %v630
    %687 = vmatpush.bf16.msra.mxu0 %v626
    %688 = vmatpush.bf16.msra.mxu0 %v622
    %689 = vmatpush.bf16.msra.mxu0 %v618
    %690 = vmatmul.bf16.gmra.mxu0 %v489
    %v691 = vpop.f32.mrf.mxu0
    %v692 = vadd.f32 0.0, %v691
    %v693 = vpop.f32.mrf.mxu0
    %694 = vdwg.mxu0
    %695 = vmatpush.bf16.msra.mxu0 %v647
    %696 = vmatpush.bf16.msra.mxu0 %v643
    %697 = vmatpush.bf16.msra.mxu0 %v639
    %698 = vmatpush.bf16.msra.mxu0 %v635
    %699 = vmatpush.bf16.msra.mxu0 %v631
    %700 = vmatpush.bf16.msra.mxu0 %v627
    %701 = vmatpush.bf16.msra.mxu0 %v623
    %702 = vmatpush.bf16.msra.mxu0 %v619
    %703 = vmatmul.bf16.gmra.mxu0 %v489
    %v704 = vpop.f32.mrf.mxu0
    %v705 = vadd.f32 0.0, %v704
    %v706 = vpop.f32.mrf.mxu0
    %707 = vdwg.mxu0
    %708 = vmatpush.bf16.msra.mxu0 %v648
    %709 = vmatpush.bf16.msra.mxu0 %v644
    %710 = vmatpush.bf16.msra.mxu0 %v640
    %711 = vmatpush.bf16.msra.mxu0 %v636
    %712 = vmatpush.bf16.msra.mxu0 %v632
    %713 = vmatpush.bf16.msra.mxu0 %v628
    %714 = vmatpush.bf16.msra.mxu0 %v624
    %715 = vmatpush.bf16.msra.mxu0 %v620
    %716 = vmatmul.bf16.gmra.mxu0 %v489
    %v717 = vpop.f32.mrf.mxu0
    %v718 = vadd.f32 0.0, %v717
    %v719 = vpop.f32.mrf.mxu0
    %720 = vdwg.mxu0
    %721 = vmatpush.bf16.msra.mxu0 %v649
    %722 = vmatpush.bf16.msra.mxu0 %v645
    %723 = vmatpush.bf16.msra.mxu0 %v641
    %724 = vmatpush.bf16.msra.mxu0 %v637
    %725 = vmatpush.bf16.msra.mxu0 %v633
    %726 = vmatpush.bf16.msra.mxu0 %v629
    %727 = vmatpush.bf16.msra.mxu0 %v625
    %728 = vmatpush.bf16.msra.mxu0 %v621
    %729 = vmatmul.bf16.gmra.mxu0 %v489
    %v730 = vpop.f32.mrf.mxu0
    %v731 = vadd.f32 0.0, %v730
    %v732 = vpop.f32.mrf.mxu0
    %733 = vdwg.mxu0
    %v734 = vadd.f32 %v485, %v692
    %v735 = vadd.f32 %v486, %v705
    %v736 = vadd.f32 %v487, %v718
    %v737 = vadd.f32 %v488, %v731
    %v738 = vxor.u32 %v734, 2147483648
    %v739 = vmul.f32 %v738, 1.442695
    %v740 = vpow.pop %v739
    %v741 = vadd.f32 %v740, 1.0
    %v742 = vrcp.pop %v741
    %v743 = vmul.f32 %v741, %v742
    %v744 = vsub.f32 1.0, %v743
    %v745 = vmul.f32 %v742, %v744
    %v746 = vadd.f32 %v742, %v745
    %vm747 = vweird.f32 %v741
    %vm748 = vweird.f32 %v742
    %vm749 = vmor %vm747, %vm748
    %v750 = vsel %vm749, %v742, %v746
    %v751 = vand.u32 2147483647, %v741
    %vm752 = vcmp.eq.f32.partialorder %v751, 8.507059e+37
    %v753 = vand.u32 %v741, 2147483648
    %v754 = vor.u32 1.1754944e-38, %v753
    %v755 = vsel %vm752, %v754, %v750
    %v756 = vmul.f32 1.0, %v755
    %v757 = vxor.u32 %v735, 2147483648
    %v758 = vmul.f32 %v757, 1.442695
    %v759 = vpow.pop %v758
    %v760 = vadd.f32 %v759, 1.0
    %v761 = vrcp.pop %v760
    %v762 = vmul.f32 %v760, %v761
    %v763 = vsub.f32 1.0, %v762
    %v764 = vmul.f32 %v761, %v763
    %v765 = vadd.f32 %v761, %v764
    %vm766 = vweird.f32 %v760
    %vm767 = vweird.f32 %v761
    %vm768 = vmor %vm766, %vm767
    %v769 = vsel %vm768, %v761, %v765
    %v770 = vand.u32 2147483647, %v760
    %vm771 = vcmp.eq.f32.partialorder %v770, 8.507059e+37
    %v772 = vand.u32 %v760, 2147483648
    %v773 = vor.u32 1.1754944e-38, %v772
    %v774 = vsel %vm771, %v773, %v769
    %v775 = vmul.f32 1.0, %v774
    %v776 = vtanh.pop %v736
    %v777 = vxor.u32 %v737, 2147483648
    %v778 = vmul.f32 %v777, 1.442695
    %v779 = vpow.pop %v778
    %v780 = vadd.f32 %v779, 1.0
    %v781 = vrcp.pop %v780
    %v782 = vmul.f32 %v780, %v781
    %v783 = vsub.f32 1.0, %v782
    %v784 = vmul.f32 %v781, %v783
    %v785 = vadd.f32 %v781, %v784
    %vm786 = vweird.f32 %v780
    %vm787 = vweird.f32 %v781
    %vm788 = vmor %vm786, %vm787
    %v789 = vsel %vm788, %v781, %v785
    %v790 = vand.u32 2147483647, %v780
    %vm791 = vcmp.eq.f32.partialorder %v790, 8.507059e+37
    %v792 = vand.u32 %v780, 2147483648
    %v793 = vor.u32 1.1754944e-38, %v792
    %v794 = vsel %vm791, %v793, %v789
    %v795 = vmul.f32 1.0, %v794
    %v796 = vmul.f32 %v775, %v481
    %v797 = vmul.f32 %v756, %v776
    %v798 = vadd.f32 %v796, %v797
    %v799 = vtanh.pop %v798
    %v800 = vmul.f32 %v795, %v799
    %801 = vst [vmem:[#allocation2] sm:$0xff] %v800
    %s802 = smul.u32 1, 4
    %s803 = smul.addr %s802, 8
    %s804 = scalar_lea.vmem [#allocation3], %s803
    %v805 = vld [vmem:[%s804] sm:$0xff]
    %v806 = vld [vmem:[%s804 + $0x8] sm:$0xff]
    %v807 = vld [vmem:[%s804 + $0x10] sm:$0xff]
    %v808 = vld [vmem:[%s804 + $0x18] sm:$0xff]
    %v809 = vpack.c.bf16 %v800, %v800
    %v810 = vld [vmem:[#allocation12] sm:$0xff]
    %v811 = vld [vmem:[#allocation12 + $0x8] sm:$0xff]
    %v812 = vld [vmem:[#allocation12 + $0x10] sm:$0xff]
    %v813 = vld [vmem:[#allocation12 + $0x18] sm:$0xff]
    %v814 = vld [vmem:[#allocation12 + $0x20] sm:$0xff]
    %v815 = vld [vmem:[#allocation12 + $0x28] sm:$0xff]
    %v816 = vld [vmem:[#allocation12 + $0x30] sm:$0xff]
    %v817 = vld [vmem:[#allocation12 + $0x38] sm:$0xff]
    %v818 = vld [vmem:[#allocation12 + $0x40] sm:$0xff]
    %v819 = vld [vmem:[#allocation12 + $0x48] sm:$0xff]
    %v820 = vld [vmem:[#allocation12 + $0x50] sm:$0xff]
    %v821 = vld [vmem:[#allocation12 + $0x58] sm:$0xff]
    %v822 = vld [vmem:[#allocation12 + $0x60] sm:$0xff]
    %v823 = vld [vmem:[#allocation12 + $0x68] sm:$0xff]
    %v824 = vld [vmem:[#allocation12 + $0x70] sm:$0xff]
    %v825 = vld [vmem:[#allocation12 + $0x78] sm:$0xff]
    %v826 = vld [vmem:[#allocation12 + $0x80] sm:$0xff]
    %v827 = vld [vmem:[#allocation12 + $0x88] sm:$0xff]
    %v828 = vld [vmem:[#allocation12 + $0x90] sm:$0xff]
    %v829 = vld [vmem:[#allocation12 + $0x98] sm:$0xff]
    %v830 = vld [vmem:[#allocation12 + $0xa0] sm:$0xff]
    %v831 = vld [vmem:[#allocation12 + $0xa8] sm:$0xff]
    %v832 = vld [vmem:[#allocation12 + $0xb0] sm:$0xff]
    %v833 = vld [vmem:[#allocation12 + $0xb8] sm:$0xff]
    %v834 = vld [vmem:[#allocation12 + $0xc0] sm:$0xff]
    %v835 = vld [vmem:[#allocation12 + $0xc8] sm:$0xff]
    %v836 = vld [vmem:[#allocation12 + $0xd0] sm:$0xff]
    %v837 = vld [vmem:[#allocation12 + $0xd8] sm:$0xff]
    %v838 = vld [vmem:[#allocation12 + $0xe0] sm:$0xff]
    %v839 = vld [vmem:[#allocation12 + $0xe8] sm:$0xff]
    %v840 = vld [vmem:[#allocation12 + $0xf0] sm:$0xff]
    %v841 = vld [vmem:[#allocation12 + $0xf8] sm:$0xff]
    %v874 = vunpack.c.l.b16 %v810
    %v875 = vunpack.c.h.b16 %v810
    %v876 = vunpack.c.l.b16 %v811
    %v877 = vunpack.c.h.b16 %v811
    %v878 = vunpack.c.l.b16 %v812
    %v879 = vunpack.c.h.b16 %v812
    %v880 = vunpack.c.l.b16 %v813
    %v881 = vunpack.c.h.b16 %v813
    %v882 = vunpack.c.l.b16 %v814
    %v883 = vunpack.c.h.b16 %v814
    %v884 = vunpack.c.l.b16 %v815
    %v885 = vunpack.c.h.b16 %v815
    %v886 = vunpack.c.l.b16 %v816
    %v887 = vunpack.c.h.b16 %v816
    %v888 = vunpack.c.l.b16 %v817
    %v889 = vunpack.c.h.b16 %v817
    %v890 = vunpack.c.l.b16 %v818
    %v891 = vunpack.c.h.b16 %v818
    %v892 = vunpack.c.l.b16 %v819
    %v893 = vunpack.c.h.b16 %v819
    %v894 = vunpack.c.l.b16 %v820
    %v895 = vunpack.c.h.b16 %v820
    %v896 = vunpack.c.l.b16 %v821
    %v897 = vunpack.c.h.b16 %v821
    %v898 = vunpack.c.l.b16 %v822
    %v899 = vunpack.c.h.b16 %v822
    %v900 = vunpack.c.l.b16 %v823
    %v901 = vunpack.c.h.b16 %v823
    %v902 = vunpack.c.l.b16 %v824
    %v903 = vunpack.c.h.b16 %v824
    %v904 = vunpack.c.l.b16 %v825
    %v905 = vunpack.c.h.b16 %v825
    %v906 = vunpack.c.l.b16 %v826
    %v907 = vunpack.c.h.b16 %v826
    %v908 = vunpack.c.l.b16 %v827
    %v909 = vunpack.c.h.b16 %v827
    %v910 = vunpack.c.l.b16 %v828
    %v911 = vunpack.c.h.b16 %v828
    %v912 = vunpack.c.l.b16 %v829
    %v913 = vunpack.c.h.b16 %v829
    %v914 = vunpack.c.l.b16 %v830
    %v915 = vunpack.c.h.b16 %v830
    %v916 = vunpack.c.l.b16 %v831
    %v917 = vunpack.c.h.b16 %v831
    %v918 = vunpack.c.l.b16 %v832
    %v919 = vunpack.c.h.b16 %v832
    %v920 = vunpack.c.l.b16 %v833
    %v921 = vunpack.c.h.b16 %v833
    %v922 = vunpack.c.l.b16 %v834
    %v923 = vunpack.c.h.b16 %v834
    %v924 = vunpack.c.l.b16 %v835
    %v925 = vunpack.c.h.b16 %v835
    %v926 = vunpack.c.l.b16 %v836
    %v927 = vunpack.c.h.b16 %v836
    %v928 = vunpack.c.l.b16 %v837
    %v929 = vunpack.c.h.b16 %v837
    %v930 = vunpack.c.l.b16 %v838
    %v931 = vunpack.c.h.b16 %v838
    %v932 = vunpack.c.l.b16 %v839
    %v933 = vunpack.c.h.b16 %v839
    %v934 = vunpack.c.l.b16 %v840
    %v935 = vunpack.c.h.b16 %v840
    %v936 = vunpack.c.l.b16 %v841
    %v937 = vunpack.c.h.b16 %v841
    %v938 = vpack.c.b16 %v878, %v874
    %v939 = vpack.c.b16 %v879, %v875
    %v940 = vpack.c.b16 %v880, %v876
    %v941 = vpack.c.b16 %v881, %v877
    %v942 = vpack.c.b16 %v886, %v882
    %v943 = vpack.c.b16 %v887, %v883
    %v944 = vpack.c.b16 %v888, %v884
    %v945 = vpack.c.b16 %v889, %v885
    %v946 = vpack.c.b16 %v894, %v890
    %v947 = vpack.c.b16 %v895, %v891
    %v948 = vpack.c.b16 %v896, %v892
    %v949 = vpack.c.b16 %v897, %v893
    %v950 = vpack.c.b16 %v902, %v898
    %v951 = vpack.c.b16 %v903, %v899
    %v952 = vpack.c.b16 %v904, %v900
    %v953 = vpack.c.b16 %v905, %v901
    %v954 = vpack.c.b16 %v910, %v906
    %v955 = vpack.c.b16 %v911, %v907
    %v956 = vpack.c.b16 %v912, %v908
    %v957 = vpack.c.b16 %v913, %v909
    %v958 = vpack.c.b16 %v918, %v914
    %v959 = vpack.c.b16 %v919, %v915
    %v960 = vpack.c.b16 %v920, %v916
    %v961 = vpack.c.b16 %v921, %v917
    %v962 = vpack.c.b16 %v926, %v922
    %v963 = vpack.c.b16 %v927, %v923
    %v964 = vpack.c.b16 %v928, %v924
    %v965 = vpack.c.b16 %v929, %v925
    %v966 = vpack.c.b16 %v934, %v930
    %v967 = vpack.c.b16 %v935, %v931
    %v968 = vpack.c.b16 %v936, %v932
    %v969 = vpack.c.b16 %v937, %v933
    %1002 = vmatpush.bf16.msra.mxu0 %v966
    %1003 = vmatpush.bf16.msra.mxu0 %v962
    %1004 = vmatpush.bf16.msra.mxu0 %v958
    %1005 = vmatpush.bf16.msra.mxu0 %v954
    %1006 = vmatpush.bf16.msra.mxu0 %v950
    %1007 = vmatpush.bf16.msra.mxu0 %v946
    %1008 = vmatpush.bf16.msra.mxu0 %v942
    %1009 = vmatpush.bf16.msra.mxu0 %v938
    %1010 = vmatmul.bf16.gmra.mxu0 %v809
    %v1011 = vpop.f32.mrf.mxu0
    %v1012 = vadd.f32 0.0, %v1011
    %v1013 = vpop.f32.mrf.mxu0
    %1014 = vdwg.mxu0
    %1015 = vmatpush.bf16.msra.mxu0 %v967
    %1016 = vmatpush.bf16.msra.mxu0 %v963
    %1017 = vmatpush.bf16.msra.mxu0 %v959
    %1018 = vmatpush.bf16.msra.mxu0 %v955
    %1019 = vmatpush.bf16.msra.mxu0 %v951
    %1020 = vmatpush.bf16.msra.mxu0 %v947
    %1021 = vmatpush.bf16.msra.mxu0 %v943
    %1022 = vmatpush.bf16.msra.mxu0 %v939
    %1023 = vmatmul.bf16.gmra.mxu0 %v809
    %v1024 = vpop.f32.mrf.mxu0
    %v1025 = vadd.f32 0.0, %v1024
    %v1026 = vpop.f32.mrf.mxu0
    %1027 = vdwg.mxu0
    %1028 = vmatpush.bf16.msra.mxu0 %v968
    %1029 = vmatpush.bf16.msra.mxu0 %v964
    %1030 = vmatpush.bf16.msra.mxu0 %v960
    %1031 = vmatpush.bf16.msra.mxu0 %v956
    %1032 = vmatpush.bf16.msra.mxu0 %v952
    %1033 = vmatpush.bf16.msra.mxu0 %v948
    %1034 = vmatpush.bf16.msra.mxu0 %v944
    %1035 = vmatpush.bf16.msra.mxu0 %v940
    %1036 = vmatmul.bf16.gmra.mxu0 %v809
    %v1037 = vpop.f32.mrf.mxu0
    %v1038 = vadd.f32 0.0, %v1037
    %v1039 = vpop.f32.mrf.mxu0
    %1040 = vdwg.mxu0
    %1041 = vmatpush.bf16.msra.mxu0 %v969
    %1042 = vmatpush.bf16.msra.mxu0 %v965
    %1043 = vmatpush.bf16.msra.mxu0 %v961
    %1044 = vmatpush.bf16.msra.mxu0 %v957
    %1045 = vmatpush.bf16.msra.mxu0 %v953
    %1046 = vmatpush.bf16.msra.mxu0 %v949
    %1047 = vmatpush.bf16.msra.mxu0 %v945
    %1048 = vmatpush.bf16.msra.mxu0 %v941
    %1049 = vmatmul.bf16.gmra.mxu0 %v809
    %v1050 = vpop.f32.mrf.mxu0
    %v1051 = vadd.f32 0.0, %v1050
    %v1052 = vpop.f32.mrf.mxu0
    %1053 = vdwg.mxu0
    %v1054 = vadd.f32 %v805, %v1012
    %v1055 = vadd.f32 %v806, %v1025
    %v1056 = vadd.f32 %v807, %v1038
    %v1057 = vadd.f32 %v808, %v1051
    %v1058 = vxor.u32 %v1054, 2147483648
    %v1059 = vmul.f32 %v1058, 1.442695
    %v1060 = vpow.pop %v1059
    %v1061 = vadd.f32 %v1060, 1.0
    %v1062 = vrcp.pop %v1061
    %v1063 = vmul.f32 %v1061, %v1062
    %v1064 = vsub.f32 1.0, %v1063
    %v1065 = vmul.f32 %v1062, %v1064
    %v1066 = vadd.f32 %v1062, %v1065
    %vm1067 = vweird.f32 %v1061
    %vm1068 = vweird.f32 %v1062
    %vm1069 = vmor %vm1067, %vm1068
    %v1070 = vsel %vm1069, %v1062, %v1066
    %v1071 = vand.u32 2147483647, %v1061
    %vm1072 = vcmp.eq.f32.partialorder %v1071, 8.507059e+37
    %v1073 = vand.u32 %v1061, 2147483648
    %v1074 = vor.u32 1.1754944e-38, %v1073
    %v1075 = vsel %vm1072, %v1074, %v1070
    %v1076 = vmul.f32 1.0, %v1075
    %v1077 = vxor.u32 %v1055, 2147483648
    %v1078 = vmul.f32 %v1077, 1.442695
    %v1079 = vpow.pop %v1078
    %v1080 = vadd.f32 %v1079, 1.0
    %v1081 = vrcp.pop %v1080
    %v1082 = vmul.f32 %v1080, %v1081
    %v1083 = vsub.f32 1.0, %v1082
    %v1084 = vmul.f32 %v1081, %v1083
    %v1085 = vadd.f32 %v1081, %v1084
    %vm1086 = vweird.f32 %v1080
    %vm1087 = vweird.f32 %v1081
    %vm1088 = vmor %vm1086, %vm1087
    %v1089 = vsel %vm1088, %v1081, %v1085
    %v1090 = vand.u32 2147483647, %v1080
    %vm1091 = vcmp.eq.f32.partialorder %v1090, 8.507059e+37
    %v1092 = vand.u32 %v1080, 2147483648
    %v1093 = vor.u32 1.1754944e-38, %v1092
    %v1094 = vsel %vm1091, %v1093, %v1089
    %v1095 = vmul.f32 1.0, %v1094
    %v1096 = vtanh.pop %v1056
    %v1097 = vxor.u32 %v1057, 2147483648
    %v1098 = vmul.f32 %v1097, 1.442695
    %v1099 = vpow.pop %v1098
    %v1100 = vadd.f32 %v1099, 1.0
    %v1101 = vrcp.pop %v1100
    %v1102 = vmul.f32 %v1100, %v1101
    %v1103 = vsub.f32 1.0, %v1102
    %v1104 = vmul.f32 %v1101, %v1103
    %v1105 = vadd.f32 %v1101, %v1104
    %vm1106 = vweird.f32 %v1100
    %vm1107 = vweird.f32 %v1101
    %vm1108 = vmor %vm1106, %vm1107
    %v1109 = vsel %vm1108, %v1101, %v1105
    %v1110 = vand.u32 2147483647, %v1100
    %vm1111 = vcmp.eq.f32.partialorder %v1110, 8.507059e+37
    %v1112 = vand.u32 %v1100, 2147483648
    %v1113 = vor.u32 1.1754944e-38, %v1112
    %v1114 = vsel %vm1111, %v1113, %v1109
    %v1115 = vmul.f32 1.0, %v1114
    %v1116 = vmul.f32 %v1095, %v798
    %v1117 = vmul.f32 %v1076, %v1096
    %v1118 = vadd.f32 %v1116, %v1117
    %v1119 = vtanh.pop %v1118
    %v1120 = vmul.f32 %v1115, %v1119
    %s1121 = scalar_lea.vmem [#allocation2], 8
    %1122 = vst [vmem:[%s1121] sm:$0xff] %v1120
    %s1123 = smul.u32 2, 4
    %s1124 = smul.addr %s1123, 8
    %s1125 = scalar_lea.vmem [#allocation3], %s1124
    %v1126 = vld [vmem:[%s1125] sm:$0xff]
    %v1127 = vld [vmem:[%s1125 + $0x8] sm:$0xff]
    %v1128 = vld [vmem:[%s1125 + $0x10] sm:$0xff]
    %v1129 = vld [vmem:[%s1125 + $0x18] sm:$0xff]
    %v1130 = vpack.c.bf16 %v1120, %v1120
    %v1131 = vld [vmem:[#allocation12] sm:$0xff]
    %v1132 = vld [vmem:[#allocation12 + $0x8] sm:$0xff]
    %v1133 = vld [vmem:[#allocation12 + $0x10] sm:$0xff]
    %v1134 = vld [vmem:[#allocation12 + $0x18] sm:$0xff]
    %v1135 = vld [vmem:[#allocation12 + $0x20] sm:$0xff]
    %v1136 = vld [vmem:[#allocation12 + $0x28] sm:$0xff]
    %v1137 = vld [vmem:[#allocation12 + $0x30] sm:$0xff]
    %v1138 = vld [vmem:[#allocation12 + $0x38] sm:$0xff]
    %v1139 = vld [vmem:[#allocation12 + $0x40] sm:$0xff]
    %v1140 = vld [vmem:[#allocation12 + $0x48] sm:$0xff]
    %v1141 = vld [vmem:[#allocation12 + $0x50] sm:$0xff]
    %v1142 = vld [vmem:[#allocation12 + $0x58] sm:$0xff]
    %v1143 = vld [vmem:[#allocation12 + $0x60] sm:$0xff]
    %v1144 = vld [vmem:[#allocation12 + $0x68] sm:$0xff]
    %v1145 = vld [vmem:[#allocation12 + $0x70] sm:$0xff]
    %v1146 = vld [vmem:[#allocation12 + $0x78] sm:$0xff]
    %v1147 = vld [vmem:[#allocation12 + $0x80] sm:$0xff]
    %v1148 = vld [vmem:[#allocation12 + $0x88] sm:$0xff]
    %v1149 = vld [vmem:[#allocation12 + $0x90] sm:$0xff]
    %v1150 = vld [vmem:[#allocation12 + $0x98] sm:$0xff]
    %v1151 = vld [vmem:[#allocation12 + $0xa0] sm:$0xff]
    %v1152 = vld [vmem:[#allocation12 + $0xa8] sm:$0xff]
    %v1153 = vld [vmem:[#allocation12 + $0xb0] sm:$0xff]
    %v1154 = vld [vmem:[#allocation12 + $0xb8] sm:$0xff]
    %v1155 = vld [vmem:[#allocation12 + $0xc0] sm:$0xff]
    %v1156 = vld [vmem:[#allocation12 + $0xc8] sm:$0xff]
    %v1157 = vld [vmem:[#allocation12 + $0xd0] sm:$0xff]
    %v1158 = vld [vmem:[#allocation12 + $0xd8] sm:$0xff]
    %v1159 = vld [vmem:[#allocation12 + $0xe0] sm:$0xff]
    %v1160 = vld [vmem:[#allocation12 + $0xe8] sm:$0xff]
    %v1161 = vld [vmem:[#allocation12 + $0xf0] sm:$0xff]
    %v1162 = vld [vmem:[#allocation12 + $0xf8] sm:$0xff]
    %v1195 = vunpack.c.l.b16 %v1131
    %v1196 = vunpack.c.h.b16 %v1131
    %v1197 = vunpack.c.l.b16 %v1132
    %v1198 = vunpack.c.h.b16 %v1132
    %v1199 = vunpack.c.l.b16 %v1133
    %v1200 = vunpack.c.h.b16 %v1133
    %v1201 = vunpack.c.l.b16 %v1134
    %v1202 = vunpack.c.h.b16 %v1134
    %v1203 = vunpack.c.l.b16 %v1135
    %v1204 = vunpack.c.h.b16 %v1135
    %v1205 = vunpack.c.l.b16 %v1136
    %v1206 = vunpack.c.h.b16 %v1136
    %v1207 = vunpack.c.l.b16 %v1137
    %v1208 = vunpack.c.h.b16 %v1137
    %v1209 = vunpack.c.l.b16 %v1138
    %v1210 = vunpack.c.h.b16 %v1138
    %v1211 = vunpack.c.l.b16 %v1139
    %v1212 = vunpack.c.h.b16 %v1139
    %v1213 = vunpack.c.l.b16 %v1140
    %v1214 = vunpack.c.h.b16 %v1140
    %v1215 = vunpack.c.l.b16 %v1141
    %v1216 = vunpack.c.h.b16 %v1141
    %v1217 = vunpack.c.l.b16 %v1142
    %v1218 = vunpack.c.h.b16 %v1142
    %v1219 = vunpack.c.l.b16 %v1143
    %v1220 = vunpack.c.h.b16 %v1143
    %v1221 = vunpack.c.l.b16 %v1144
    %v1222 = vunpack.c.h.b16 %v1144
    %v1223 = vunpack.c.l.b16 %v1145
    %v1224 = vunpack.c.h.b16 %v1145
    %v1225 = vunpack.c.l.b16 %v1146
    %v1226 = vunpack.c.h.b16 %v1146
    %v1227 = vunpack.c.l.b16 %v1147
    %v1228 = vunpack.c.h.b16 %v1147
    %v1229 = vunpack.c.l.b16 %v1148
    %v1230 = vunpack.c.h.b16 %v1148
    %v1231 = vunpack.c.l.b16 %v1149
    %v1232 = vunpack.c.h.b16 %v1149
    %v1233 = vunpack.c.l.b16 %v1150
    %v1234 = vunpack.c.h.b16 %v1150
    %v1235 = vunpack.c.l.b16 %v1151
    %v1236 = vunpack.c.h.b16 %v1151
    %v1237 = vunpack.c.l.b16 %v1152
    %v1238 = vunpack.c.h.b16 %v1152
    %v1239 = vunpack.c.l.b16 %v1153
    %v1240 = vunpack.c.h.b16 %v1153
    %v1241 = vunpack.c.l.b16 %v1154
    %v1242 = vunpack.c.h.b16 %v1154
    %v1243 = vunpack.c.l.b16 %v1155
    %v1244 = vunpack.c.h.b16 %v1155
    %v1245 = vunpack.c.l.b16 %v1156
    %v1246 = vunpack.c.h.b16 %v1156
    %v1247 = vunpack.c.l.b16 %v1157
    %v1248 = vunpack.c.h.b16 %v1157
    %v1249 = vunpack.c.l.b16 %v1158
    %v1250 = vunpack.c.h.b16 %v1158
    %v1251 = vunpack.c.l.b16 %v1159
    %v1252 = vunpack.c.h.b16 %v1159
    %v1253 = vunpack.c.l.b16 %v1160
    %v1254 = vunpack.c.h.b16 %v1160
    %v1255 = vunpack.c.l.b16 %v1161
    %v1256 = vunpack.c.h.b16 %v1161
    %v1257 = vunpack.c.l.b16 %v1162
    %v1258 = vunpack.c.h.b16 %v1162
    %v1259 = vpack.c.b16 %v1199, %v1195
    %v1260 = vpack.c.b16 %v1200, %v1196
    %v1261 = vpack.c.b16 %v1201, %v1197
    %v1262 = vpack.c.b16 %v1202, %v1198
    %v1263 = vpack.c.b16 %v1207, %v1203
    %v1264 = vpack.c.b16 %v1208, %v1204
    %v1265 = vpack.c.b16 %v1209, %v1205
    %v1266 = vpack.c.b16 %v1210, %v1206
    %v1267 = vpack.c.b16 %v1215, %v1211
    %v1268 = vpack.c.b16 %v1216, %v1212
    %v1269 = vpack.c.b16 %v1217, %v1213
    %v1270 = vpack.c.b16 %v1218, %v1214
    %v1271 = vpack.c.b16 %v1223, %v1219
    %v1272 = vpack.c.b16 %v1224, %v1220
    %v1273 = vpack.c.b16 %v1225, %v1221
    %v1274 = vpack.c.b16 %v1226, %v1222
    %v1275 = vpack.c.b16 %v1231, %v1227
    %v1276 = vpack.c.b16 %v1232, %v1228
    %v1277 = vpack.c.b16 %v1233, %v1229
    %v1278 = vpack.c.b16 %v1234, %v1230
    %v1279 = vpack.c.b16 %v1239, %v1235
    %v1280 = vpack.c.b16 %v1240, %v1236
    %v1281 = vpack.c.b16 %v1241, %v1237
    %v1282 = vpack.c.b16 %v1242, %v1238
    %v1283 = vpack.c.b16 %v1247, %v1243
    %v1284 = vpack.c.b16 %v1248, %v1244
    %v1285 = vpack.c.b16 %v1249, %v1245
    %v1286 = vpack.c.b16 %v1250, %v1246
    %v1287 = vpack.c.b16 %v1255, %v1251
    %v1288 = vpack.c.b16 %v1256, %v1252
    %v1289 = vpack.c.b16 %v1257, %v1253
    %v1290 = vpack.c.b16 %v1258, %v1254
    %1323 = vmatpush.bf16.msra.mxu0 %v1287
    %1324 = vmatpush.bf16.msra.mxu0 %v1283
    %1325 = vmatpush.bf16.msra.mxu0 %v1279
    %1326 = vmatpush.bf16.msra.mxu0 %v1275
    %1327 = vmatpush.bf16.msra.mxu0 %v1271
    %1328 = vmatpush.bf16.msra.mxu0 %v1267
    %1329 = vmatpush.bf16.msra.mxu0 %v1263
    %1330 = vmatpush.bf16.msra.mxu0 %v1259
    %1331 = vmatmul.bf16.gmra.mxu0 %v1130
    %v1332 = vpop.f32.mrf.mxu0
    %v1333 = vadd.f32 0.0, %v1332
    %v1334 = vpop.f32.mrf.mxu0
    %1335 = vdwg.mxu0
    %1336 = vmatpush.bf16.msra.mxu0 %v1288
    %1337 = vmatpush.bf16.msra.mxu0 %v1284
    %1338 = vmatpush.bf16.msra.mxu0 %v1280
    %1339 = vmatpush.bf16.msra.mxu0 %v1276
    %1340 = vmatpush.bf16.msra.mxu0 %v1272
    %1341 = vmatpush.bf16.msra.mxu0 %v1268
    %1342 = vmatpush.bf16.msra.mxu0 %v1264
    %1343 = vmatpush.bf16.msra.mxu0 %v1260
    %1344 = vmatmul.bf16.gmra.mxu0 %v1130
    %v1345 = vpop.f32.mrf.mxu0
    %v1346 = vadd.f32 0.0, %v1345
    %v1347 = vpop.f32.mrf.mxu0
    %1348 = vdwg.mxu0
    %1349 = vmatpush.bf16.msra.mxu0 %v1289
    %1350 = vmatpush.bf16.msra.mxu0 %v1285
    %1351 = vmatpush.bf16.msra.mxu0 %v1281
    %1352 = vmatpush.bf16.msra.mxu0 %v1277
    %1353 = vmatpush.bf16.msra.mxu0 %v1273
    %1354 = vmatpush.bf16.msra.mxu0 %v1269
    %1355 = vmatpush.bf16.msra.mxu0 %v1265
    %1356 = vmatpush.bf16.msra.mxu0 %v1261
    %1357 = vmatmul.bf16.gmra.mxu0 %v1130
    %v1358 = vpop.f32.mrf.mxu0
    %v1359 = vadd.f32 0.0, %v1358
    %v1360 = vpop.f32.mrf.mxu0
    %1361 = vdwg.mxu0
    %1362 = vmatpush.bf16.msra.mxu0 %v1290
    %1363 = vmatpush.bf16.msra.mxu0 %v1286
    %1364 = vmatpush.bf16.msra.mxu0 %v1282
    %1365 = vmatpush.bf16.msra.mxu0 %v1278
    %1366 = vmatpush.bf16.msra.mxu0 %v1274
    %1367 = vmatpush.bf16.msra.mxu0 %v1270
    %1368 = vmatpush.bf16.msra.mxu0 %v1266
    %1369 = vmatpush.bf16.msra.mxu0 %v1262
    %1370 = vmatmul.bf16.gmra.mxu0 %v1130
    %v1371 = vpop.f32.mrf.mxu0
    %v1372 = vadd.f32 0.0, %v1371
    %v1373 = vpop.f32.mrf.mxu0
    %1374 = vdwg.mxu0
    %v1375 = vadd.f32 %v1126, %v1333
    %v1376 = vadd.f32 %v1127, %v1346
    %v1377 = vadd.f32 %v1128, %v1359
    %v1378 = vadd.f32 %v1129, %v1372
    %v1379 = vxor.u32 %v1375, 2147483648
    %v1380 = vmul.f32 %v1379, 1.442695
    %v1381 = vpow.pop %v1380
    %v1382 = vadd.f32 %v1381, 1.0
    %v1383 = vrcp.pop %v1382
    %v1384 = vmul.f32 %v1382, %v1383
    %v1385 = vsub.f32 1.0, %v1384
    %v1386 = vmul.f32 %v1383, %v1385
    %v1387 = vadd.f32 %v1383, %v1386
    %vm1388 = vweird.f32 %v1382
    %vm1389 = vweird.f32 %v1383
    %vm1390 = vmor %vm1388, %vm1389
    %v1391 = vsel %vm1390, %v1383, %v1387
    %v1392 = vand.u32 2147483647, %v1382
    %vm1393 = vcmp.eq.f32.partialorder %v1392, 8.507059e+37
    %v1394 = vand.u32 %v1382, 2147483648
    %v1395 = vor.u32 1.1754944e-38, %v1394
    %v1396 = vsel %vm1393, %v1395, %v1391
    %v1397 = vmul.f32 1.0, %v1396
    %v1398 = vxor.u32 %v1376, 2147483648
    %v1399 = vmul.f32 %v1398, 1.442695
    %v1400 = vpow.pop %v1399
    %v1401 = vadd.f32 %v1400, 1.0
    %v1402 = vrcp.pop %v1401
    %v1403 = vmul.f32 %v1401, %v1402
    %v1404 = vsub.f32 1.0, %v1403
    %v1405 = vmul.f32 %v1402, %v1404
    %v1406 = vadd.f32 %v1402, %v1405
    %vm1407 = vweird.f32 %v1401
    %vm1408 = vweird.f32 %v1402
    %vm1409 = vmor %vm1407, %vm1408
    %v1410 = vsel %vm1409, %v1402, %v1406
    %v1411 = vand.u32 2147483647, %v1401
    %vm1412 = vcmp.eq.f32.partialorder %v1411, 8.507059e+37
    %v1413 = vand.u32 %v1401, 2147483648
    %v1414 = vor.u32 1.1754944e-38, %v1413
    %v1415 = vsel %vm1412, %v1414, %v1410
    %v1416 = vmul.f32 1.0, %v1415
    %v1417 = vtanh.pop %v1377
    %v1418 = vxor.u32 %v1378, 2147483648
    %v1419 = vmul.f32 %v1418, 1.442695
    %v1420 = vpow.pop %v1419
    %v1421 = vadd.f32 %v1420, 1.0
    %v1422 = vrcp.pop %v1421
    %v1423 = vmul.f32 %v1421, %v1422
    %v1424 = vsub.f32 1.0, %v1423
    %v1425 = vmul.f32 %v1422, %v1424
    %v1426 = vadd.f32 %v1422, %v1425
    %vm1427 = vweird.f32 %v1421
    %vm1428 = vweird.f32 %v1422
    %vm1429 = vmor %vm1427, %vm1428
    %v1430 = vsel %vm1429, %v1422, %v1426
    %v1431 = vand.u32 2147483647, %v1421
    %vm1432 = vcmp.eq.f32.partialorder %v1431, 8.507059e+37
    %v1433 = vand.u32 %v1421, 2147483648
    %v1434 = vor.u32 1.1754944e-38, %v1433
    %v1435 = vsel %vm1432, %v1434, %v1430
    %v1436 = vmul.f32 1.0, %v1435
    %v1437 = vmul.f32 %v1416, %v1118
    %v1438 = vmul.f32 %v1397, %v1417
    %v1439 = vadd.f32 %v1437, %v1438
    %v1440 = vtanh.pop %v1439
    %v1441 = vmul.f32 %v1436, %v1440
    %s1442 = scalar_lea.vmem [#allocation2], 16
    %1443 = vst [vmem:[%s1442] sm:$0xff] %v1441
    %s1444 = smul.u32 3, 4
    %s1445 = smul.addr %s1444, 8
    %s1446 = scalar_lea.vmem [#allocation3], %s1445
    %v1447 = vld [vmem:[%s1446] sm:$0xff]
    %v1448 = vld [vmem:[%s1446 + $0x8] sm:$0xff]
    %v1449 = vld [vmem:[%s1446 + $0x10] sm:$0xff]
    %v1450 = vld [vmem:[%s1446 + $0x18] sm:$0xff]
    %v1451 = vpack.c.bf16 %v1441, %v1441
    %v1452 = vld [vmem:[#allocation12] sm:$0xff]
    %v1453 = vld [vmem:[#allocation12 + $0x8] sm:$0xff]
    %v1454 = vld [vmem:[#allocation12 + $0x10] sm:$0xff]
    %v1455 = vld [vmem:[#allocation12 + $0x18] sm:$0xff]
    %v1456 = vld [vmem:[#allocation12 + $0x20] sm:$0xff]
    %v1457 = vld [vmem:[#allocation12 + $0x28] sm:$0xff]
    %v1458 = vld [vmem:[#allocation12 + $0x30] sm:$0xff]
    %v1459 = vld [vmem:[#allocation12 + $0x38] sm:$0xff]
    %v1460 = vld [vmem:[#allocation12 + $0x40] sm:$0xff]
    %v1461 = vld [vmem:[#allocation12 + $0x48] sm:$0xff]
    %v1462 = vld [vmem:[#allocation12 + $0x50] sm:$0xff]
    %v1463 = vld [vmem:[#allocation12 + $0x58] sm:$0xff]
    %v1464 = vld [vmem:[#allocation12 + $0x60] sm:$0xff]
    %v1465 = vld [vmem:[#allocation12 + $0x68] sm:$0xff]
    %v1466 = vld [vmem:[#allocation12 + $0x70] sm:$0xff]
    %v1467 = vld [vmem:[#allocation12 + $0x78] sm:$0xff]
    %v1468 = vld [vmem:[#allocation12 + $0x80] sm:$0xff]
    %v1469 = vld [vmem:[#allocation12 + $0x88] sm:$0xff]
    %v1470 = vld [vmem:[#allocation12 + $0x90] sm:$0xff]
    %v1471 = vld [vmem:[#allocation12 + $0x98] sm:$0xff]
    %v1472 = vld [vmem:[#allocation12 + $0xa0] sm:$0xff]
    %v1473 = vld [vmem:[#allocation12 + $0xa8] sm:$0xff]
    %v1474 = vld [vmem:[#allocation12 + $0xb0] sm:$0xff]
    %v1475 = vld [vmem:[#allocation12 + $0xb8] sm:$0xff]
    %v1476 = vld [vmem:[#allocation12 + $0xc0] sm:$0xff]
    %v1477 = vld [vmem:[#allocation12 + $0xc8] sm:$0xff]
    %v1478 = vld [vmem:[#allocation12 + $0xd0] sm:$0xff]
    %v1479 = vld [vmem:[#allocation12 + $0xd8] sm:$0xff]
    %v1480 = vld [vmem:[#allocation12 + $0xe0] sm:$0xff]
    %v1481 = vld [vmem:[#allocation12 + $0xe8] sm:$0xff]
    %v1482 = vld [vmem:[#allocation12 + $0xf0] sm:$0xff]
    %v1483 = vld [vmem:[#allocation12 + $0xf8] sm:$0xff]
    %v1516 = vunpack.c.l.b16 %v1452
    %v1517 = vunpack.c.h.b16 %v1452
    %v1518 = vunpack.c.l.b16 %v1453
    %v1519 = vunpack.c.h.b16 %v1453
    %v1520 = vunpack.c.l.b16 %v1454
    %v1521 = vunpack.c.h.b16 %v1454
    %v1522 = vunpack.c.l.b16 %v1455
    %v1523 = vunpack.c.h.b16 %v1455
    %v1524 = vunpack.c.l.b16 %v1456
    %v1525 = vunpack.c.h.b16 %v1456
    %v1526 = vunpack.c.l.b16 %v1457
    %v1527 = vunpack.c.h.b16 %v1457
    %v1528 = vunpack.c.l.b16 %v1458
    %v1529 = vunpack.c.h.b16 %v1458
    %v1530 = vunpack.c.l.b16 %v1459
    %v1531 = vunpack.c.h.b16 %v1459
    %v1532 = vunpack.c.l.b16 %v1460
    %v1533 = vunpack.c.h.b16 %v1460
    %v1534 = vunpack.c.l.b16 %v1461
    %v1535 = vunpack.c.h.b16 %v1461
    %v1536 = vunpack.c.l.b16 %v1462
    %v1537 = vunpack.c.h.b16 %v1462
    %v1538 = vunpack.c.l.b16 %v1463
    %v1539 = vunpack.c.h.b16 %v1463
    %v1540 = vunpack.c.l.b16 %v1464
    %v1541 = vunpack.c.h.b16 %v1464
    %v1542 = vunpack.c.l.b16 %v1465
    %v1543 = vunpack.c.h.b16 %v1465
    %v1544 = vunpack.c.l.b16 %v1466
    %v1545 = vunpack.c.h.b16 %v1466
    %v1546 = vunpack.c.l.b16 %v1467
    %v1547 = vunpack.c.h.b16 %v1467
    %v1548 = vunpack.c.l.b16 %v1468
    %v1549 = vunpack.c.h.b16 %v1468
    %v1550 = vunpack.c.l.b16 %v1469
    %v1551 = vunpack.c.h.b16 %v1469
    %v1552 = vunpack.c.l.b16 %v1470
    %v1553 = vunpack.c.h.b16 %v1470
    %v1554 = vunpack.c.l.b16 %v1471
    %v1555 = vunpack.c.h.b16 %v1471
    %v1556 = vunpack.c.l.b16 %v1472
    %v1557 = vunpack.c.h.b16 %v1472
    %v1558 = vunpack.c.l.b16 %v1473
    %v1559 = vunpack.c.h.b16 %v1473
    %v1560 = vunpack.c.l.b16 %v1474
    %v1561 = vunpack.c.h.b16 %v1474
    %v1562 = vunpack.c.l.b16 %v1475
    %v1563 = vunpack.c.h.b16 %v1475
    %v1564 = vunpack.c.l.b16 %v1476
    %v1565 = vunpack.c.h.b16 %v1476
    %v1566 = vunpack.c.l.b16 %v1477
    %v1567 = vunpack.c.h.b16 %v1477
    %v1568 = vunpack.c.l.b16 %v1478
    %v1569 = vunpack.c.h.b16 %v1478
    %v1570 = vunpack.c.l.b16 %v1479
    %v1571 = vunpack.c.h.b16 %v1479
    %v1572 = vunpack.c.l.b16 %v1480
    %v1573 = vunpack.c.h.b16 %v1480
    %v1574 = vunpack.c.l.b16 %v1481
    %v1575 = vunpack.c.h.b16 %v1481
    %v1576 = vunpack.c.l.b16 %v1482
    %v1577 = vunpack.c.h.b16 %v1482
    %v1578 = vunpack.c.l.b16 %v1483
    %v1579 = vunpack.c.h.b16 %v1483
    %v1580 = vpack.c.b16 %v1520, %v1516
    %v1581 = vpack.c.b16 %v1521, %v1517
    %v1582 = vpack.c.b16 %v1522, %v1518
    %v1583 = vpack.c.b16 %v1523, %v1519
    %v1584 = vpack.c.b16 %v1528, %v1524
    %v1585 = vpack.c.b16 %v1529, %v1525
    %v1586 = vpack.c.b16 %v1530, %v1526
    %v1587 = vpack.c.b16 %v1531, %v1527
    %v1588 = vpack.c.b16 %v1536, %v1532
    %v1589 = vpack.c.b16 %v1537, %v1533
    %v1590 = vpack.c.b16 %v1538, %v1534
    %v1591 = vpack.c.b16 %v1539, %v1535
    %v1592 = vpack.c.b16 %v1544, %v1540
    %v1593 = vpack.c.b16 %v1545, %v1541
    %v1594 = vpack.c.b16 %v1546, %v1542
    %v1595 = vpack.c.b16 %v1547, %v1543
    %v1596 = vpack.c.b16 %v1552, %v1548
    %v1597 = vpack.c.b16 %v1553, %v1549
    %v1598 = vpack.c.b16 %v1554, %v1550
    %v1599 = vpack.c.b16 %v1555, %v1551
    %v1600 = vpack.c.b16 %v1560, %v1556
    %v1601 = vpack.c.b16 %v1561, %v1557
    %v1602 = vpack.c.b16 %v1562, %v1558
    %v1603 = vpack.c.b16 %v1563, %v1559
    %v1604 = vpack.c.b16 %v1568, %v1564
    %v1605 = vpack.c.b16 %v1569, %v1565
    %v1606 = vpack.c.b16 %v1570, %v1566
    %v1607 = vpack.c.b16 %v1571, %v1567
    %v1608 = vpack.c.b16 %v1576, %v1572
    %v1609 = vpack.c.b16 %v1577, %v1573
    %v1610 = vpack.c.b16 %v1578, %v1574
    %v1611 = vpack.c.b16 %v1579, %v1575
    %1644 = vmatpush.bf16.msra.mxu0 %v1608
    %1645 = vmatpush.bf16.msra.mxu0 %v1604
    %1646 = vmatpush.bf16.msra.mxu0 %v1600
    %1647 = vmatpush.bf16.msra.mxu0 %v1596
    %1648 = vmatpush.bf16.msra.mxu0 %v1592
    %1649 = vmatpush.bf16.msra.mxu0 %v1588
    %1650 = vmatpush.bf16.msra.mxu0 %v1584
    %1651 = vmatpush.bf16.msra.mxu0 %v1580
    %1652 = vmatmul.bf16.gmra.mxu0 %v1451
    %v1653 = vpop.f32.mrf.mxu0
    %v1654 = vadd.f32 0.0, %v1653
    %v1655 = vpop.f32.mrf.mxu0
    %1656 = vdwg.mxu0
    %1657 = vmatpush.bf16.msra.mxu0 %v1609
    %1658 = vmatpush.bf16.msra.mxu0 %v1605
    %1659 = vmatpush.bf16.msra.mxu0 %v1601
    %1660 = vmatpush.bf16.msra.mxu0 %v1597
    %1661 = vmatpush.bf16.msra.mxu0 %v1593
    %1662 = vmatpush.bf16.msra.mxu0 %v1589
    %1663 = vmatpush.bf16.msra.mxu0 %v1585
    %1664 = vmatpush.bf16.msra.mxu0 %v1581
    %1665 = vmatmul.bf16.gmra.mxu0 %v1451
    %v1666 = vpop.f32.mrf.mxu0
    %v1667 = vadd.f32 0.0, %v1666
    %v1668 = vpop.f32.mrf.mxu0
    %1669 = vdwg.mxu0
    %1670 = vmatpush.bf16.msra.mxu0 %v1610
    %1671 = vmatpush.bf16.msra.mxu0 %v1606
    %1672 = vmatpush.bf16.msra.mxu0 %v1602
    %1673 = vmatpush.bf16.msra.mxu0 %v1598
    %1674 = vmatpush.bf16.msra.mxu0 %v1594
    %1675 = vmatpush.bf16.msra.mxu0 %v1590
    %1676 = vmatpush.bf16.msra.mxu0 %v1586
    %1677 = vmatpush.bf16.msra.mxu0 %v1582
    %1678 = vmatmul.bf16.gmra.mxu0 %v1451
    %v1679 = vpop.f32.mrf.mxu0
    %v1680 = vadd.f32 0.0, %v1679
    %v1681 = vpop.f32.mrf.mxu0
    %1682 = vdwg.mxu0
    %1683 = vmatpush.bf16.msra.mxu0 %v1611
    %1684 = vmatpush.bf16.msra.mxu0 %v1607
    %1685 = vmatpush.bf16.msra.mxu0 %v1603
    %1686 = vmatpush.bf16.msra.mxu0 %v1599
    %1687 = vmatpush.bf16.msra.mxu0 %v1595
    %1688 = vmatpush.bf16.msra.mxu0 %v1591
    %1689 = vmatpush.bf16.msra.mxu0 %v1587
    %1690 = vmatpush.bf16.msra.mxu0 %v1583
    %1691 = vmatmul.bf16.gmra.mxu0 %v1451
    %v1692 = vpop.f32.mrf.mxu0
    %v1693 = vadd.f32 0.0, %v1692
    %v1694 = vpop.f32.mrf.mxu0
    %1695 = vdwg.mxu0
    %v1696 = vadd.f32 %v1447, %v1654
    %v1697 = vadd.f32 %v1448, %v1667
    %v1698 = vadd.f32 %v1449, %v1680
    %v1699 = vadd.f32 %v1450, %v1693
    %v1700 = vxor.u32 %v1696, 2147483648
    %v1701 = vmul.f32 %v1700, 1.442695
    %v1702 = vpow.pop %v1701
    %v1703 = vadd.f32 %v1702, 1.0
    %v1704 = vrcp.pop %v1703
    %v1705 = vmul.f32 %v1703, %v1704
    %v1706 = vsub.f32 1.0, %v1705
    %v1707 = vmul.f32 %v1704, %v1706
    %v1708 = vadd.f32 %v1704, %v1707
    %vm1709 = vweird.f32 %v1703
    %vm1710 = vweird.f32 %v1704
    %vm1711 = vmor %vm1709, %vm1710
    %v1712 = vsel %vm1711, %v1704, %v1708
    %v1713 = vand.u32 2147483647, %v1703
    %vm1714 = vcmp.eq.f32.partialorder %v1713, 8.507059e+37
    %v1715 = vand.u32 %v1703, 2147483648
    %v1716 = vor.u32 1.1754944e-38, %v1715
    %v1717 = vsel %vm1714, %v1716, %v1712
    %v1718 = vmul.f32 1.0, %v1717
    %v1719 = vxor.u32 %v1697, 2147483648
    %v1720 = vmul.f32 %v1719, 1.442695
    %v1721 = vpow.pop %v1720
    %v1722 = vadd.f32 %v1721, 1.0
    %v1723 = vrcp.pop %v1722
    %v1724 = vmul.f32 %v1722, %v1723
    %v1725 = vsub.f32 1.0, %v1724
    %v1726 = vmul.f32 %v1723, %v1725
    %v1727 = vadd.f32 %v1723, %v1726
    %vm1728 = vweird.f32 %v1722
    %vm1729 = vweird.f32 %v1723
    %vm1730 = vmor %vm1728, %vm1729
    %v1731 = vsel %vm1730, %v1723, %v1727
    %v1732 = vand.u32 2147483647, %v1722
    %vm1733 = vcmp.eq.f32.partialorder %v1732, 8.507059e+37
    %v1734 = vand.u32 %v1722, 2147483648
    %v1735 = vor.u32 1.1754944e-38, %v1734
    %v1736 = vsel %vm1733, %v1735, %v1731
    %v1737 = vmul.f32 1.0, %v1736
    %v1738 = vtanh.pop %v1698
    %v1739 = vxor.u32 %v1699, 2147483648
    %v1740 = vmul.f32 %v1739, 1.442695
    %v1741 = vpow.pop %v1740
    %v1742 = vadd.f32 %v1741, 1.0
    %v1743 = vrcp.pop %v1742
    %v1744 = vmul.f32 %v1742, %v1743
    %v1745 = vsub.f32 1.0, %v1744
    %v1746 = vmul.f32 %v1743, %v1745
    %v1747 = vadd.f32 %v1743, %v1746
    %vm1748 = vweird.f32 %v1742
    %vm1749 = vweird.f32 %v1743
    %vm1750 = vmor %vm1748, %vm1749
    %v1751 = vsel %vm1750, %v1743, %v1747
    %v1752 = vand.u32 2147483647, %v1742
    %vm1753 = vcmp.eq.f32.partialorder %v1752, 8.507059e+37
    %v1754 = vand.u32 %v1742, 2147483648
    %v1755 = vor.u32 1.1754944e-38, %v1754
    %v1756 = vsel %vm1753, %v1755, %v1751
    %v1757 = vmul.f32 1.0, %v1756
    %v1758 = vmul.f32 %v1737, %v1439
    %v1759 = vmul.f32 %v1718, %v1738
    %v1760 = vadd.f32 %v1758, %v1759
    %v1761 = vtanh.pop %v1760
    %v1762 = vmul.f32 %v1757, %v1761
    %s1763 = scalar_lea.vmem [#allocation2], 24
    %1764 = vst [vmem:[%s1763] sm:$0xff] %v1762
    %s1765 = smul.u32 4, 4
    %s1766 = smul.addr %s1765, 8
    %s1767 = scalar_lea.vmem [#allocation3], %s1766
    %v1768 = vld [vmem:[%s1767] sm:$0xff]
    %v1769 = vld [vmem:[%s1767 + $0x8] sm:$0xff]
    %v1770 = vld [vmem:[%s1767 + $0x10] sm:$0xff]
    %v1771 = vld [vmem:[%s1767 + $0x18] sm:$0xff]
    %v1772 = vpack.c.bf16 %v1762, %v1762
    %v1773 = vld [vmem:[#allocation12] sm:$0xff]
    %v1774 = vld [vmem:[#allocation12 + $0x8] sm:$0xff]
    %v1775 = vld [vmem:[#allocation12 + $0x10] sm:$0xff]
    %v1776 = vld [vmem:[#allocation12 + $0x18] sm:$0xff]
    %v1777 = vld [vmem:[#allocation12 + $0x20] sm:$0xff]
    %v1778 = vld [vmem:[#allocation12 + $0x28] sm:$0xff]
    %v1779 = vld [vmem:[#allocation12 + $0x30] sm:$0xff]
    %v1780 = vld [vmem:[#allocation12 + $0x38] sm:$0xff]
    %v1781 = vld [vmem:[#allocation12 + $0x40] sm:$0xff]
    %v1782 = vld [vmem:[#allocation12 + $0x48] sm:$0xff]
    %v1783 = vld [vmem:[#allocation12 + $0x50] sm:$0xff]
    %v1784 = vld [vmem:[#allocation12 + $0x58] sm:$0xff]
    %v1785 = vld [vmem:[#allocation12 + $0x60] sm:$0xff]
    %v1786 = vld [vmem:[#allocation12 + $0x68] sm:$0xff]
    %v1787 = vld [vmem:[#allocation12 + $0x70] sm:$0xff]
    %v1788 = vld [vmem:[#allocation12 + $0x78] sm:$0xff]
    %v1789 = vld [vmem:[#allocation12 + $0x80] sm:$0xff]
    %v1790 = vld [vmem:[#allocation12 + $0x88] sm:$0xff]
    %v1791 = vld [vmem:[#allocation12 + $0x90] sm:$0xff]
    %v1792 = vld [vmem:[#allocation12 + $0x98] sm:$0xff]
    %v1793 = vld [vmem:[#allocation12 + $0xa0] sm:$0xff]
    %v1794 = vld [vmem:[#allocation12 + $0xa8] sm:$0xff]
    %v1795 = vld [vmem:[#allocation12 + $0xb0] sm:$0xff]
    %v1796 = vld [vmem:[#allocation12 + $0xb8] sm:$0xff]
    %v1797 = vld [vmem:[#allocation12 + $0xc0] sm:$0xff]
    %v1798 = vld [vmem:[#allocation12 + $0xc8] sm:$0xff]
    %v1799 = vld [vmem:[#allocation12 + $0xd0] sm:$0xff]
    %v1800 = vld [vmem:[#allocation12 + $0xd8] sm:$0xff]
    %v1801 = vld [vmem:[#allocation12 + $0xe0] sm:$0xff]
    %v1802 = vld [vmem:[#allocation12 + $0xe8] sm:$0xff]
    %v1803 = vld [vmem:[#allocation12 + $0xf0] sm:$0xff]
    %v1804 = vld [vmem:[#allocation12 + $0xf8] sm:$0xff]
    %v1837 = vunpack.c.l.b16 %v1773
    %v1838 = vunpack.c.h.b16 %v1773
    %v1839 = vunpack.c.l.b16 %v1774
    %v1840 = vunpack.c.h.b16 %v1774
    %v1841 = vunpack.c.l.b16 %v1775
    %v1842 = vunpack.c.h.b16 %v1775
    %v1843 = vunpack.c.l.b16 %v1776
    %v1844 = vunpack.c.h.b16 %v1776
    %v1845 = vunpack.c.l.b16 %v1777
    %v1846 = vunpack.c.h.b16 %v1777
    %v1847 = vunpack.c.l.b16 %v1778
    %v1848 = vunpack.c.h.b16 %v1778
    %v1849 = vunpack.c.l.b16 %v1779
    %v1850 = vunpack.c.h.b16 %v1779
    %v1851 = vunpack.c.l.b16 %v1780
    %v1852 = vunpack.c.h.b16 %v1780
    %v1853 = vunpack.c.l.b16 %v1781
    %v1854 = vunpack.c.h.b16 %v1781
    %v1855 = vunpack.c.l.b16 %v1782
    %v1856 = vunpack.c.h.b16 %v1782
    %v1857 = vunpack.c.l.b16 %v1783
    %v1858 = vunpack.c.h.b16 %v1783
    %v1859 = vunpack.c.l.b16 %v1784
    %v1860 = vunpack.c.h.b16 %v1784
    %v1861 = vunpack.c.l.b16 %v1785
    %v1862 = vunpack.c.h.b16 %v1785
    %v1863 = vunpack.c.l.b16 %v1786
    %v1864 = vunpack.c.h.b16 %v1786
    %v1865 = vunpack.c.l.b16 %v1787
    %v1866 = vunpack.c.h.b16 %v1787
    %v1867 = vunpack.c.l.b16 %v1788
    %v1868 = vunpack.c.h.b16 %v1788
    %v1869 = vunpack.c.l.b16 %v1789
    %v1870 = vunpack.c.h.b16 %v1789
    %v1871 = vunpack.c.l.b16 %v1790
    %v1872 = vunpack.c.h.b16 %v1790
    %v1873 = vunpack.c.l.b16 %v1791
    %v1874 = vunpack.c.h.b16 %v1791
    %v1875 = vunpack.c.l.b16 %v1792
    %v1876 = vunpack.c.h.b16 %v1792
    %v1877 = vunpack.c.l.b16 %v1793
    %v1878 = vunpack.c.h.b16 %v1793
    %v1879 = vunpack.c.l.b16 %v1794
    %v1880 = vunpack.c.h.b16 %v1794
    %v1881 = vunpack.c.l.b16 %v1795
    %v1882 = vunpack.c.h.b16 %v1795
    %v1883 = vunpack.c.l.b16 %v1796
    %v1884 = vunpack.c.h.b16 %v1796
    %v1885 = vunpack.c.l.b16 %v1797
    %v1886 = vunpack.c.h.b16 %v1797
    %v1887 = vunpack.c.l.b16 %v1798
    %v1888 = vunpack.c.h.b16 %v1798
    %v1889 = vunpack.c.l.b16 %v1799
    %v1890 = vunpack.c.h.b16 %v1799
    %v1891 = vunpack.c.l.b16 %v1800
    %v1892 = vunpack.c.h.b16 %v1800
    %v1893 = vunpack.c.l.b16 %v1801
    %v1894 = vunpack.c.h.b16 %v1801
    %v1895 = vunpack.c.l.b16 %v1802
    %v1896 = vunpack.c.h.b16 %v1802
    %v1897 = vunpack.c.l.b16 %v1803
    %v1898 = vunpack.c.h.b16 %v1803
    %v1899 = vunpack.c.l.b16 %v1804
    %v1900 = vunpack.c.h.b16 %v1804
    %v1901 = vpack.c.b16 %v1841, %v1837
    %v1902 = vpack.c.b16 %v1842, %v1838
    %v1903 = vpack.c.b16 %v1843, %v1839
    %v1904 = vpack.c.b16 %v1844, %v1840
    %v1905 = vpack.c.b16 %v1849, %v1845
    %v1906 = vpack.c.b16 %v1850, %v1846
    %v1907 = vpack.c.b16 %v1851, %v1847
    %v1908 = vpack.c.b16 %v1852, %v1848
    %v1909 = vpack.c.b16 %v1857, %v1853
    %v1910 = vpack.c.b16 %v1858, %v1854
    %v1911 = vpack.c.b16 %v1859, %v1855
    %v1912 = vpack.c.b16 %v1860, %v1856
    %v1913 = vpack.c.b16 %v1865, %v1861
    %v1914 = vpack.c.b16 %v1866, %v1862
    %v1915 = vpack.c.b16 %v1867, %v1863
    %v1916 = vpack.c.b16 %v1868, %v1864
    %v1917 = vpack.c.b16 %v1873, %v1869
    %v1918 = vpack.c.b16 %v1874, %v1870
    %v1919 = vpack.c.b16 %v1875, %v1871
    %v1920 = vpack.c.b16 %v1876, %v1872
    %v1921 = vpack.c.b16 %v1881, %v1877
    %v1922 = vpack.c.b16 %v1882, %v1878
    %v1923 = vpack.c.b16 %v1883, %v1879
    %v1924 = vpack.c.b16 %v1884, %v1880
    %v1925 = vpack.c.b16 %v1889, %v1885
    %v1926 = vpack.c.b16 %v1890, %v1886
    %v1927 = vpack.c.b16 %v1891, %v1887
    %v1928 = vpack.c.b16 %v1892, %v1888
    %v1929 = vpack.c.b16 %v1897, %v1893
    %v1930 = vpack.c.b16 %v1898, %v1894
    %v1931 = vpack.c.b16 %v1899, %v1895
    %v1932 = vpack.c.b16 %v1900, %v1896
    %1965 = vmatpush.bf16.msra.mxu0 %v1929
    %1966 = vmatpush.bf16.msra.mxu0 %v1925
    %1967 = vmatpush.bf16.msra.mxu0 %v1921
    %1968 = vmatpush.bf16.msra.mxu0 %v1917
    %1969 = vmatpush.bf16.msra.mxu0 %v1913
    %1970 = vmatpush.bf16.msra.mxu0 %v1909
    %1971 = vmatpush.bf16.msra.mxu0 %v1905
    %1972 = vmatpush.bf16.msra.mxu0 %v1901
    %1973 = vmatmul.bf16.gmra.mxu0 %v1772
    %v1974 = vpop.f32.mrf.mxu0
    %v1975 = vadd.f32 0.0, %v1974
    %v1976 = vpop.f32.mrf.mxu0
    %1977 = vdwg.mxu0
    %1978 = vmatpush.bf16.msra.mxu0 %v1930
    %1979 = vmatpush.bf16.msra.mxu0 %v1926
    %1980 = vmatpush.bf16.msra.mxu0 %v1922
    %1981 = vmatpush.bf16.msra.mxu0 %v1918
    %1982 = vmatpush.bf16.msra.mxu0 %v1914
    %1983 = vmatpush.bf16.msra.mxu0 %v1910
    %1984 = vmatpush.bf16.msra.mxu0 %v1906
    %1985 = vmatpush.bf16.msra.mxu0 %v1902
    %1986 = vmatmul.bf16.gmra.mxu0 %v1772
    %v1987 = vpop.f32.mrf.mxu0
    %v1988 = vadd.f32 0.0, %v1987
    %v1989 = vpop.f32.mrf.mxu0
    %1990 = vdwg.mxu0
    %1991 = vmatpush.bf16.msra.mxu0 %v1931
    %1992 = vmatpush.bf16.msra.mxu0 %v1927
    %1993 = vmatpush.bf16.msra.mxu0 %v1923
    %1994 = vmatpush.bf16.msra.mxu0 %v1919
    %1995 = vmatpush.bf16.msra.mxu0 %v1915
    %1996 = vmatpush.bf16.msra.mxu0 %v1911
    %1997 = vmatpush.bf16.msra.mxu0 %v1907
    %1998 = vmatpush.bf16.msra.mxu0 %v1903
    %1999 = vmatmul.bf16.gmra.mxu0 %v1772
    %v2000 = vpop.f32.mrf.mxu0
    %v2001 = vadd.f32 0.0, %v2000
    %v2002 = vpop.f32.mrf.mxu0
    %2003 = vdwg.mxu0
    %2004 = vmatpush.bf16.msra.mxu0 %v1932
    %2005 = vmatpush.bf16.msra.mxu0 %v1928
    %2006 = vmatpush.bf16.msra.mxu0 %v1924
    %2007 = vmatpush.bf16.msra.mxu0 %v1920
    %2008 = vmatpush.bf16.msra.mxu0 %v1916
    %2009 = vmatpush.bf16.msra.mxu0 %v1912
    %2010 = vmatpush.bf16.msra.mxu0 %v1908
    %2011 = vmatpush.bf16.msra.mxu0 %v1904
    %2012 = vmatmul.bf16.gmra.mxu0 %v1772
    %v2013 = vpop.f32.mrf.mxu0
    %v2014 = vadd.f32 0.0, %v2013
    %v2015 = vpop.f32.mrf.mxu0
    %2016 = vdwg.mxu0
    %v2017 = vadd.f32 %v1768, %v1975
    %v2018 = vadd.f32 %v1769, %v1988
    %v2019 = vadd.f32 %v1770, %v2001
    %v2020 = vadd.f32 %v1771, %v2014
    %v2021 = vxor.u32 %v2017, 2147483648
    %v2022 = vmul.f32 %v2021, 1.442695
    %v2023 = vpow.pop %v2022
    %v2024 = vadd.f32 %v2023, 1.0
    %v2025 = vrcp.pop %v2024
    %v2026 = vmul.f32 %v2024, %v2025
    %v2027 = vsub.f32 1.0, %v2026
    %v2028 = vmul.f32 %v2025, %v2027
    %v2029 = vadd.f32 %v2025, %v2028
    %vm2030 = vweird.f32 %v2024
    %vm2031 = vweird.f32 %v2025
    %vm2032 = vmor %vm2030, %vm2031
    %v2033 = vsel %vm2032, %v2025, %v2029
    %v2034 = vand.u32 2147483647, %v2024
    %vm2035 = vcmp.eq.f32.partialorder %v2034, 8.507059e+37
    %v2036 = vand.u32 %v2024, 2147483648
    %v2037 = vor.u32 1.1754944e-38, %v2036
    %v2038 = vsel %vm2035, %v2037, %v2033
    %v2039 = vmul.f32 1.0, %v2038
    %v2040 = vxor.u32 %v2018, 2147483648
    %v2041 = vmul.f32 %v2040, 1.442695
    %v2042 = vpow.pop %v2041
    %v2043 = vadd.f32 %v2042, 1.0
    %v2044 = vrcp.pop %v2043
    %v2045 = vmul.f32 %v2043, %v2044
    %v2046 = vsub.f32 1.0, %v2045
    %v2047 = vmul.f32 %v2044, %v2046
    %v2048 = vadd.f32 %v2044, %v2047
    %vm2049 = vweird.f32 %v2043
    %vm2050 = vweird.f32 %v2044
    %vm2051 = vmor %vm2049, %vm2050
    %v2052 = vsel %vm2051, %v2044, %v2048
    %v2053 = vand.u32 2147483647, %v2043
    %vm2054 = vcmp.eq.f32.partialorder %v2053, 8.507059e+37
    %v2055 = vand.u32 %v2043, 2147483648
    %v2056 = vor.u32 1.1754944e-38, %v2055
    %v2057 = vsel %vm2054, %v2056, %v2052
    %v2058 = vmul.f32 1.0, %v2057
    %v2059 = vtanh.pop %v2019
    %v2060 = vxor.u32 %v2020, 2147483648
    %v2061 = vmul.f32 %v2060, 1.442695
    %v2062 = vpow.pop %v2061
    %v2063 = vadd.f32 %v2062, 1.0
    %v2064 = vrcp.pop %v2063
    %v2065 = vmul.f32 %v2063, %v2064
    %v2066 = vsub.f32 1.0, %v2065
    %v2067 = vmul.f32 %v2064, %v2066
    %v2068 = vadd.f32 %v2064, %v2067
    %vm2069 = vweird.f32 %v2063
    %vm2070 = vweird.f32 %v2064
    %vm2071 = vmor %vm2069, %vm2070
    %v2072 = vsel %vm2071, %v2064, %v2068
    %v2073 = vand.u32 2147483647, %v2063
    %vm2074 = vcmp.eq.f32.partialorder %v2073, 8.507059e+37
    %v2075 = vand.u32 %v2063, 2147483648
    %v2076 = vor.u32 1.1754944e-38, %v2075
    %v2077 = vsel %vm2074, %v2076, %v2072
    %v2078 = vmul.f32 1.0, %v2077
    %v2079 = vmul.f32 %v2058, %v1760
    %v2080 = vmul.f32 %v2039, %v2059
    %v2081 = vadd.f32 %v2079, %v2080
    %v2082 = vtanh.pop %v2081
    %v2083 = vmul.f32 %v2078, %v2082
    %s2084 = scalar_lea.vmem [#allocation2], 32
    %2085 = vst [vmem:[%s2084] sm:$0xff] %v2083
    %s2086 = smul.u32 5, 4
    %s2087 = smul.addr %s2086, 8
    %s2088 = scalar_lea.vmem [#allocation3], %s2087
    %v2089 = vld [vmem:[%s2088] sm:$0xff]
    %v2090 = vld [vmem:[%s2088 + $0x8] sm:$0xff]
    %v2091 = vld [vmem:[%s2088 + $0x10] sm:$0xff]
    %v2092 = vld [vmem:[%s2088 + $0x18] sm:$0xff]
    %v2093 = vpack.c.bf16 %v2083, %v2083
    %v2094 = vld [vmem:[#allocation12] sm:$0xff]
    %v2095 = vld [vmem:[#allocation12 + $0x8] sm:$0xff]
    %v2096 = vld [vmem:[#allocation12 + $0x10] sm:$0xff]
    %v2097 = vld [vmem:[#allocation12 + $0x18] sm:$0xff]
    %v2098 = vld [vmem:[#allocation12 + $0x20] sm:$0xff]
    %v2099 = vld [vmem:[#allocation12 + $0x28] sm:$0xff]
    %v2100 = vld [vmem:[#allocation12 + $0x30] sm:$0xff]
    %v2101 = vld [vmem:[#allocation12 + $0x38] sm:$0xff]
    %v2102 = vld [vmem:[#allocation12 + $0x40] sm:$0xff]
    %v2103 = vld [vmem:[#allocation12 + $0x48] sm:$0xff]
    %v2104 = vld [vmem:[#allocation12 + $0x50] sm:$0xff]
    %v2105 = vld [vmem:[#allocation12 + $0x58] sm:$0xff]
    %v2106 = vld [vmem:[#allocation12 + $0x60] sm:$0xff]
    %v2107 = vld [vmem:[#allocation12 + $0x68] sm:$0xff]
    %v2108 = vld [vmem:[#allocation12 + $0x70] sm:$0xff]
    %v2109 = vld [vmem:[#allocation12 + $0x78] sm:$0xff]
    %v2110 = vld [vmem:[#allocation12 + $0x80] sm:$0xff]
    %v2111 = vld [vmem:[#allocation12 + $0x88] sm:$0xff]
    %v2112 = vld [vmem:[#allocation12 + $0x90] sm:$0xff]
    %v2113 = vld [vmem:[#allocation12 + $0x98] sm:$0xff]
    %v2114 = vld [vmem:[#allocation12 + $0xa0] sm:$0xff]
    %v2115 = vld [vmem:[#allocation12 + $0xa8] sm:$0xff]
    %v2116 = vld [vmem:[#allocation12 + $0xb0] sm:$0xff]
    %v2117 = vld [vmem:[#allocation12 + $0xb8] sm:$0xff]
    %v2118 = vld [vmem:[#allocation12 + $0xc0] sm:$0xff]
    %v2119 = vld [vmem:[#allocation12 + $0xc8] sm:$0xff]
    %v2120 = vld [vmem:[#allocation12 + $0xd0] sm:$0xff]
    %v2121 = vld [vmem:[#allocation12 + $0xd8] sm:$0xff]
    %v2122 = vld [vmem:[#allocation12 + $0xe0] sm:$0xff]
    %v2123 = vld [vmem:[#allocation12 + $0xe8] sm:$0xff]
    %v2124 = vld [vmem:[#allocation12 + $0xf0] sm:$0xff]
    %v2125 = vld [vmem:[#allocation12 + $0xf8] sm:$0xff]
    %v2158 = vunpack.c.l.b16 %v2094
    %v2159 = vunpack.c.h.b16 %v2094
    %v2160 = vunpack.c.l.b16 %v2095
    %v2161 = vunpack.c.h.b16 %v2095
    %v2162 = vunpack.c.l.b16 %v2096
    %v2163 = vunpack.c.h.b16 %v2096
    %v2164 = vunpack.c.l.b16 %v2097
    %v2165 = vunpack.c.h.b16 %v2097
    %v2166 = vunpack.c.l.b16 %v2098
    %v2167 = vunpack.c.h.b16 %v2098
    %v2168 = vunpack.c.l.b16 %v2099
    %v2169 = vunpack.c.h.b16 %v2099
    %v2170 = vunpack.c.l.b16 %v2100
    %v2171 = vunpack.c.h.b16 %v2100
    %v2172 = vunpack.c.l.b16 %v2101
    %v2173 = vunpack.c.h.b16 %v2101
    %v2174 = vunpack.c.l.b16 %v2102
    %v2175 = vunpack.c.h.b16 %v2102
    %v2176 = vunpack.c.l.b16 %v2103
    %v2177 = vunpack.c.h.b16 %v2103
    %v2178 = vunpack.c.l.b16 %v2104
    %v2179 = vunpack.c.h.b16 %v2104
    %v2180 = vunpack.c.l.b16 %v2105
    %v2181 = vunpack.c.h.b16 %v2105
    %v2182 = vunpack.c.l.b16 %v2106
    %v2183 = vunpack.c.h.b16 %v2106
    %v2184 = vunpack.c.l.b16 %v2107
    %v2185 = vunpack.c.h.b16 %v2107
    %v2186 = vunpack.c.l.b16 %v2108
    %v2187 = vunpack.c.h.b16 %v2108
    %v2188 = vunpack.c.l.b16 %v2109
    %v2189 = vunpack.c.h.b16 %v2109
    %v2190 = vunpack.c.l.b16 %v2110
    %v2191 = vunpack.c.h.b16 %v2110
    %v2192 = vunpack.c.l.b16 %v2111
    %v2193 = vunpack.c.h.b16 %v2111
    %v2194 = vunpack.c.l.b16 %v2112
    %v2195 = vunpack.c.h.b16 %v2112
    %v2196 = vunpack.c.l.b16 %v2113
    %v2197 = vunpack.c.h.b16 %v2113
    %v2198 = vunpack.c.l.b16 %v2114
    %v2199 = vunpack.c.h.b16 %v2114
    %v2200 = vunpack.c.l.b16 %v2115
    %v2201 = vunpack.c.h.b16 %v2115
    %v2202 = vunpack.c.l.b16 %v2116
    %v2203 = vunpack.c.h.b16 %v2116
    %v2204 = vunpack.c.l.b16 %v2117
    %v2205 = vunpack.c.h.b16 %v2117
    %v2206 = vunpack.c.l.b16 %v2118
    %v2207 = vunpack.c.h.b16 %v2118
    %v2208 = vunpack.c.l.b16 %v2119
    %v2209 = vunpack.c.h.b16 %v2119
    %v2210 = vunpack.c.l.b16 %v2120
    %v2211 = vunpack.c.h.b16 %v2120
    %v2212 = vunpack.c.l.b16 %v2121
    %v2213 = vunpack.c.h.b16 %v2121
    %v2214 = vunpack.c.l.b16 %v2122
    %v2215 = vunpack.c.h.b16 %v2122
    %v2216 = vunpack.c.l.b16 %v2123
    %v2217 = vunpack.c.h.b16 %v2123
    %v2218 = vunpack.c.l.b16 %v2124
    %v2219 = vunpack.c.h.b16 %v2124
    %v2220 = vunpack.c.l.b16 %v2125
    %v2221 = vunpack.c.h.b16 %v2125
    %v2222 = vpack.c.b16 %v2162, %v2158
    %v2223 = vpack.c.b16 %v2163, %v2159
    %v2224 = vpack.c.b16 %v2164, %v2160
    %v2225 = vpack.c.b16 %v2165, %v2161
    %v2226 = vpack.c.b16 %v2170, %v2166
    %v2227 = vpack.c.b16 %v2171, %v2167
    %v2228 = vpack.c.b16 %v2172, %v2168
    %v2229 = vpack.c.b16 %v2173, %v2169
    %v2230 = vpack.c.b16 %v2178, %v2174
    %v2231 = vpack.c.b16 %v2179, %v2175
    %v2232 = vpack.c.b16 %v2180, %v2176
    %v2233 = vpack.c.b16 %v2181, %v2177
    %v2234 = vpack.c.b16 %v2186, %v2182
    %v2235 = vpack.c.b16 %v2187, %v2183
    %v2236 = vpack.c.b16 %v2188, %v2184
    %v2237 = vpack.c.b16 %v2189, %v2185
    %v2238 = vpack.c.b16 %v2194, %v2190
    %v2239 = vpack.c.b16 %v2195, %v2191
    %v2240 = vpack.c.b16 %v2196, %v2192
    %v2241 = vpack.c.b16 %v2197, %v2193
    %v2242 = vpack.c.b16 %v2202, %v2198
    %v2243 = vpack.c.b16 %v2203, %v2199
    %v2244 = vpack.c.b16 %v2204, %v2200
    %v2245 = vpack.c.b16 %v2205, %v2201
    %v2246 = vpack.c.b16 %v2210, %v2206
    %v2247 = vpack.c.b16 %v2211, %v2207
    %v2248 = vpack.c.b16 %v2212, %v2208
    %v2249 = vpack.c.b16 %v2213, %v2209
    %v2250 = vpack.c.b16 %v2218, %v2214
    %v2251 = vpack.c.b16 %v2219, %v2215
    %v2252 = vpack.c.b16 %v2220, %v2216
    %v2253 = vpack.c.b16 %v2221, %v2217
    %2286 = vmatpush.bf16.msra.mxu0 %v2250
    %2287 = vmatpush.bf16.msra.mxu0 %v2246
    %2288 = vmatpush.bf16.msra.mxu0 %v2242
    %2289 = vmatpush.bf16.msra.mxu0 %v2238
    %2290 = vmatpush.bf16.msra.mxu0 %v2234
    %2291 = vmatpush.bf16.msra.mxu0 %v2230
    %2292 = vmatpush.bf16.msra.mxu0 %v2226
    %2293 = vmatpush.bf16.msra.mxu0 %v2222
    %2294 = vmatmul.bf16.gmra.mxu0 %v2093
    %v2295 = vpop.f32.mrf.mxu0
    %v2296 = vadd.f32 0.0, %v2295
    %v2297 = vpop.f32.mrf.mxu0
    %2298 = vdwg.mxu0
    %2299 = vmatpush.bf16.msra.mxu0 %v2251
    %2300 = vmatpush.bf16.msra.mxu0 %v2247
    %2301 = vmatpush.bf16.msra.mxu0 %v2243
    %2302 = vmatpush.bf16.msra.mxu0 %v2239
    %2303 = vmatpush.bf16.msra.mxu0 %v2235
    %2304 = vmatpush.bf16.msra.mxu0 %v2231
    %2305 = vmatpush.bf16.msra.mxu0 %v2227
    %2306 = vmatpush.bf16.msra.mxu0 %v2223
    %2307 = vmatmul.bf16.gmra.mxu0 %v2093
    %v2308 = vpop.f32.mrf.mxu0
    %v2309 = vadd.f32 0.0, %v2308
    %v2310 = vpop.f32.mrf.mxu0
    %2311 = vdwg.mxu0
    %2312 = vmatpush.bf16.msra.mxu0 %v2252
    %2313 = vmatpush.bf16.msra.mxu0 %v2248
    %2314 = vmatpush.bf16.msra.mxu0 %v2244
    %2315 = vmatpush.bf16.msra.mxu0 %v2240
    %2316 = vmatpush.bf16.msra.mxu0 %v2236
    %2317 = vmatpush.bf16.msra.mxu0 %v2232
    %2318 = vmatpush.bf16.msra.mxu0 %v2228
    %2319 = vmatpush.bf16.msra.mxu0 %v2224
    %2320 = vmatmul.bf16.gmra.mxu0 %v2093
    %v2321 = vpop.f32.mrf.mxu0
    %v2322 = vadd.f32 0.0, %v2321
    %v2323 = vpop.f32.mrf.mxu0
    %2324 = vdwg.mxu0
    %2325 = vmatpush.bf16.msra.mxu0 %v2253
    %2326 = vmatpush.bf16.msra.mxu0 %v2249
    %2327 = vmatpush.bf16.msra.mxu0 %v2245
    %2328 = vmatpush.bf16.msra.mxu0 %v2241
    %2329 = vmatpush.bf16.msra.mxu0 %v2237
    %2330 = vmatpush.bf16.msra.mxu0 %v2233
    %2331 = vmatpush.bf16.msra.mxu0 %v2229
    %2332 = vmatpush.bf16.msra.mxu0 %v2225
    %2333 = vmatmul.bf16.gmra.mxu0 %v2093
    %v2334 = vpop.f32.mrf.mxu0
    %v2335 = vadd.f32 0.0, %v2334
    %v2336 = vpop.f32.mrf.mxu0
    %2337 = vdwg.mxu0
    %v2338 = vadd.f32 %v2089, %v2296
    %v2339 = vadd.f32 %v2090, %v2309
    %v2340 = vadd.f32 %v2091, %v2322
    %v2341 = vadd.f32 %v2092, %v2335
    %v2342 = vxor.u32 %v2338, 2147483648
    %v2343 = vmul.f32 %v2342, 1.442695
    %v2344 = vpow.pop %v2343
    %v2345 = vadd.f32 %v2344, 1.0
    %v2346 = vrcp.pop %v2345
    %v2347 = vmul.f32 %v2345, %v2346
    %v2348 = vsub.f32 1.0, %v2347
    %v2349 = vmul.f32 %v2346, %v2348
    %v2350 = vadd.f32 %v2346, %v2349
    %vm2351 = vweird.f32 %v2345
    %vm2352 = vweird.f32 %v2346
    %vm2353 = vmor %vm2351, %vm2352
    %v2354 = vsel %vm2353, %v2346, %v2350
    %v2355 = vand.u32 2147483647, %v2345
    %vm2356 = vcmp.eq.f32.partialorder %v2355, 8.507059e+37
    %v2357 = vand.u32 %v2345, 2147483648
    %v2358 = vor.u32 1.1754944e-38, %v2357
    %v2359 = vsel %vm2356, %v2358, %v2354
    %v2360 = vmul.f32 1.0, %v2359
    %v2361 = vxor.u32 %v2339, 2147483648
    %v2362 = vmul.f32 %v2361, 1.442695
    %v2363 = vpow.pop %v2362
    %v2364 = vadd.f32 %v2363, 1.0
    %v2365 = vrcp.pop %v2364
    %v2366 = vmul.f32 %v2364, %v2365
    %v2367 = vsub.f32 1.0, %v2366
    %v2368 = vmul.f32 %v2365, %v2367
    %v2369 = vadd.f32 %v2365, %v2368
    %vm2370 = vweird.f32 %v2364
    %vm2371 = vweird.f32 %v2365
    %vm2372 = vmor %vm2370, %vm2371
    %v2373 = vsel %vm2372, %v2365, %v2369
    %v2374 = vand.u32 2147483647, %v2364
    %vm2375 = vcmp.eq.f32.partialorder %v2374, 8.507059e+37
    %v2376 = vand.u32 %v2364, 2147483648
    %v2377 = vor.u32 1.1754944e-38, %v2376
    %v2378 = vsel %vm2375, %v2377, %v2373
    %v2379 = vmul.f32 1.0, %v2378
    %v2380 = vtanh.pop %v2340
    %v2381 = vxor.u32 %v2341, 2147483648
    %v2382 = vmul.f32 %v2381, 1.442695
    %v2383 = vpow.pop %v2382
    %v2384 = vadd.f32 %v2383, 1.0
    %v2385 = vrcp.pop %v2384
    %v2386 = vmul.f32 %v2384, %v2385
    %v2387 = vsub.f32 1.0, %v2386
    %v2388 = vmul.f32 %v2385, %v2387
    %v2389 = vadd.f32 %v2385, %v2388
    %vm2390 = vweird.f32 %v2384
    %vm2391 = vweird.f32 %v2385
    %vm2392 = vmor %vm2390, %vm2391
    %v2393 = vsel %vm2392, %v2385, %v2389
    %v2394 = vand.u32 2147483647, %v2384
    %vm2395 = vcmp.eq.f32.partialorder %v2394, 8.507059e+37
    %v2396 = vand.u32 %v2384, 2147483648
    %v2397 = vor.u32 1.1754944e-38, %v2396
    %v2398 = vsel %vm2395, %v2397, %v2393
    %v2399 = vmul.f32 1.0, %v2398
    %v2400 = vmul.f32 %v2379, %v2081
    %v2401 = vmul.f32 %v2360, %v2380
    %v2402 = vadd.f32 %v2400, %v2401
    %v2403 = vtanh.pop %v2402
    %v2404 = vmul.f32 %v2399, %v2403
    %s2405 = scalar_lea.vmem [#allocation2], 40
    %2406 = vst [vmem:[%s2405] sm:$0xff] %v2404
    %s2407 = smul.u32 6, 4
    %s2408 = smul.addr %s2407, 8
    %s2409 = scalar_lea.vmem [#allocation3], %s2408
    %v2410 = vld [vmem:[%s2409] sm:$0xff]
    %v2411 = vld [vmem:[%s2409 + $0x8] sm:$0xff]
    %v2412 = vld [vmem:[%s2409 + $0x10] sm:$0xff]
    %v2413 = vld [vmem:[%s2409 + $0x18] sm:$0xff]
    %v2414 = vpack.c.bf16 %v2404, %v2404
    %v2415 = vld [vmem:[#allocation12] sm:$0xff]
    %v2416 = vld [vmem:[#allocation12 + $0x8] sm:$0xff]
    %v2417 = vld [vmem:[#allocation12 + $0x10] sm:$0xff]
    %v2418 = vld [vmem:[#allocation12 + $0x18] sm:$0xff]
    %v2419 = vld [vmem:[#allocation12 + $0x20] sm:$0xff]
    %v2420 = vld [vmem:[#allocation12 + $0x28] sm:$0xff]
    %v2421 = vld [vmem:[#allocation12 + $0x30] sm:$0xff]
    %v2422 = vld [vmem:[#allocation12 + $0x38] sm:$0xff]
    %v2423 = vld [vmem:[#allocation12 + $0x40] sm:$0xff]
    %v2424 = vld [vmem:[#allocation12 + $0x48] sm:$0xff]
    %v2425 = vld [vmem:[#allocation12 + $0x50] sm:$0xff]
    %v2426 = vld [vmem:[#allocation12 + $0x58] sm:$0xff]
    %v2427 = vld [vmem:[#allocation12 + $0x60] sm:$0xff]
    %v2428 = vld [vmem:[#allocation12 + $0x68] sm:$0xff]
    %v2429 = vld [vmem:[#allocation12 + $0x70] sm:$0xff]
    %v2430 = vld [vmem:[#allocation12 + $0x78] sm:$0xff]
    %v2431 = vld [vmem:[#allocation12 + $0x80] sm:$0xff]
    %v2432 = vld [vmem:[#allocation12 + $0x88] sm:$0xff]
    %v2433 = vld [vmem:[#allocation12 + $0x90] sm:$0xff]
    %v2434 = vld [vmem:[#allocation12 + $0x98] sm:$0xff]
    %v2435 = vld [vmem:[#allocation12 + $0xa0] sm:$0xff]
    %v2436 = vld [vmem:[#allocation12 + $0xa8] sm:$0xff]
    %v2437 = vld [vmem:[#allocation12 + $0xb0] sm:$0xff]
    %v2438 = vld [vmem:[#allocation12 + $0xb8] sm:$0xff]
    %v2439 = vld [vmem:[#allocation12 + $0xc0] sm:$0xff]
    %v2440 = vld [vmem:[#allocation12 + $0xc8] sm:$0xff]
    %v2441 = vld [vmem:[#allocation12 + $0xd0] sm:$0xff]
    %v2442 = vld [vmem:[#allocation12 + $0xd8] sm:$0xff]
    %v2443 = vld [vmem:[#allocation12 + $0xe0] sm:$0xff]
    %v2444 = vld [vmem:[#allocation12 + $0xe8] sm:$0xff]
    %v2445 = vld [vmem:[#allocation12 + $0xf0] sm:$0xff]
    %v2446 = vld [vmem:[#allocation12 + $0xf8] sm:$0xff]
    %v2479 = vunpack.c.l.b16 %v2415
    %v2480 = vunpack.c.h.b16 %v2415
    %v2481 = vunpack.c.l.b16 %v2416
    %v2482 = vunpack.c.h.b16 %v2416
    %v2483 = vunpack.c.l.b16 %v2417
    %v2484 = vunpack.c.h.b16 %v2417
    %v2485 = vunpack.c.l.b16 %v2418
    %v2486 = vunpack.c.h.b16 %v2418
    %v2487 = vunpack.c.l.b16 %v2419
    %v2488 = vunpack.c.h.b16 %v2419
    %v2489 = vunpack.c.l.b16 %v2420
    %v2490 = vunpack.c.h.b16 %v2420
    %v2491 = vunpack.c.l.b16 %v2421
    %v2492 = vunpack.c.h.b16 %v2421
    %v2493 = vunpack.c.l.b16 %v2422
    %v2494 = vunpack.c.h.b16 %v2422
    %v2495 = vunpack.c.l.b16 %v2423
    %v2496 = vunpack.c.h.b16 %v2423
    %v2497 = vunpack.c.l.b16 %v2424
    %v2498 = vunpack.c.h.b16 %v2424
    %v2499 = vunpack.c.l.b16 %v2425
    %v2500 = vunpack.c.h.b16 %v2425
    %v2501 = vunpack.c.l.b16 %v2426
    %v2502 = vunpack.c.h.b16 %v2426
    %v2503 = vunpack.c.l.b16 %v2427
    %v2504 = vunpack.c.h.b16 %v2427
    %v2505 = vunpack.c.l.b16 %v2428
    %v2506 = vunpack.c.h.b16 %v2428
    %v2507 = vunpack.c.l.b16 %v2429
    %v2508 = vunpack.c.h.b16 %v2429
    %v2509 = vunpack.c.l.b16 %v2430
    %v2510 = vunpack.c.h.b16 %v2430
    %v2511 = vunpack.c.l.b16 %v2431
    %v2512 = vunpack.c.h.b16 %v2431
    %v2513 = vunpack.c.l.b16 %v2432
    %v2514 = vunpack.c.h.b16 %v2432
    %v2515 = vunpack.c.l.b16 %v2433
    %v2516 = vunpack.c.h.b16 %v2433
    %v2517 = vunpack.c.l.b16 %v2434
    %v2518 = vunpack.c.h.b16 %v2434
    %v2519 = vunpack.c.l.b16 %v2435
    %v2520 = vunpack.c.h.b16 %v2435
    %v2521 = vunpack.c.l.b16 %v2436
    %v2522 = vunpack.c.h.b16 %v2436
    %v2523 = vunpack.c.l.b16 %v2437
    %v2524 = vunpack.c.h.b16 %v2437
    %v2525 = vunpack.c.l.b16 %v2438
    %v2526 = vunpack.c.h.b16 %v2438
    %v2527 = vunpack.c.l.b16 %v2439
    %v2528 = vunpack.c.h.b16 %v2439
    %v2529 = vunpack.c.l.b16 %v2440
    %v2530 = vunpack.c.h.b16 %v2440
    %v2531 = vunpack.c.l.b16 %v2441
    %v2532 = vunpack.c.h.b16 %v2441
    %v2533 = vunpack.c.l.b16 %v2442
    %v2534 = vunpack.c.h.b16 %v2442
    %v2535 = vunpack.c.l.b16 %v2443
    %v2536 = vunpack.c.h.b16 %v2443
    %v2537 = vunpack.c.l.b16 %v2444
    %v2538 = vunpack.c.h.b16 %v2444
    %v2539 = vunpack.c.l.b16 %v2445
    %v2540 = vunpack.c.h.b16 %v2445
    %v2541 = vunpack.c.l.b16 %v2446
    %v2542 = vunpack.c.h.b16 %v2446
    %v2543 = vpack.c.b16 %v2483, %v2479
    %v2544 = vpack.c.b16 %v2484, %v2480
    %v2545 = vpack.c.b16 %v2485, %v2481
    %v2546 = vpack.c.b16 %v2486, %v2482
    %v2547 = vpack.c.b16 %v2491, %v2487
    %v2548 = vpack.c.b16 %v2492, %v2488
    %v2549 = vpack.c.b16 %v2493, %v2489
    %v2550 = vpack.c.b16 %v2494, %v2490
    %v2551 = vpack.c.b16 %v2499, %v2495
    %v2552 = vpack.c.b16 %v2500, %v2496
    %v2553 = vpack.c.b16 %v2501, %v2497
    %v2554 = vpack.c.b16 %v2502, %v2498
    %v2555 = vpack.c.b16 %v2507, %v2503
    %v2556 = vpack.c.b16 %v2508, %v2504
    %v2557 = vpack.c.b16 %v2509, %v2505
    %v2558 = vpack.c.b16 %v2510, %v2506
    %v2559 = vpack.c.b16 %v2515, %v2511
    %v2560 = vpack.c.b16 %v2516, %v2512
    %v2561 = vpack.c.b16 %v2517, %v2513
    %v2562 = vpack.c.b16 %v2518, %v2514
    %v2563 = vpack.c.b16 %v2523, %v2519
    %v2564 = vpack.c.b16 %v2524, %v2520
    %v2565 = vpack.c.b16 %v2525, %v2521
    %v2566 = vpack.c.b16 %v2526, %v2522
    %v2567 = vpack.c.b16 %v2531, %v2527
    %v2568 = vpack.c.b16 %v2532, %v2528
    %v2569 = vpack.c.b16 %v2533, %v2529
    %v2570 = vpack.c.b16 %v2534, %v2530
    %v2571 = vpack.c.b16 %v2539, %v2535
    %v2572 = vpack.c.b16 %v2540, %v2536
    %v2573 = vpack.c.b16 %v2541, %v2537
    %v2574 = vpack.c.b16 %v2542, %v2538
    %2607 = vmatpush.bf16.msra.mxu0 %v2571
    %2608 = vmatpush.bf16.msra.mxu0 %v2567
    %2609 = vmatpush.bf16.msra.mxu0 %v2563
    %2610 = vmatpush.bf16.msra.mxu0 %v2559
    %2611 = vmatpush.bf16.msra.mxu0 %v2555
    %2612 = vmatpush.bf16.msra.mxu0 %v2551
    %2613 = vmatpush.bf16.msra.mxu0 %v2547
    %2614 = vmatpush.bf16.msra.mxu0 %v2543
    %2615 = vmatmul.bf16.gmra.mxu0 %v2414
    %v2616 = vpop.f32.mrf.mxu0
    %v2617 = vadd.f32 0.0, %v2616
    %v2618 = vpop.f32.mrf.mxu0
    %2619 = vdwg.mxu0
    %2620 = vmatpush.bf16.msra.mxu0 %v2572
    %2621 = vmatpush.bf16.msra.mxu0 %v2568
    %2622 = vmatpush.bf16.msra.mxu0 %v2564
    %2623 = vmatpush.bf16.msra.mxu0 %v2560
    %2624 = vmatpush.bf16.msra.mxu0 %v2556
    %2625 = vmatpush.bf16.msra.mxu0 %v2552
    %2626 = vmatpush.bf16.msra.mxu0 %v2548
    %2627 = vmatpush.bf16.msra.mxu0 %v2544
    %2628 = vmatmul.bf16.gmra.mxu0 %v2414
    %v2629 = vpop.f32.mrf.mxu0
    %v2630 = vadd.f32 0.0, %v2629
    %v2631 = vpop.f32.mrf.mxu0
    %2632 = vdwg.mxu0
    %2633 = vmatpush.bf16.msra.mxu0 %v2573
    %2634 = vmatpush.bf16.msra.mxu0 %v2569
    %2635 = vmatpush.bf16.msra.mxu0 %v2565
    %2636 = vmatpush.bf16.msra.mxu0 %v2561
    %2637 = vmatpush.bf16.msra.mxu0 %v2557
    %2638 = vmatpush.bf16.msra.mxu0 %v2553
    %2639 = vmatpush.bf16.msra.mxu0 %v2549
    %2640 = vmatpush.bf16.msra.mxu0 %v2545
    %2641 = vmatmul.bf16.gmra.mxu0 %v2414
    %v2642 = vpop.f32.mrf.mxu0
    %v2643 = vadd.f32 0.0, %v2642
    %v2644 = vpop.f32.mrf.mxu0
    %2645 = vdwg.mxu0
    %2646 = vmatpush.bf16.msra.mxu0 %v2574
    %2647 = vmatpush.bf16.msra.mxu0 %v2570
    %2648 = vmatpush.bf16.msra.mxu0 %v2566
    %2649 = vmatpush.bf16.msra.mxu0 %v2562
    %2650 = vmatpush.bf16.msra.mxu0 %v2558
    %2651 = vmatpush.bf16.msra.mxu0 %v2554
    %2652 = vmatpush.bf16.msra.mxu0 %v2550
    %2653 = vmatpush.bf16.msra.mxu0 %v2546
    %2654 = vmatmul.bf16.gmra.mxu0 %v2414
    %v2655 = vpop.f32.mrf.mxu0
    %v2656 = vadd.f32 0.0, %v2655
    %v2657 = vpop.f32.mrf.mxu0
    %2658 = vdwg.mxu0
    %v2659 = vadd.f32 %v2410, %v2617
    %v2660 = vadd.f32 %v2411, %v2630
    %v2661 = vadd.f32 %v2412, %v2643
    %v2662 = vadd.f32 %v2413, %v2656
    %v2663 = vxor.u32 %v2659, 2147483648
    %v2664 = vmul.f32 %v2663, 1.442695
    %v2665 = vpow.pop %v2664
    %v2666 = vadd.f32 %v2665, 1.0
    %v2667 = vrcp.pop %v2666
    %v2668 = vmul.f32 %v2666, %v2667
    %v2669 = vsub.f32 1.0, %v2668
    %v2670 = vmul.f32 %v2667, %v2669
    %v2671 = vadd.f32 %v2667, %v2670
    %vm2672 = vweird.f32 %v2666
    %vm2673 = vweird.f32 %v2667
    %vm2674 = vmor %vm2672, %vm2673
    %v2675 = vsel %vm2674, %v2667, %v2671
    %v2676 = vand.u32 2147483647, %v2666
    %vm2677 = vcmp.eq.f32.partialorder %v2676, 8.507059e+37
    %v2678 = vand.u32 %v2666, 2147483648
    %v2679 = vor.u32 1.1754944e-38, %v2678
    %v2680 = vsel %vm2677, %v2679, %v2675
    %v2681 = vmul.f32 1.0, %v2680
    %v2682 = vxor.u32 %v2660, 2147483648
    %v2683 = vmul.f32 %v2682, 1.442695
    %v2684 = vpow.pop %v2683
    %v2685 = vadd.f32 %v2684, 1.0
    %v2686 = vrcp.pop %v2685
    %v2687 = vmul.f32 %v2685, %v2686
    %v2688 = vsub.f32 1.0, %v2687
    %v2689 = vmul.f32 %v2686, %v2688
    %v2690 = vadd.f32 %v2686, %v2689
    %vm2691 = vweird.f32 %v2685
    %vm2692 = vweird.f32 %v2686
    %vm2693 = vmor %vm2691, %vm2692
    %v2694 = vsel %vm2693, %v2686, %v2690
    %v2695 = vand.u32 2147483647, %v2685
    %vm2696 = vcmp.eq.f32.partialorder %v2695, 8.507059e+37
    %v2697 = vand.u32 %v2685, 2147483648
    %v2698 = vor.u32 1.1754944e-38, %v2697
    %v2699 = vsel %vm2696, %v2698, %v2694
    %v2700 = vmul.f32 1.0, %v2699
    %v2701 = vtanh.pop %v2661
    %v2702 = vxor.u32 %v2662, 2147483648
    %v2703 = vmul.f32 %v2702, 1.442695
    %v2704 = vpow.pop %v2703
    %v2705 = vadd.f32 %v2704, 1.0
    %v2706 = vrcp.pop %v2705
    %v2707 = vmul.f32 %v2705, %v2706
    %v2708 = vsub.f32 1.0, %v2707
    %v2709 = vmul.f32 %v2706, %v2708
    %v2710 = vadd.f32 %v2706, %v2709
    %vm2711 = vweird.f32 %v2705
    %vm2712 = vweird.f32 %v2706
    %vm2713 = vmor %vm2711, %vm2712
    %v2714 = vsel %vm2713, %v2706, %v2710
    %v2715 = vand.u32 2147483647, %v2705
    %vm2716 = vcmp.eq.f32.partialorder %v2715, 8.507059e+37
    %v2717 = vand.u32 %v2705, 2147483648
    %v2718 = vor.u32 1.1754944e-38, %v2717
    %v2719 = vsel %vm2716, %v2718, %v2714
    %v2720 = vmul.f32 1.0, %v2719
    %v2721 = vmul.f32 %v2700, %v2402
    %v2722 = vmul.f32 %v2681, %v2701
    %v2723 = vadd.f32 %v2721, %v2722
    %v2724 = vtanh.pop %v2723
    %v2725 = vmul.f32 %v2720, %v2724
    %s2726 = scalar_lea.vmem [#allocation2], 48
    %2727 = vst [vmem:[%s2726] sm:$0xff] %v2725
    %s2728 = smul.u32 7, 4
    %s2729 = smul.addr %s2728, 8
    %s2730 = scalar_lea.vmem [#allocation3], %s2729
    %v2731 = vld [vmem:[%s2730] sm:$0xff]
    %v2732 = vld [vmem:[%s2730 + $0x8] sm:$0xff]
    %v2733 = vld [vmem:[%s2730 + $0x10] sm:$0xff]
    %v2734 = vld [vmem:[%s2730 + $0x18] sm:$0xff]
    %v2735 = vpack.c.bf16 %v2725, %v2725
    %v2736 = vld [vmem:[#allocation12] sm:$0xff]
    %v2737 = vld [vmem:[#allocation12 + $0x8] sm:$0xff]
    %v2738 = vld [vmem:[#allocation12 + $0x10] sm:$0xff]
    %v2739 = vld [vmem:[#allocation12 + $0x18] sm:$0xff]
    %v2740 = vld [vmem:[#allocation12 + $0x20] sm:$0xff]
    %v2741 = vld [vmem:[#allocation12 + $0x28] sm:$0xff]
    %v2742 = vld [vmem:[#allocation12 + $0x30] sm:$0xff]
    %v2743 = vld [vmem:[#allocation12 + $0x38] sm:$0xff]
    %v2744 = vld [vmem:[#allocation12 + $0x40] sm:$0xff]
    %v2745 = vld [vmem:[#allocation12 + $0x48] sm:$0xff]
    %v2746 = vld [vmem:[#allocation12 + $0x50] sm:$0xff]
    %v2747 = vld [vmem:[#allocation12 + $0x58] sm:$0xff]
    %v2748 = vld [vmem:[#allocation12 + $0x60] sm:$0xff]
    %v2749 = vld [vmem:[#allocation12 + $0x68] sm:$0xff]
    %v2750 = vld [vmem:[#allocation12 + $0x70] sm:$0xff]
    %v2751 = vld [vmem:[#allocation12 + $0x78] sm:$0xff]
    %v2752 = vld [vmem:[#allocation12 + $0x80] sm:$0xff]
    %v2753 = vld [vmem:[#allocation12 + $0x88] sm:$0xff]
    %v2754 = vld [vmem:[#allocation12 + $0x90] sm:$0xff]
    %v2755 = vld [vmem:[#allocation12 + $0x98] sm:$0xff]
    %v2756 = vld [vmem:[#allocation12 + $0xa0] sm:$0xff]
    %v2757 = vld [vmem:[#allocation12 + $0xa8] sm:$0xff]
    %v2758 = vld [vmem:[#allocation12 + $0xb0] sm:$0xff]
    %v2759 = vld [vmem:[#allocation12 + $0xb8] sm:$0xff]
    %v2760 = vld [vmem:[#allocation12 + $0xc0] sm:$0xff]
    %v2761 = vld [vmem:[#allocation12 + $0xc8] sm:$0xff]
    %v2762 = vld [vmem:[#allocation12 + $0xd0] sm:$0xff]
    %v2763 = vld [vmem:[#allocation12 + $0xd8] sm:$0xff]
    %v2764 = vld [vmem:[#allocation12 + $0xe0] sm:$0xff]
    %v2765 = vld [vmem:[#allocation12 + $0xe8] sm:$0xff]
    %v2766 = vld [vmem:[#allocation12 + $0xf0] sm:$0xff]
    %v2767 = vld [vmem:[#allocation12 + $0xf8] sm:$0xff]
    %v2800 = vunpack.c.l.b16 %v2736
    %v2801 = vunpack.c.h.b16 %v2736
    %v2802 = vunpack.c.l.b16 %v2737
    %v2803 = vunpack.c.h.b16 %v2737
    %v2804 = vunpack.c.l.b16 %v2738
    %v2805 = vunpack.c.h.b16 %v2738
    %v2806 = vunpack.c.l.b16 %v2739
    %v2807 = vunpack.c.h.b16 %v2739
    %v2808 = vunpack.c.l.b16 %v2740
    %v2809 = vunpack.c.h.b16 %v2740
    %v2810 = vunpack.c.l.b16 %v2741
    %v2811 = vunpack.c.h.b16 %v2741
    %v2812 = vunpack.c.l.b16 %v2742
    %v2813 = vunpack.c.h.b16 %v2742
    %v2814 = vunpack.c.l.b16 %v2743
    %v2815 = vunpack.c.h.b16 %v2743
    %v2816 = vunpack.c.l.b16 %v2744
    %v2817 = vunpack.c.h.b16 %v2744
    %v2818 = vunpack.c.l.b16 %v2745
    %v2819 = vunpack.c.h.b16 %v2745
    %v2820 = vunpack.c.l.b16 %v2746
    %v2821 = vunpack.c.h.b16 %v2746
    %v2822 = vunpack.c.l.b16 %v2747
    %v2823 = vunpack.c.h.b16 %v2747
    %v2824 = vunpack.c.l.b16 %v2748
    %v2825 = vunpack.c.h.b16 %v2748
    %v2826 = vunpack.c.l.b16 %v2749
    %v2827 = vunpack.c.h.b16 %v2749
    %v2828 = vunpack.c.l.b16 %v2750
    %v2829 = vunpack.c.h.b16 %v2750
    %v2830 = vunpack.c.l.b16 %v2751
    %v2831 = vunpack.c.h.b16 %v2751
    %v2832 = vunpack.c.l.b16 %v2752
    %v2833 = vunpack.c.h.b16 %v2752
    %v2834 = vunpack.c.l.b16 %v2753
    %v2835 = vunpack.c.h.b16 %v2753
    %v2836 = vunpack.c.l.b16 %v2754
    %v2837 = vunpack.c.h.b16 %v2754
    %v2838 = vunpack.c.l.b16 %v2755
    %v2839 = vunpack.c.h.b16 %v2755
    %v2840 = vunpack.c.l.b16 %v2756
    %v2841 = vunpack.c.h.b16 %v2756
    %v2842 = vunpack.c.l.b16 %v2757
    %v2843 = vunpack.c.h.b16 %v2757
    %v2844 = vunpack.c.l.b16 %v2758
    %v2845 = vunpack.c.h.b16 %v2758
    %v2846 = vunpack.c.l.b16 %v2759
    %v2847 = vunpack.c.h.b16 %v2759
    %v2848 = vunpack.c.l.b16 %v2760
    %v2849 = vunpack.c.h.b16 %v2760
    %v2850 = vunpack.c.l.b16 %v2761
    %v2851 = vunpack.c.h.b16 %v2761
    %v2852 = vunpack.c.l.b16 %v2762
    %v2853 = vunpack.c.h.b16 %v2762
    %v2854 = vunpack.c.l.b16 %v2763
    %v2855 = vunpack.c.h.b16 %v2763
    %v2856 = vunpack.c.l.b16 %v2764
    %v2857 = vunpack.c.h.b16 %v2764
    %v2858 = vunpack.c.l.b16 %v2765
    %v2859 = vunpack.c.h.b16 %v2765
    %v2860 = vunpack.c.l.b16 %v2766
    %v2861 = vunpack.c.h.b16 %v2766
    %v2862 = vunpack.c.l.b16 %v2767
    %v2863 = vunpack.c.h.b16 %v2767
    %v2864 = vpack.c.b16 %v2804, %v2800
    %v2865 = vpack.c.b16 %v2805, %v2801
    %v2866 = vpack.c.b16 %v2806, %v2802
    %v2867 = vpack.c.b16 %v2807, %v2803
    %v2868 = vpack.c.b16 %v2812, %v2808
    %v2869 = vpack.c.b16 %v2813, %v2809
    %v2870 = vpack.c.b16 %v2814, %v2810
    %v2871 = vpack.c.b16 %v2815, %v2811
    %v2872 = vpack.c.b16 %v2820, %v2816
    %v2873 = vpack.c.b16 %v2821, %v2817
    %v2874 = vpack.c.b16 %v2822, %v2818
    %v2875 = vpack.c.b16 %v2823, %v2819
    %v2876 = vpack.c.b16 %v2828, %v2824
    %v2877 = vpack.c.b16 %v2829, %v2825
    %v2878 = vpack.c.b16 %v2830, %v2826
    %v2879 = vpack.c.b16 %v2831, %v2827
    %v2880 = vpack.c.b16 %v2836, %v2832
    %v2881 = vpack.c.b16 %v2837, %v2833
    %v2882 = vpack.c.b16 %v2838, %v2834
    %v2883 = vpack.c.b16 %v2839, %v2835
    %v2884 = vpack.c.b16 %v2844, %v2840
    %v2885 = vpack.c.b16 %v2845, %v2841
    %v2886 = vpack.c.b16 %v2846, %v2842
    %v2887 = vpack.c.b16 %v2847, %v2843
    %v2888 = vpack.c.b16 %v2852, %v2848
    %v2889 = vpack.c.b16 %v2853, %v2849
    %v2890 = vpack.c.b16 %v2854, %v2850
    %v2891 = vpack.c.b16 %v2855, %v2851
    %v2892 = vpack.c.b16 %v2860, %v2856
    %v2893 = vpack.c.b16 %v2861, %v2857
    %v2894 = vpack.c.b16 %v2862, %v2858
    %v2895 = vpack.c.b16 %v2863, %v2859
    %2928 = vmatpush.bf16.msra.mxu0 %v2892
    %2929 = vmatpush.bf16.msra.mxu0 %v2888
    %2930 = vmatpush.bf16.msra.mxu0 %v2884
    %2931 = vmatpush.bf16.msra.mxu0 %v2880
    %2932 = vmatpush.bf16.msra.mxu0 %v2876
    %2933 = vmatpush.bf16.msra.mxu0 %v2872
    %2934 = vmatpush.bf16.msra.mxu0 %v2868
    %2935 = vmatpush.bf16.msra.mxu0 %v2864
    %2936 = vmatmul.bf16.gmra.mxu0 %v2735
    %v2937 = vpop.f32.mrf.mxu0
    %v2938 = vadd.f32 0.0, %v2937
    %v2939 = vpop.f32.mrf.mxu0
    %2940 = vdwg.mxu0
    %2941 = vmatpush.bf16.msra.mxu0 %v2893
    %2942 = vmatpush.bf16.msra.mxu0 %v2889
    %2943 = vmatpush.bf16.msra.mxu0 %v2885
    %2944 = vmatpush.bf16.msra.mxu0 %v2881
    %2945 = vmatpush.bf16.msra.mxu0 %v2877
    %2946 = vmatpush.bf16.msra.mxu0 %v2873
    %2947 = vmatpush.bf16.msra.mxu0 %v2869
    %2948 = vmatpush.bf16.msra.mxu0 %v2865
    %2949 = vmatmul.bf16.gmra.mxu0 %v2735
    %v2950 = vpop.f32.mrf.mxu0
    %v2951 = vadd.f32 0.0, %v2950
    %v2952 = vpop.f32.mrf.mxu0
    %2953 = vdwg.mxu0
    %2954 = vmatpush.bf16.msra.mxu0 %v2894
    %2955 = vmatpush.bf16.msra.mxu0 %v2890
    %2956 = vmatpush.bf16.msra.mxu0 %v2886
    %2957 = vmatpush.bf16.msra.mxu0 %v2882
    %2958 = vmatpush.bf16.msra.mxu0 %v2878
    %2959 = vmatpush.bf16.msra.mxu0 %v2874
    %2960 = vmatpush.bf16.msra.mxu0 %v2870
    %2961 = vmatpush.bf16.msra.mxu0 %v2866
    %2962 = vmatmul.bf16.gmra.mxu0 %v2735
    %v2963 = vpop.f32.mrf.mxu0
    %v2964 = vadd.f32 0.0, %v2963
    %v2965 = vpop.f32.mrf.mxu0
    %2966 = vdwg.mxu0
    %2967 = vmatpush.bf16.msra.mxu0 %v2895
    %2968 = vmatpush.bf16.msra.mxu0 %v2891
    %2969 = vmatpush.bf16.msra.mxu0 %v2887
    %2970 = vmatpush.bf16.msra.mxu0 %v2883
    %2971 = vmatpush.bf16.msra.mxu0 %v2879
    %2972 = vmatpush.bf16.msra.mxu0 %v2875
    %2973 = vmatpush.bf16.msra.mxu0 %v2871
    %2974 = vmatpush.bf16.msra.mxu0 %v2867
    %2975 = vmatmul.bf16.gmra.mxu0 %v2735
    %v2976 = vpop.f32.mrf.mxu0
    %v2977 = vadd.f32 0.0, %v2976
    %v2978 = vpop.f32.mrf.mxu0
    %2979 = vdwg.mxu0
    %v2980 = vadd.f32 %v2731, %v2938
    %v2981 = vadd.f32 %v2732, %v2951
    %v2982 = vadd.f32 %v2733, %v2964
    %v2983 = vadd.f32 %v2734, %v2977
    %v2984 = vxor.u32 %v2980, 2147483648
    %v2985 = vmul.f32 %v2984, 1.442695
    %v2986 = vpow.pop %v2985
    %v2987 = vadd.f32 %v2986, 1.0
    %v2988 = vrcp.pop %v2987
    %v2989 = vmul.f32 %v2987, %v2988
    %v2990 = vsub.f32 1.0, %v2989
    %v2991 = vmul.f32 %v2988, %v2990
    %v2992 = vadd.f32 %v2988, %v2991
    %vm2993 = vweird.f32 %v2987
    %vm2994 = vweird.f32 %v2988
    %vm2995 = vmor %vm2993, %vm2994
    %v2996 = vsel %vm2995, %v2988, %v2992
    %v2997 = vand.u32 2147483647, %v2987
    %vm2998 = vcmp.eq.f32.partialorder %v2997, 8.507059e+37
    %v2999 = vand.u32 %v2987, 2147483648
    %v3000 = vor.u32 1.1754944e-38, %v2999
    %v3001 = vsel %vm2998, %v3000, %v2996
    %v3002 = vmul.f32 1.0, %v3001
    %v3003 = vxor.u32 %v2981, 2147483648
    %v3004 = vmul.f32 %v3003, 1.442695
    %v3005 = vpow.pop %v3004
    %v3006 = vadd.f32 %v3005, 1.0
    %v3007 = vrcp.pop %v3006
    %v3008 = vmul.f32 %v3006, %v3007
    %v3009 = vsub.f32 1.0, %v3008
    %v3010 = vmul.f32 %v3007, %v3009
    %v3011 = vadd.f32 %v3007, %v3010
    %vm3012 = vweird.f32 %v3006
    %vm3013 = vweird.f32 %v3007
    %vm3014 = vmor %vm3012, %vm3013
    %v3015 = vsel %vm3014, %v3007, %v3011
    %v3016 = vand.u32 2147483647, %v3006
    %vm3017 = vcmp.eq.f32.partialorder %v3016, 8.507059e+37
    %v3018 = vand.u32 %v3006, 2147483648
    %v3019 = vor.u32 1.1754944e-38, %v3018
    %v3020 = vsel %vm3017, %v3019, %v3015
    %v3021 = vmul.f32 1.0, %v3020
    %v3022 = vtanh.pop %v2982
    %v3023 = vxor.u32 %v2983, 2147483648
    %v3024 = vmul.f32 %v3023, 1.442695
    %v3025 = vpow.pop %v3024
    %v3026 = vadd.f32 %v3025, 1.0
    %v3027 = vrcp.pop %v3026
    %v3028 = vmul.f32 %v3026, %v3027
    %v3029 = vsub.f32 1.0, %v3028
    %v3030 = vmul.f32 %v3027, %v3029
    %v3031 = vadd.f32 %v3027, %v3030
    %vm3032 = vweird.f32 %v3026
    %vm3033 = vweird.f32 %v3027
    %vm3034 = vmor %vm3032, %vm3033
    %v3035 = vsel %vm3034, %v3027, %v3031
    %v3036 = vand.u32 2147483647, %v3026
    %vm3037 = vcmp.eq.f32.partialorder %v3036, 8.507059e+37
    %v3038 = vand.u32 %v3026, 2147483648
    %v3039 = vor.u32 1.1754944e-38, %v3038
    %v3040 = vsel %vm3037, %v3039, %v3035
    %v3041 = vmul.f32 1.0, %v3040
    %v3042 = vmul.f32 %v3021, %v2723
    %v3043 = vmul.f32 %v3002, %v3022
    %v3044 = vadd.f32 %v3042, %v3043
    %v3045 = vtanh.pop %v3044
    %v3046 = vmul.f32 %v3041, %v3045
    %s3047 = scalar_lea.vmem [#allocation2], 56
    %3048 = vst [vmem:[%s3047] sm:$0xff] %v3046
    %3049 = vst [vmem:[#allocation22] sm:$0xff] %v3046
    %3050 = vst [vmem:[#allocation24] sm:$0xff] %v3044
    %v3051 = vld [vmem:[#allocation2] sm:$0xff]
    %v3052 = vld [vmem:[#allocation2 + $0x8] sm:$0xff]
    %v3053 = vld [vmem:[#allocation2 + $0x10] sm:$0xff]
    %v3054 = vld [vmem:[#allocation2 + $0x18] sm:$0xff]
    %v3055 = vld [vmem:[#allocation2 + $0x20] sm:$0xff]
    %v3056 = vld [vmem:[#allocation2 + $0x28] sm:$0xff]
    %v3057 = vld [vmem:[#allocation2 + $0x30] sm:$0xff]
    %v3058 = vld [vmem:[#allocation2 + $0x38] sm:$0xff]
    %v3059 = vpack.c.bf16 %v3052, %v3051
    %v3060 = vpack.c.bf16 %v3054, %v3053
    %v3061 = vpack.c.bf16 %v3056, %v3055
    %v3062 = vpack.c.bf16 %v3058, %v3057
    %v3063 = vld [vmem:[#allocation13] sm:$0xff]
    %v3064 = vld [vmem:[#allocation13 + $0x8] sm:$0xff]
    %v3065 = vld [vmem:[#allocation13 + $0x10] sm:$0xff]
    %v3066 = vld [vmem:[#allocation13 + $0x18] sm:$0xff]
    %v3067 = vld [vmem:[#allocation13 + $0x20] sm:$0xff]
    %v3068 = vld [vmem:[#allocation13 + $0x28] sm:$0xff]
    %v3069 = vld [vmem:[#allocation13 + $0x30] sm:$0xff]
    %v3070 = vld [vmem:[#allocation13 + $0x38] sm:$0xff]
    %v3071 = vld [vmem:[#allocation13 + $0x40] sm:$0xff]
    %v3072 = vld [vmem:[#allocation13 + $0x48] sm:$0xff]
    %v3073 = vld [vmem:[#allocation13 + $0x50] sm:$0xff]
    %v3074 = vld [vmem:[#allocation13 + $0x58] sm:$0xff]
    %v3075 = vld [vmem:[#allocation13 + $0x60] sm:$0xff]
    %v3076 = vld [vmem:[#allocation13 + $0x68] sm:$0xff]
    %v3077 = vld [vmem:[#allocation13 + $0x70] sm:$0xff]
    %v3078 = vld [vmem:[#allocation13 + $0x78] sm:$0xff]
    %v3079 = vld [vmem:[#allocation13 + $0x80] sm:$0xff]
    %v3080 = vld [vmem:[#allocation13 + $0x88] sm:$0xff]
    %v3081 = vld [vmem:[#allocation13 + $0x90] sm:$0xff]
    %v3082 = vld [vmem:[#allocation13 + $0x98] sm:$0xff]
    %v3083 = vld [vmem:[#allocation13 + $0xa0] sm:$0xff]
    %v3084 = vld [vmem:[#allocation13 + $0xa8] sm:$0xff]
    %v3085 = vld [vmem:[#allocation13 + $0xb0] sm:$0xff]
    %v3086 = vld [vmem:[#allocation13 + $0xb8] sm:$0xff]
    %v3087 = vld [vmem:[#allocation13 + $0xc0] sm:$0xff]
    %v3088 = vld [vmem:[#allocation13 + $0xc8] sm:$0xff]
    %v3089 = vld [vmem:[#allocation13 + $0xd0] sm:$0xff]
    %v3090 = vld [vmem:[#allocation13 + $0xd8] sm:$0xff]
    %v3091 = vld [vmem:[#allocation13 + $0xe0] sm:$0xff]
    %v3092 = vld [vmem:[#allocation13 + $0xe8] sm:$0xff]
    %v3093 = vld [vmem:[#allocation13 + $0xf0] sm:$0xff]
    %v3094 = vld [vmem:[#allocation13 + $0xf8] sm:$0xff]
    %v3095 = vld [vmem:[#allocation16] sm:$0xf]
    %v3097 = vperm.slane %v3095, 0
    %v3098 = vperm.slane %v3095, 1
    %v3099 = vperm.slane %v3095, 2
    %v3100 = vperm.slane %v3095, 3
    %v3137 = vunpack.c.l.b16 %v3063
    %v3138 = vunpack.c.h.b16 %v3063
    %v3139 = vunpack.c.l.b16 %v3064
    %v3140 = vunpack.c.h.b16 %v3064
    %v3141 = vunpack.c.l.b16 %v3065
    %v3142 = vunpack.c.h.b16 %v3065
    %v3143 = vunpack.c.l.b16 %v3066
    %v3144 = vunpack.c.h.b16 %v3066
    %v3145 = vunpack.c.l.b16 %v3067
    %v3146 = vunpack.c.h.b16 %v3067
    %v3147 = vunpack.c.l.b16 %v3068
    %v3148 = vunpack.c.h.b16 %v3068
    %v3149 = vunpack.c.l.b16 %v3069
    %v3150 = vunpack.c.h.b16 %v3069
    %v3151 = vunpack.c.l.b16 %v3070
    %v3152 = vunpack.c.h.b16 %v3070
    %v3153 = vunpack.c.l.b16 %v3071
    %v3154 = vunpack.c.h.b16 %v3071
    %v3155 = vunpack.c.l.b16 %v3072
    %v3156 = vunpack.c.h.b16 %v3072
    %v3157 = vunpack.c.l.b16 %v3073
    %v3158 = vunpack.c.h.b16 %v3073
    %v3159 = vunpack.c.l.b16 %v3074
    %v3160 = vunpack.c.h.b16 %v3074
    %v3161 = vunpack.c.l.b16 %v3075
    %v3162 = vunpack.c.h.b16 %v3075
    %v3163 = vunpack.c.l.b16 %v3076
    %v3164 = vunpack.c.h.b16 %v3076
    %v3165 = vunpack.c.l.b16 %v3077
    %v3166 = vunpack.c.h.b16 %v3077
    %v3167 = vunpack.c.l.b16 %v3078
    %v3168 = vunpack.c.h.b16 %v3078
    %v3169 = vunpack.c.l.b16 %v3079
    %v3170 = vunpack.c.h.b16 %v3079
    %v3171 = vunpack.c.l.b16 %v3080
    %v3172 = vunpack.c.h.b16 %v3080
    %v3173 = vunpack.c.l.b16 %v3081
    %v3174 = vunpack.c.h.b16 %v3081
    %v3175 = vunpack.c.l.b16 %v3082
    %v3176 = vunpack.c.h.b16 %v3082
    %v3177 = vunpack.c.l.b16 %v3083
    %v3178 = vunpack.c.h.b16 %v3083
    %v3179 = vunpack.c.l.b16 %v3084
    %v3180 = vunpack.c.h.b16 %v3084
    %v3181 = vunpack.c.l.b16 %v3085
    %v3182 = vunpack.c.h.b16 %v3085
    %v3183 = vunpack.c.l.b16 %v3086
    %v3184 = vunpack.c.h.b16 %v3086
    %v3185 = vunpack.c.l.b16 %v3087
    %v3186 = vunpack.c.h.b16 %v3087
    %v3187 = vunpack.c.l.b16 %v3088
    %v3188 = vunpack.c.h.b16 %v3088
    %v3189 = vunpack.c.l.b16 %v3089
    %v3190 = vunpack.c.h.b16 %v3089
    %v3191 = vunpack.c.l.b16 %v3090
    %v3192 = vunpack.c.h.b16 %v3090
    %v3193 = vunpack.c.l.b16 %v3091
    %v3194 = vunpack.c.h.b16 %v3091
    %v3195 = vunpack.c.l.b16 %v3092
    %v3196 = vunpack.c.h.b16 %v3092
    %v3197 = vunpack.c.l.b16 %v3093
    %v3198 = vunpack.c.h.b16 %v3093
    %v3199 = vunpack.c.l.b16 %v3094
    %v3200 = vunpack.c.h.b16 %v3094
    %v3201 = vpack.c.b16 %v3141, %v3137
    %v3202 = vpack.c.b16 %v3142, %v3138
    %v3203 = vpack.c.b16 %v3143, %v3139
    %v3204 = vpack.c.b16 %v3144, %v3140
    %v3205 = vpack.c.b16 %v3149, %v3145
    %v3206 = vpack.c.b16 %v3150, %v3146
    %v3207 = vpack.c.b16 %v3151, %v3147
    %v3208 = vpack.c.b16 %v3152, %v3148
    %v3209 = vpack.c.b16 %v3157, %v3153
    %v3210 = vpack.c.b16 %v3158, %v3154
    %v3211 = vpack.c.b16 %v3159, %v3155
    %v3212 = vpack.c.b16 %v3160, %v3156
    %v3213 = vpack.c.b16 %v3165, %v3161
    %v3214 = vpack.c.b16 %v3166, %v3162
    %v3215 = vpack.c.b16 %v3167, %v3163
    %v3216 = vpack.c.b16 %v3168, %v3164
    %v3217 = vpack.c.b16 %v3173, %v3169
    %v3218 = vpack.c.b16 %v3174, %v3170
    %v3219 = vpack.c.b16 %v3175, %v3171
    %v3220 = vpack.c.b16 %v3176, %v3172
    %v3221 = vpack.c.b16 %v3181, %v3177
    %v3222 = vpack.c.b16 %v3182, %v3178
    %v3223 = vpack.c.b16 %v3183, %v3179
    %v3224 = vpack.c.b16 %v3184, %v3180
    %v3225 = vpack.c.b16 %v3189, %v3185
    %v3226 = vpack.c.b16 %v3190, %v3186
    %v3227 = vpack.c.b16 %v3191, %v3187
    %v3228 = vpack.c.b16 %v3192, %v3188
    %v3229 = vpack.c.b16 %v3197, %v3193
    %v3230 = vpack.c.b16 %v3198, %v3194
    %v3231 = vpack.c.b16 %v3199, %v3195
    %v3232 = vpack.c.b16 %v3200, %v3196
    %3265 = vmatpush.bf16.msra.mxu0 %v3229
    %3266 = vmatpush.bf16.msra.mxu0 %v3225
    %3267 = vmatpush.bf16.msra.mxu0 %v3221
    %3268 = vmatpush.bf16.msra.mxu0 %v3217
    %3269 = vmatpush.bf16.msra.mxu0 %v3213
    %3270 = vmatpush.bf16.msra.mxu0 %v3209
    %3271 = vmatpush.bf16.msra.mxu0 %v3205
    %3272 = vmatpush.bf16.msra.mxu0 %v3201
    %3273 = vmatmul.bf16.gmra.mxu0 %v3059
    %v3274 = vpop.f32.mrf.mxu0
    %v3275 = vadd.f32 %v3097, %v3274
    %v3276 = vpop.f32.mrf.mxu0
    %v3277 = vadd.f32 %v3097, %v3276
    %3278 = vmatmul.bf16.gmra.mxu0 %v3060
    %v3279 = vpop.f32.mrf.mxu0
    %v3280 = vadd.f32 %v3097, %v3279
    %v3281 = vpop.f32.mrf.mxu0
    %v3282 = vadd.f32 %v3097, %v3281
    %3283 = vmatmul.bf16.gmra.mxu0 %v3061
    %v3284 = vpop.f32.mrf.mxu0
    %v3285 = vadd.f32 %v3097, %v3284
    %v3286 = vpop.f32.mrf.mxu0
    %v3287 = vadd.f32 %v3097, %v3286
    %3288 = vmatmul.bf16.gmra.mxu0 %v3062
    %v3289 = vpop.f32.mrf.mxu0
    %v3290 = vadd.f32 %v3097, %v3289
    %v3291 = vpop.f32.mrf.mxu0
    %v3292 = vadd.f32 %v3097, %v3291
    %3293 = vdwg.mxu0
    %3294 = vmatpush.bf16.msra.mxu0 %v3230
    %3295 = vmatpush.bf16.msra.mxu0 %v3226
    %3296 = vmatpush.bf16.msra.mxu0 %v3222
    %3297 = vmatpush.bf16.msra.mxu0 %v3218
    %3298 = vmatpush.bf16.msra.mxu0 %v3214
    %3299 = vmatpush.bf16.msra.mxu0 %v3210
    %3300 = vmatpush.bf16.msra.mxu0 %v3206
    %3301 = vmatpush.bf16.msra.mxu0 %v3202
    %3302 = vmatmul.bf16.gmra.mxu0 %v3059
    %v3303 = vpop.f32.mrf.mxu0
    %v3304 = vadd.f32 %v3098, %v3303
    %v3305 = vpop.f32.mrf.mxu0
    %v3306 = vadd.f32 %v3098, %v3305
    %3307 = vmatmul.bf16.gmra.mxu0 %v3060
    %v3308 = vpop.f32.mrf.mxu0
    %v3309 = vadd.f32 %v3098, %v3308
    %v3310 = vpop.f32.mrf.mxu0
    %v3311 = vadd.f32 %v3098, %v3310
    %3312 = vmatmul.bf16.gmra.mxu0 %v3061
    %v3313 = vpop.f32.mrf.mxu0
    %v3314 = vadd.f32 %v3098, %v3313
    %v3315 = vpop.f32.mrf.mxu0
    %v3316 = vadd.f32 %v3098, %v3315
    %3317 = vmatmul.bf16.gmra.mxu0 %v3062
    %v3318 = vpop.f32.mrf.mxu0
    %v3319 = vadd.f32 %v3098, %v3318
    %v3320 = vpop.f32.mrf.mxu0
    %v3321 = vadd.f32 %v3098, %v3320
    %3322 = vdwg.mxu0
    %3323 = vmatpush.bf16.msra.mxu0 %v3231
    %3324 = vmatpush.bf16.msra.mxu0 %v3227
    %3325 = vmatpush.bf16.msra.mxu0 %v3223
    %3326 = vmatpush.bf16.msra.mxu0 %v3219
    %3327 = vmatpush.bf16.msra.mxu0 %v3215
    %3328 = vmatpush.bf16.msra.mxu0 %v3211
    %3329 = vmatpush.bf16.msra.mxu0 %v3207
    %3330 = vmatpush.bf16.msra.mxu0 %v3203
    %3331 = vmatmul.bf16.gmra.mxu0 %v3059
    %v3332 = vpop.f32.mrf.mxu0
    %v3333 = vadd.f32 %v3099, %v3332
    %v3334 = vpop.f32.mrf.mxu0
    %v3335 = vadd.f32 %v3099, %v3334
    %3336 = vmatmul.bf16.gmra.mxu0 %v3060
    %v3337 = vpop.f32.mrf.mxu0
    %v3338 = vadd.f32 %v3099, %v3337
    %v3339 = vpop.f32.mrf.mxu0
    %v3340 = vadd.f32 %v3099, %v3339
    %3341 = vmatmul.bf16.gmra.mxu0 %v3061
    %v3342 = vpop.f32.mrf.mxu0
    %v3343 = vadd.f32 %v3099, %v3342
    %v3344 = vpop.f32.mrf.mxu0
    %v3345 = vadd.f32 %v3099, %v3344
    %3346 = vmatmul.bf16.gmra.mxu0 %v3062
    %v3347 = vpop.f32.mrf.mxu0
    %v3348 = vadd.f32 %v3099, %v3347
    %v3349 = vpop.f32.mrf.mxu0
    %v3350 = vadd.f32 %v3099, %v3349
    %3351 = vdwg.mxu0
    %3352 = vmatpush.bf16.msra.mxu0 %v3232
    %3353 = vmatpush.bf16.msra.mxu0 %v3228
    %3354 = vmatpush.bf16.msra.mxu0 %v3224
    %3355 = vmatpush.bf16.msra.mxu0 %v3220
    %3356 = vmatpush.bf16.msra.mxu0 %v3216
    %3357 = vmatpush.bf16.msra.mxu0 %v3212
    %3358 = vmatpush.bf16.msra.mxu0 %v3208
    %3359 = vmatpush.bf16.msra.mxu0 %v3204
    %3360 = vmatmul.bf16.gmra.mxu0 %v3059
    %v3361 = vpop.f32.mrf.mxu0
    %v3362 = vadd.f32 %v3100, %v3361
    %v3363 = vpop.f32.mrf.mxu0
    %v3364 = vadd.f32 %v3100, %v3363
    %3365 = vmatmul.bf16.gmra.mxu0 %v3060
    %v3366 = vpop.f32.mrf.mxu0
    %v3367 = vadd.f32 %v3100, %v3366
    %v3368 = vpop.f32.mrf.mxu0
    %v3369 = vadd.f32 %v3100, %v3368
    %3370 = vmatmul.bf16.gmra.mxu0 %v3061
    %v3371 = vpop.f32.mrf.mxu0
    %v3372 = vadd.f32 %v3100, %v3371
    %v3373 = vpop.f32.mrf.mxu0
    %v3374 = vadd.f32 %v3100, %v3373
    %3375 = vmatmul.bf16.gmra.mxu0 %v3062
    %v3376 = vpop.f32.mrf.mxu0
    %v3377 = vadd.f32 %v3100, %v3376
    %v3378 = vpop.f32.mrf.mxu0
    %v3379 = vadd.f32 %v3100, %v3378
    %3380 = vdwg.mxu0
    %3381 = vst [vmem:[#allocation3] sm:$0xff] %v3275
    %3382 = vst [vmem:[#allocation3 + $0x8] sm:$0xff] %v3304
    %3383 = vst [vmem:[#allocation3 + $0x10] sm:$0xff] %v3333
    %3384 = vst [vmem:[#allocation3 + $0x18] sm:$0xff] %v3362
    %3385 = vst [vmem:[#allocation3 + $0x20] sm:$0xff] %v3277
    %3386 = vst [vmem:[#allocation3 + $0x28] sm:$0xff] %v3306
    %3387 = vst [vmem:[#allocation3 + $0x30] sm:$0xff] %v3335
    %3388 = vst [vmem:[#allocation3 + $0x38] sm:$0xff] %v3364
    %3389 = vst [vmem:[#allocation3 + $0x40] sm:$0xff] %v3280
    %3390 = vst [vmem:[#allocation3 + $0x48] sm:$0xff] %v3309
    %3391 = vst [vmem:[#allocation3 + $0x50] sm:$0xff] %v3338
    %3392 = vst [vmem:[#allocation3 + $0x58] sm:$0xff] %v3367
    %3393 = vst [vmem:[#allocation3 + $0x60] sm:$0xff] %v3282
    %3394 = vst [vmem:[#allocation3 + $0x68] sm:$0xff] %v3311
    %3395 = vst [vmem:[#allocation3 + $0x70] sm:$0xff] %v3340
    %3396 = vst [vmem:[#allocation3 + $0x78] sm:$0xff] %v3369
    %3397 = vst [vmem:[#allocation3 + $0x80] sm:$0xff] %v3285
    %3398 = vst [vmem:[#allocation3 + $0x88] sm:$0xff] %v3314
    %3399 = vst [vmem:[#allocation3 + $0x90] sm:$0xff] %v3343
    %3400 = vst [vmem:[#allocation3 + $0x98] sm:$0xff] %v3372
    %3401 = vst [vmem:[#allocation3 + $0xa0] sm:$0xff] %v3287
    %3402 = vst [vmem:[#allocation3 + $0xa8] sm:$0xff] %v3316
    %3403 = vst [vmem:[#allocation3 + $0xb0] sm:$0xff] %v3345
    %3404 = vst [vmem:[#allocation3 + $0xb8] sm:$0xff] %v3374
    %3405 = vst [vmem:[#allocation3 + $0xc0] sm:$0xff] %v3290
    %3406 = vst [vmem:[#allocation3 + $0xc8] sm:$0xff] %v3319
    %3407 = vst [vmem:[#allocation3 + $0xd0] sm:$0xff] %v3348
    %3408 = vst [vmem:[#allocation3 + $0xd8] sm:$0xff] %v3377
    %3409 = vst [vmem:[#allocation3 + $0xe0] sm:$0xff] %v3292
    %3410 = vst [vmem:[#allocation3 + $0xe8] sm:$0xff] %v3321
    %3411 = vst [vmem:[#allocation3 + $0xf0] sm:$0xff] %v3350
    %3412 = vst [vmem:[#allocation3 + $0xf8] sm:$0xff] %v3379
    %s3413 = scalar_lea.vmem [#allocation7], 8
    %v3414 = vld [vmem:[%s3413] sm:$0xff]
    %s3415 = scalar_lea.vmem [#allocation9], 8
    %v3416 = vld [vmem:[%s3415] sm:$0xff]
    %v3417 = vld [vmem:[%s484] sm:$0xff]
    %v3418 = vld [vmem:[%s484 + $0x8] sm:$0xff]
    %v3419 = vld [vmem:[%s484 + $0x10] sm:$0xff]
    %v3420 = vld [vmem:[%s484 + $0x18] sm:$0xff]
    %v3421 = vpack.c.bf16 %v3414, %v3414
    %v3422 = vld [vmem:[#allocation15] sm:$0xff]
    %v3423 = vld [vmem:[#allocation15 + $0x8] sm:$0xff]
    %v3424 = vld [vmem:[#allocation15 + $0x10] sm:$0xff]
    %v3425 = vld [vmem:[#allocation15 + $0x18] sm:$0xff]
    %v3426 = vld [vmem:[#allocation15 + $0x20] sm:$0xff]
    %v3427 = vld [vmem:[#allocation15 + $0x28] sm:$0xff]
    %v3428 = vld [vmem:[#allocation15 + $0x30] sm:$0xff]
    %v3429 = vld [vmem:[#allocation15 + $0x38] sm:$0xff]
    %v3430 = vld [vmem:[#allocation15 + $0x40] sm:$0xff]
    %v3431 = vld [vmem:[#allocation15 + $0x48] sm:$0xff]
    %v3432 = vld [vmem:[#allocation15 + $0x50] sm:$0xff]
    %v3433 = vld [vmem:[#allocation15 + $0x58] sm:$0xff]
    %v3434 = vld [vmem:[#allocation15 + $0x60] sm:$0xff]
    %v3435 = vld [vmem:[#allocation15 + $0x68] sm:$0xff]
    %v3436 = vld [vmem:[#allocation15 + $0x70] sm:$0xff]
    %v3437 = vld [vmem:[#allocation15 + $0x78] sm:$0xff]
    %v3438 = vld [vmem:[#allocation15 + $0x80] sm:$0xff]
    %v3439 = vld [vmem:[#allocation15 + $0x88] sm:$0xff]
    %v3440 = vld [vmem:[#allocation15 + $0x90] sm:$0xff]
    %v3441 = vld [vmem:[#allocation15 + $0x98] sm:$0xff]
    %v3442 = vld [vmem:[#allocation15 + $0xa0] sm:$0xff]
    %v3443 = vld [vmem:[#allocation15 + $0xa8] sm:$0xff]
    %v3444 = vld [vmem:[#allocation15 + $0xb0] sm:$0xff]
    %v3445 = vld [vmem:[#allocation15 + $0xb8] sm:$0xff]
    %v3446 = vld [vmem:[#allocation15 + $0xc0] sm:$0xff]
    %v3447 = vld [vmem:[#allocation15 + $0xc8] sm:$0xff]
    %v3448 = vld [vmem:[#allocation15 + $0xd0] sm:$0xff]
    %v3449 = vld [vmem:[#allocation15 + $0xd8] sm:$0xff]
    %v3450 = vld [vmem:[#allocation15 + $0xe0] sm:$0xff]
    %v3451 = vld [vmem:[#allocation15 + $0xe8] sm:$0xff]
    %v3452 = vld [vmem:[#allocation15 + $0xf0] sm:$0xff]
    %v3453 = vld [vmem:[#allocation15 + $0xf8] sm:$0xff]
    %v3486 = vunpack.c.l.b16 %v3422
    %v3487 = vunpack.c.h.b16 %v3422
    %v3488 = vunpack.c.l.b16 %v3423
    %v3489 = vunpack.c.h.b16 %v3423
    %v3490 = vunpack.c.l.b16 %v3424
    %v3491 = vunpack.c.h.b16 %v3424
    %v3492 = vunpack.c.l.b16 %v3425
    %v3493 = vunpack.c.h.b16 %v3425
    %v3494 = vunpack.c.l.b16 %v3426
    %v3495 = vunpack.c.h.b16 %v3426
    %v3496 = vunpack.c.l.b16 %v3427
    %v3497 = vunpack.c.h.b16 %v3427
    %v3498 = vunpack.c.l.b16 %v3428
    %v3499 = vunpack.c.h.b16 %v3428
    %v3500 = vunpack.c.l.b16 %v3429
    %v3501 = vunpack.c.h.b16 %v3429
    %v3502 = vunpack.c.l.b16 %v3430
    %v3503 = vunpack.c.h.b16 %v3430
    %v3504 = vunpack.c.l.b16 %v3431
    %v3505 = vunpack.c.h.b16 %v3431
    %v3506 = vunpack.c.l.b16 %v3432
    %v3507 = vunpack.c.h.b16 %v3432
    %v3508 = vunpack.c.l.b16 %v3433
    %v3509 = vunpack.c.h.b16 %v3433
    %v3510 = vunpack.c.l.b16 %v3434
    %v3511 = vunpack.c.h.b16 %v3434
    %v3512 = vunpack.c.l.b16 %v3435
    %v3513 = vunpack.c.h.b16 %v3435
    %v3514 = vunpack.c.l.b16 %v3436
    %v3515 = vunpack.c.h.b16 %v3436
    %v3516 = vunpack.c.l.b16 %v3437
    %v3517 = vunpack.c.h.b16 %v3437
    %v3518 = vunpack.c.l.b16 %v3438
    %v3519 = vunpack.c.h.b16 %v3438
    %v3520 = vunpack.c.l.b16 %v3439
    %v3521 = vunpack.c.h.b16 %v3439
    %v3522 = vunpack.c.l.b16 %v3440
    %v3523 = vunpack.c.h.b16 %v3440
    %v3524 = vunpack.c.l.b16 %v3441
    %v3525 = vunpack.c.h.b16 %v3441
    %v3526 = vunpack.c.l.b16 %v3442
    %v3527 = vunpack.c.h.b16 %v3442
    %v3528 = vunpack.c.l.b16 %v3443
    %v3529 = vunpack.c.h.b16 %v3443
    %v3530 = vunpack.c.l.b16 %v3444
    %v3531 = vunpack.c.h.b16 %v3444
    %v3532 = vunpack.c.l.b16 %v3445
    %v3533 = vunpack.c.h.b16 %v3445
    %v3534 = vunpack.c.l.b16 %v3446
    %v3535 = vunpack.c.h.b16 %v3446
    %v3536 = vunpack.c.l.b16 %v3447
    %v3537 = vunpack.c.h.b16 %v3447
    %v3538 = vunpack.c.l.b16 %v3448
    %v3539 = vunpack.c.h.b16 %v3448
    %v3540 = vunpack.c.l.b16 %v3449
    %v3541 = vunpack.c.h.b16 %v3449
    %v3542 = vunpack.c.l.b16 %v3450
    %v3543 = vunpack.c.h.b16 %v3450
    %v3544 = vunpack.c.l.b16 %v3451
    %v3545 = vunpack.c.h.b16 %v3451
    %v3546 = vunpack.c.l.b16 %v3452
    %v3547 = vunpack.c.h.b16 %v3452
    %v3548 = vunpack.c.l.b16 %v3453
    %v3549 = vunpack.c.h.b16 %v3453
    %v3550 = vpack.c.b16 %v3490, %v3486
    %v3551 = vpack.c.b16 %v3491, %v3487
    %v3552 = vpack.c.b16 %v3492, %v3488
    %v3553 = vpack.c.b16 %v3493, %v3489
    %v3554 = vpack.c.b16 %v3498, %v3494
    %v3555 = vpack.c.b16 %v3499, %v3495
    %v3556 = vpack.c.b16 %v3500, %v3496
    %v3557 = vpack.c.b16 %v3501, %v3497
    %v3558 = vpack.c.b16 %v3506, %v3502
    %v3559 = vpack.c.b16 %v3507, %v3503
    %v3560 = vpack.c.b16 %v3508, %v3504
    %v3561 = vpack.c.b16 %v3509, %v3505
    %v3562 = vpack.c.b16 %v3514, %v3510
    %v3563 = vpack.c.b16 %v3515, %v3511
    %v3564 = vpack.c.b16 %v3516, %v3512
    %v3565 = vpack.c.b16 %v3517, %v3513
    %v3566 = vpack.c.b16 %v3522, %v3518
    %v3567 = vpack.c.b16 %v3523, %v3519
    %v3568 = vpack.c.b16 %v3524, %v3520
    %v3569 = vpack.c.b16 %v3525, %v3521
    %v3570 = vpack.c.b16 %v3530, %v3526
    %v3571 = vpack.c.b16 %v3531, %v3527
    %v3572 = vpack.c.b16 %v3532, %v3528
    %v3573 = vpack.c.b16 %v3533, %v3529
    %v3574 = vpack.c.b16 %v3538, %v3534
    %v3575 = vpack.c.b16 %v3539, %v3535
    %v3576 = vpack.c.b16 %v3540, %v3536
    %v3577 = vpack.c.b16 %v3541, %v3537
    %v3578 = vpack.c.b16 %v3546, %v3542
    %v3579 = vpack.c.b16 %v3547, %v3543
    %v3580 = vpack.c.b16 %v3548, %v3544
    %v3581 = vpack.c.b16 %v3549, %v3545
    %3614 = vmatpush.bf16.msra.mxu0 %v3578
    %3615 = vmatpush.bf16.msra.mxu0 %v3574
    %3616 = vmatpush.bf16.msra.mxu0 %v3570
    %3617 = vmatpush.bf16.msra.mxu0 %v3566
    %3618 = vmatpush.bf16.msra.mxu0 %v3562
    %3619 = vmatpush.bf16.msra.mxu0 %v3558
    %3620 = vmatpush.bf16.msra.mxu0 %v3554
    %3621 = vmatpush.bf16.msra.mxu0 %v3550
    %3622 = vmatmul.bf16.gmra.mxu0 %v3421
    %v3623 = vpop.f32.mrf.mxu0
    %v3624 = vadd.f32 0.0, %v3623
    %v3625 = vpop.f32.mrf.mxu0
    %3626 = vdwg.mxu0
    %3627 = vmatpush.bf16.msra.mxu0 %v3579
    %3628 = vmatpush.bf16.msra.mxu0 %v3575
    %3629 = vmatpush.bf16.msra.mxu0 %v3571
    %3630 = vmatpush.bf16.msra.mxu0 %v3567
    %3631 = vmatpush.bf16.msra.mxu0 %v3563
    %3632 = vmatpush.bf16.msra.mxu0 %v3559
    %3633 = vmatpush.bf16.msra.mxu0 %v3555
    %3634 = vmatpush.bf16.msra.mxu0 %v3551
    %3635 = vmatmul.bf16.gmra.mxu0 %v3421
    %v3636 = vpop.f32.mrf.mxu0
    %v3637 = vadd.f32 0.0, %v3636
    %v3638 = vpop.f32.mrf.mxu0
    %3639 = vdwg.mxu0
    %3640 = vmatpush.bf16.msra.mxu0 %v3580
    %3641 = vmatpush.bf16.msra.mxu0 %v3576
    %3642 = vmatpush.bf16.msra.mxu0 %v3572
    %3643 = vmatpush.bf16.msra.mxu0 %v3568
    %3644 = vmatpush.bf16.msra.mxu0 %v3564
    %3645 = vmatpush.bf16.msra.mxu0 %v3560
    %3646 = vmatpush.bf16.msra.mxu0 %v3556
    %3647 = vmatpush.bf16.msra.mxu0 %v3552
    %3648 = vmatmul.bf16.gmra.mxu0 %v3421
    %v3649 = vpop.f32.mrf.mxu0
    %v3650 = vadd.f32 0.0, %v3649
    %v3651 = vpop.f32.mrf.mxu0
    %3652 = vdwg.mxu0
    %3653 = vmatpush.bf16.msra.mxu0 %v3581
    %3654 = vmatpush.bf16.msra.mxu0 %v3577
    %3655 = vmatpush.bf16.msra.mxu0 %v3573
    %3656 = vmatpush.bf16.msra.mxu0 %v3569
    %3657 = vmatpush.bf16.msra.mxu0 %v3565
    %3658 = vmatpush.bf16.msra.mxu0 %v3561
    %3659 = vmatpush.bf16.msra.mxu0 %v3557
    %3660 = vmatpush.bf16.msra.mxu0 %v3553
    %3661 = vmatmul.bf16.gmra.mxu0 %v3421
    %v3662 = vpop.f32.mrf.mxu0
    %v3663 = vadd.f32 0.0, %v3662
    %v3664 = vpop.f32.mrf.mxu0
    %3665 = vdwg.mxu0
    %v3666 = vadd.f32 %v3417, %v3624
    %v3667 = vadd.f32 %v3418, %v3637
    %v3668 = vadd.f32 %v3419, %v3650
    %v3669 = vadd.f32 %v3420, %v3663
    %v3670 = vxor.u32 %v3666, 2147483648
    %v3671 = vmul.f32 %v3670, 1.442695
    %v3672 = vpow.pop %v3671
    %v3673 = vadd.f32 %v3672, 1.0
    %v3674 = vrcp.pop %v3673
    %v3675 = vmul.f32 %v3673, %v3674
    %v3676 = vsub.f32 1.0, %v3675
    %v3677 = vmul.f32 %v3674, %v3676
    %v3678 = vadd.f32 %v3674, %v3677
    %vm3679 = vweird.f32 %v3673
    %vm3680 = vweird.f32 %v3674
    %vm3681 = vmor %vm3679, %vm3680
    %v3682 = vsel %vm3681, %v3674, %v3678
    %v3683 = vand.u32 2147483647, %v3673
    %vm3684 = vcmp.eq.f32.partialorder %v3683, 8.507059e+37
    %v3685 = vand.u32 %v3673, 2147483648
    %v3686 = vor.u32 1.1754944e-38, %v3685
    %v3687 = vsel %vm3684, %v3686, %v3682
    %v3688 = vmul.f32 1.0, %v3687
    %v3689 = vxor.u32 %v3667, 2147483648
    %v3690 = vmul.f32 %v3689, 1.442695
    %v3691 = vpow.pop %v3690
    %v3692 = vadd.f32 %v3691, 1.0
    %v3693 = vrcp.pop %v3692
    %v3694 = vmul.f32 %v3692, %v3693
    %v3695 = vsub.f32 1.0, %v3694
    %v3696 = vmul.f32 %v3693, %v3695
    %v3697 = vadd.f32 %v3693, %v3696
    %vm3698 = vweird.f32 %v3692
    %vm3699 = vweird.f32 %v3693
    %vm3700 = vmor %vm3698, %vm3699
    %v3701 = vsel %vm3700, %v3693, %v3697
    %v3702 = vand.u32 2147483647, %v3692
    %vm3703 = vcmp.eq.f32.partialorder %v3702, 8.507059e+37
    %v3704 = vand.u32 %v3692, 2147483648
    %v3705 = vor.u32 1.1754944e-38, %v3704
    %v3706 = vsel %vm3703, %v3705, %v3701
    %v3707 = vmul.f32 1.0, %v3706
    %v3708 = vtanh.pop %v3668
    %v3709 = vxor.u32 %v3669, 2147483648
    %v3710 = vmul.f32 %v3709, 1.442695
    %v3711 = vpow.pop %v3710
    %v3712 = vadd.f32 %v3711, 1.0
    %v3713 = vrcp.pop %v3712
    %v3714 = vmul.f32 %v3712, %v3713
    %v3715 = vsub.f32 1.0, %v3714
    %v3716 = vmul.f32 %v3713, %v3715
    %v3717 = vadd.f32 %v3713, %v3716
    %vm3718 = vweird.f32 %v3712
    %vm3719 = vweird.f32 %v3713
    %vm3720 = vmor %vm3718, %vm3719
    %v3721 = vsel %vm3720, %v3713, %v3717
    %v3722 = vand.u32 2147483647, %v3712
    %vm3723 = vcmp.eq.f32.partialorder %v3722, 8.507059e+37
    %v3724 = vand.u32 %v3712, 2147483648
    %v3725 = vor.u32 1.1754944e-38, %v3724
    %v3726 = vsel %vm3723, %v3725, %v3721
    %v3727 = vmul.f32 1.0, %v3726
    %v3728 = vmul.f32 %v3707, %v3416
    %v3729 = vmul.f32 %v3688, %v3708
    %v3730 = vadd.f32 %v3728, %v3729
    %v3731 = vtanh.pop %v3730
    %v3732 = vmul.f32 %v3727, %v3731
    %3733 = vst [vmem:[#allocation2] sm:$0xff] %v3732
    %v3734 = vld [vmem:[%s804] sm:$0xff]
    %v3735 = vld [vmem:[%s804 + $0x8] sm:$0xff]
    %v3736 = vld [vmem:[%s804 + $0x10] sm:$0xff]
    %v3737 = vld [vmem:[%s804 + $0x18] sm:$0xff]
    %v3738 = vpack.c.bf16 %v3732, %v3732
    %v3739 = vld [vmem:[#allocation15] sm:$0xff]
    %v3740 = vld [vmem:[#allocation15 + $0x8] sm:$0xff]
    %v3741 = vld [vmem:[#allocation15 + $0x10] sm:$0xff]
    %v3742 = vld [vmem:[#allocation15 + $0x18] sm:$0xff]
    %v3743 = vld [vmem:[#allocation15 + $0x20] sm:$0xff]
    %v3744 = vld [vmem:[#allocation15 + $0x28] sm:$0xff]
    %v3745 = vld [vmem:[#allocation15 + $0x30] sm:$0xff]
    %v3746 = vld [vmem:[#allocation15 + $0x38] sm:$0xff]
    %v3747 = vld [vmem:[#allocation15 + $0x40] sm:$0xff]
    %v3748 = vld [vmem:[#allocation15 + $0x48] sm:$0xff]
    %v3749 = vld [vmem:[#allocation15 + $0x50] sm:$0xff]
    %v3750 = vld [vmem:[#allocation15 + $0x58] sm:$0xff]
    %v3751 = vld [vmem:[#allocation15 + $0x60] sm:$0xff]
    %v3752 = vld [vmem:[#allocation15 + $0x68] sm:$0xff]
    %v3753 = vld [vmem:[#allocation15 + $0x70] sm:$0xff]
    %v3754 = vld [vmem:[#allocation15 + $0x78] sm:$0xff]
    %v3755 = vld [vmem:[#allocation15 + $0x80] sm:$0xff]
    %v3756 = vld [vmem:[#allocation15 + $0x88] sm:$0xff]
    %v3757 = vld [vmem:[#allocation15 + $0x90] sm:$0xff]
    %v3758 = vld [vmem:[#allocation15 + $0x98] sm:$0xff]
    %v3759 = vld [vmem:[#allocation15 + $0xa0] sm:$0xff]
    %v3760 = vld [vmem:[#allocation15 + $0xa8] sm:$0xff]
    %v3761 = vld [vmem:[#allocation15 + $0xb0] sm:$0xff]
    %v3762 = vld [vmem:[#allocation15 + $0xb8] sm:$0xff]
    %v3763 = vld [vmem:[#allocation15 + $0xc0] sm:$0xff]
    %v3764 = vld [vmem:[#allocation15 + $0xc8] sm:$0xff]
    %v3765 = vld [vmem:[#allocation15 + $0xd0] sm:$0xff]
    %v3766 = vld [vmem:[#allocation15 + $0xd8] sm:$0xff]
    %v3767 = vld [vmem:[#allocation15 + $0xe0] sm:$0xff]
    %v3768 = vld [vmem:[#allocation15 + $0xe8] sm:$0xff]
    %v3769 = vld [vmem:[#allocation15 + $0xf0] sm:$0xff]
    %v3770 = vld [vmem:[#allocation15 + $0xf8] sm:$0xff]
    %v3803 = vunpack.c.l.b16 %v3739
    %v3804 = vunpack.c.h.b16 %v3739
    %v3805 = vunpack.c.l.b16 %v3740
    %v3806 = vunpack.c.h.b16 %v3740
    %v3807 = vunpack.c.l.b16 %v3741
    %v3808 = vunpack.c.h.b16 %v3741
    %v3809 = vunpack.c.l.b16 %v3742
    %v3810 = vunpack.c.h.b16 %v3742
    %v3811 = vunpack.c.l.b16 %v3743
    %v3812 = vunpack.c.h.b16 %v3743
    %v3813 = vunpack.c.l.b16 %v3744
    %v3814 = vunpack.c.h.b16 %v3744
    %v3815 = vunpack.c.l.b16 %v3745
    %v3816 = vunpack.c.h.b16 %v3745
    %v3817 = vunpack.c.l.b16 %v3746
    %v3818 = vunpack.c.h.b16 %v3746
    %v3819 = vunpack.c.l.b16 %v3747
    %v3820 = vunpack.c.h.b16 %v3747
    %v3821 = vunpack.c.l.b16 %v3748
    %v3822 = vunpack.c.h.b16 %v3748
    %v3823 = vunpack.c.l.b16 %v3749
    %v3824 = vunpack.c.h.b16 %v3749
    %v3825 = vunpack.c.l.b16 %v3750
    %v3826 = vunpack.c.h.b16 %v3750
    %v3827 = vunpack.c.l.b16 %v3751
    %v3828 = vunpack.c.h.b16 %v3751
    %v3829 = vunpack.c.l.b16 %v3752
    %v3830 = vunpack.c.h.b16 %v3752
    %v3831 = vunpack.c.l.b16 %v3753
    %v3832 = vunpack.c.h.b16 %v3753
    %v3833 = vunpack.c.l.b16 %v3754
    %v3834 = vunpack.c.h.b16 %v3754
    %v3835 = vunpack.c.l.b16 %v3755
    %v3836 = vunpack.c.h.b16 %v3755
    %v3837 = vunpack.c.l.b16 %v3756
    %v3838 = vunpack.c.h.b16 %v3756
    %v3839 = vunpack.c.l.b16 %v3757
    %v3840 = vunpack.c.h.b16 %v3757
    %v3841 = vunpack.c.l.b16 %v3758
    %v3842 = vunpack.c.h.b16 %v3758
    %v3843 = vunpack.c.l.b16 %v3759
    %v3844 = vunpack.c.h.b16 %v3759
    %v3845 = vunpack.c.l.b16 %v3760
    %v3846 = vunpack.c.h.b16 %v3760
    %v3847 = vunpack.c.l.b16 %v3761
    %v3848 = vunpack.c.h.b16 %v3761
    %v3849 = vunpack.c.l.b16 %v3762
    %v3850 = vunpack.c.h.b16 %v3762
    %v3851 = vunpack.c.l.b16 %v3763
    %v3852 = vunpack.c.h.b16 %v3763
    %v3853 = vunpack.c.l.b16 %v3764
    %v3854 = vunpack.c.h.b16 %v3764
    %v3855 = vunpack.c.l.b16 %v3765
    %v3856 = vunpack.c.h.b16 %v3765
    %v3857 = vunpack.c.l.b16 %v3766
    %v3858 = vunpack.c.h.b16 %v3766
    %v3859 = vunpack.c.l.b16 %v3767
    %v3860 = vunpack.c.h.b16 %v3767
    %v3861 = vunpack.c.l.b16 %v3768
    %v3862 = vunpack.c.h.b16 %v3768
    %v3863 = vunpack.c.l.b16 %v3769
    %v3864 = vunpack.c.h.b16 %v3769
    %v3865 = vunpack.c.l.b16 %v3770
    %v3866 = vunpack.c.h.b16 %v3770
    %v3867 = vpack.c.b16 %v3807, %v3803
    %v3868 = vpack.c.b16 %v3808, %v3804
    %v3869 = vpack.c.b16 %v3809, %v3805
    %v3870 = vpack.c.b16 %v3810, %v3806
    %v3871 = vpack.c.b16 %v3815, %v3811
    %v3872 = vpack.c.b16 %v3816, %v3812
    %v3873 = vpack.c.b16 %v3817, %v3813
    %v3874 = vpack.c.b16 %v3818, %v3814
    %v3875 = vpack.c.b16 %v3823, %v3819
    %v3876 = vpack.c.b16 %v3824, %v3820
    %v3877 = vpack.c.b16 %v3825, %v3821
    %v3878 = vpack.c.b16 %v3826, %v3822
    %v3879 = vpack.c.b16 %v3831, %v3827
    %v3880 = vpack.c.b16 %v3832, %v3828
    %v3881 = vpack.c.b16 %v3833, %v3829
    %v3882 = vpack.c.b16 %v3834, %v3830
    %v3883 = vpack.c.b16 %v3839, %v3835
    %v3884 = vpack.c.b16 %v3840, %v3836
    %v3885 = vpack.c.b16 %v3841, %v3837
    %v3886 = vpack.c.b16 %v3842, %v3838
    %v3887 = vpack.c.b16 %v3847, %v3843
    %v3888 = vpack.c.b16 %v3848, %v3844
    %v3889 = vpack.c.b16 %v3849, %v3845
    %v3890 = vpack.c.b16 %v3850, %v3846
    %v3891 = vpack.c.b16 %v3855, %v3851
    %v3892 = vpack.c.b16 %v3856, %v3852
    %v3893 = vpack.c.b16 %v3857, %v3853
    %v3894 = vpack.c.b16 %v3858, %v3854
    %v3895 = vpack.c.b16 %v3863, %v3859
    %v3896 = vpack.c.b16 %v3864, %v3860
    %v3897 = vpack.c.b16 %v3865, %v3861
    %v3898 = vpack.c.b16 %v3866, %v3862
    %3931 = vmatpush.bf16.msra.mxu0 %v3895
    %3932 = vmatpush.bf16.msra.mxu0 %v3891
    %3933 = vmatpush.bf16.msra.mxu0 %v3887
    %3934 = vmatpush.bf16.msra.mxu0 %v3883
    %3935 = vmatpush.bf16.msra.mxu0 %v3879
    %3936 = vmatpush.bf16.msra.mxu0 %v3875
    %3937 = vmatpush.bf16.msra.mxu0 %v3871
    %3938 = vmatpush.bf16.msra.mxu0 %v3867
    %3939 = vmatmul.bf16.gmra.mxu0 %v3738
    %v3940 = vpop.f32.mrf.mxu0
    %v3941 = vadd.f32 0.0, %v3940
    %v3942 = vpop.f32.mrf.mxu0
    %3943 = vdwg.mxu0
    %3944 = vmatpush.bf16.msra.mxu0 %v3896
    %3945 = vmatpush.bf16.msra.mxu0 %v3892
    %3946 = vmatpush.bf16.msra.mxu0 %v3888
    %3947 = vmatpush.bf16.msra.mxu0 %v3884
    %3948 = vmatpush.bf16.msra.mxu0 %v3880
    %3949 = vmatpush.bf16.msra.mxu0 %v3876
    %3950 = vmatpush.bf16.msra.mxu0 %v3872
    %3951 = vmatpush.bf16.msra.mxu0 %v3868
    %3952 = vmatmul.bf16.gmra.mxu0 %v3738
    %v3953 = vpop.f32.mrf.mxu0
    %v3954 = vadd.f32 0.0, %v3953
    %v3955 = vpop.f32.mrf.mxu0
    %3956 = vdwg.mxu0
    %3957 = vmatpush.bf16.msra.mxu0 %v3897
    %3958 = vmatpush.bf16.msra.mxu0 %v3893
    %3959 = vmatpush.bf16.msra.mxu0 %v3889
    %3960 = vmatpush.bf16.msra.mxu0 %v3885
    %3961 = vmatpush.bf16.msra.mxu0 %v3881
    %3962 = vmatpush.bf16.msra.mxu0 %v3877
    %3963 = vmatpush.bf16.msra.mxu0 %v3873
    %3964 = vmatpush.bf16.msra.mxu0 %v3869
    %3965 = vmatmul.bf16.gmra.mxu0 %v3738
    %v3966 = vpop.f32.mrf.mxu0
    %v3967 = vadd.f32 0.0, %v3966
    %v3968 = vpop.f32.mrf.mxu0
    %3969 = vdwg.mxu0
    %3970 = vmatpush.bf16.msra.mxu0 %v3898
    %3971 = vmatpush.bf16.msra.mxu0 %v3894
    %3972 = vmatpush.bf16.msra.mxu0 %v3890
    %3973 = vmatpush.bf16.msra.mxu0 %v3886
    %3974 = vmatpush.bf16.msra.mxu0 %v3882
    %3975 = vmatpush.bf16.msra.mxu0 %v3878
    %3976 = vmatpush.bf16.msra.mxu0 %v3874
    %3977 = vmatpush.bf16.msra.mxu0 %v3870
    %3978 = vmatmul.bf16.gmra.mxu0 %v3738
    %v3979 = vpop.f32.mrf.mxu0
    %v3980 = vadd.f32 0.0, %v3979
    %v3981 = vpop.f32.mrf.mxu0
    %3982 = vdwg.mxu0
    %v3983 = vadd.f32 %v3734, %v3941
    %v3984 = vadd.f32 %v3735, %v3954
    %v3985 = vadd.f32 %v3736, %v3967
    %v3986 = vadd.f32 %v3737, %v3980
    %v3987 = vxor.u32 %v3983, 2147483648
    %v3988 = vmul.f32 %v3987, 1.442695
    %v3989 = vpow.pop %v3988
    %v3990 = vadd.f32 %v3989, 1.0
    %v3991 = vrcp.pop %v3990
    %v3992 = vmul.f32 %v3990, %v3991
    %v3993 = vsub.f32 1.0, %v3992
    %v3994 = vmul.f32 %v3991, %v3993
    %v3995 = vadd.f32 %v3991, %v3994
    %vm3996 = vweird.f32 %v3990
    %vm3997 = vweird.f32 %v3991
    %vm3998 = vmor %vm3996, %vm3997
    %v3999 = vsel %vm3998, %v3991, %v3995
    %v4000 = vand.u32 2147483647, %v3990
    %vm4001 = vcmp.eq.f32.partialorder %v4000, 8.507059e+37
    %v4002 = vand.u32 %v3990, 2147483648
    %v4003 = vor.u32 1.1754944e-38, %v4002
    %v4004 = vsel %vm4001, %v4003, %v3999
    %v4005 = vmul.f32 1.0, %v4004
    %v4006 = vxor.u32 %v3984, 2147483648
    %v4007 = vmul.f32 %v4006, 1.442695
    %v4008 = vpow.pop %v4007
    %v4009 = vadd.f32 %v4008, 1.0
    %v4010 = vrcp.pop %v4009
    %v4011 = vmul.f32 %v4009, %v4010
    %v4012 = vsub.f32 1.0, %v4011
    %v4013 = vmul.f32 %v4010, %v4012
    %v4014 = vadd.f32 %v4010, %v4013
    %vm4015 = vweird.f32 %v4009
    %vm4016 = vweird.f32 %v4010
    %vm4017 = vmor %vm4015, %vm4016
    %v4018 = vsel %vm4017, %v4010, %v4014
    %v4019 = vand.u32 2147483647, %v4009
    %vm4020 = vcmp.eq.f32.partialorder %v4019, 8.507059e+37
    %v4021 = vand.u32 %v4009, 2147483648
    %v4022 = vor.u32 1.1754944e-38, %v4021
    %v4023 = vsel %vm4020, %v4022, %v4018
    %v4024 = vmul.f32 1.0, %v4023
    %v4025 = vtanh.pop %v3985
    %v4026 = vxor.u32 %v3986, 2147483648
    %v4027 = vmul.f32 %v4026, 1.442695
    %v4028 = vpow.pop %v4027
    %v4029 = vadd.f32 %v4028, 1.0
    %v4030 = vrcp.pop %v4029
    %v4031 = vmul.f32 %v4029, %v4030
    %v4032 = vsub.f32 1.0, %v4031
    %v4033 = vmul.f32 %v4030, %v4032
    %v4034 = vadd.f32 %v4030, %v4033
    %vm4035 = vweird.f32 %v4029
    %vm4036 = vweird.f32 %v4030
    %vm4037 = vmor %vm4035, %vm4036
    %v4038 = vsel %vm4037, %v4030, %v4034
    %v4039 = vand.u32 2147483647, %v4029
    %vm4040 = vcmp.eq.f32.partialorder %v4039, 8.507059e+37
    %v4041 = vand.u32 %v4029, 2147483648
    %v4042 = vor.u32 1.1754944e-38, %v4041
    %v4043 = vsel %vm4040, %v4042, %v4038
    %v4044 = vmul.f32 1.0, %v4043
    %v4045 = vmul.f32 %v4024, %v3730
    %v4046 = vmul.f32 %v4005, %v4025
    %v4047 = vadd.f32 %v4045, %v4046
    %v4048 = vtanh.pop %v4047
    %v4049 = vmul.f32 %v4044, %v4048
    %4050 = vst [vmem:[%s1121] sm:$0xff] %v4049
    %v4051 = vld [vmem:[%s1125] sm:$0xff]
    %v4052 = vld [vmem:[%s1125 + $0x8] sm:$0xff]
    %v4053 = vld [vmem:[%s1125 + $0x10] sm:$0xff]
    %v4054 = vld [vmem:[%s1125 + $0x18] sm:$0xff]
    %v4055 = vpack.c.bf16 %v4049, %v4049
    %v4056 = vld [vmem:[#allocation15] sm:$0xff]
    %v4057 = vld [vmem:[#allocation15 + $0x8] sm:$0xff]
    %v4058 = vld [vmem:[#allocation15 + $0x10] sm:$0xff]
    %v4059 = vld [vmem:[#allocation15 + $0x18] sm:$0xff]
    %v4060 = vld [vmem:[#allocation15 + $0x20] sm:$0xff]
    %v4061 = vld [vmem:[#allocation15 + $0x28] sm:$0xff]
    %v4062 = vld [vmem:[#allocation15 + $0x30] sm:$0xff]
    %v4063 = vld [vmem:[#allocation15 + $0x38] sm:$0xff]
    %v4064 = vld [vmem:[#allocation15 + $0x40] sm:$0xff]
    %v4065 = vld [vmem:[#allocation15 + $0x48] sm:$0xff]
    %v4066 = vld [vmem:[#allocation15 + $0x50] sm:$0xff]
    %v4067 = vld [vmem:[#allocation15 + $0x58] sm:$0xff]
    %v4068 = vld [vmem:[#allocation15 + $0x60] sm:$0xff]
    %v4069 = vld [vmem:[#allocation15 + $0x68] sm:$0xff]
    %v4070 = vld [vmem:[#allocation15 + $0x70] sm:$0xff]
    %v4071 = vld [vmem:[#allocation15 + $0x78] sm:$0xff]
    %v4072 = vld [vmem:[#allocation15 + $0x80] sm:$0xff]
    %v4073 = vld [vmem:[#allocation15 + $0x88] sm:$0xff]
    %v4074 = vld [vmem:[#allocation15 + $0x90] sm:$0xff]
    %v4075 = vld [vmem:[#allocation15 + $0x98] sm:$0xff]
    %v4076 = vld [vmem:[#allocation15 + $0xa0] sm:$0xff]
    %v4077 = vld [vmem:[#allocation15 + $0xa8] sm:$0xff]
    %v4078 = vld [vmem:[#allocation15 + $0xb0] sm:$0xff]
    %v4079 = vld [vmem:[#allocation15 + $0xb8] sm:$0xff]
    %v4080 = vld [vmem:[#allocation15 + $0xc0] sm:$0xff]
    %v4081 = vld [vmem:[#allocation15 + $0xc8] sm:$0xff]
    %v4082 = vld [vmem:[#allocation15 + $0xd0] sm:$0xff]
    %v4083 = vld [vmem:[#allocation15 + $0xd8] sm:$0xff]
    %v4084 = vld [vmem:[#allocation15 + $0xe0] sm:$0xff]
    %v4085 = vld [vmem:[#allocation15 + $0xe8] sm:$0xff]
    %v4086 = vld [vmem:[#allocation15 + $0xf0] sm:$0xff]
    %v4087 = vld [vmem:[#allocation15 + $0xf8] sm:$0xff]
    %v4120 = vunpack.c.l.b16 %v4056
    %v4121 = vunpack.c.h.b16 %v4056
    %v4122 = vunpack.c.l.b16 %v4057
    %v4123 = vunpack.c.h.b16 %v4057
    %v4124 = vunpack.c.l.b16 %v4058
    %v4125 = vunpack.c.h.b16 %v4058
    %v4126 = vunpack.c.l.b16 %v4059
    %v4127 = vunpack.c.h.b16 %v4059
    %v4128 = vunpack.c.l.b16 %v4060
    %v4129 = vunpack.c.h.b16 %v4060
    %v4130 = vunpack.c.l.b16 %v4061
    %v4131 = vunpack.c.h.b16 %v4061
    %v4132 = vunpack.c.l.b16 %v4062
    %v4133 = vunpack.c.h.b16 %v4062
    %v4134 = vunpack.c.l.b16 %v4063
    %v4135 = vunpack.c.h.b16 %v4063
    %v4136 = vunpack.c.l.b16 %v4064
    %v4137 = vunpack.c.h.b16 %v4064
    %v4138 = vunpack.c.l.b16 %v4065
    %v4139 = vunpack.c.h.b16 %v4065
    %v4140 = vunpack.c.l.b16 %v4066
    %v4141 = vunpack.c.h.b16 %v4066
    %v4142 = vunpack.c.l.b16 %v4067
    %v4143 = vunpack.c.h.b16 %v4067
    %v4144 = vunpack.c.l.b16 %v4068
    %v4145 = vunpack.c.h.b16 %v4068
    %v4146 = vunpack.c.l.b16 %v4069
    %v4147 = vunpack.c.h.b16 %v4069
    %v4148 = vunpack.c.l.b16 %v4070
    %v4149 = vunpack.c.h.b16 %v4070
    %v4150 = vunpack.c.l.b16 %v4071
    %v4151 = vunpack.c.h.b16 %v4071
    %v4152 = vunpack.c.l.b16 %v4072
    %v4153 = vunpack.c.h.b16 %v4072
    %v4154 = vunpack.c.l.b16 %v4073
    %v4155 = vunpack.c.h.b16 %v4073
    %v4156 = vunpack.c.l.b16 %v4074
    %v4157 = vunpack.c.h.b16 %v4074
    %v4158 = vunpack.c.l.b16 %v4075
    %v4159 = vunpack.c.h.b16 %v4075
    %v4160 = vunpack.c.l.b16 %v4076
    %v4161 = vunpack.c.h.b16 %v4076
    %v4162 = vunpack.c.l.b16 %v4077
    %v4163 = vunpack.c.h.b16 %v4077
    %v4164 = vunpack.c.l.b16 %v4078
    %v4165 = vunpack.c.h.b16 %v4078
    %v4166 = vunpack.c.l.b16 %v4079
    %v4167 = vunpack.c.h.b16 %v4079
    %v4168 = vunpack.c.l.b16 %v4080
    %v4169 = vunpack.c.h.b16 %v4080
    %v4170 = vunpack.c.l.b16 %v4081
    %v4171 = vunpack.c.h.b16 %v4081
    %v4172 = vunpack.c.l.b16 %v4082
    %v4173 = vunpack.c.h.b16 %v4082
    %v4174 = vunpack.c.l.b16 %v4083
    %v4175 = vunpack.c.h.b16 %v4083
    %v4176 = vunpack.c.l.b16 %v4084
    %v4177 = vunpack.c.h.b16 %v4084
    %v4178 = vunpack.c.l.b16 %v4085
    %v4179 = vunpack.c.h.b16 %v4085
    %v4180 = vunpack.c.l.b16 %v4086
    %v4181 = vunpack.c.h.b16 %v4086
    %v4182 = vunpack.c.l.b16 %v4087
    %v4183 = vunpack.c.h.b16 %v4087
    %v4184 = vpack.c.b16 %v4124, %v4120
    %v4185 = vpack.c.b16 %v4125, %v4121
    %v4186 = vpack.c.b16 %v4126, %v4122
    %v4187 = vpack.c.b16 %v4127, %v4123
    %v4188 = vpack.c.b16 %v4132, %v4128
    %v4189 = vpack.c.b16 %v4133, %v4129
    %v4190 = vpack.c.b16 %v4134, %v4130
    %v4191 = vpack.c.b16 %v4135, %v4131
    %v4192 = vpack.c.b16 %v4140, %v4136
    %v4193 = vpack.c.b16 %v4141, %v4137
    %v4194 = vpack.c.b16 %v4142, %v4138
    %v4195 = vpack.c.b16 %v4143, %v4139
    %v4196 = vpack.c.b16 %v4148, %v4144
    %v4197 = vpack.c.b16 %v4149, %v4145
    %v4198 = vpack.c.b16 %v4150, %v4146
    %v4199 = vpack.c.b16 %v4151, %v4147
    %v4200 = vpack.c.b16 %v4156, %v4152
    %v4201 = vpack.c.b16 %v4157, %v4153
    %v4202 = vpack.c.b16 %v4158, %v4154
    %v4203 = vpack.c.b16 %v4159, %v4155
    %v4204 = vpack.c.b16 %v4164, %v4160
    %v4205 = vpack.c.b16 %v4165, %v4161
    %v4206 = vpack.c.b16 %v4166, %v4162
    %v4207 = vpack.c.b16 %v4167, %v4163
    %v4208 = vpack.c.b16 %v4172, %v4168
    %v4209 = vpack.c.b16 %v4173, %v4169
    %v4210 = vpack.c.b16 %v4174, %v4170
    %v4211 = vpack.c.b16 %v4175, %v4171
    %v4212 = vpack.c.b16 %v4180, %v4176
    %v4213 = vpack.c.b16 %v4181, %v4177
    %v4214 = vpack.c.b16 %v4182, %v4178
    %v4215 = vpack.c.b16 %v4183, %v4179
    %4248 = vmatpush.bf16.msra.mxu0 %v4212
    %4249 = vmatpush.bf16.msra.mxu0 %v4208
    %4250 = vmatpush.bf16.msra.mxu0 %v4204
    %4251 = vmatpush.bf16.msra.mxu0 %v4200
    %4252 = vmatpush.bf16.msra.mxu0 %v4196
    %4253 = vmatpush.bf16.msra.mxu0 %v4192
    %4254 = vmatpush.bf16.msra.mxu0 %v4188
    %4255 = vmatpush.bf16.msra.mxu0 %v4184
    %4256 = vmatmul.bf16.gmra.mxu0 %v4055
    %v4257 = vpop.f32.mrf.mxu0
    %v4258 = vadd.f32 0.0, %v4257
    %v4259 = vpop.f32.mrf.mxu0
    %4260 = vdwg.mxu0
    %4261 = vmatpush.bf16.msra.mxu0 %v4213
    %4262 = vmatpush.bf16.msra.mxu0 %v4209
    %4263 = vmatpush.bf16.msra.mxu0 %v4205
    %4264 = vmatpush.bf16.msra.mxu0 %v4201
    %4265 = vmatpush.bf16.msra.mxu0 %v4197
    %4266 = vmatpush.bf16.msra.mxu0 %v4193
    %4267 = vmatpush.bf16.msra.mxu0 %v4189
    %4268 = vmatpush.bf16.msra.mxu0 %v4185
    %4269 = vmatmul.bf16.gmra.mxu0 %v4055
    %v4270 = vpop.f32.mrf.mxu0
    %v4271 = vadd.f32 0.0, %v4270
    %v4272 = vpop.f32.mrf.mxu0
    %4273 = vdwg.mxu0
    %4274 = vmatpush.bf16.msra.mxu0 %v4214
    %4275 = vmatpush.bf16.msra.mxu0 %v4210
    %4276 = vmatpush.bf16.msra.mxu0 %v4206
    %4277 = vmatpush.bf16.msra.mxu0 %v4202
    %4278 = vmatpush.bf16.msra.mxu0 %v4198
    %4279 = vmatpush.bf16.msra.mxu0 %v4194
    %4280 = vmatpush.bf16.msra.mxu0 %v4190
    %4281 = vmatpush.bf16.msra.mxu0 %v4186
    %4282 = vmatmul.bf16.gmra.mxu0 %v4055
    %v4283 = vpop.f32.mrf.mxu0
    %v4284 = vadd.f32 0.0, %v4283
    %v4285 = vpop.f32.mrf.mxu0
    %4286 = vdwg.mxu0
    %4287 = vmatpush.bf16.msra.mxu0 %v4215
    %4288 = vmatpush.bf16.msra.mxu0 %v4211
    %4289 = vmatpush.bf16.msra.mxu0 %v4207
    %4290 = vmatpush.bf16.msra.mxu0 %v4203
    %4291 = vmatpush.bf16.msra.mxu0 %v4199
    %4292 = vmatpush.bf16.msra.mxu0 %v4195
    %4293 = vmatpush.bf16.msra.mxu0 %v4191
    %4294 = vmatpush.bf16.msra.mxu0 %v4187
    %4295 = vmatmul.bf16.gmra.mxu0 %v4055
    %v4296 = vpop.f32.mrf.mxu0
    %v4297 = vadd.f32 0.0, %v4296
    %v4298 = vpop.f32.mrf.mxu0
    %4299 = vdwg.mxu0
    %v4300 = vadd.f32 %v4051, %v4258
    %v4301 = vadd.f32 %v4052, %v4271
    %v4302 = vadd.f32 %v4053, %v4284
    %v4303 = vadd.f32 %v4054, %v4297
    %v4304 = vxor.u32 %v4300, 2147483648
    %v4305 = vmul.f32 %v4304, 1.442695
    %v4306 = vpow.pop %v4305
    %v4307 = vadd.f32 %v4306, 1.0
    %v4308 = vrcp.pop %v4307
    %v4309 = vmul.f32 %v4307, %v4308
    %v4310 = vsub.f32 1.0, %v4309
    %v4311 = vmul.f32 %v4308, %v4310
    %v4312 = vadd.f32 %v4308, %v4311
    %vm4313 = vweird.f32 %v4307
    %vm4314 = vweird.f32 %v4308
    %vm4315 = vmor %vm4313, %vm4314
    %v4316 = vsel %vm4315, %v4308, %v4312
    %v4317 = vand.u32 2147483647, %v4307
    %vm4318 = vcmp.eq.f32.partialorder %v4317, 8.507059e+37
    %v4319 = vand.u32 %v4307, 2147483648
    %v4320 = vor.u32 1.1754944e-38, %v4319
    %v4321 = vsel %vm4318, %v4320, %v4316
    %v4322 = vmul.f32 1.0, %v4321
    %v4323 = vxor.u32 %v4301, 2147483648
    %v4324 = vmul.f32 %v4323, 1.442695
    %v4325 = vpow.pop %v4324
    %v4326 = vadd.f32 %v4325, 1.0
    %v4327 = vrcp.pop %v4326
    %v4328 = vmul.f32 %v4326, %v4327
    %v4329 = vsub.f32 1.0, %v4328
    %v4330 = vmul.f32 %v4327, %v4329
    %v4331 = vadd.f32 %v4327, %v4330
    %vm4332 = vweird.f32 %v4326
    %vm4333 = vweird.f32 %v4327
    %vm4334 = vmor %vm4332, %vm4333
    %v4335 = vsel %vm4334, %v4327, %v4331
    %v4336 = vand.u32 2147483647, %v4326
    %vm4337 = vcmp.eq.f32.partialorder %v4336, 8.507059e+37
    %v4338 = vand.u32 %v4326, 2147483648
    %v4339 = vor.u32 1.1754944e-38, %v4338
    %v4340 = vsel %vm4337, %v4339, %v4335
    %v4341 = vmul.f32 1.0, %v4340
    %v4342 = vtanh.pop %v4302
    %v4343 = vxor.u32 %v4303, 2147483648
    %v4344 = vmul.f32 %v4343, 1.442695
    %v4345 = vpow.pop %v4344
    %v4346 = vadd.f32 %v4345, 1.0
    %v4347 = vrcp.pop %v4346
    %v4348 = vmul.f32 %v4346, %v4347
    %v4349 = vsub.f32 1.0, %v4348
    %v4350 = vmul.f32 %v4347, %v4349
    %v4351 = vadd.f32 %v4347, %v4350
    %vm4352 = vweird.f32 %v4346
    %vm4353 = vweird.f32 %v4347
    %vm4354 = vmor %vm4352, %vm4353
    %v4355 = vsel %vm4354, %v4347, %v4351
    %v4356 = vand.u32 2147483647, %v4346
    %vm4357 = vcmp.eq.f32.partialorder %v4356, 8.507059e+37
    %v4358 = vand.u32 %v4346, 2147483648
    %v4359 = vor.u32 1.1754944e-38, %v4358
    %v4360 = vsel %vm4357, %v4359, %v4355
    %v4361 = vmul.f32 1.0, %v4360
    %v4362 = vmul.f32 %v4341, %v4047
    %v4363 = vmul.f32 %v4322, %v4342
    %v4364 = vadd.f32 %v4362, %v4363
    %v4365 = vtanh.pop %v4364
    %v4366 = vmul.f32 %v4361, %v4365
    %4367 = vst [vmem:[%s1442] sm:$0xff] %v4366
    %v4368 = vld [vmem:[%s1446] sm:$0xff]
    %v4369 = vld [vmem:[%s1446 + $0x8] sm:$0xff]
    %v4370 = vld [vmem:[%s1446 + $0x10] sm:$0xff]
    %v4371 = vld [vmem:[%s1446 + $0x18] sm:$0xff]
    %v4372 = vpack.c.bf16 %v4366, %v4366
    %v4373 = vld [vmem:[#allocation15] sm:$0xff]
    %v4374 = vld [vmem:[#allocation15 + $0x8] sm:$0xff]
    %v4375 = vld [vmem:[#allocation15 + $0x10] sm:$0xff]
    %v4376 = vld [vmem:[#allocation15 + $0x18] sm:$0xff]
    %v4377 = vld [vmem:[#allocation15 + $0x20] sm:$0xff]
    %v4378 = vld [vmem:[#allocation15 + $0x28] sm:$0xff]
    %v4379 = vld [vmem:[#allocation15 + $0x30] sm:$0xff]
    %v4380 = vld [vmem:[#allocation15 + $0x38] sm:$0xff]
    %v4381 = vld [vmem:[#allocation15 + $0x40] sm:$0xff]
    %v4382 = vld [vmem:[#allocation15 + $0x48] sm:$0xff]
    %v4383 = vld [vmem:[#allocation15 + $0x50] sm:$0xff]
    %v4384 = vld [vmem:[#allocation15 + $0x58] sm:$0xff]
    %v4385 = vld [vmem:[#allocation15 + $0x60] sm:$0xff]
    %v4386 = vld [vmem:[#allocation15 + $0x68] sm:$0xff]
    %v4387 = vld [vmem:[#allocation15 + $0x70] sm:$0xff]
    %v4388 = vld [vmem:[#allocation15 + $0x78] sm:$0xff]
    %v4389 = vld [vmem:[#allocation15 + $0x80] sm:$0xff]
    %v4390 = vld [vmem:[#allocation15 + $0x88] sm:$0xff]
    %v4391 = vld [vmem:[#allocation15 + $0x90] sm:$0xff]
    %v4392 = vld [vmem:[#allocation15 + $0x98] sm:$0xff]
    %v4393 = vld [vmem:[#allocation15 + $0xa0] sm:$0xff]
    %v4394 = vld [vmem:[#allocation15 + $0xa8] sm:$0xff]
    %v4395 = vld [vmem:[#allocation15 + $0xb0] sm:$0xff]
    %v4396 = vld [vmem:[#allocation15 + $0xb8] sm:$0xff]
    %v4397 = vld [vmem:[#allocation15 + $0xc0] sm:$0xff]
    %v4398 = vld [vmem:[#allocation15 + $0xc8] sm:$0xff]
    %v4399 = vld [vmem:[#allocation15 + $0xd0] sm:$0xff]
    %v4400 = vld [vmem:[#allocation15 + $0xd8] sm:$0xff]
    %v4401 = vld [vmem:[#allocation15 + $0xe0] sm:$0xff]
    %v4402 = vld [vmem:[#allocation15 + $0xe8] sm:$0xff]
    %v4403 = vld [vmem:[#allocation15 + $0xf0] sm:$0xff]
    %v4404 = vld [vmem:[#allocation15 + $0xf8] sm:$0xff]
    %v4437 = vunpack.c.l.b16 %v4373
    %v4438 = vunpack.c.h.b16 %v4373
    %v4439 = vunpack.c.l.b16 %v4374
    %v4440 = vunpack.c.h.b16 %v4374
    %v4441 = vunpack.c.l.b16 %v4375
    %v4442 = vunpack.c.h.b16 %v4375
    %v4443 = vunpack.c.l.b16 %v4376
    %v4444 = vunpack.c.h.b16 %v4376
    %v4445 = vunpack.c.l.b16 %v4377
    %v4446 = vunpack.c.h.b16 %v4377
    %v4447 = vunpack.c.l.b16 %v4378
    %v4448 = vunpack.c.h.b16 %v4378
    %v4449 = vunpack.c.l.b16 %v4379
    %v4450 = vunpack.c.h.b16 %v4379
    %v4451 = vunpack.c.l.b16 %v4380
    %v4452 = vunpack.c.h.b16 %v4380
    %v4453 = vunpack.c.l.b16 %v4381
    %v4454 = vunpack.c.h.b16 %v4381
    %v4455 = vunpack.c.l.b16 %v4382
    %v4456 = vunpack.c.h.b16 %v4382
    %v4457 = vunpack.c.l.b16 %v4383
    %v4458 = vunpack.c.h.b16 %v4383
    %v4459 = vunpack.c.l.b16 %v4384
    %v4460 = vunpack.c.h.b16 %v4384
    %v4461 = vunpack.c.l.b16 %v4385
    %v4462 = vunpack.c.h.b16 %v4385
    %v4463 = vunpack.c.l.b16 %v4386
    %v4464 = vunpack.c.h.b16 %v4386
    %v4465 = vunpack.c.l.b16 %v4387
    %v4466 = vunpack.c.h.b16 %v4387
    %v4467 = vunpack.c.l.b16 %v4388
    %v4468 = vunpack.c.h.b16 %v4388
    %v4469 = vunpack.c.l.b16 %v4389
    %v4470 = vunpack.c.h.b16 %v4389
    %v4471 = vunpack.c.l.b16 %v4390
    %v4472 = vunpack.c.h.b16 %v4390
    %v4473 = vunpack.c.l.b16 %v4391
    %v4474 = vunpack.c.h.b16 %v4391
    %v4475 = vunpack.c.l.b16 %v4392
    %v4476 = vunpack.c.h.b16 %v4392
    %v4477 = vunpack.c.l.b16 %v4393
    %v4478 = vunpack.c.h.b16 %v4393
    %v4479 = vunpack.c.l.b16 %v4394
    %v4480 = vunpack.c.h.b16 %v4394
    %v4481 = vunpack.c.l.b16 %v4395
    %v4482 = vunpack.c.h.b16 %v4395
    %v4483 = vunpack.c.l.b16 %v4396
    %v4484 = vunpack.c.h.b16 %v4396
    %v4485 = vunpack.c.l.b16 %v4397
    %v4486 = vunpack.c.h.b16 %v4397
    %v4487 = vunpack.c.l.b16 %v4398
    %v4488 = vunpack.c.h.b16 %v4398
    %v4489 = vunpack.c.l.b16 %v4399
    %v4490 = vunpack.c.h.b16 %v4399
    %v4491 = vunpack.c.l.b16 %v4400
    %v4492 = vunpack.c.h.b16 %v4400
    %v4493 = vunpack.c.l.b16 %v4401
    %v4494 = vunpack.c.h.b16 %v4401
    %v4495 = vunpack.c.l.b16 %v4402
    %v4496 = vunpack.c.h.b16 %v4402
    %v4497 = vunpack.c.l.b16 %v4403
    %v4498 = vunpack.c.h.b16 %v4403
    %v4499 = vunpack.c.l.b16 %v4404
    %v4500 = vunpack.c.h.b16 %v4404
    %v4501 = vpack.c.b16 %v4441, %v4437
    %v4502 = vpack.c.b16 %v4442, %v4438
    %v4503 = vpack.c.b16 %v4443, %v4439
    %v4504 = vpack.c.b16 %v4444, %v4440
    %v4505 = vpack.c.b16 %v4449, %v4445
    %v4506 = vpack.c.b16 %v4450, %v4446
    %v4507 = vpack.c.b16 %v4451, %v4447
    %v4508 = vpack.c.b16 %v4452, %v4448
    %v4509 = vpack.c.b16 %v4457, %v4453
    %v4510 = vpack.c.b16 %v4458, %v4454
    %v4511 = vpack.c.b16 %v4459, %v4455
    %v4512 = vpack.c.b16 %v4460, %v4456
    %v4513 = vpack.c.b16 %v4465, %v4461
    %v4514 = vpack.c.b16 %v4466, %v4462
    %v4515 = vpack.c.b16 %v4467, %v4463
    %v4516 = vpack.c.b16 %v4468, %v4464
    %v4517 = vpack.c.b16 %v4473, %v4469
    %v4518 = vpack.c.b16 %v4474, %v4470
    %v4519 = vpack.c.b16 %v4475, %v4471
    %v4520 = vpack.c.b16 %v4476, %v4472
    %v4521 = vpack.c.b16 %v4481, %v4477
    %v4522 = vpack.c.b16 %v4482, %v4478
    %v4523 = vpack.c.b16 %v4483, %v4479
    %v4524 = vpack.c.b16 %v4484, %v4480
    %v4525 = vpack.c.b16 %v4489, %v4485
    %v4526 = vpack.c.b16 %v4490, %v4486
    %v4527 = vpack.c.b16 %v4491, %v4487
    %v4528 = vpack.c.b16 %v4492, %v4488
    %v4529 = vpack.c.b16 %v4497, %v4493
    %v4530 = vpack.c.b16 %v4498, %v4494
    %v4531 = vpack.c.b16 %v4499, %v4495
    %v4532 = vpack.c.b16 %v4500, %v4496
    %4565 = vmatpush.bf16.msra.mxu0 %v4529
    %4566 = vmatpush.bf16.msra.mxu0 %v4525
    %4567 = vmatpush.bf16.msra.mxu0 %v4521
    %4568 = vmatpush.bf16.msra.mxu0 %v4517
    %4569 = vmatpush.bf16.msra.mxu0 %v4513
    %4570 = vmatpush.bf16.msra.mxu0 %v4509
    %4571 = vmatpush.bf16.msra.mxu0 %v4505
    %4572 = vmatpush.bf16.msra.mxu0 %v4501
    %4573 = vmatmul.bf16.gmra.mxu0 %v4372
    %v4574 = vpop.f32.mrf.mxu0
    %v4575 = vadd.f32 0.0, %v4574
    %v4576 = vpop.f32.mrf.mxu0
    %4577 = vdwg.mxu0
    %4578 = vmatpush.bf16.msra.mxu0 %v4530
    %4579 = vmatpush.bf16.msra.mxu0 %v4526
    %4580 = vmatpush.bf16.msra.mxu0 %v4522
    %4581 = vmatpush.bf16.msra.mxu0 %v4518
    %4582 = vmatpush.bf16.msra.mxu0 %v4514
    %4583 = vmatpush.bf16.msra.mxu0 %v4510
    %4584 = vmatpush.bf16.msra.mxu0 %v4506
    %4585 = vmatpush.bf16.msra.mxu0 %v4502
    %4586 = vmatmul.bf16.gmra.mxu0 %v4372
    %v4587 = vpop.f32.mrf.mxu0
    %v4588 = vadd.f32 0.0, %v4587
    %v4589 = vpop.f32.mrf.mxu0
    %4590 = vdwg.mxu0
    %4591 = vmatpush.bf16.msra.mxu0 %v4531
    %4592 = vmatpush.bf16.msra.mxu0 %v4527
    %4593 = vmatpush.bf16.msra.mxu0 %v4523
    %4594 = vmatpush.bf16.msra.mxu0 %v4519
    %4595 = vmatpush.bf16.msra.mxu0 %v4515
    %4596 = vmatpush.bf16.msra.mxu0 %v4511
    %4597 = vmatpush.bf16.msra.mxu0 %v4507
    %4598 = vmatpush.bf16.msra.mxu0 %v4503
    %4599 = vmatmul.bf16.gmra.mxu0 %v4372
    %v4600 = vpop.f32.mrf.mxu0
    %v4601 = vadd.f32 0.0, %v4600
    %v4602 = vpop.f32.mrf.mxu0
    %4603 = vdwg.mxu0
    %4604 = vmatpush.bf16.msra.mxu0 %v4532
    %4605 = vmatpush.bf16.msra.mxu0 %v4528
    %4606 = vmatpush.bf16.msra.mxu0 %v4524
    %4607 = vmatpush.bf16.msra.mxu0 %v4520
    %4608 = vmatpush.bf16.msra.mxu0 %v4516
    %4609 = vmatpush.bf16.msra.mxu0 %v4512
    %4610 = vmatpush.bf16.msra.mxu0 %v4508
    %4611 = vmatpush.bf16.msra.mxu0 %v4504
    %4612 = vmatmul.bf16.gmra.mxu0 %v4372
    %v4613 = vpop.f32.mrf.mxu0
    %v4614 = vadd.f32 0.0, %v4613
    %v4615 = vpop.f32.mrf.mxu0
    %4616 = vdwg.mxu0
    %v4617 = vadd.f32 %v4368, %v4575
    %v4618 = vadd.f32 %v4369, %v4588
    %v4619 = vadd.f32 %v4370, %v4601
    %v4620 = vadd.f32 %v4371, %v4614
    %v4621 = vxor.u32 %v4617, 2147483648
    %v4622 = vmul.f32 %v4621, 1.442695
    %v4623 = vpow.pop %v4622
    %v4624 = vadd.f32 %v4623, 1.0
    %v4625 = vrcp.pop %v4624
    %v4626 = vmul.f32 %v4624, %v4625
    %v4627 = vsub.f32 1.0, %v4626
    %v4628 = vmul.f32 %v4625, %v4627
    %v4629 = vadd.f32 %v4625, %v4628
    %vm4630 = vweird.f32 %v4624
    %vm4631 = vweird.f32 %v4625
    %vm4632 = vmor %vm4630, %vm4631
    %v4633 = vsel %vm4632, %v4625, %v4629
    %v4634 = vand.u32 2147483647, %v4624
    %vm4635 = vcmp.eq.f32.partialorder %v4634, 8.507059e+37
    %v4636 = vand.u32 %v4624, 2147483648
    %v4637 = vor.u32 1.1754944e-38, %v4636
    %v4638 = vsel %vm4635, %v4637, %v4633
    %v4639 = vmul.f32 1.0, %v4638
    %v4640 = vxor.u32 %v4618, 2147483648
    %v4641 = vmul.f32 %v4640, 1.442695
    %v4642 = vpow.pop %v4641
    %v4643 = vadd.f32 %v4642, 1.0
    %v4644 = vrcp.pop %v4643
    %v4645 = vmul.f32 %v4643, %v4644
    %v4646 = vsub.f32 1.0, %v4645
    %v4647 = vmul.f32 %v4644, %v4646
    %v4648 = vadd.f32 %v4644, %v4647
    %vm4649 = vweird.f32 %v4643
    %vm4650 = vweird.f32 %v4644
    %vm4651 = vmor %vm4649, %vm4650
    %v4652 = vsel %vm4651, %v4644, %v4648
    %v4653 = vand.u32 2147483647, %v4643
    %vm4654 = vcmp.eq.f32.partialorder %v4653, 8.507059e+37
    %v4655 = vand.u32 %v4643, 2147483648
    %v4656 = vor.u32 1.1754944e-38, %v4655
    %v4657 = vsel %vm4654, %v4656, %v4652
    %v4658 = vmul.f32 1.0, %v4657
    %v4659 = vtanh.pop %v4619
    %v4660 = vxor.u32 %v4620, 2147483648
    %v4661 = vmul.f32 %v4660, 1.442695
    %v4662 = vpow.pop %v4661
    %v4663 = vadd.f32 %v4662, 1.0
    %v4664 = vrcp.pop %v4663
    %v4665 = vmul.f32 %v4663, %v4664
    %v4666 = vsub.f32 1.0, %v4665
    %v4667 = vmul.f32 %v4664, %v4666
    %v4668 = vadd.f32 %v4664, %v4667
    %vm4669 = vweird.f32 %v4663
    %vm4670 = vweird.f32 %v4664
    %vm4671 = vmor %vm4669, %vm4670
    %v4672 = vsel %vm4671, %v4664, %v4668
    %v4673 = vand.u32 2147483647, %v4663
    %vm4674 = vcmp.eq.f32.partialorder %v4673, 8.507059e+37
    %v4675 = vand.u32 %v4663, 2147483648
    %v4676 = vor.u32 1.1754944e-38, %v4675
    %v4677 = vsel %vm4674, %v4676, %v4672
    %v4678 = vmul.f32 1.0, %v4677
    %v4679 = vmul.f32 %v4658, %v4364
    %v4680 = vmul.f32 %v4639, %v4659
    %v4681 = vadd.f32 %v4679, %v4680
    %v4682 = vtanh.pop %v4681
    %v4683 = vmul.f32 %v4678, %v4682
    %4684 = vst [vmem:[%s1763] sm:$0xff] %v4683
    %v4685 = vld [vmem:[%s1767] sm:$0xff]
    %v4686 = vld [vmem:[%s1767 + $0x8] sm:$0xff]
    %v4687 = vld [vmem:[%s1767 + $0x10] sm:$0xff]
    %v4688 = vld [vmem:[%s1767 + $0x18] sm:$0xff]
    %v4689 = vpack.c.bf16 %v4683, %v4683
    %v4690 = vld [vmem:[#allocation15] sm:$0xff]
    %v4691 = vld [vmem:[#allocation15 + $0x8] sm:$0xff]
    %v4692 = vld [vmem:[#allocation15 + $0x10] sm:$0xff]
    %v4693 = vld [vmem:[#allocation15 + $0x18] sm:$0xff]
    %v4694 = vld [vmem:[#allocation15 + $0x20] sm:$0xff]
    %v4695 = vld [vmem:[#allocation15 + $0x28] sm:$0xff]
    %v4696 = vld [vmem:[#allocation15 + $0x30] sm:$0xff]
    %v4697 = vld [vmem:[#allocation15 + $0x38] sm:$0xff]
    %v4698 = vld [vmem:[#allocation15 + $0x40] sm:$0xff]
    %v4699 = vld [vmem:[#allocation15 + $0x48] sm:$0xff]
    %v4700 = vld [vmem:[#allocation15 + $0x50] sm:$0xff]
    %v4701 = vld [vmem:[#allocation15 + $0x58] sm:$0xff]
    %v4702 = vld [vmem:[#allocation15 + $0x60] sm:$0xff]
    %v4703 = vld [vmem:[#allocation15 + $0x68] sm:$0xff]
    %v4704 = vld [vmem:[#allocation15 + $0x70] sm:$0xff]
    %v4705 = vld [vmem:[#allocation15 + $0x78] sm:$0xff]
    %v4706 = vld [vmem:[#allocation15 + $0x80] sm:$0xff]
    %v4707 = vld [vmem:[#allocation15 + $0x88] sm:$0xff]
    %v4708 = vld [vmem:[#allocation15 + $0x90] sm:$0xff]
    %v4709 = vld [vmem:[#allocation15 + $0x98] sm:$0xff]
    %v4710 = vld [vmem:[#allocation15 + $0xa0] sm:$0xff]
    %v4711 = vld [vmem:[#allocation15 + $0xa8] sm:$0xff]
    %v4712 = vld [vmem:[#allocation15 + $0xb0] sm:$0xff]
    %v4713 = vld [vmem:[#allocation15 + $0xb8] sm:$0xff]
    %v4714 = vld [vmem:[#allocation15 + $0xc0] sm:$0xff]
    %v4715 = vld [vmem:[#allocation15 + $0xc8] sm:$0xff]
    %v4716 = vld [vmem:[#allocation15 + $0xd0] sm:$0xff]
    %v4717 = vld [vmem:[#allocation15 + $0xd8] sm:$0xff]
    %v4718 = vld [vmem:[#allocation15 + $0xe0] sm:$0xff]
    %v4719 = vld [vmem:[#allocation15 + $0xe8] sm:$0xff]
    %v4720 = vld [vmem:[#allocation15 + $0xf0] sm:$0xff]
    %v4721 = vld [vmem:[#allocation15 + $0xf8] sm:$0xff]
    %v4754 = vunpack.c.l.b16 %v4690
    %v4755 = vunpack.c.h.b16 %v4690
    %v4756 = vunpack.c.l.b16 %v4691
    %v4757 = vunpack.c.h.b16 %v4691
    %v4758 = vunpack.c.l.b16 %v4692
    %v4759 = vunpack.c.h.b16 %v4692
    %v4760 = vunpack.c.l.b16 %v4693
    %v4761 = vunpack.c.h.b16 %v4693
    %v4762 = vunpack.c.l.b16 %v4694
    %v4763 = vunpack.c.h.b16 %v4694
    %v4764 = vunpack.c.l.b16 %v4695
    %v4765 = vunpack.c.h.b16 %v4695
    %v4766 = vunpack.c.l.b16 %v4696
    %v4767 = vunpack.c.h.b16 %v4696
    %v4768 = vunpack.c.l.b16 %v4697
    %v4769 = vunpack.c.h.b16 %v4697
    %v4770 = vunpack.c.l.b16 %v4698
    %v4771 = vunpack.c.h.b16 %v4698
    %v4772 = vunpack.c.l.b16 %v4699
    %v4773 = vunpack.c.h.b16 %v4699
    %v4774 = vunpack.c.l.b16 %v4700
    %v4775 = vunpack.c.h.b16 %v4700
    %v4776 = vunpack.c.l.b16 %v4701
    %v4777 = vunpack.c.h.b16 %v4701
    %v4778 = vunpack.c.l.b16 %v4702
    %v4779 = vunpack.c.h.b16 %v4702
    %v4780 = vunpack.c.l.b16 %v4703
    %v4781 = vunpack.c.h.b16 %v4703
    %v4782 = vunpack.c.l.b16 %v4704
    %v4783 = vunpack.c.h.b16 %v4704
    %v4784 = vunpack.c.l.b16 %v4705
    %v4785 = vunpack.c.h.b16 %v4705
    %v4786 = vunpack.c.l.b16 %v4706
    %v4787 = vunpack.c.h.b16 %v4706
    %v4788 = vunpack.c.l.b16 %v4707
    %v4789 = vunpack.c.h.b16 %v4707
    %v4790 = vunpack.c.l.b16 %v4708
    %v4791 = vunpack.c.h.b16 %v4708
    %v4792 = vunpack.c.l.b16 %v4709
    %v4793 = vunpack.c.h.b16 %v4709
    %v4794 = vunpack.c.l.b16 %v4710
    %v4795 = vunpack.c.h.b16 %v4710
    %v4796 = vunpack.c.l.b16 %v4711
    %v4797 = vunpack.c.h.b16 %v4711
    %v4798 = vunpack.c.l.b16 %v4712
    %v4799 = vunpack.c.h.b16 %v4712
    %v4800 = vunpack.c.l.b16 %v4713
    %v4801 = vunpack.c.h.b16 %v4713
    %v4802 = vunpack.c.l.b16 %v4714
    %v4803 = vunpack.c.h.b16 %v4714
    %v4804 = vunpack.c.l.b16 %v4715
    %v4805 = vunpack.c.h.b16 %v4715
    %v4806 = vunpack.c.l.b16 %v4716
    %v4807 = vunpack.c.h.b16 %v4716
    %v4808 = vunpack.c.l.b16 %v4717
    %v4809 = vunpack.c.h.b16 %v4717
    %v4810 = vunpack.c.l.b16 %v4718
    %v4811 = vunpack.c.h.b16 %v4718
    %v4812 = vunpack.c.l.b16 %v4719
    %v4813 = vunpack.c.h.b16 %v4719
    %v4814 = vunpack.c.l.b16 %v4720
    %v4815 = vunpack.c.h.b16 %v4720
    %v4816 = vunpack.c.l.b16 %v4721
    %v4817 = vunpack.c.h.b16 %v4721
    %v4818 = vpack.c.b16 %v4758, %v4754
    %v4819 = vpack.c.b16 %v4759, %v4755
    %v4820 = vpack.c.b16 %v4760, %v4756
    %v4821 = vpack.c.b16 %v4761, %v4757
    %v4822 = vpack.c.b16 %v4766, %v4762
    %v4823 = vpack.c.b16 %v4767, %v4763
    %v4824 = vpack.c.b16 %v4768, %v4764
    %v4825 = vpack.c.b16 %v4769, %v4765
    %v4826 = vpack.c.b16 %v4774, %v4770
    %v4827 = vpack.c.b16 %v4775, %v4771
    %v4828 = vpack.c.b16 %v4776, %v4772
    %v4829 = vpack.c.b16 %v4777, %v4773
    %v4830 = vpack.c.b16 %v4782, %v4778
    %v4831 = vpack.c.b16 %v4783, %v4779
    %v4832 = vpack.c.b16 %v4784, %v4780
    %v4833 = vpack.c.b16 %v4785, %v4781
    %v4834 = vpack.c.b16 %v4790, %v4786
    %v4835 = vpack.c.b16 %v4791, %v4787
    %v4836 = vpack.c.b16 %v4792, %v4788
    %v4837 = vpack.c.b16 %v4793, %v4789
    %v4838 = vpack.c.b16 %v4798, %v4794
    %v4839 = vpack.c.b16 %v4799, %v4795
    %v4840 = vpack.c.b16 %v4800, %v4796
    %v4841 = vpack.c.b16 %v4801, %v4797
    %v4842 = vpack.c.b16 %v4806, %v4802
    %v4843 = vpack.c.b16 %v4807, %v4803
    %v4844 = vpack.c.b16 %v4808, %v4804
    %v4845 = vpack.c.b16 %v4809, %v4805
    %v4846 = vpack.c.b16 %v4814, %v4810
    %v4847 = vpack.c.b16 %v4815, %v4811
    %v4848 = vpack.c.b16 %v4816, %v4812
    %v4849 = vpack.c.b16 %v4817, %v4813
    %4882 = vmatpush.bf16.msra.mxu0 %v4846
    %4883 = vmatpush.bf16.msra.mxu0 %v4842
    %4884 = vmatpush.bf16.msra.mxu0 %v4838
    %4885 = vmatpush.bf16.msra.mxu0 %v4834
    %4886 = vmatpush.bf16.msra.mxu0 %v4830
    %4887 = vmatpush.bf16.msra.mxu0 %v4826
    %4888 = vmatpush.bf16.msra.mxu0 %v4822
    %4889 = vmatpush.bf16.msra.mxu0 %v4818
    %4890 = vmatmul.bf16.gmra.mxu0 %v4689
    %v4891 = vpop.f32.mrf.mxu0
    %v4892 = vadd.f32 0.0, %v4891
    %v4893 = vpop.f32.mrf.mxu0
    %4894 = vdwg.mxu0
    %4895 = vmatpush.bf16.msra.mxu0 %v4847
    %4896 = vmatpush.bf16.msra.mxu0 %v4843
    %4897 = vmatpush.bf16.msra.mxu0 %v4839
    %4898 = vmatpush.bf16.msra.mxu0 %v4835
    %4899 = vmatpush.bf16.msra.mxu0 %v4831
    %4900 = vmatpush.bf16.msra.mxu0 %v4827
    %4901 = vmatpush.bf16.msra.mxu0 %v4823
    %4902 = vmatpush.bf16.msra.mxu0 %v4819
    %4903 = vmatmul.bf16.gmra.mxu0 %v4689
    %v4904 = vpop.f32.mrf.mxu0
    %v4905 = vadd.f32 0.0, %v4904
    %v4906 = vpop.f32.mrf.mxu0
    %4907 = vdwg.mxu0
    %4908 = vmatpush.bf16.msra.mxu0 %v4848
    %4909 = vmatpush.bf16.msra.mxu0 %v4844
    %4910 = vmatpush.bf16.msra.mxu0 %v4840
    %4911 = vmatpush.bf16.msra.mxu0 %v4836
    %4912 = vmatpush.bf16.msra.mxu0 %v4832
    %4913 = vmatpush.bf16.msra.mxu0 %v4828
    %4914 = vmatpush.bf16.msra.mxu0 %v4824
    %4915 = vmatpush.bf16.msra.mxu0 %v4820
    %4916 = vmatmul.bf16.gmra.mxu0 %v4689
    %v4917 = vpop.f32.mrf.mxu0
    %v4918 = vadd.f32 0.0, %v4917
    %v4919 = vpop.f32.mrf.mxu0
    %4920 = vdwg.mxu0
    %4921 = vmatpush.bf16.msra.mxu0 %v4849
    %4922 = vmatpush.bf16.msra.mxu0 %v4845
    %4923 = vmatpush.bf16.msra.mxu0 %v4841
    %4924 = vmatpush.bf16.msra.mxu0 %v4837
    %4925 = vmatpush.bf16.msra.mxu0 %v4833
    %4926 = vmatpush.bf16.msra.mxu0 %v4829
    %4927 = vmatpush.bf16.msra.mxu0 %v4825
    %4928 = vmatpush.bf16.msra.mxu0 %v4821
    %4929 = vmatmul.bf16.gmra.mxu0 %v4689
    %v4930 = vpop.f32.mrf.mxu0
    %v4931 = vadd.f32 0.0, %v4930
    %v4932 = vpop.f32.mrf.mxu0
    %4933 = vdwg.mxu0
    %v4934 = vadd.f32 %v4685, %v4892
    %v4935 = vadd.f32 %v4686, %v4905
    %v4936 = vadd.f32 %v4687, %v4918
    %v4937 = vadd.f32 %v4688, %v4931
    %v4938 = vxor.u32 %v4934, 2147483648
    %v4939 = vmul.f32 %v4938, 1.442695
    %v4940 = vpow.pop %v4939
    %v4941 = vadd.f32 %v4940, 1.0
    %v4942 = vrcp.pop %v4941
    %v4943 = vmul.f32 %v4941, %v4942
    %v4944 = vsub.f32 1.0, %v4943
    %v4945 = vmul.f32 %v4942, %v4944
    %v4946 = vadd.f32 %v4942, %v4945
    %vm4947 = vweird.f32 %v4941
    %vm4948 = vweird.f32 %v4942
    %vm4949 = vmor %vm4947, %vm4948
    %v4950 = vsel %vm4949, %v4942, %v4946
    %v4951 = vand.u32 2147483647, %v4941
    %vm4952 = vcmp.eq.f32.partialorder %v4951, 8.507059e+37
    %v4953 = vand.u32 %v4941, 2147483648
    %v4954 = vor.u32 1.1754944e-38, %v4953
    %v4955 = vsel %vm4952, %v4954, %v4950
    %v4956 = vmul.f32 1.0, %v4955
    %v4957 = vxor.u32 %v4935, 2147483648
    %v4958 = vmul.f32 %v4957, 1.442695
    %v4959 = vpow.pop %v4958
    %v4960 = vadd.f32 %v4959, 1.0
    %v4961 = vrcp.pop %v4960
    %v4962 = vmul.f32 %v4960, %v4961
    %v4963 = vsub.f32 1.0, %v4962
    %v4964 = vmul.f32 %v4961, %v4963
    %v4965 = vadd.f32 %v4961, %v4964
    %vm4966 = vweird.f32 %v4960
    %vm4967 = vweird.f32 %v4961
    %vm4968 = vmor %vm4966, %vm4967
    %v4969 = vsel %vm4968, %v4961, %v4965
    %v4970 = vand.u32 2147483647, %v4960
    %vm4971 = vcmp.eq.f32.partialorder %v4970, 8.507059e+37
    %v4972 = vand.u32 %v4960, 2147483648
    %v4973 = vor.u32 1.1754944e-38, %v4972
    %v4974 = vsel %vm4971, %v4973, %v4969
    %v4975 = vmul.f32 1.0, %v4974
    %v4976 = vtanh.pop %v4936
    %v4977 = vxor.u32 %v4937, 2147483648
    %v4978 = vmul.f32 %v4977, 1.442695
    %v4979 = vpow.pop %v4978
    %v4980 = vadd.f32 %v4979, 1.0
    %v4981 = vrcp.pop %v4980
    %v4982 = vmul.f32 %v4980, %v4981
    %v4983 = vsub.f32 1.0, %v4982
    %v4984 = vmul.f32 %v4981, %v4983
    %v4985 = vadd.f32 %v4981, %v4984
    %vm4986 = vweird.f32 %v4980
    %vm4987 = vweird.f32 %v4981
    %vm4988 = vmor %vm4986, %vm4987
    %v4989 = vsel %vm4988, %v4981, %v4985
    %v4990 = vand.u32 2147483647, %v4980
    %vm4991 = vcmp.eq.f32.partialorder %v4990, 8.507059e+37
    %v4992 = vand.u32 %v4980, 2147483648
    %v4993 = vor.u32 1.1754944e-38, %v4992
    %v4994 = vsel %vm4991, %v4993, %v4989
    %v4995 = vmul.f32 1.0, %v4994
    %v4996 = vmul.f32 %v4975, %v4681
    %v4997 = vmul.f32 %v4956, %v4976
    %v4998 = vadd.f32 %v4996, %v4997
    %v4999 = vtanh.pop %v4998
    %v5000 = vmul.f32 %v4995, %v4999
    %5001 = vst [vmem:[%s2084] sm:$0xff] %v5000
    %v5002 = vld [vmem:[%s2088] sm:$0xff]
    %v5003 = vld [vmem:[%s2088 + $0x8] sm:$0xff]
    %v5004 = vld [vmem:[%s2088 + $0x10] sm:$0xff]
    %v5005 = vld [vmem:[%s2088 + $0x18] sm:$0xff]
    %v5006 = vpack.c.bf16 %v5000, %v5000
    %v5007 = vld [vmem:[#allocation15] sm:$0xff]
    %v5008 = vld [vmem:[#allocation15 + $0x8] sm:$0xff]
    %v5009 = vld [vmem:[#allocation15 + $0x10] sm:$0xff]
    %v5010 = vld [vmem:[#allocation15 + $0x18] sm:$0xff]
    %v5011 = vld [vmem:[#allocation15 + $0x20] sm:$0xff]
    %v5012 = vld [vmem:[#allocation15 + $0x28] sm:$0xff]
    %v5013 = vld [vmem:[#allocation15 + $0x30] sm:$0xff]
    %v5014 = vld [vmem:[#allocation15 + $0x38] sm:$0xff]
    %v5015 = vld [vmem:[#allocation15 + $0x40] sm:$0xff]
    %v5016 = vld [vmem:[#allocation15 + $0x48] sm:$0xff]
    %v5017 = vld [vmem:[#allocation15 + $0x50] sm:$0xff]
    %v5018 = vld [vmem:[#allocation15 + $0x58] sm:$0xff]
    %v5019 = vld [vmem:[#allocation15 + $0x60] sm:$0xff]
    %v5020 = vld [vmem:[#allocation15 + $0x68] sm:$0xff]
    %v5021 = vld [vmem:[#allocation15 + $0x70] sm:$0xff]
    %v5022 = vld [vmem:[#allocation15 + $0x78] sm:$0xff]
    %v5023 = vld [vmem:[#allocation15 + $0x80] sm:$0xff]
    %v5024 = vld [vmem:[#allocation15 + $0x88] sm:$0xff]
    %v5025 = vld [vmem:[#allocation15 + $0x90] sm:$0xff]
    %v5026 = vld [vmem:[#allocation15 + $0x98] sm:$0xff]
    %v5027 = vld [vmem:[#allocation15 + $0xa0] sm:$0xff]
    %v5028 = vld [vmem:[#allocation15 + $0xa8] sm:$0xff]
    %v5029 = vld [vmem:[#allocation15 + $0xb0] sm:$0xff]
    %v5030 = vld [vmem:[#allocation15 + $0xb8] sm:$0xff]
    %v5031 = vld [vmem:[#allocation15 + $0xc0] sm:$0xff]
    %v5032 = vld [vmem:[#allocation15 + $0xc8] sm:$0xff]
    %v5033 = vld [vmem:[#allocation15 + $0xd0] sm:$0xff]
    %v5034 = vld [vmem:[#allocation15 + $0xd8] sm:$0xff]
    %v5035 = vld [vmem:[#allocation15 + $0xe0] sm:$0xff]
    %v5036 = vld [vmem:[#allocation15 + $0xe8] sm:$0xff]
    %v5037 = vld [vmem:[#allocation15 + $0xf0] sm:$0xff]
    %v5038 = vld [vmem:[#allocation15 + $0xf8] sm:$0xff]
    %v5071 = vunpack.c.l.b16 %v5007
    %v5072 = vunpack.c.h.b16 %v5007
    %v5073 = vunpack.c.l.b16 %v5008
    %v5074 = vunpack.c.h.b16 %v5008
    %v5075 = vunpack.c.l.b16 %v5009
    %v5076 = vunpack.c.h.b16 %v5009
    %v5077 = vunpack.c.l.b16 %v5010
    %v5078 = vunpack.c.h.b16 %v5010
    %v5079 = vunpack.c.l.b16 %v5011
    %v5080 = vunpack.c.h.b16 %v5011
    %v5081 = vunpack.c.l.b16 %v5012
    %v5082 = vunpack.c.h.b16 %v5012
    %v5083 = vunpack.c.l.b16 %v5013
    %v5084 = vunpack.c.h.b16 %v5013
    %v5085 = vunpack.c.l.b16 %v5014
    %v5086 = vunpack.c.h.b16 %v5014
    %v5087 = vunpack.c.l.b16 %v5015
    %v5088 = vunpack.c.h.b16 %v5015
    %v5089 = vunpack.c.l.b16 %v5016
    %v5090 = vunpack.c.h.b16 %v5016
    %v5091 = vunpack.c.l.b16 %v5017
    %v5092 = vunpack.c.h.b16 %v5017
    %v5093 = vunpack.c.l.b16 %v5018
    %v5094 = vunpack.c.h.b16 %v5018
    %v5095 = vunpack.c.l.b16 %v5019
    %v5096 = vunpack.c.h.b16 %v5019
    %v5097 = vunpack.c.l.b16 %v5020
    %v5098 = vunpack.c.h.b16 %v5020
    %v5099 = vunpack.c.l.b16 %v5021
    %v5100 = vunpack.c.h.b16 %v5021
    %v5101 = vunpack.c.l.b16 %v5022
    %v5102 = vunpack.c.h.b16 %v5022
    %v5103 = vunpack.c.l.b16 %v5023
    %v5104 = vunpack.c.h.b16 %v5023
    %v5105 = vunpack.c.l.b16 %v5024
    %v5106 = vunpack.c.h.b16 %v5024
    %v5107 = vunpack.c.l.b16 %v5025
    %v5108 = vunpack.c.h.b16 %v5025
    %v5109 = vunpack.c.l.b16 %v5026
    %v5110 = vunpack.c.h.b16 %v5026
    %v5111 = vunpack.c.l.b16 %v5027
    %v5112 = vunpack.c.h.b16 %v5027
    %v5113 = vunpack.c.l.b16 %v5028
    %v5114 = vunpack.c.h.b16 %v5028
    %v5115 = vunpack.c.l.b16 %v5029
    %v5116 = vunpack.c.h.b16 %v5029
    %v5117 = vunpack.c.l.b16 %v5030
    %v5118 = vunpack.c.h.b16 %v5030
    %v5119 = vunpack.c.l.b16 %v5031
    %v5120 = vunpack.c.h.b16 %v5031
    %v5121 = vunpack.c.l.b16 %v5032
    %v5122 = vunpack.c.h.b16 %v5032
    %v5123 = vunpack.c.l.b16 %v5033
    %v5124 = vunpack.c.h.b16 %v5033
    %v5125 = vunpack.c.l.b16 %v5034
    %v5126 = vunpack.c.h.b16 %v5034
    %v5127 = vunpack.c.l.b16 %v5035
    %v5128 = vunpack.c.h.b16 %v5035
    %v5129 = vunpack.c.l.b16 %v5036
    %v5130 = vunpack.c.h.b16 %v5036
    %v5131 = vunpack.c.l.b16 %v5037
    %v5132 = vunpack.c.h.b16 %v5037
    %v5133 = vunpack.c.l.b16 %v5038
    %v5134 = vunpack.c.h.b16 %v5038
    %v5135 = vpack.c.b16 %v5075, %v5071
    %v5136 = vpack.c.b16 %v5076, %v5072
    %v5137 = vpack.c.b16 %v5077, %v5073
    %v5138 = vpack.c.b16 %v5078, %v5074
    %v5139 = vpack.c.b16 %v5083, %v5079
    %v5140 = vpack.c.b16 %v5084, %v5080
    %v5141 = vpack.c.b16 %v5085, %v5081
    %v5142 = vpack.c.b16 %v5086, %v5082
    %v5143 = vpack.c.b16 %v5091, %v5087
    %v5144 = vpack.c.b16 %v5092, %v5088
    %v5145 = vpack.c.b16 %v5093, %v5089
    %v5146 = vpack.c.b16 %v5094, %v5090
    %v5147 = vpack.c.b16 %v5099, %v5095
    %v5148 = vpack.c.b16 %v5100, %v5096
    %v5149 = vpack.c.b16 %v5101, %v5097
    %v5150 = vpack.c.b16 %v5102, %v5098
    %v5151 = vpack.c.b16 %v5107, %v5103
    %v5152 = vpack.c.b16 %v5108, %v5104
    %v5153 = vpack.c.b16 %v5109, %v5105
    %v5154 = vpack.c.b16 %v5110, %v5106
    %v5155 = vpack.c.b16 %v5115, %v5111
    %v5156 = vpack.c.b16 %v5116, %v5112
    %v5157 = vpack.c.b16 %v5117, %v5113
    %v5158 = vpack.c.b16 %v5118, %v5114
    %v5159 = vpack.c.b16 %v5123, %v5119
    %v5160 = vpack.c.b16 %v5124, %v5120
    %v5161 = vpack.c.b16 %v5125, %v5121
    %v5162 = vpack.c.b16 %v5126, %v5122
    %v5163 = vpack.c.b16 %v5131, %v5127
    %v5164 = vpack.c.b16 %v5132, %v5128
    %v5165 = vpack.c.b16 %v5133, %v5129
    %v5166 = vpack.c.b16 %v5134, %v5130
    %5199 = vmatpush.bf16.msra.mxu0 %v5163
    %5200 = vmatpush.bf16.msra.mxu0 %v5159
    %5201 = vmatpush.bf16.msra.mxu0 %v5155
    %5202 = vmatpush.bf16.msra.mxu0 %v5151
    %5203 = vmatpush.bf16.msra.mxu0 %v5147
    %5204 = vmatpush.bf16.msra.mxu0 %v5143
    %5205 = vmatpush.bf16.msra.mxu0 %v5139
    %5206 = vmatpush.bf16.msra.mxu0 %v5135
    %5207 = vmatmul.bf16.gmra.mxu0 %v5006
    %v5208 = vpop.f32.mrf.mxu0
    %v5209 = vadd.f32 0.0, %v5208
    %v5210 = vpop.f32.mrf.mxu0
    %5211 = vdwg.mxu0
    %5212 = vmatpush.bf16.msra.mxu0 %v5164
    %5213 = vmatpush.bf16.msra.mxu0 %v5160
    %5214 = vmatpush.bf16.msra.mxu0 %v5156
    %5215 = vmatpush.bf16.msra.mxu0 %v5152
    %5216 = vmatpush.bf16.msra.mxu0 %v5148
    %5217 = vmatpush.bf16.msra.mxu0 %v5144
    %5218 = vmatpush.bf16.msra.mxu0 %v5140
    %5219 = vmatpush.bf16.msra.mxu0 %v5136
    %5220 = vmatmul.bf16.gmra.mxu0 %v5006
    %v5221 = vpop.f32.mrf.mxu0
    %v5222 = vadd.f32 0.0, %v5221
    %v5223 = vpop.f32.mrf.mxu0
    %5224 = vdwg.mxu0
    %5225 = vmatpush.bf16.msra.mxu0 %v5165
    %5226 = vmatpush.bf16.msra.mxu0 %v5161
    %5227 = vmatpush.bf16.msra.mxu0 %v5157
    %5228 = vmatpush.bf16.msra.mxu0 %v5153
    %5229 = vmatpush.bf16.msra.mxu0 %v5149
    %5230 = vmatpush.bf16.msra.mxu0 %v5145
    %5231 = vmatpush.bf16.msra.mxu0 %v5141
    %5232 = vmatpush.bf16.msra.mxu0 %v5137
    %5233 = vmatmul.bf16.gmra.mxu0 %v5006
    %v5234 = vpop.f32.mrf.mxu0
    %v5235 = vadd.f32 0.0, %v5234
    %v5236 = vpop.f32.mrf.mxu0
    %5237 = vdwg.mxu0
    %5238 = vmatpush.bf16.msra.mxu0 %v5166
    %5239 = vmatpush.bf16.msra.mxu0 %v5162
    %5240 = vmatpush.bf16.msra.mxu0 %v5158
    %5241 = vmatpush.bf16.msra.mxu0 %v5154
    %5242 = vmatpush.bf16.msra.mxu0 %v5150
    %5243 = vmatpush.bf16.msra.mxu0 %v5146
    %5244 = vmatpush.bf16.msra.mxu0 %v5142
    %5245 = vmatpush.bf16.msra.mxu0 %v5138
    %5246 = vmatmul.bf16.gmra.mxu0 %v5006
    %v5247 = vpop.f32.mrf.mxu0
    %v5248 = vadd.f32 0.0, %v5247
    %v5249 = vpop.f32.mrf.mxu0
    %5250 = vdwg.mxu0
    %v5251 = vadd.f32 %v5002, %v5209
    %v5252 = vadd.f32 %v5003, %v5222
    %v5253 = vadd.f32 %v5004, %v5235
    %v5254 = vadd.f32 %v5005, %v5248
    %v5255 = vxor.u32 %v5251, 2147483648
    %v5256 = vmul.f32 %v5255, 1.442695
    %v5257 = vpow.pop %v5256
    %v5258 = vadd.f32 %v5257, 1.0
    %v5259 = vrcp.pop %v5258
    %v5260 = vmul.f32 %v5258, %v5259
    %v5261 = vsub.f32 1.0, %v5260
    %v5262 = vmul.f32 %v5259, %v5261
    %v5263 = vadd.f32 %v5259, %v5262
    %vm5264 = vweird.f32 %v5258
    %vm5265 = vweird.f32 %v5259
    %vm5266 = vmor %vm5264, %vm5265
    %v5267 = vsel %vm5266, %v5259, %v5263
    %v5268 = vand.u32 2147483647, %v5258
    %vm5269 = vcmp.eq.f32.partialorder %v5268, 8.507059e+37
    %v5270 = vand.u32 %v5258, 2147483648
    %v5271 = vor.u32 1.1754944e-38, %v5270
    %v5272 = vsel %vm5269, %v5271, %v5267
    %v5273 = vmul.f32 1.0, %v5272
    %v5274 = vxor.u32 %v5252, 2147483648
    %v5275 = vmul.f32 %v5274, 1.442695
    %v5276 = vpow.pop %v5275
    %v5277 = vadd.f32 %v5276, 1.0
    %v5278 = vrcp.pop %v5277
    %v5279 = vmul.f32 %v5277, %v5278
    %v5280 = vsub.f32 1.0, %v5279
    %v5281 = vmul.f32 %v5278, %v5280
    %v5282 = vadd.f32 %v5278, %v5281
    %vm5283 = vweird.f32 %v5277
    %vm5284 = vweird.f32 %v5278
    %vm5285 = vmor %vm5283, %vm5284
    %v5286 = vsel %vm5285, %v5278, %v5282
    %v5287 = vand.u32 2147483647, %v5277
    %vm5288 = vcmp.eq.f32.partialorder %v5287, 8.507059e+37
    %v5289 = vand.u32 %v5277, 2147483648
    %v5290 = vor.u32 1.1754944e-38, %v5289
    %v5291 = vsel %vm5288, %v5290, %v5286
    %v5292 = vmul.f32 1.0, %v5291
    %v5293 = vtanh.pop %v5253
    %v5294 = vxor.u32 %v5254, 2147483648
    %v5295 = vmul.f32 %v5294, 1.442695
    %v5296 = vpow.pop %v5295
    %v5297 = vadd.f32 %v5296, 1.0
    %v5298 = vrcp.pop %v5297
    %v5299 = vmul.f32 %v5297, %v5298
    %v5300 = vsub.f32 1.0, %v5299
    %v5301 = vmul.f32 %v5298, %v5300
    %v5302 = vadd.f32 %v5298, %v5301
    %vm5303 = vweird.f32 %v5297
    %vm5304 = vweird.f32 %v5298
    %vm5305 = vmor %vm5303, %vm5304
    %v5306 = vsel %vm5305, %v5298, %v5302
    %v5307 = vand.u32 2147483647, %v5297
    %vm5308 = vcmp.eq.f32.partialorder %v5307, 8.507059e+37
    %v5309 = vand.u32 %v5297, 2147483648
    %v5310 = vor.u32 1.1754944e-38, %v5309
    %v5311 = vsel %vm5308, %v5310, %v5306
    %v5312 = vmul.f32 1.0, %v5311
    %v5313 = vmul.f32 %v5292, %v4998
    %v5314 = vmul.f32 %v5273, %v5293
    %v5315 = vadd.f32 %v5313, %v5314
    %v5316 = vtanh.pop %v5315
    %v5317 = vmul.f32 %v5312, %v5316
    %5318 = vst [vmem:[%s2405] sm:$0xff] %v5317
    %v5319 = vld [vmem:[%s2409] sm:$0xff]
    %v5320 = vld [vmem:[%s2409 + $0x8] sm:$0xff]
    %v5321 = vld [vmem:[%s2409 + $0x10] sm:$0xff]
    %v5322 = vld [vmem:[%s2409 + $0x18] sm:$0xff]
    %v5323 = vpack.c.bf16 %v5317, %v5317
    %v5324 = vld [vmem:[#allocation15] sm:$0xff]
    %v5325 = vld [vmem:[#allocation15 + $0x8] sm:$0xff]
    %v5326 = vld [vmem:[#allocation15 + $0x10] sm:$0xff]
    %v5327 = vld [vmem:[#allocation15 + $0x18] sm:$0xff]
    %v5328 = vld [vmem:[#allocation15 + $0x20] sm:$0xff]
    %v5329 = vld [vmem:[#allocation15 + $0x28] sm:$0xff]
    %v5330 = vld [vmem:[#allocation15 + $0x30] sm:$0xff]
    %v5331 = vld [vmem:[#allocation15 + $0x38] sm:$0xff]
    %v5332 = vld [vmem:[#allocation15 + $0x40] sm:$0xff]
    %v5333 = vld [vmem:[#allocation15 + $0x48] sm:$0xff]
    %v5334 = vld [vmem:[#allocation15 + $0x50] sm:$0xff]
    %v5335 = vld [vmem:[#allocation15 + $0x58] sm:$0xff]
    %v5336 = vld [vmem:[#allocation15 + $0x60] sm:$0xff]
    %v5337 = vld [vmem:[#allocation15 + $0x68] sm:$0xff]
    %v5338 = vld [vmem:[#allocation15 + $0x70] sm:$0xff]
    %v5339 = vld [vmem:[#allocation15 + $0x78] sm:$0xff]
    %v5340 = vld [vmem:[#allocation15 + $0x80] sm:$0xff]
    %v5341 = vld [vmem:[#allocation15 + $0x88] sm:$0xff]
    %v5342 = vld [vmem:[#allocation15 + $0x90] sm:$0xff]
    %v5343 = vld [vmem:[#allocation15 + $0x98] sm:$0xff]
    %v5344 = vld [vmem:[#allocation15 + $0xa0] sm:$0xff]
    %v5345 = vld [vmem:[#allocation15 + $0xa8] sm:$0xff]
    %v5346 = vld [vmem:[#allocation15 + $0xb0] sm:$0xff]
    %v5347 = vld [vmem:[#allocation15 + $0xb8] sm:$0xff]
    %v5348 = vld [vmem:[#allocation15 + $0xc0] sm:$0xff]
    %v5349 = vld [vmem:[#allocation15 + $0xc8] sm:$0xff]
    %v5350 = vld [vmem:[#allocation15 + $0xd0] sm:$0xff]
    %v5351 = vld [vmem:[#allocation15 + $0xd8] sm:$0xff]
    %v5352 = vld [vmem:[#allocation15 + $0xe0] sm:$0xff]
    %v5353 = vld [vmem:[#allocation15 + $0xe8] sm:$0xff]
    %v5354 = vld [vmem:[#allocation15 + $0xf0] sm:$0xff]
    %v5355 = vld [vmem:[#allocation15 + $0xf8] sm:$0xff]
    %v5388 = vunpack.c.l.b16 %v5324
    %v5389 = vunpack.c.h.b16 %v5324
    %v5390 = vunpack.c.l.b16 %v5325
    %v5391 = vunpack.c.h.b16 %v5325
    %v5392 = vunpack.c.l.b16 %v5326
    %v5393 = vunpack.c.h.b16 %v5326
    %v5394 = vunpack.c.l.b16 %v5327
    %v5395 = vunpack.c.h.b16 %v5327
    %v5396 = vunpack.c.l.b16 %v5328
    %v5397 = vunpack.c.h.b16 %v5328
    %v5398 = vunpack.c.l.b16 %v5329
    %v5399 = vunpack.c.h.b16 %v5329
    %v5400 = vunpack.c.l.b16 %v5330
    %v5401 = vunpack.c.h.b16 %v5330
    %v5402 = vunpack.c.l.b16 %v5331
    %v5403 = vunpack.c.h.b16 %v5331
    %v5404 = vunpack.c.l.b16 %v5332
    %v5405 = vunpack.c.h.b16 %v5332
    %v5406 = vunpack.c.l.b16 %v5333
    %v5407 = vunpack.c.h.b16 %v5333
    %v5408 = vunpack.c.l.b16 %v5334
    %v5409 = vunpack.c.h.b16 %v5334
    %v5410 = vunpack.c.l.b16 %v5335
    %v5411 = vunpack.c.h.b16 %v5335
    %v5412 = vunpack.c.l.b16 %v5336
    %v5413 = vunpack.c.h.b16 %v5336
    %v5414 = vunpack.c.l.b16 %v5337
    %v5415 = vunpack.c.h.b16 %v5337
    %v5416 = vunpack.c.l.b16 %v5338
    %v5417 = vunpack.c.h.b16 %v5338
    %v5418 = vunpack.c.l.b16 %v5339
    %v5419 = vunpack.c.h.b16 %v5339
    %v5420 = vunpack.c.l.b16 %v5340
    %v5421 = vunpack.c.h.b16 %v5340
    %v5422 = vunpack.c.l.b16 %v5341
    %v5423 = vunpack.c.h.b16 %v5341
    %v5424 = vunpack.c.l.b16 %v5342
    %v5425 = vunpack.c.h.b16 %v5342
    %v5426 = vunpack.c.l.b16 %v5343
    %v5427 = vunpack.c.h.b16 %v5343
    %v5428 = vunpack.c.l.b16 %v5344
    %v5429 = vunpack.c.h.b16 %v5344
    %v5430 = vunpack.c.l.b16 %v5345
    %v5431 = vunpack.c.h.b16 %v5345
    %v5432 = vunpack.c.l.b16 %v5346
    %v5433 = vunpack.c.h.b16 %v5346
    %v5434 = vunpack.c.l.b16 %v5347
    %v5435 = vunpack.c.h.b16 %v5347
    %v5436 = vunpack.c.l.b16 %v5348
    %v5437 = vunpack.c.h.b16 %v5348
    %v5438 = vunpack.c.l.b16 %v5349
    %v5439 = vunpack.c.h.b16 %v5349
    %v5440 = vunpack.c.l.b16 %v5350
    %v5441 = vunpack.c.h.b16 %v5350
    %v5442 = vunpack.c.l.b16 %v5351
    %v5443 = vunpack.c.h.b16 %v5351
    %v5444 = vunpack.c.l.b16 %v5352
    %v5445 = vunpack.c.h.b16 %v5352
    %v5446 = vunpack.c.l.b16 %v5353
    %v5447 = vunpack.c.h.b16 %v5353
    %v5448 = vunpack.c.l.b16 %v5354
    %v5449 = vunpack.c.h.b16 %v5354
    %v5450 = vunpack.c.l.b16 %v5355
    %v5451 = vunpack.c.h.b16 %v5355
    %v5452 = vpack.c.b16 %v5392, %v5388
    %v5453 = vpack.c.b16 %v5393, %v5389
    %v5454 = vpack.c.b16 %v5394, %v5390
    %v5455 = vpack.c.b16 %v5395, %v5391
    %v5456 = vpack.c.b16 %v5400, %v5396
    %v5457 = vpack.c.b16 %v5401, %v5397
    %v5458 = vpack.c.b16 %v5402, %v5398
    %v5459 = vpack.c.b16 %v5403, %v5399
    %v5460 = vpack.c.b16 %v5408, %v5404
    %v5461 = vpack.c.b16 %v5409, %v5405
    %v5462 = vpack.c.b16 %v5410, %v5406
    %v5463 = vpack.c.b16 %v5411, %v5407
    %v5464 = vpack.c.b16 %v5416, %v5412
    %v5465 = vpack.c.b16 %v5417, %v5413
    %v5466 = vpack.c.b16 %v5418, %v5414
    %v5467 = vpack.c.b16 %v5419, %v5415
    %v5468 = vpack.c.b16 %v5424, %v5420
    %v5469 = vpack.c.b16 %v5425, %v5421
    %v5470 = vpack.c.b16 %v5426, %v5422
    %v5471 = vpack.c.b16 %v5427, %v5423
    %v5472 = vpack.c.b16 %v5432, %v5428
    %v5473 = vpack.c.b16 %v5433, %v5429
    %v5474 = vpack.c.b16 %v5434, %v5430
    %v5475 = vpack.c.b16 %v5435, %v5431
    %v5476 = vpack.c.b16 %v5440, %v5436
    %v5477 = vpack.c.b16 %v5441, %v5437
    %v5478 = vpack.c.b16 %v5442, %v5438
    %v5479 = vpack.c.b16 %v5443, %v5439
    %v5480 = vpack.c.b16 %v5448, %v5444
    %v5481 = vpack.c.b16 %v5449, %v5445
    %v5482 = vpack.c.b16 %v5450, %v5446
    %v5483 = vpack.c.b16 %v5451, %v5447
    %5516 = vmatpush.bf16.msra.mxu0 %v5480
    %5517 = vmatpush.bf16.msra.mxu0 %v5476
    %5518 = vmatpush.bf16.msra.mxu0 %v5472
    %5519 = vmatpush.bf16.msra.mxu0 %v5468
    %5520 = vmatpush.bf16.msra.mxu0 %v5464
    %5521 = vmatpush.bf16.msra.mxu0 %v5460
    %5522 = vmatpush.bf16.msra.mxu0 %v5456
    %5523 = vmatpush.bf16.msra.mxu0 %v5452
    %5524 = vmatmul.bf16.gmra.mxu0 %v5323
    %v5525 = vpop.f32.mrf.mxu0
    %v5526 = vadd.f32 0.0, %v5525
    %v5527 = vpop.f32.mrf.mxu0
    %5528 = vdwg.mxu0
    %5529 = vmatpush.bf16.msra.mxu0 %v5481
    %5530 = vmatpush.bf16.msra.mxu0 %v5477
    %5531 = vmatpush.bf16.msra.mxu0 %v5473
    %5532 = vmatpush.bf16.msra.mxu0 %v5469
    %5533 = vmatpush.bf16.msra.mxu0 %v5465
    %5534 = vmatpush.bf16.msra.mxu0 %v5461
    %5535 = vmatpush.bf16.msra.mxu0 %v5457
    %5536 = vmatpush.bf16.msra.mxu0 %v5453
    %5537 = vmatmul.bf16.gmra.mxu0 %v5323
    %v5538 = vpop.f32.mrf.mxu0
    %v5539 = vadd.f32 0.0, %v5538
    %v5540 = vpop.f32.mrf.mxu0
    %5541 = vdwg.mxu0
    %5542 = vmatpush.bf16.msra.mxu0 %v5482
    %5543 = vmatpush.bf16.msra.mxu0 %v5478
    %5544 = vmatpush.bf16.msra.mxu0 %v5474
    %5545 = vmatpush.bf16.msra.mxu0 %v5470
    %5546 = vmatpush.bf16.msra.mxu0 %v5466
    %5547 = vmatpush.bf16.msra.mxu0 %v5462
    %5548 = vmatpush.bf16.msra.mxu0 %v5458
    %5549 = vmatpush.bf16.msra.mxu0 %v5454
    %5550 = vmatmul.bf16.gmra.mxu0 %v5323
    %v5551 = vpop.f32.mrf.mxu0
    %v5552 = vadd.f32 0.0, %v5551
    %v5553 = vpop.f32.mrf.mxu0
    %5554 = vdwg.mxu0
    %5555 = vmatpush.bf16.msra.mxu0 %v5483
    %5556 = vmatpush.bf16.msra.mxu0 %v5479
    %5557 = vmatpush.bf16.msra.mxu0 %v5475
    %5558 = vmatpush.bf16.msra.mxu0 %v5471
    %5559 = vmatpush.bf16.msra.mxu0 %v5467
    %5560 = vmatpush.bf16.msra.mxu0 %v5463
    %5561 = vmatpush.bf16.msra.mxu0 %v5459
    %5562 = vmatpush.bf16.msra.mxu0 %v5455
    %5563 = vmatmul.bf16.gmra.mxu0 %v5323
    %v5564 = vpop.f32.mrf.mxu0
    %v5565 = vadd.f32 0.0, %v5564
    %v5566 = vpop.f32.mrf.mxu0
    %5567 = vdwg.mxu0
    %v5568 = vadd.f32 %v5319, %v5526
    %v5569 = vadd.f32 %v5320, %v5539
    %v5570 = vadd.f32 %v5321, %v5552
    %v5571 = vadd.f32 %v5322, %v5565
    %v5572 = vxor.u32 %v5568, 2147483648
    %v5573 = vmul.f32 %v5572, 1.442695
    %v5574 = vpow.pop %v5573
    %v5575 = vadd.f32 %v5574, 1.0
    %v5576 = vrcp.pop %v5575
    %v5577 = vmul.f32 %v5575, %v5576
    %v5578 = vsub.f32 1.0, %v5577
    %v5579 = vmul.f32 %v5576, %v5578
    %v5580 = vadd.f32 %v5576, %v5579
    %vm5581 = vweird.f32 %v5575
    %vm5582 = vweird.f32 %v5576
    %vm5583 = vmor %vm5581, %vm5582
    %v5584 = vsel %vm5583, %v5576, %v5580
    %v5585 = vand.u32 2147483647, %v5575
    %vm5586 = vcmp.eq.f32.partialorder %v5585, 8.507059e+37
    %v5587 = vand.u32 %v5575, 2147483648
    %v5588 = vor.u32 1.1754944e-38, %v5587
    %v5589 = vsel %vm5586, %v5588, %v5584
    %v5590 = vmul.f32 1.0, %v5589
    %v5591 = vxor.u32 %v5569, 2147483648
    %v5592 = vmul.f32 %v5591, 1.442695
    %v5593 = vpow.pop %v5592
    %v5594 = vadd.f32 %v5593, 1.0
    %v5595 = vrcp.pop %v5594
    %v5596 = vmul.f32 %v5594, %v5595
    %v5597 = vsub.f32 1.0, %v5596
    %v5598 = vmul.f32 %v5595, %v5597
    %v5599 = vadd.f32 %v5595, %v5598
    %vm5600 = vweird.f32 %v5594
    %vm5601 = vweird.f32 %v5595
    %vm5602 = vmor %vm5600, %vm5601
    %v5603 = vsel %vm5602, %v5595, %v5599
    %v5604 = vand.u32 2147483647, %v5594
    %vm5605 = vcmp.eq.f32.partialorder %v5604, 8.507059e+37
    %v5606 = vand.u32 %v5594, 2147483648
    %v5607 = vor.u32 1.1754944e-38, %v5606
    %v5608 = vsel %vm5605, %v5607, %v5603
    %v5609 = vmul.f32 1.0, %v5608
    %v5610 = vtanh.pop %v5570
    %v5611 = vxor.u32 %v5571, 2147483648
    %v5612 = vmul.f32 %v5611, 1.442695
    %v5613 = vpow.pop %v5612
    %v5614 = vadd.f32 %v5613, 1.0
    %v5615 = vrcp.pop %v5614
    %v5616 = vmul.f32 %v5614, %v5615
    %v5617 = vsub.f32 1.0, %v5616
    %v5618 = vmul.f32 %v5615, %v5617
    %v5619 = vadd.f32 %v5615, %v5618
    %vm5620 = vweird.f32 %v5614
    %vm5621 = vweird.f32 %v5615
    %vm5622 = vmor %vm5620, %vm5621
    %v5623 = vsel %vm5622, %v5615, %v5619
    %v5624 = vand.u32 2147483647, %v5614
    %vm5625 = vcmp.eq.f32.partialorder %v5624, 8.507059e+37
    %v5626 = vand.u32 %v5614, 2147483648
    %v5627 = vor.u32 1.1754944e-38, %v5626
    %v5628 = vsel %vm5625, %v5627, %v5623
    %v5629 = vmul.f32 1.0, %v5628
    %v5630 = vmul.f32 %v5609, %v5315
    %v5631 = vmul.f32 %v5590, %v5610
    %v5632 = vadd.f32 %v5630, %v5631
    %v5633 = vtanh.pop %v5632
    %v5634 = vmul.f32 %v5629, %v5633
    %5635 = vst [vmem:[%s2726] sm:$0xff] %v5634
    %v5636 = vld [vmem:[%s2730] sm:$0xff]
    %v5637 = vld [vmem:[%s2730 + $0x8] sm:$0xff]
    %v5638 = vld [vmem:[%s2730 + $0x10] sm:$0xff]
    %v5639 = vld [vmem:[%s2730 + $0x18] sm:$0xff]
    %v5640 = vpack.c.bf16 %v5634, %v5634
    %v5641 = vld [vmem:[#allocation15] sm:$0xff]
    %v5642 = vld [vmem:[#allocation15 + $0x8] sm:$0xff]
    %v5643 = vld [vmem:[#allocation15 + $0x10] sm:$0xff]
    %v5644 = vld [vmem:[#allocation15 + $0x18] sm:$0xff]
    %v5645 = vld [vmem:[#allocation15 + $0x20] sm:$0xff]
    %v5646 = vld [vmem:[#allocation15 + $0x28] sm:$0xff]
    %v5647 = vld [vmem:[#allocation15 + $0x30] sm:$0xff]
    %v5648 = vld [vmem:[#allocation15 + $0x38] sm:$0xff]
    %v5649 = vld [vmem:[#allocation15 + $0x40] sm:$0xff]
    %v5650 = vld [vmem:[#allocation15 + $0x48] sm:$0xff]
    %v5651 = vld [vmem:[#allocation15 + $0x50] sm:$0xff]
    %v5652 = vld [vmem:[#allocation15 + $0x58] sm:$0xff]
    %v5653 = vld [vmem:[#allocation15 + $0x60] sm:$0xff]
    %v5654 = vld [vmem:[#allocation15 + $0x68] sm:$0xff]
    %v5655 = vld [vmem:[#allocation15 + $0x70] sm:$0xff]
    %v5656 = vld [vmem:[#allocation15 + $0x78] sm:$0xff]
    %v5657 = vld [vmem:[#allocation15 + $0x80] sm:$0xff]
    %v5658 = vld [vmem:[#allocation15 + $0x88] sm:$0xff]
    %v5659 = vld [vmem:[#allocation15 + $0x90] sm:$0xff]
    %v5660 = vld [vmem:[#allocation15 + $0x98] sm:$0xff]
    %v5661 = vld [vmem:[#allocation15 + $0xa0] sm:$0xff]
    %v5662 = vld [vmem:[#allocation15 + $0xa8] sm:$0xff]
    %v5663 = vld [vmem:[#allocation15 + $0xb0] sm:$0xff]
    %v5664 = vld [vmem:[#allocation15 + $0xb8] sm:$0xff]
    %v5665 = vld [vmem:[#allocation15 + $0xc0] sm:$0xff]
    %v5666 = vld [vmem:[#allocation15 + $0xc8] sm:$0xff]
    %v5667 = vld [vmem:[#allocation15 + $0xd0] sm:$0xff]
    %v5668 = vld [vmem:[#allocation15 + $0xd8] sm:$0xff]
    %v5669 = vld [vmem:[#allocation15 + $0xe0] sm:$0xff]
    %v5670 = vld [vmem:[#allocation15 + $0xe8] sm:$0xff]
    %v5671 = vld [vmem:[#allocation15 + $0xf0] sm:$0xff]
    %v5672 = vld [vmem:[#allocation15 + $0xf8] sm:$0xff]
    %v5705 = vunpack.c.l.b16 %v5641
    %v5706 = vunpack.c.h.b16 %v5641
    %v5707 = vunpack.c.l.b16 %v5642
    %v5708 = vunpack.c.h.b16 %v5642
    %v5709 = vunpack.c.l.b16 %v5643
    %v5710 = vunpack.c.h.b16 %v5643
    %v5711 = vunpack.c.l.b16 %v5644
    %v5712 = vunpack.c.h.b16 %v5644
    %v5713 = vunpack.c.l.b16 %v5645
    %v5714 = vunpack.c.h.b16 %v5645
    %v5715 = vunpack.c.l.b16 %v5646
    %v5716 = vunpack.c.h.b16 %v5646
    %v5717 = vunpack.c.l.b16 %v5647
    %v5718 = vunpack.c.h.b16 %v5647
    %v5719 = vunpack.c.l.b16 %v5648
    %v5720 = vunpack.c.h.b16 %v5648
    %v5721 = vunpack.c.l.b16 %v5649
    %v5722 = vunpack.c.h.b16 %v5649
    %v5723 = vunpack.c.l.b16 %v5650
    %v5724 = vunpack.c.h.b16 %v5650
    %v5725 = vunpack.c.l.b16 %v5651
    %v5726 = vunpack.c.h.b16 %v5651
    %v5727 = vunpack.c.l.b16 %v5652
    %v5728 = vunpack.c.h.b16 %v5652
    %v5729 = vunpack.c.l.b16 %v5653
    %v5730 = vunpack.c.h.b16 %v5653
    %v5731 = vunpack.c.l.b16 %v5654
    %v5732 = vunpack.c.h.b16 %v5654
    %v5733 = vunpack.c.l.b16 %v5655
    %v5734 = vunpack.c.h.b16 %v5655
    %v5735 = vunpack.c.l.b16 %v5656
    %v5736 = vunpack.c.h.b16 %v5656
    %v5737 = vunpack.c.l.b16 %v5657
    %v5738 = vunpack.c.h.b16 %v5657
    %v5739 = vunpack.c.l.b16 %v5658
    %v5740 = vunpack.c.h.b16 %v5658
    %v5741 = vunpack.c.l.b16 %v5659
    %v5742 = vunpack.c.h.b16 %v5659
    %v5743 = vunpack.c.l.b16 %v5660
    %v5744 = vunpack.c.h.b16 %v5660
    %v5745 = vunpack.c.l.b16 %v5661
    %v5746 = vunpack.c.h.b16 %v5661
    %v5747 = vunpack.c.l.b16 %v5662
    %v5748 = vunpack.c.h.b16 %v5662
    %v5749 = vunpack.c.l.b16 %v5663
    %v5750 = vunpack.c.h.b16 %v5663
    %v5751 = vunpack.c.l.b16 %v5664
    %v5752 = vunpack.c.h.b16 %v5664
    %v5753 = vunpack.c.l.b16 %v5665
    %v5754 = vunpack.c.h.b16 %v5665
    %v5755 = vunpack.c.l.b16 %v5666
    %v5756 = vunpack.c.h.b16 %v5666
    %v5757 = vunpack.c.l.b16 %v5667
    %v5758 = vunpack.c.h.b16 %v5667
    %v5759 = vunpack.c.l.b16 %v5668
    %v5760 = vunpack.c.h.b16 %v5668
    %v5761 = vunpack.c.l.b16 %v5669
    %v5762 = vunpack.c.h.b16 %v5669
    %v5763 = vunpack.c.l.b16 %v5670
    %v5764 = vunpack.c.h.b16 %v5670
    %v5765 = vunpack.c.l.b16 %v5671
    %v5766 = vunpack.c.h.b16 %v5671
    %v5767 = vunpack.c.l.b16 %v5672
    %v5768 = vunpack.c.h.b16 %v5672
    %v5769 = vpack.c.b16 %v5709, %v5705
    %v5770 = vpack.c.b16 %v5710, %v5706
    %v5771 = vpack.c.b16 %v5711, %v5707
    %v5772 = vpack.c.b16 %v5712, %v5708
    %v5773 = vpack.c.b16 %v5717, %v5713
    %v5774 = vpack.c.b16 %v5718, %v5714
    %v5775 = vpack.c.b16 %v5719, %v5715
    %v5776 = vpack.c.b16 %v5720, %v5716
    %v5777 = vpack.c.b16 %v5725, %v5721
    %v5778 = vpack.c.b16 %v5726, %v5722
    %v5779 = vpack.c.b16 %v5727, %v5723
    %v5780 = vpack.c.b16 %v5728, %v5724
    %v5781 = vpack.c.b16 %v5733, %v5729
    %v5782 = vpack.c.b16 %v5734, %v5730
    %v5783 = vpack.c.b16 %v5735, %v5731
    %v5784 = vpack.c.b16 %v5736, %v5732
    %v5785 = vpack.c.b16 %v5741, %v5737
    %v5786 = vpack.c.b16 %v5742, %v5738
    %v5787 = vpack.c.b16 %v5743, %v5739
    %v5788 = vpack.c.b16 %v5744, %v5740
    %v5789 = vpack.c.b16 %v5749, %v5745
    %v5790 = vpack.c.b16 %v5750, %v5746
    %v5791 = vpack.c.b16 %v5751, %v5747
    %v5792 = vpack.c.b16 %v5752, %v5748
    %v5793 = vpack.c.b16 %v5757, %v5753
    %v5794 = vpack.c.b16 %v5758, %v5754
    %v5795 = vpack.c.b16 %v5759, %v5755
    %v5796 = vpack.c.b16 %v5760, %v5756
    %v5797 = vpack.c.b16 %v5765, %v5761
    %v5798 = vpack.c.b16 %v5766, %v5762
    %v5799 = vpack.c.b16 %v5767, %v5763
    %v5800 = vpack.c.b16 %v5768, %v5764
    %5833 = vmatpush.bf16.msra.mxu0 %v5797
    %5834 = vmatpush.bf16.msra.mxu0 %v5793
    %5835 = vmatpush.bf16.msra.mxu0 %v5789
    %5836 = vmatpush.bf16.msra.mxu0 %v5785
    %5837 = vmatpush.bf16.msra.mxu0 %v5781
    %5838 = vmatpush.bf16.msra.mxu0 %v5777
    %5839 = vmatpush.bf16.msra.mxu0 %v5773
    %5840 = vmatpush.bf16.msra.mxu0 %v5769
    %5841 = vmatmul.bf16.gmra.mxu0 %v5640
    %v5842 = vpop.f32.mrf.mxu0
    %v5843 = vadd.f32 0.0, %v5842
    %v5844 = vpop.f32.mrf.mxu0
    %5845 = vdwg.mxu0
    %5846 = vmatpush.bf16.msra.mxu0 %v5798
    %5847 = vmatpush.bf16.msra.mxu0 %v5794
    %5848 = vmatpush.bf16.msra.mxu0 %v5790
    %5849 = vmatpush.bf16.msra.mxu0 %v5786
    %5850 = vmatpush.bf16.msra.mxu0 %v5782
    %5851 = vmatpush.bf16.msra.mxu0 %v5778
    %5852 = vmatpush.bf16.msra.mxu0 %v5774
    %5853 = vmatpush.bf16.msra.mxu0 %v5770
    %5854 = vmatmul.bf16.gmra.mxu0 %v5640
    %v5855 = vpop.f32.mrf.mxu0
    %v5856 = vadd.f32 0.0, %v5855
    %v5857 = vpop.f32.mrf.mxu0
    %5858 = vdwg.mxu0
    %5859 = vmatpush.bf16.msra.mxu0 %v5799
    %5860 = vmatpush.bf16.msra.mxu0 %v5795
    %5861 = vmatpush.bf16.msra.mxu0 %v5791
    %5862 = vmatpush.bf16.msra.mxu0 %v5787
    %5863 = vmatpush.bf16.msra.mxu0 %v5783
    %5864 = vmatpush.bf16.msra.mxu0 %v5779
    %5865 = vmatpush.bf16.msra.mxu0 %v5775
    %5866 = vmatpush.bf16.msra.mxu0 %v5771
    %5867 = vmatmul.bf16.gmra.mxu0 %v5640
    %v5868 = vpop.f32.mrf.mxu0
    %v5869 = vadd.f32 0.0, %v5868
    %v5870 = vpop.f32.mrf.mxu0
    %5871 = vdwg.mxu0
    %5872 = vmatpush.bf16.msra.mxu0 %v5800
    %5873 = vmatpush.bf16.msra.mxu0 %v5796
    %5874 = vmatpush.bf16.msra.mxu0 %v5792
    %5875 = vmatpush.bf16.msra.mxu0 %v5788
    %5876 = vmatpush.bf16.msra.mxu0 %v5784
    %5877 = vmatpush.bf16.msra.mxu0 %v5780
    %5878 = vmatpush.bf16.msra.mxu0 %v5776
    %5879 = vmatpush.bf16.msra.mxu0 %v5772
    %5880 = vmatmul.bf16.gmra.mxu0 %v5640
    %v5881 = vpop.f32.mrf.mxu0
    %v5882 = vadd.f32 0.0, %v5881
    %v5883 = vpop.f32.mrf.mxu0
    %5884 = vdwg.mxu0
    %v5885 = vadd.f32 %v5636, %v5843
    %v5886 = vadd.f32 %v5637, %v5856
    %v5887 = vadd.f32 %v5638, %v5869
    %v5888 = vadd.f32 %v5639, %v5882
    %v5889 = vxor.u32 %v5885, 2147483648
    %v5890 = vmul.f32 %v5889, 1.442695
    %v5891 = vpow.pop %v5890
    %v5892 = vadd.f32 %v5891, 1.0
    %v5893 = vrcp.pop %v5892
    %v5894 = vmul.f32 %v5892, %v5893
    %v5895 = vsub.f32 1.0, %v5894
    %v5896 = vmul.f32 %v5893, %v5895
    %v5897 = vadd.f32 %v5893, %v5896
    %vm5898 = vweird.f32 %v5892
    %vm5899 = vweird.f32 %v5893
    %vm5900 = vmor %vm5898, %vm5899
    %v5901 = vsel %vm5900, %v5893, %v5897
    %v5902 = vand.u32 2147483647, %v5892
    %vm5903 = vcmp.eq.f32.partialorder %v5902, 8.507059e+37
    %v5904 = vand.u32 %v5892, 2147483648
    %v5905 = vor.u32 1.1754944e-38, %v5904
    %v5906 = vsel %vm5903, %v5905, %v5901
    %v5907 = vmul.f32 1.0, %v5906
    %v5908 = vxor.u32 %v5886, 2147483648
    %v5909 = vmul.f32 %v5908, 1.442695
    %v5910 = vpow.pop %v5909
    %v5911 = vadd.f32 %v5910, 1.0
    %v5912 = vrcp.pop %v5911
    %v5913 = vmul.f32 %v5911, %v5912
    %v5914 = vsub.f32 1.0, %v5913
    %v5915 = vmul.f32 %v5912, %v5914
    %v5916 = vadd.f32 %v5912, %v5915
    %vm5917 = vweird.f32 %v5911
    %vm5918 = vweird.f32 %v5912
    %vm5919 = vmor %vm5917, %vm5918
    %v5920 = vsel %vm5919, %v5912, %v5916
    %v5921 = vand.u32 2147483647, %v5911
    %vm5922 = vcmp.eq.f32.partialorder %v5921, 8.507059e+37
    %v5923 = vand.u32 %v5911, 2147483648
    %v5924 = vor.u32 1.1754944e-38, %v5923
    %v5925 = vsel %vm5922, %v5924, %v5920
    %v5926 = vmul.f32 1.0, %v5925
    %v5927 = vtanh.pop %v5887
    %v5928 = vxor.u32 %v5888, 2147483648
    %v5929 = vmul.f32 %v5928, 1.442695
    %v5930 = vpow.pop %v5929
    %v5931 = vadd.f32 %v5930, 1.0
    %v5932 = vrcp.pop %v5931
    %v5933 = vmul.f32 %v5931, %v5932
    %v5934 = vsub.f32 1.0, %v5933
    %v5935 = vmul.f32 %v5932, %v5934
    %v5936 = vadd.f32 %v5932, %v5935
    %vm5937 = vweird.f32 %v5931
    %vm5938 = vweird.f32 %v5932
    %vm5939 = vmor %vm5937, %vm5938
    %v5940 = vsel %vm5939, %v5932, %v5936
    %v5941 = vand.u32 2147483647, %v5931
    %vm5942 = vcmp.eq.f32.partialorder %v5941, 8.507059e+37
    %v5943 = vand.u32 %v5931, 2147483648
    %v5944 = vor.u32 1.1754944e-38, %v5943
    %v5945 = vsel %vm5942, %v5944, %v5940
    %v5946 = vmul.f32 1.0, %v5945
    %v5947 = vmul.f32 %v5926, %v5632
    %v5948 = vmul.f32 %v5907, %v5927
    %v5949 = vadd.f32 %v5947, %v5948
    %v5950 = vtanh.pop %v5949
    %v5951 = vmul.f32 %v5946, %v5950
    %5952 = vst [vmem:[%s3047] sm:$0xff] %v5951
    %s5953 = scalar_lea.vmem [#allocation22], 8
    %5954 = vst [vmem:[%s5953] sm:$0xff] %v5951
    %s5955 = scalar_lea.vmem [#allocation24], 8
    %5956 = vst [vmem:[%s5955] sm:$0xff] %v5949
    %v5957 = vld [vmem:[#allocation2] sm:$0xff]
    %v5958 = vld [vmem:[#allocation2 + $0x8] sm:$0xff]
    %v5959 = vld [vmem:[#allocation2 + $0x10] sm:$0xff]
    %v5960 = vld [vmem:[#allocation2 + $0x18] sm:$0xff]
    %v5961 = vld [vmem:[#allocation2 + $0x20] sm:$0xff]
    %v5962 = vld [vmem:[#allocation2 + $0x28] sm:$0xff]
    %v5963 = vld [vmem:[#allocation2 + $0x30] sm:$0xff]
    %v5964 = vld [vmem:[#allocation2 + $0x38] sm:$0xff]
    %v5965 = vpack.c.bf16 %v5958, %v5957
    %v5966 = vpack.c.bf16 %v5960, %v5959
    %v5967 = vpack.c.bf16 %v5962, %v5961
    %v5968 = vpack.c.bf16 %v5964, %v5963
    %v5969 = vld [vmem:[#allocation18] sm:$0xff]
    %v5970 = vld [vmem:[#allocation18 + $0x8] sm:$0xff]
    %v5971 = vld [vmem:[#allocation18 + $0x10] sm:$0xff]
    %v5972 = vld [vmem:[#allocation18 + $0x18] sm:$0xff]
    %v5973 = vld [vmem:[#allocation18 + $0x20] sm:$0xff]
    %v5974 = vld [vmem:[#allocation18 + $0x28] sm:$0xff]
    %v5975 = vld [vmem:[#allocation18 + $0x30] sm:$0xff]
    %v5976 = vld [vmem:[#allocation18 + $0x38] sm:$0xff]
    %v5977 = vld [vmem:[#allocation18 + $0x40] sm:$0xff]
    %v5978 = vld [vmem:[#allocation18 + $0x48] sm:$0xff]
    %v5979 = vld [vmem:[#allocation18 + $0x50] sm:$0xff]
    %v5980 = vld [vmem:[#allocation18 + $0x58] sm:$0xff]
    %v5981 = vld [vmem:[#allocation18 + $0x60] sm:$0xff]
    %v5982 = vld [vmem:[#allocation18 + $0x68] sm:$0xff]
    %v5983 = vld [vmem:[#allocation18 + $0x70] sm:$0xff]
    %v5984 = vld [vmem:[#allocation18 + $0x78] sm:$0xff]
    %v5985 = vld [vmem:[#allocation18 + $0x80] sm:$0xff]
    %v5986 = vld [vmem:[#allocation18 + $0x88] sm:$0xff]
    %v5987 = vld [vmem:[#allocation18 + $0x90] sm:$0xff]
    %v5988 = vld [vmem:[#allocation18 + $0x98] sm:$0xff]
    %v5989 = vld [vmem:[#allocation18 + $0xa0] sm:$0xff]
    %v5990 = vld [vmem:[#allocation18 + $0xa8] sm:$0xff]
    %v5991 = vld [vmem:[#allocation18 + $0xb0] sm:$0xff]
    %v5992 = vld [vmem:[#allocation18 + $0xb8] sm:$0xff]
    %v5993 = vld [vmem:[#allocation18 + $0xc0] sm:$0xff]
    %v5994 = vld [vmem:[#allocation18 + $0xc8] sm:$0xff]
    %v5995 = vld [vmem:[#allocation18 + $0xd0] sm:$0xff]
    %v5996 = vld [vmem:[#allocation18 + $0xd8] sm:$0xff]
    %v5997 = vld [vmem:[#allocation18 + $0xe0] sm:$0xff]
    %v5998 = vld [vmem:[#allocation18 + $0xe8] sm:$0xff]
    %v5999 = vld [vmem:[#allocation18 + $0xf0] sm:$0xff]
    %v6000 = vld [vmem:[#allocation18 + $0xf8] sm:$0xff]
    %v6001 = vld [vmem:[%s11] sm:$0xf]
    %v6003 = vperm.slane %v6001, 0
    %v6004 = vperm.slane %v6001, 1
    %v6005 = vperm.slane %v6001, 2
    %v6006 = vperm.slane %v6001, 3
    %v6043 = vunpack.c.l.b16 %v5969
    %v6044 = vunpack.c.h.b16 %v5969
    %v6045 = vunpack.c.l.b16 %v5970
    %v6046 = vunpack.c.h.b16 %v5970
    %v6047 = vunpack.c.l.b16 %v5971
    %v6048 = vunpack.c.h.b16 %v5971
    %v6049 = vunpack.c.l.b16 %v5972
    %v6050 = vunpack.c.h.b16 %v5972
    %v6051 = vunpack.c.l.b16 %v5973
    %v6052 = vunpack.c.h.b16 %v5973
    %v6053 = vunpack.c.l.b16 %v5974
    %v6054 = vunpack.c.h.b16 %v5974
    %v6055 = vunpack.c.l.b16 %v5975
    %v6056 = vunpack.c.h.b16 %v5975
    %v6057 = vunpack.c.l.b16 %v5976
    %v6058 = vunpack.c.h.b16 %v5976
    %v6059 = vunpack.c.l.b16 %v5977
    %v6060 = vunpack.c.h.b16 %v5977
    %v6061 = vunpack.c.l.b16 %v5978
    %v6062 = vunpack.c.h.b16 %v5978
    %v6063 = vunpack.c.l.b16 %v5979
    %v6064 = vunpack.c.h.b16 %v5979
    %v6065 = vunpack.c.l.b16 %v5980
    %v6066 = vunpack.c.h.b16 %v5980
    %v6067 = vunpack.c.l.b16 %v5981
    %v6068 = vunpack.c.h.b16 %v5981
    %v6069 = vunpack.c.l.b16 %v5982
    %v6070 = vunpack.c.h.b16 %v5982
    %v6071 = vunpack.c.l.b16 %v5983
    %v6072 = vunpack.c.h.b16 %v5983
    %v6073 = vunpack.c.l.b16 %v5984
    %v6074 = vunpack.c.h.b16 %v5984
    %v6075 = vunpack.c.l.b16 %v5985
    %v6076 = vunpack.c.h.b16 %v5985
    %v6077 = vunpack.c.l.b16 %v5986
    %v6078 = vunpack.c.h.b16 %v5986
    %v6079 = vunpack.c.l.b16 %v5987
    %v6080 = vunpack.c.h.b16 %v5987
    %v6081 = vunpack.c.l.b16 %v5988
    %v6082 = vunpack.c.h.b16 %v5988
    %v6083 = vunpack.c.l.b16 %v5989
    %v6084 = vunpack.c.h.b16 %v5989
    %v6085 = vunpack.c.l.b16 %v5990
    %v6086 = vunpack.c.h.b16 %v5990
    %v6087 = vunpack.c.l.b16 %v5991
    %v6088 = vunpack.c.h.b16 %v5991
    %v6089 = vunpack.c.l.b16 %v5992
    %v6090 = vunpack.c.h.b16 %v5992
    %v6091 = vunpack.c.l.b16 %v5993
    %v6092 = vunpack.c.h.b16 %v5993
    %v6093 = vunpack.c.l.b16 %v5994
    %v6094 = vunpack.c.h.b16 %v5994
    %v6095 = vunpack.c.l.b16 %v5995
    %v6096 = vunpack.c.h.b16 %v5995
    %v6097 = vunpack.c.l.b16 %v5996
    %v6098 = vunpack.c.h.b16 %v5996
    %v6099 = vunpack.c.l.b16 %v5997
    %v6100 = vunpack.c.h.b16 %v5997
    %v6101 = vunpack.c.l.b16 %v5998
    %v6102 = vunpack.c.h.b16 %v5998
    %v6103 = vunpack.c.l.b16 %v5999
    %v6104 = vunpack.c.h.b16 %v5999
    %v6105 = vunpack.c.l.b16 %v6000
    %v6106 = vunpack.c.h.b16 %v6000
    %v6107 = vpack.c.b16 %v6047, %v6043
    %v6108 = vpack.c.b16 %v6048, %v6044
    %v6109 = vpack.c.b16 %v6049, %v6045
    %v6110 = vpack.c.b16 %v6050, %v6046
    %v6111 = vpack.c.b16 %v6055, %v6051
    %v6112 = vpack.c.b16 %v6056, %v6052
    %v6113 = vpack.c.b16 %v6057, %v6053
    %v6114 = vpack.c.b16 %v6058, %v6054
    %v6115 = vpack.c.b16 %v6063, %v6059
    %v6116 = vpack.c.b16 %v6064, %v6060
    %v6117 = vpack.c.b16 %v6065, %v6061
    %v6118 = vpack.c.b16 %v6066, %v6062
    %v6119 = vpack.c.b16 %v6071, %v6067
    %v6120 = vpack.c.b16 %v6072, %v6068
    %v6121 = vpack.c.b16 %v6073, %v6069
    %v6122 = vpack.c.b16 %v6074, %v6070
    %v6123 = vpack.c.b16 %v6079, %v6075
    %v6124 = vpack.c.b16 %v6080, %v6076
    %v6125 = vpack.c.b16 %v6081, %v6077
    %v6126 = vpack.c.b16 %v6082, %v6078
    %v6127 = vpack.c.b16 %v6087, %v6083
    %v6128 = vpack.c.b16 %v6088, %v6084
    %v6129 = vpack.c.b16 %v6089, %v6085
    %v6130 = vpack.c.b16 %v6090, %v6086
    %v6131 = vpack.c.b16 %v6095, %v6091
    %v6132 = vpack.c.b16 %v6096, %v6092
    %v6133 = vpack.c.b16 %v6097, %v6093
    %v6134 = vpack.c.b16 %v6098, %v6094
    %v6135 = vpack.c.b16 %v6103, %v6099
    %v6136 = vpack.c.b16 %v6104, %v6100
    %v6137 = vpack.c.b16 %v6105, %v6101
    %v6138 = vpack.c.b16 %v6106, %v6102
    %6171 = vmatpush.bf16.msra.mxu0 %v6135
    %6172 = vmatpush.bf16.msra.mxu0 %v6131
    %6173 = vmatpush.bf16.msra.mxu0 %v6127
    %6174 = vmatpush.bf16.msra.mxu0 %v6123
    %6175 = vmatpush.bf16.msra.mxu0 %v6119
    %6176 = vmatpush.bf16.msra.mxu0 %v6115
    %6177 = vmatpush.bf16.msra.mxu0 %v6111
    %6178 = vmatpush.bf16.msra.mxu0 %v6107
    %6179 = vmatmul.bf16.gmra.mxu0 %v5965
    %v6180 = vpop.f32.mrf.mxu0
    %v6181 = vadd.f32 %v6003, %v6180
    %v6182 = vpop.f32.mrf.mxu0
    %v6183 = vadd.f32 %v6003, %v6182
    %6184 = vmatmul.bf16.gmra.mxu0 %v5966
    %v6185 = vpop.f32.mrf.mxu0
    %v6186 = vadd.f32 %v6003, %v6185
    %v6187 = vpop.f32.mrf.mxu0
    %v6188 = vadd.f32 %v6003, %v6187
    %6189 = vmatmul.bf16.gmra.mxu0 %v5967
    %v6190 = vpop.f32.mrf.mxu0
    %v6191 = vadd.f32 %v6003, %v6190
    %v6192 = vpop.f32.mrf.mxu0
    %v6193 = vadd.f32 %v6003, %v6192
    %6194 = vmatmul.bf16.gmra.mxu0 %v5968
    %v6195 = vpop.f32.mrf.mxu0
    %v6196 = vadd.f32 %v6003, %v6195
    %v6197 = vpop.f32.mrf.mxu0
    %v6198 = vadd.f32 %v6003, %v6197
    %6199 = vdwg.mxu0
    %6200 = vmatpush.bf16.msra.mxu0 %v6136
    %6201 = vmatpush.bf16.msra.mxu0 %v6132
    %6202 = vmatpush.bf16.msra.mxu0 %v6128
    %6203 = vmatpush.bf16.msra.mxu0 %v6124
    %6204 = vmatpush.bf16.msra.mxu0 %v6120
    %6205 = vmatpush.bf16.msra.mxu0 %v6116
    %6206 = vmatpush.bf16.msra.mxu0 %v6112
    %6207 = vmatpush.bf16.msra.mxu0 %v6108
    %6208 = vmatmul.bf16.gmra.mxu0 %v5965
    %v6209 = vpop.f32.mrf.mxu0
    %v6210 = vadd.f32 %v6004, %v6209
    %v6211 = vpop.f32.mrf.mxu0
    %v6212 = vadd.f32 %v6004, %v6211
    %6213 = vmatmul.bf16.gmra.mxu0 %v5966
    %v6214 = vpop.f32.mrf.mxu0
    %v6215 = vadd.f32 %v6004, %v6214
    %v6216 = vpop.f32.mrf.mxu0
    %v6217 = vadd.f32 %v6004, %v6216
    %6218 = vmatmul.bf16.gmra.mxu0 %v5967
    %v6219 = vpop.f32.mrf.mxu0
    %v6220 = vadd.f32 %v6004, %v6219
    %v6221 = vpop.f32.mrf.mxu0
    %v6222 = vadd.f32 %v6004, %v6221
    %6223 = vmatmul.bf16.gmra.mxu0 %v5968
    %v6224 = vpop.f32.mrf.mxu0
    %v6225 = vadd.f32 %v6004, %v6224
    %v6226 = vpop.f32.mrf.mxu0
    %v6227 = vadd.f32 %v6004, %v6226
    %6228 = vdwg.mxu0
    %6229 = vmatpush.bf16.msra.mxu0 %v6137
    %6230 = vmatpush.bf16.msra.mxu0 %v6133
    %6231 = vmatpush.bf16.msra.mxu0 %v6129
    %6232 = vmatpush.bf16.msra.mxu0 %v6125
    %6233 = vmatpush.bf16.msra.mxu0 %v6121
    %6234 = vmatpush.bf16.msra.mxu0 %v6117
    %6235 = vmatpush.bf16.msra.mxu0 %v6113
    %6236 = vmatpush.bf16.msra.mxu0 %v6109
    %6237 = vmatmul.bf16.gmra.mxu0 %v5965
    %v6238 = vpop.f32.mrf.mxu0
    %v6239 = vadd.f32 %v6005, %v6238
    %v6240 = vpop.f32.mrf.mxu0
    %v6241 = vadd.f32 %v6005, %v6240
    %6242 = vmatmul.bf16.gmra.mxu0 %v5966
    %v6243 = vpop.f32.mrf.mxu0
    %v6244 = vadd.f32 %v6005, %v6243
    %v6245 = vpop.f32.mrf.mxu0
    %v6246 = vadd.f32 %v6005, %v6245
    %6247 = vmatmul.bf16.gmra.mxu0 %v5967
    %v6248 = vpop.f32.mrf.mxu0
    %v6249 = vadd.f32 %v6005, %v6248
    %v6250 = vpop.f32.mrf.mxu0
    %v6251 = vadd.f32 %v6005, %v6250
    %6252 = vmatmul.bf16.gmra.mxu0 %v5968
    %v6253 = vpop.f32.mrf.mxu0
    %v6254 = vadd.f32 %v6005, %v6253
    %v6255 = vpop.f32.mrf.mxu0
    %v6256 = vadd.f32 %v6005, %v6255
    %6257 = vdwg.mxu0
    %6258 = vmatpush.bf16.msra.mxu0 %v6138
    %6259 = vmatpush.bf16.msra.mxu0 %v6134
    %6260 = vmatpush.bf16.msra.mxu0 %v6130
    %6261 = vmatpush.bf16.msra.mxu0 %v6126
    %6262 = vmatpush.bf16.msra.mxu0 %v6122
    %6263 = vmatpush.bf16.msra.mxu0 %v6118
    %6264 = vmatpush.bf16.msra.mxu0 %v6114
    %6265 = vmatpush.bf16.msra.mxu0 %v6110
    %6266 = vmatmul.bf16.gmra.mxu0 %v5965
    %v6267 = vpop.f32.mrf.mxu0
    %v6268 = vadd.f32 %v6006, %v6267
    %v6269 = vpop.f32.mrf.mxu0
    %v6270 = vadd.f32 %v6006, %v6269
    %6271 = vmatmul.bf16.gmra.mxu0 %v5966
    %v6272 = vpop.f32.mrf.mxu0
    %v6273 = vadd.f32 %v6006, %v6272
    %v6274 = vpop.f32.mrf.mxu0
    %v6275 = vadd.f32 %v6006, %v6274
    %6276 = vmatmul.bf16.gmra.mxu0 %v5967
    %v6277 = vpop.f32.mrf.mxu0
    %v6278 = vadd.f32 %v6006, %v6277
    %v6279 = vpop.f32.mrf.mxu0
    %v6280 = vadd.f32 %v6006, %v6279
    %6281 = vmatmul.bf16.gmra.mxu0 %v5968
    %v6282 = vpop.f32.mrf.mxu0
    %v6283 = vadd.f32 %v6006, %v6282
    %v6284 = vpop.f32.mrf.mxu0
    %v6285 = vadd.f32 %v6006, %v6284
    %6286 = vdwg.mxu0
    %6287 = vst [vmem:[#allocation3] sm:$0xff] %v6181
    %6288 = vst [vmem:[#allocation3 + $0x8] sm:$0xff] %v6210
    %6289 = vst [vmem:[#allocation3 + $0x10] sm:$0xff] %v6239
    %6290 = vst [vmem:[#allocation3 + $0x18] sm:$0xff] %v6268
    %6291 = vst [vmem:[#allocation3 + $0x20] sm:$0xff] %v6183
    %6292 = vst [vmem:[#allocation3 + $0x28] sm:$0xff] %v6212
    %6293 = vst [vmem:[#allocation3 + $0x30] sm:$0xff] %v6241
    %6294 = vst [vmem:[#allocation3 + $0x38] sm:$0xff] %v6270
    %6295 = vst [vmem:[#allocation3 + $0x40] sm:$0xff] %v6186
    %6296 = vst [vmem:[#allocation3 + $0x48] sm:$0xff] %v6215
    %6297 = vst [vmem:[#allocation3 + $0x50] sm:$0xff] %v6244
    %6298 = vst [vmem:[#allocation3 + $0x58] sm:$0xff] %v6273
    %6299 = vst [vmem:[#allocation3 + $0x60] sm:$0xff] %v6188
    %6300 = vst [vmem:[#allocation3 + $0x68] sm:$0xff] %v6217
    %6301 = vst [vmem:[#allocation3 + $0x70] sm:$0xff] %v6246
    %6302 = vst [vmem:[#allocation3 + $0x78] sm:$0xff] %v6275
    %6303 = vst [vmem:[#allocation3 + $0x80] sm:$0xff] %v6191
    %6304 = vst [vmem:[#allocation3 + $0x88] sm:$0xff] %v6220
    %6305 = vst [vmem:[#allocation3 + $0x90] sm:$0xff] %v6249
    %6306 = vst [vmem:[#allocation3 + $0x98] sm:$0xff] %v6278
    %6307 = vst [vmem:[#allocation3 + $0xa0] sm:$0xff] %v6193
    %6308 = vst [vmem:[#allocation3 + $0xa8] sm:$0xff] %v6222
    %6309 = vst [vmem:[#allocation3 + $0xb0] sm:$0xff] %v6251
    %6310 = vst [vmem:[#allocation3 + $0xb8] sm:$0xff] %v6280
    %6311 = vst [vmem:[#allocation3 + $0xc0] sm:$0xff] %v6196
    %6312 = vst [vmem:[#allocation3 + $0xc8] sm:$0xff] %v6225
    %6313 = vst [vmem:[#allocation3 + $0xd0] sm:$0xff] %v6254
    %6314 = vst [vmem:[#allocation3 + $0xd8] sm:$0xff] %v6283
    %6315 = vst [vmem:[#allocation3 + $0xe0] sm:$0xff] %v6198
    %6316 = vst [vmem:[#allocation3 + $0xe8] sm:$0xff] %v6227
    %6317 = vst [vmem:[#allocation3 + $0xf0] sm:$0xff] %v6256
    %6318 = vst [vmem:[#allocation3 + $0xf8] sm:$0xff] %v6285
    %s6319 = scalar_lea.vmem [#allocation7], 16
    %v6320 = vld [vmem:[%s6319] sm:$0xff]
    %s6321 = scalar_lea.vmem [#allocation9], 16
    %v6322 = vld [vmem:[%s6321] sm:$0xff]
    %v6323 = vld [vmem:[%s484] sm:$0xff]
    %v6324 = vld [vmem:[%s484 + $0x8] sm:$0xff]
    %v6325 = vld [vmem:[%s484 + $0x10] sm:$0xff]
    %v6326 = vld [vmem:[%s484 + $0x18] sm:$0xff]
    %v6327 = vpack.c.bf16 %v6320, %v6320
    %v6328 = vld [vmem:[#allocation19] sm:$0xff]
    %v6329 = vld [vmem:[#allocation19 + $0x8] sm:$0xff]
    %v6330 = vld [vmem:[#allocation19 + $0x10] sm:$0xff]
    %v6331 = vld [vmem:[#allocation19 + $0x18] sm:$0xff]
    %v6332 = vld [vmem:[#allocation19 + $0x20] sm:$0xff]
    %v6333 = vld [vmem:[#allocation19 + $0x28] sm:$0xff]
    %v6334 = vld [vmem:[#allocation19 + $0x30] sm:$0xff]
    %v6335 = vld [vmem:[#allocation19 + $0x38] sm:$0xff]
    %v6336 = vld [vmem:[#allocation19 + $0x40] sm:$0xff]
    %v6337 = vld [vmem:[#allocation19 + $0x48] sm:$0xff]
    %v6338 = vld [vmem:[#allocation19 + $0x50] sm:$0xff]
    %v6339 = vld [vmem:[#allocation19 + $0x58] sm:$0xff]
    %v6340 = vld [vmem:[#allocation19 + $0x60] sm:$0xff]
    %v6341 = vld [vmem:[#allocation19 + $0x68] sm:$0xff]
    %v6342 = vld [vmem:[#allocation19 + $0x70] sm:$0xff]
    %v6343 = vld [vmem:[#allocation19 + $0x78] sm:$0xff]
    %v6344 = vld [vmem:[#allocation19 + $0x80] sm:$0xff]
    %v6345 = vld [vmem:[#allocation19 + $0x88] sm:$0xff]
    %v6346 = vld [vmem:[#allocation19 + $0x90] sm:$0xff]
    %v6347 = vld [vmem:[#allocation19 + $0x98] sm:$0xff]
    %v6348 = vld [vmem:[#allocation19 + $0xa0] sm:$0xff]
    %v6349 = vld [vmem:[#allocation19 + $0xa8] sm:$0xff]
    %v6350 = vld [vmem:[#allocation19 + $0xb0] sm:$0xff]
    %v6351 = vld [vmem:[#allocation19 + $0xb8] sm:$0xff]
    %v6352 = vld [vmem:[#allocation19 + $0xc0] sm:$0xff]
    %v6353 = vld [vmem:[#allocation19 + $0xc8] sm:$0xff]
    %v6354 = vld [vmem:[#allocation19 + $0xd0] sm:$0xff]
    %v6355 = vld [vmem:[#allocation19 + $0xd8] sm:$0xff]
    %v6356 = vld [vmem:[#allocation19 + $0xe0] sm:$0xff]
    %v6357 = vld [vmem:[#allocation19 + $0xe8] sm:$0xff]
    %v6358 = vld [vmem:[#allocation19 + $0xf0] sm:$0xff]
    %v6359 = vld [vmem:[#allocation19 + $0xf8] sm:$0xff]
    %v6392 = vunpack.c.l.b16 %v6328
    %v6393 = vunpack.c.h.b16 %v6328
    %v6394 = vunpack.c.l.b16 %v6329
    %v6395 = vunpack.c.h.b16 %v6329
    %v6396 = vunpack.c.l.b16 %v6330
    %v6397 = vunpack.c.h.b16 %v6330
    %v6398 = vunpack.c.l.b16 %v6331
    %v6399 = vunpack.c.h.b16 %v6331
    %v6400 = vunpack.c.l.b16 %v6332
    %v6401 = vunpack.c.h.b16 %v6332
    %v6402 = vunpack.c.l.b16 %v6333
    %v6403 = vunpack.c.h.b16 %v6333
    %v6404 = vunpack.c.l.b16 %v6334
    %v6405 = vunpack.c.h.b16 %v6334
    %v6406 = vunpack.c.l.b16 %v6335
    %v6407 = vunpack.c.h.b16 %v6335
    %v6408 = vunpack.c.l.b16 %v6336
    %v6409 = vunpack.c.h.b16 %v6336
    %v6410 = vunpack.c.l.b16 %v6337
    %v6411 = vunpack.c.h.b16 %v6337
    %v6412 = vunpack.c.l.b16 %v6338
    %v6413 = vunpack.c.h.b16 %v6338
    %v6414 = vunpack.c.l.b16 %v6339
    %v6415 = vunpack.c.h.b16 %v6339
    %v6416 = vunpack.c.l.b16 %v6340
    %v6417 = vunpack.c.h.b16 %v6340
    %v6418 = vunpack.c.l.b16 %v6341
    %v6419 = vunpack.c.h.b16 %v6341
    %v6420 = vunpack.c.l.b16 %v6342
    %v6421 = vunpack.c.h.b16 %v6342
    %v6422 = vunpack.c.l.b16 %v6343
    %v6423 = vunpack.c.h.b16 %v6343
    %v6424 = vunpack.c.l.b16 %v6344
    %v6425 = vunpack.c.h.b16 %v6344
    %v6426 = vunpack.c.l.b16 %v6345
    %v6427 = vunpack.c.h.b16 %v6345
    %v6428 = vunpack.c.l.b16 %v6346
    %v6429 = vunpack.c.h.b16 %v6346
    %v6430 = vunpack.c.l.b16 %v6347
    %v6431 = vunpack.c.h.b16 %v6347
    %v6432 = vunpack.c.l.b16 %v6348
    %v6433 = vunpack.c.h.b16 %v6348
    %v6434 = vunpack.c.l.b16 %v6349
    %v6435 = vunpack.c.h.b16 %v6349
    %v6436 = vunpack.c.l.b16 %v6350
    %v6437 = vunpack.c.h.b16 %v6350
    %v6438 = vunpack.c.l.b16 %v6351
    %v6439 = vunpack.c.h.b16 %v6351
    %v6440 = vunpack.c.l.b16 %v6352
    %v6441 = vunpack.c.h.b16 %v6352
    %v6442 = vunpack.c.l.b16 %v6353
    %v6443 = vunpack.c.h.b16 %v6353
    %v6444 = vunpack.c.l.b16 %v6354
    %v6445 = vunpack.c.h.b16 %v6354
    %v6446 = vunpack.c.l.b16 %v6355
    %v6447 = vunpack.c.h.b16 %v6355
    %v6448 = vunpack.c.l.b16 %v6356
    %v6449 = vunpack.c.h.b16 %v6356
    %v6450 = vunpack.c.l.b16 %v6357
    %v6451 = vunpack.c.h.b16 %v6357
    %v6452 = vunpack.c.l.b16 %v6358
    %v6453 = vunpack.c.h.b16 %v6358
    %v6454 = vunpack.c.l.b16 %v6359
    %v6455 = vunpack.c.h.b16 %v6359
    %v6456 = vpack.c.b16 %v6396, %v6392
    %v6457 = vpack.c.b16 %v6397, %v6393
    %v6458 = vpack.c.b16 %v6398, %v6394
    %v6459 = vpack.c.b16 %v6399, %v6395
    %v6460 = vpack.c.b16 %v6404, %v6400
    %v6461 = vpack.c.b16 %v6405, %v6401
    %v6462 = vpack.c.b16 %v6406, %v6402
    %v6463 = vpack.c.b16 %v6407, %v6403
    %v6464 = vpack.c.b16 %v6412, %v6408
    %v6465 = vpack.c.b16 %v6413, %v6409
    %v6466 = vpack.c.b16 %v6414, %v6410
    %v6467 = vpack.c.b16 %v6415, %v6411
    %v6468 = vpack.c.b16 %v6420, %v6416
    %v6469 = vpack.c.b16 %v6421, %v6417
    %v6470 = vpack.c.b16 %v6422, %v6418
    %v6471 = vpack.c.b16 %v6423, %v6419
    %v6472 = vpack.c.b16 %v6428, %v6424
    %v6473 = vpack.c.b16 %v6429, %v6425
    %v6474 = vpack.c.b16 %v6430, %v6426
    %v6475 = vpack.c.b16 %v6431, %v6427
    %v6476 = vpack.c.b16 %v6436, %v6432
    %v6477 = vpack.c.b16 %v6437, %v6433
    %v6478 = vpack.c.b16 %v6438, %v6434
    %v6479 = vpack.c.b16 %v6439, %v6435
    %v6480 = vpack.c.b16 %v6444, %v6440
    %v6481 = vpack.c.b16 %v6445, %v6441
    %v6482 = vpack.c.b16 %v6446, %v6442
    %v6483 = vpack.c.b16 %v6447, %v6443
    %v6484 = vpack.c.b16 %v6452, %v6448
    %v6485 = vpack.c.b16 %v6453, %v6449
    %v6486 = vpack.c.b16 %v6454, %v6450
    %v6487 = vpack.c.b16 %v6455, %v6451
    %6520 = vmatpush.bf16.msra.mxu0 %v6484
    %6521 = vmatpush.bf16.msra.mxu0 %v6480
    %6522 = vmatpush.bf16.msra.mxu0 %v6476
    %6523 = vmatpush.bf16.msra.mxu0 %v6472
    %6524 = vmatpush.bf16.msra.mxu0 %v6468
    %6525 = vmatpush.bf16.msra.mxu0 %v6464
    %6526 = vmatpush.bf16.msra.mxu0 %v6460
    %6527 = vmatpush.bf16.msra.mxu0 %v6456
    %6528 = vmatmul.bf16.gmra.mxu0 %v6327
    %v6529 = vpop.f32.mrf.mxu0
    %v6530 = vadd.f32 0.0, %v6529
    %v6531 = vpop.f32.mrf.mxu0
    %6532 = vdwg.mxu0
    %6533 = vmatpush.bf16.msra.mxu0 %v6485
    %6534 = vmatpush.bf16.msra.mxu0 %v6481
    %6535 = vmatpush.bf16.msra.mxu0 %v6477
    %6536 = vmatpush.bf16.msra.mxu0 %v6473
    %6537 = vmatpush.bf16.msra.mxu0 %v6469
    %6538 = vmatpush.bf16.msra.mxu0 %v6465
    %6539 = vmatpush.bf16.msra.mxu0 %v6461
    %6540 = vmatpush.bf16.msra.mxu0 %v6457
    %6541 = vmatmul.bf16.gmra.mxu0 %v6327
    %v6542 = vpop.f32.mrf.mxu0
    %v6543 = vadd.f32 0.0, %v6542
    %v6544 = vpop.f32.mrf.mxu0
    %6545 = vdwg.mxu0
    %6546 = vmatpush.bf16.msra.mxu0 %v6486
    %6547 = vmatpush.bf16.msra.mxu0 %v6482
    %6548 = vmatpush.bf16.msra.mxu0 %v6478
    %6549 = vmatpush.bf16.msra.mxu0 %v6474
    %6550 = vmatpush.bf16.msra.mxu0 %v6470
    %6551 = vmatpush.bf16.msra.mxu0 %v6466
    %6552 = vmatpush.bf16.msra.mxu0 %v6462
    %6553 = vmatpush.bf16.msra.mxu0 %v6458
    %6554 = vmatmul.bf16.gmra.mxu0 %v6327
    %v6555 = vpop.f32.mrf.mxu0
    %v6556 = vadd.f32 0.0, %v6555
    %v6557 = vpop.f32.mrf.mxu0
    %6558 = vdwg.mxu0
    %6559 = vmatpush.bf16.msra.mxu0 %v6487
    %6560 = vmatpush.bf16.msra.mxu0 %v6483
    %6561 = vmatpush.bf16.msra.mxu0 %v6479
    %6562 = vmatpush.bf16.msra.mxu0 %v6475
    %6563 = vmatpush.bf16.msra.mxu0 %v6471
    %6564 = vmatpush.bf16.msra.mxu0 %v6467
    %6565 = vmatpush.bf16.msra.mxu0 %v6463
    %6566 = vmatpush.bf16.msra.mxu0 %v6459
    %6567 = vmatmul.bf16.gmra.mxu0 %v6327
    %v6568 = vpop.f32.mrf.mxu0
    %v6569 = vadd.f32 0.0, %v6568
    %v6570 = vpop.f32.mrf.mxu0
    %6571 = vdwg.mxu0
    %v6572 = vadd.f32 %v6323, %v6530
    %v6573 = vadd.f32 %v6324, %v6543
    %v6574 = vadd.f32 %v6325, %v6556
    %v6575 = vadd.f32 %v6326, %v6569
    %v6576 = vxor.u32 %v6572, 2147483648
    %v6577 = vmul.f32 %v6576, 1.442695
    %v6578 = vpow.pop %v6577
    %v6579 = vadd.f32 %v6578, 1.0
    %v6580 = vrcp.pop %v6579
    %v6581 = vmul.f32 %v6579, %v6580
    %v6582 = vsub.f32 1.0, %v6581
    %v6583 = vmul.f32 %v6580, %v6582
    %v6584 = vadd.f32 %v6580, %v6583
    %vm6585 = vweird.f32 %v6579
    %vm6586 = vweird.f32 %v6580
    %vm6587 = vmor %vm6585, %vm6586
    %v6588 = vsel %vm6587, %v6580, %v6584
    %v6589 = vand.u32 2147483647, %v6579
    %vm6590 = vcmp.eq.f32.partialorder %v6589, 8.507059e+37
    %v6591 = vand.u32 %v6579, 2147483648
    %v6592 = vor.u32 1.1754944e-38, %v6591
    %v6593 = vsel %vm6590, %v6592, %v6588
    %v6594 = vmul.f32 1.0, %v6593
    %v6595 = vxor.u32 %v6573, 2147483648
    %v6596 = vmul.f32 %v6595, 1.442695
    %v6597 = vpow.pop %v6596
    %v6598 = vadd.f32 %v6597, 1.0
    %v6599 = vrcp.pop %v6598
    %v6600 = vmul.f32 %v6598, %v6599
    %v6601 = vsub.f32 1.0, %v6600
    %v6602 = vmul.f32 %v6599, %v6601
    %v6603 = vadd.f32 %v6599, %v6602
    %vm6604 = vweird.f32 %v6598
    %vm6605 = vweird.f32 %v6599
    %vm6606 = vmor %vm6604, %vm6605
    %v6607 = vsel %vm6606, %v6599, %v6603
    %v6608 = vand.u32 2147483647, %v6598
    %vm6609 = vcmp.eq.f32.partialorder %v6608, 8.507059e+37
    %v6610 = vand.u32 %v6598, 2147483648
    %v6611 = vor.u32 1.1754944e-38, %v6610
    %v6612 = vsel %vm6609, %v6611, %v6607
    %v6613 = vmul.f32 1.0, %v6612
    %v6614 = vtanh.pop %v6574
    %v6615 = vxor.u32 %v6575, 2147483648
    %v6616 = vmul.f32 %v6615, 1.442695
    %v6617 = vpow.pop %v6616
    %v6618 = vadd.f32 %v6617, 1.0
    %v6619 = vrcp.pop %v6618
    %v6620 = vmul.f32 %v6618, %v6619
    %v6621 = vsub.f32 1.0, %v6620
    %v6622 = vmul.f32 %v6619, %v6621
    %v6623 = vadd.f32 %v6619, %v6622
    %vm6624 = vweird.f32 %v6618
    %vm6625 = vweird.f32 %v6619
    %vm6626 = vmor %vm6624, %vm6625
    %v6627 = vsel %vm6626, %v6619, %v6623
    %v6628 = vand.u32 2147483647, %v6618
    %vm6629 = vcmp.eq.f32.partialorder %v6628, 8.507059e+37
    %v6630 = vand.u32 %v6618, 2147483648
    %v6631 = vor.u32 1.1754944e-38, %v6630
    %v6632 = vsel %vm6629, %v6631, %v6627
    %v6633 = vmul.f32 1.0, %v6632
    %v6634 = vmul.f32 %v6613, %v6322
    %v6635 = vmul.f32 %v6594, %v6614
    %v6636 = vadd.f32 %v6634, %v6635
    %v6637 = vtanh.pop %v6636
    %v6638 = vmul.f32 %v6633, %v6637
    %6639 = vst [vmem:[#allocation21] sm:$0xff] %v6638
    %v6640 = vld [vmem:[%s804] sm:$0xff]
    %v6641 = vld [vmem:[%s804 + $0x8] sm:$0xff]
    %v6642 = vld [vmem:[%s804 + $0x10] sm:$0xff]
    %v6643 = vld [vmem:[%s804 + $0x18] sm:$0xff]
    %v6644 = vpack.c.bf16 %v6638, %v6638
    %v6645 = vld [vmem:[#allocation19] sm:$0xff]
    %v6646 = vld [vmem:[#allocation19 + $0x8] sm:$0xff]
    %v6647 = vld [vmem:[#allocation19 + $0x10] sm:$0xff]
    %v6648 = vld [vmem:[#allocation19 + $0x18] sm:$0xff]
    %v6649 = vld [vmem:[#allocation19 + $0x20] sm:$0xff]
    %v6650 = vld [vmem:[#allocation19 + $0x28] sm:$0xff]
    %v6651 = vld [vmem:[#allocation19 + $0x30] sm:$0xff]
    %v6652 = vld [vmem:[#allocation19 + $0x38] sm:$0xff]
    %v6653 = vld [vmem:[#allocation19 + $0x40] sm:$0xff]
    %v6654 = vld [vmem:[#allocation19 + $0x48] sm:$0xff]
    %v6655 = vld [vmem:[#allocation19 + $0x50] sm:$0xff]
    %v6656 = vld [vmem:[#allocation19 + $0x58] sm:$0xff]
    %v6657 = vld [vmem:[#allocation19 + $0x60] sm:$0xff]
    %v6658 = vld [vmem:[#allocation19 + $0x68] sm:$0xff]
    %v6659 = vld [vmem:[#allocation19 + $0x70] sm:$0xff]
    %v6660 = vld [vmem:[#allocation19 + $0x78] sm:$0xff]
    %v6661 = vld [vmem:[#allocation19 + $0x80] sm:$0xff]
    %v6662 = vld [vmem:[#allocation19 + $0x88] sm:$0xff]
    %v6663 = vld [vmem:[#allocation19 + $0x90] sm:$0xff]
    %v6664 = vld [vmem:[#allocation19 + $0x98] sm:$0xff]
    %v6665 = vld [vmem:[#allocation19 + $0xa0] sm:$0xff]
    %v6666 = vld [vmem:[#allocation19 + $0xa8] sm:$0xff]
    %v6667 = vld [vmem:[#allocation19 + $0xb0] sm:$0xff]
    %v6668 = vld [vmem:[#allocation19 + $0xb8] sm:$0xff]
    %v6669 = vld [vmem:[#allocation19 + $0xc0] sm:$0xff]
    %v6670 = vld [vmem:[#allocation19 + $0xc8] sm:$0xff]
    %v6671 = vld [vmem:[#allocation19 + $0xd0] sm:$0xff]
    %v6672 = vld [vmem:[#allocation19 + $0xd8] sm:$0xff]
    %v6673 = vld [vmem:[#allocation19 + $0xe0] sm:$0xff]
    %v6674 = vld [vmem:[#allocation19 + $0xe8] sm:$0xff]
    %v6675 = vld [vmem:[#allocation19 + $0xf0] sm:$0xff]
    %v6676 = vld [vmem:[#allocation19 + $0xf8] sm:$0xff]
    %v6709 = vunpack.c.l.b16 %v6645
    %v6710 = vunpack.c.h.b16 %v6645
    %v6711 = vunpack.c.l.b16 %v6646
    %v6712 = vunpack.c.h.b16 %v6646
    %v6713 = vunpack.c.l.b16 %v6647
    %v6714 = vunpack.c.h.b16 %v6647
    %v6715 = vunpack.c.l.b16 %v6648
    %v6716 = vunpack.c.h.b16 %v6648
    %v6717 = vunpack.c.l.b16 %v6649
    %v6718 = vunpack.c.h.b16 %v6649
    %v6719 = vunpack.c.l.b16 %v6650
    %v6720 = vunpack.c.h.b16 %v6650
    %v6721 = vunpack.c.l.b16 %v6651
    %v6722 = vunpack.c.h.b16 %v6651
    %v6723 = vunpack.c.l.b16 %v6652
    %v6724 = vunpack.c.h.b16 %v6652
    %v6725 = vunpack.c.l.b16 %v6653
    %v6726 = vunpack.c.h.b16 %v6653
    %v6727 = vunpack.c.l.b16 %v6654
    %v6728 = vunpack.c.h.b16 %v6654
    %v6729 = vunpack.c.l.b16 %v6655
    %v6730 = vunpack.c.h.b16 %v6655
    %v6731 = vunpack.c.l.b16 %v6656
    %v6732 = vunpack.c.h.b16 %v6656
    %v6733 = vunpack.c.l.b16 %v6657
    %v6734 = vunpack.c.h.b16 %v6657
    %v6735 = vunpack.c.l.b16 %v6658
    %v6736 = vunpack.c.h.b16 %v6658
    %v6737 = vunpack.c.l.b16 %v6659
    %v6738 = vunpack.c.h.b16 %v6659
    %v6739 = vunpack.c.l.b16 %v6660
    %v6740 = vunpack.c.h.b16 %v6660
    %v6741 = vunpack.c.l.b16 %v6661
    %v6742 = vunpack.c.h.b16 %v6661
    %v6743 = vunpack.c.l.b16 %v6662
    %v6744 = vunpack.c.h.b16 %v6662
    %v6745 = vunpack.c.l.b16 %v6663
    %v6746 = vunpack.c.h.b16 %v6663
    %v6747 = vunpack.c.l.b16 %v6664
    %v6748 = vunpack.c.h.b16 %v6664
    %v6749 = vunpack.c.l.b16 %v6665
    %v6750 = vunpack.c.h.b16 %v6665
    %v6751 = vunpack.c.l.b16 %v6666
    %v6752 = vunpack.c.h.b16 %v6666
    %v6753 = vunpack.c.l.b16 %v6667
    %v6754 = vunpack.c.h.b16 %v6667
    %v6755 = vunpack.c.l.b16 %v6668
    %v6756 = vunpack.c.h.b16 %v6668
    %v6757 = vunpack.c.l.b16 %v6669
    %v6758 = vunpack.c.h.b16 %v6669
    %v6759 = vunpack.c.l.b16 %v6670
    %v6760 = vunpack.c.h.b16 %v6670
    %v6761 = vunpack.c.l.b16 %v6671
    %v6762 = vunpack.c.h.b16 %v6671
    %v6763 = vunpack.c.l.b16 %v6672
    %v6764 = vunpack.c.h.b16 %v6672
    %v6765 = vunpack.c.l.b16 %v6673
    %v6766 = vunpack.c.h.b16 %v6673
    %v6767 = vunpack.c.l.b16 %v6674
    %v6768 = vunpack.c.h.b16 %v6674
    %v6769 = vunpack.c.l.b16 %v6675
    %v6770 = vunpack.c.h.b16 %v6675
    %v6771 = vunpack.c.l.b16 %v6676
    %v6772 = vunpack.c.h.b16 %v6676
    %v6773 = vpack.c.b16 %v6713, %v6709
    %v6774 = vpack.c.b16 %v6714, %v6710
    %v6775 = vpack.c.b16 %v6715, %v6711
    %v6776 = vpack.c.b16 %v6716, %v6712
    %v6777 = vpack.c.b16 %v6721, %v6717
    %v6778 = vpack.c.b16 %v6722, %v6718
    %v6779 = vpack.c.b16 %v6723, %v6719
    %v6780 = vpack.c.b16 %v6724, %v6720
    %v6781 = vpack.c.b16 %v6729, %v6725
    %v6782 = vpack.c.b16 %v6730, %v6726
    %v6783 = vpack.c.b16 %v6731, %v6727
    %v6784 = vpack.c.b16 %v6732, %v6728
    %v6785 = vpack.c.b16 %v6737, %v6733
    %v6786 = vpack.c.b16 %v6738, %v6734
    %v6787 = vpack.c.b16 %v6739, %v6735
    %v6788 = vpack.c.b16 %v6740, %v6736
    %v6789 = vpack.c.b16 %v6745, %v6741
    %v6790 = vpack.c.b16 %v6746, %v6742
    %v6791 = vpack.c.b16 %v6747, %v6743
    %v6792 = vpack.c.b16 %v6748, %v6744
    %v6793 = vpack.c.b16 %v6753, %v6749
    %v6794 = vpack.c.b16 %v6754, %v6750
    %v6795 = vpack.c.b16 %v6755, %v6751
    %v6796 = vpack.c.b16 %v6756, %v6752
    %v6797 = vpack.c.b16 %v6761, %v6757
    %v6798 = vpack.c.b16 %v6762, %v6758
    %v6799 = vpack.c.b16 %v6763, %v6759
    %v6800 = vpack.c.b16 %v6764, %v6760
    %v6801 = vpack.c.b16 %v6769, %v6765
    %v6802 = vpack.c.b16 %v6770, %v6766
    %v6803 = vpack.c.b16 %v6771, %v6767
    %v6804 = vpack.c.b16 %v6772, %v6768
    %6837 = vmatpush.bf16.msra.mxu0 %v6801
    %6838 = vmatpush.bf16.msra.mxu0 %v6797
    %6839 = vmatpush.bf16.msra.mxu0 %v6793
    %6840 = vmatpush.bf16.msra.mxu0 %v6789
    %6841 = vmatpush.bf16.msra.mxu0 %v6785
    %6842 = vmatpush.bf16.msra.mxu0 %v6781
    %6843 = vmatpush.bf16.msra.mxu0 %v6777
    %6844 = vmatpush.bf16.msra.mxu0 %v6773
    %6845 = vmatmul.bf16.gmra.mxu0 %v6644
    %v6846 = vpop.f32.mrf.mxu0
    %v6847 = vadd.f32 0.0, %v6846
    %v6848 = vpop.f32.mrf.mxu0
    %6849 = vdwg.mxu0
    %6850 = vmatpush.bf16.msra.mxu0 %v6802
    %6851 = vmatpush.bf16.msra.mxu0 %v6798
    %6852 = vmatpush.bf16.msra.mxu0 %v6794
    %6853 = vmatpush.bf16.msra.mxu0 %v6790
    %6854 = vmatpush.bf16.msra.mxu0 %v6786
    %6855 = vmatpush.bf16.msra.mxu0 %v6782
    %6856 = vmatpush.bf16.msra.mxu0 %v6778
    %6857 = vmatpush.bf16.msra.mxu0 %v6774
    %6858 = vmatmul.bf16.gmra.mxu0 %v6644
    %v6859 = vpop.f32.mrf.mxu0
    %v6860 = vadd.f32 0.0, %v6859
    %v6861 = vpop.f32.mrf.mxu0
    %6862 = vdwg.mxu0
    %6863 = vmatpush.bf16.msra.mxu0 %v6803
    %6864 = vmatpush.bf16.msra.mxu0 %v6799
    %6865 = vmatpush.bf16.msra.mxu0 %v6795
    %6866 = vmatpush.bf16.msra.mxu0 %v6791
    %6867 = vmatpush.bf16.msra.mxu0 %v6787
    %6868 = vmatpush.bf16.msra.mxu0 %v6783
    %6869 = vmatpush.bf16.msra.mxu0 %v6779
    %6870 = vmatpush.bf16.msra.mxu0 %v6775
    %6871 = vmatmul.bf16.gmra.mxu0 %v6644
    %v6872 = vpop.f32.mrf.mxu0
    %v6873 = vadd.f32 0.0, %v6872
    %v6874 = vpop.f32.mrf.mxu0
    %6875 = vdwg.mxu0
    %6876 = vmatpush.bf16.msra.mxu0 %v6804
    %6877 = vmatpush.bf16.msra.mxu0 %v6800
    %6878 = vmatpush.bf16.msra.mxu0 %v6796
    %6879 = vmatpush.bf16.msra.mxu0 %v6792
    %6880 = vmatpush.bf16.msra.mxu0 %v6788
    %6881 = vmatpush.bf16.msra.mxu0 %v6784
    %6882 = vmatpush.bf16.msra.mxu0 %v6780
    %6883 = vmatpush.bf16.msra.mxu0 %v6776
    %6884 = vmatmul.bf16.gmra.mxu0 %v6644
    %v6885 = vpop.f32.mrf.mxu0
    %v6886 = vadd.f32 0.0, %v6885
    %v6887 = vpop.f32.mrf.mxu0
    %6888 = vdwg.mxu0
    %v6889 = vadd.f32 %v6640, %v6847
    %v6890 = vadd.f32 %v6641, %v6860
    %v6891 = vadd.f32 %v6642, %v6873
    %v6892 = vadd.f32 %v6643, %v6886
    %v6893 = vxor.u32 %v6889, 2147483648
    %v6894 = vmul.f32 %v6893, 1.442695
    %v6895 = vpow.pop %v6894
    %v6896 = vadd.f32 %v6895, 1.0
    %v6897 = vrcp.pop %v6896
    %v6898 = vmul.f32 %v6896, %v6897
    %v6899 = vsub.f32 1.0, %v6898
    %v6900 = vmul.f32 %v6897, %v6899
    %v6901 = vadd.f32 %v6897, %v6900
    %vm6902 = vweird.f32 %v6896
    %vm6903 = vweird.f32 %v6897
    %vm6904 = vmor %vm6902, %vm6903
    %v6905 = vsel %vm6904, %v6897, %v6901
    %v6906 = vand.u32 2147483647, %v6896
    %vm6907 = vcmp.eq.f32.partialorder %v6906, 8.507059e+37
    %v6908 = vand.u32 %v6896, 2147483648
    %v6909 = vor.u32 1.1754944e-38, %v6908
    %v6910 = vsel %vm6907, %v6909, %v6905
    %v6911 = vmul.f32 1.0, %v6910
    %v6912 = vxor.u32 %v6890, 2147483648
    %v6913 = vmul.f32 %v6912, 1.442695
    %v6914 = vpow.pop %v6913
    %v6915 = vadd.f32 %v6914, 1.0
    %v6916 = vrcp.pop %v6915
    %v6917 = vmul.f32 %v6915, %v6916
    %v6918 = vsub.f32 1.0, %v6917
    %v6919 = vmul.f32 %v6916, %v6918
    %v6920 = vadd.f32 %v6916, %v6919
    %vm6921 = vweird.f32 %v6915
    %vm6922 = vweird.f32 %v6916
    %vm6923 = vmor %vm6921, %vm6922
    %v6924 = vsel %vm6923, %v6916, %v6920
    %v6925 = vand.u32 2147483647, %v6915
    %vm6926 = vcmp.eq.f32.partialorder %v6925, 8.507059e+37
    %v6927 = vand.u32 %v6915, 2147483648
    %v6928 = vor.u32 1.1754944e-38, %v6927
    %v6929 = vsel %vm6926, %v6928, %v6924
    %v6930 = vmul.f32 1.0, %v6929
    %v6931 = vtanh.pop %v6891
    %v6932 = vxor.u32 %v6892, 2147483648
    %v6933 = vmul.f32 %v6932, 1.442695
    %v6934 = vpow.pop %v6933
    %v6935 = vadd.f32 %v6934, 1.0
    %v6936 = vrcp.pop %v6935
    %v6937 = vmul.f32 %v6935, %v6936
    %v6938 = vsub.f32 1.0, %v6937
    %v6939 = vmul.f32 %v6936, %v6938
    %v6940 = vadd.f32 %v6936, %v6939
    %vm6941 = vweird.f32 %v6935
    %vm6942 = vweird.f32 %v6936
    %vm6943 = vmor %vm6941, %vm6942
    %v6944 = vsel %vm6943, %v6936, %v6940
    %v6945 = vand.u32 2147483647, %v6935
    %vm6946 = vcmp.eq.f32.partialorder %v6945, 8.507059e+37
    %v6947 = vand.u32 %v6935, 2147483648
    %v6948 = vor.u32 1.1754944e-38, %v6947
    %v6949 = vsel %vm6946, %v6948, %v6944
    %v6950 = vmul.f32 1.0, %v6949
    %v6951 = vmul.f32 %v6930, %v6636
    %v6952 = vmul.f32 %v6911, %v6931
    %v6953 = vadd.f32 %v6951, %v6952
    %v6954 = vtanh.pop %v6953
    %v6955 = vmul.f32 %v6950, %v6954
    %s6956 = scalar_lea.vmem [#allocation21], 8
    %6957 = vst [vmem:[%s6956] sm:$0xff] %v6955
    %v6958 = vld [vmem:[%s1125] sm:$0xff]
    %v6959 = vld [vmem:[%s1125 + $0x8] sm:$0xff]
    %v6960 = vld [vmem:[%s1125 + $0x10] sm:$0xff]
    %v6961 = vld [vmem:[%s1125 + $0x18] sm:$0xff]
    %v6962 = vpack.c.bf16 %v6955, %v6955
    %v6963 = vld [vmem:[#allocation19] sm:$0xff]
    %v6964 = vld [vmem:[#allocation19 + $0x8] sm:$0xff]
    %v6965 = vld [vmem:[#allocation19 + $0x10] sm:$0xff]
    %v6966 = vld [vmem:[#allocation19 + $0x18] sm:$0xff]
    %v6967 = vld [vmem:[#allocation19 + $0x20] sm:$0xff]
    %v6968 = vld [vmem:[#allocation19 + $0x28] sm:$0xff]
    %v6969 = vld [vmem:[#allocation19 + $0x30] sm:$0xff]
    %v6970 = vld [vmem:[#allocation19 + $0x38] sm:$0xff]
    %v6971 = vld [vmem:[#allocation19 + $0x40] sm:$0xff]
    %v6972 = vld [vmem:[#allocation19 + $0x48] sm:$0xff]
    %v6973 = vld [vmem:[#allocation19 + $0x50] sm:$0xff]
    %v6974 = vld [vmem:[#allocation19 + $0x58] sm:$0xff]
    %v6975 = vld [vmem:[#allocation19 + $0x60] sm:$0xff]
    %v6976 = vld [vmem:[#allocation19 + $0x68] sm:$0xff]
    %v6977 = vld [vmem:[#allocation19 + $0x70] sm:$0xff]
    %v6978 = vld [vmem:[#allocation19 + $0x78] sm:$0xff]
    %v6979 = vld [vmem:[#allocation19 + $0x80] sm:$0xff]
    %v6980 = vld [vmem:[#allocation19 + $0x88] sm:$0xff]
    %v6981 = vld [vmem:[#allocation19 + $0x90] sm:$0xff]
    %v6982 = vld [vmem:[#allocation19 + $0x98] sm:$0xff]
    %v6983 = vld [vmem:[#allocation19 + $0xa0] sm:$0xff]
    %v6984 = vld [vmem:[#allocation19 + $0xa8] sm:$0xff]
    %v6985 = vld [vmem:[#allocation19 + $0xb0] sm:$0xff]
    %v6986 = vld [vmem:[#allocation19 + $0xb8] sm:$0xff]
    %v6987 = vld [vmem:[#allocation19 + $0xc0] sm:$0xff]
    %v6988 = vld [vmem:[#allocation19 + $0xc8] sm:$0xff]
    %v6989 = vld [vmem:[#allocation19 + $0xd0] sm:$0xff]
    %v6990 = vld [vmem:[#allocation19 + $0xd8] sm:$0xff]
    %v6991 = vld [vmem:[#allocation19 + $0xe0] sm:$0xff]
    %v6992 = vld [vmem:[#allocation19 + $0xe8] sm:$0xff]
    %v6993 = vld [vmem:[#allocation19 + $0xf0] sm:$0xff]
    %v6994 = vld [vmem:[#allocation19 + $0xf8] sm:$0xff]
    %v7027 = vunpack.c.l.b16 %v6963
    %v7028 = vunpack.c.h.b16 %v6963
    %v7029 = vunpack.c.l.b16 %v6964
    %v7030 = vunpack.c.h.b16 %v6964
    %v7031 = vunpack.c.l.b16 %v6965
    %v7032 = vunpack.c.h.b16 %v6965
    %v7033 = vunpack.c.l.b16 %v6966
    %v7034 = vunpack.c.h.b16 %v6966
    %v7035 = vunpack.c.l.b16 %v6967
    %v7036 = vunpack.c.h.b16 %v6967
    %v7037 = vunpack.c.l.b16 %v6968
    %v7038 = vunpack.c.h.b16 %v6968
    %v7039 = vunpack.c.l.b16 %v6969
    %v7040 = vunpack.c.h.b16 %v6969
    %v7041 = vunpack.c.l.b16 %v6970
    %v7042 = vunpack.c.h.b16 %v6970
    %v7043 = vunpack.c.l.b16 %v6971
    %v7044 = vunpack.c.h.b16 %v6971
    %v7045 = vunpack.c.l.b16 %v6972
    %v7046 = vunpack.c.h.b16 %v6972
    %v7047 = vunpack.c.l.b16 %v6973
    %v7048 = vunpack.c.h.b16 %v6973
    %v7049 = vunpack.c.l.b16 %v6974
    %v7050 = vunpack.c.h.b16 %v6974
    %v7051 = vunpack.c.l.b16 %v6975
    %v7052 = vunpack.c.h.b16 %v6975
    %v7053 = vunpack.c.l.b16 %v6976
    %v7054 = vunpack.c.h.b16 %v6976
    %v7055 = vunpack.c.l.b16 %v6977
    %v7056 = vunpack.c.h.b16 %v6977
    %v7057 = vunpack.c.l.b16 %v6978
    %v7058 = vunpack.c.h.b16 %v6978
    %v7059 = vunpack.c.l.b16 %v6979
    %v7060 = vunpack.c.h.b16 %v6979
    %v7061 = vunpack.c.l.b16 %v6980
    %v7062 = vunpack.c.h.b16 %v6980
    %v7063 = vunpack.c.l.b16 %v6981
    %v7064 = vunpack.c.h.b16 %v6981
    %v7065 = vunpack.c.l.b16 %v6982
    %v7066 = vunpack.c.h.b16 %v6982
    %v7067 = vunpack.c.l.b16 %v6983
    %v7068 = vunpack.c.h.b16 %v6983
    %v7069 = vunpack.c.l.b16 %v6984
    %v7070 = vunpack.c.h.b16 %v6984
    %v7071 = vunpack.c.l.b16 %v6985
    %v7072 = vunpack.c.h.b16 %v6985
    %v7073 = vunpack.c.l.b16 %v6986
    %v7074 = vunpack.c.h.b16 %v6986
    %v7075 = vunpack.c.l.b16 %v6987
    %v7076 = vunpack.c.h.b16 %v6987
    %v7077 = vunpack.c.l.b16 %v6988
    %v7078 = vunpack.c.h.b16 %v6988
    %v7079 = vunpack.c.l.b16 %v6989
    %v7080 = vunpack.c.h.b16 %v6989
    %v7081 = vunpack.c.l.b16 %v6990
    %v7082 = vunpack.c.h.b16 %v6990
    %v7083 = vunpack.c.l.b16 %v6991
    %v7084 = vunpack.c.h.b16 %v6991
    %v7085 = vunpack.c.l.b16 %v6992
    %v7086 = vunpack.c.h.b16 %v6992
    %v7087 = vunpack.c.l.b16 %v6993
    %v7088 = vunpack.c.h.b16 %v6993
    %v7089 = vunpack.c.l.b16 %v6994
    %v7090 = vunpack.c.h.b16 %v6994
    %v7091 = vpack.c.b16 %v7031, %v7027
    %v7092 = vpack.c.b16 %v7032, %v7028
    %v7093 = vpack.c.b16 %v7033, %v7029
    %v7094 = vpack.c.b16 %v7034, %v7030
    %v7095 = vpack.c.b16 %v7039, %v7035
    %v7096 = vpack.c.b16 %v7040, %v7036
    %v7097 = vpack.c.b16 %v7041, %v7037
    %v7098 = vpack.c.b16 %v7042, %v7038
    %v7099 = vpack.c.b16 %v7047, %v7043
    %v7100 = vpack.c.b16 %v7048, %v7044
    %v7101 = vpack.c.b16 %v7049, %v7045
    %v7102 = vpack.c.b16 %v7050, %v7046
    %v7103 = vpack.c.b16 %v7055, %v7051
    %v7104 = vpack.c.b16 %v7056, %v7052
    %v7105 = vpack.c.b16 %v7057, %v7053
    %v7106 = vpack.c.b16 %v7058, %v7054
    %v7107 = vpack.c.b16 %v7063, %v7059
    %v7108 = vpack.c.b16 %v7064, %v7060
    %v7109 = vpack.c.b16 %v7065, %v7061
    %v7110 = vpack.c.b16 %v7066, %v7062
    %v7111 = vpack.c.b16 %v7071, %v7067
    %v7112 = vpack.c.b16 %v7072, %v7068
    %v7113 = vpack.c.b16 %v7073, %v7069
    %v7114 = vpack.c.b16 %v7074, %v7070
    %v7115 = vpack.c.b16 %v7079, %v7075
    %v7116 = vpack.c.b16 %v7080, %v7076
    %v7117 = vpack.c.b16 %v7081, %v7077
    %v7118 = vpack.c.b16 %v7082, %v7078
    %v7119 = vpack.c.b16 %v7087, %v7083
    %v7120 = vpack.c.b16 %v7088, %v7084
    %v7121 = vpack.c.b16 %v7089, %v7085
    %v7122 = vpack.c.b16 %v7090, %v7086
    %7155 = vmatpush.bf16.msra.mxu0 %v7119
    %7156 = vmatpush.bf16.msra.mxu0 %v7115
    %7157 = vmatpush.bf16.msra.mxu0 %v7111
    %7158 = vmatpush.bf16.msra.mxu0 %v7107
    %7159 = vmatpush.bf16.msra.mxu0 %v7103
    %7160 = vmatpush.bf16.msra.mxu0 %v7099
    %7161 = vmatpush.bf16.msra.mxu0 %v7095
    %7162 = vmatpush.bf16.msra.mxu0 %v7091
    %7163 = vmatmul.bf16.gmra.mxu0 %v6962
    %v7164 = vpop.f32.mrf.mxu0
    %v7165 = vadd.f32 0.0, %v7164
    %v7166 = vpop.f32.mrf.mxu0
    %7167 = vdwg.mxu0
    %7168 = vmatpush.bf16.msra.mxu0 %v7120
    %7169 = vmatpush.bf16.msra.mxu0 %v7116
    %7170 = vmatpush.bf16.msra.mxu0 %v7112
    %7171 = vmatpush.bf16.msra.mxu0 %v7108
    %7172 = vmatpush.bf16.msra.mxu0 %v7104
    %7173 = vmatpush.bf16.msra.mxu0 %v7100
    %7174 = vmatpush.bf16.msra.mxu0 %v7096
    %7175 = vmatpush.bf16.msra.mxu0 %v7092
    %7176 = vmatmul.bf16.gmra.mxu0 %v6962
    %v7177 = vpop.f32.mrf.mxu0
    %v7178 = vadd.f32 0.0, %v7177
    %v7179 = vpop.f32.mrf.mxu0
    %7180 = vdwg.mxu0
    %7181 = vmatpush.bf16.msra.mxu0 %v7121
    %7182 = vmatpush.bf16.msra.mxu0 %v7117
    %7183 = vmatpush.bf16.msra.mxu0 %v7113
    %7184 = vmatpush.bf16.msra.mxu0 %v7109
    %7185 = vmatpush.bf16.msra.mxu0 %v7105
    %7186 = vmatpush.bf16.msra.mxu0 %v7101
    %7187 = vmatpush.bf16.msra.mxu0 %v7097
    %7188 = vmatpush.bf16.msra.mxu0 %v7093
    %7189 = vmatmul.bf16.gmra.mxu0 %v6962
    %v7190 = vpop.f32.mrf.mxu0
    %v7191 = vadd.f32 0.0, %v7190
    %v7192 = vpop.f32.mrf.mxu0
    %7193 = vdwg.mxu0
    %7194 = vmatpush.bf16.msra.mxu0 %v7122
    %7195 = vmatpush.bf16.msra.mxu0 %v7118
    %7196 = vmatpush.bf16.msra.mxu0 %v7114
    %7197 = vmatpush.bf16.msra.mxu0 %v7110
    %7198 = vmatpush.bf16.msra.mxu0 %v7106
    %7199 = vmatpush.bf16.msra.mxu0 %v7102
    %7200 = vmatpush.bf16.msra.mxu0 %v7098
    %7201 = vmatpush.bf16.msra.mxu0 %v7094
    %7202 = vmatmul.bf16.gmra.mxu0 %v6962
    %v7203 = vpop.f32.mrf.mxu0
    %v7204 = vadd.f32 0.0, %v7203
    %v7205 = vpop.f32.mrf.mxu0
    %7206 = vdwg.mxu0
    %v7207 = vadd.f32 %v6958, %v7165
    %v7208 = vadd.f32 %v6959, %v7178
    %v7209 = vadd.f32 %v6960, %v7191
    %v7210 = vadd.f32 %v6961, %v7204
    %v7211 = vxor.u32 %v7207, 2147483648
    %v7212 = vmul.f32 %v7211, 1.442695
    %v7213 = vpow.pop %v7212
    %v7214 = vadd.f32 %v7213, 1.0
    %v7215 = vrcp.pop %v7214
    %v7216 = vmul.f32 %v7214, %v7215
    %v7217 = vsub.f32 1.0, %v7216
    %v7218 = vmul.f32 %v7215, %v7217
    %v7219 = vadd.f32 %v7215, %v7218
    %vm7220 = vweird.f32 %v7214
    %vm7221 = vweird.f32 %v7215
    %vm7222 = vmor %vm7220, %vm7221
    %v7223 = vsel %vm7222, %v7215, %v7219
    %v7224 = vand.u32 2147483647, %v7214
    %vm7225 = vcmp.eq.f32.partialorder %v7224, 8.507059e+37
    %v7226 = vand.u32 %v7214, 2147483648
    %v7227 = vor.u32 1.1754944e-38, %v7226
    %v7228 = vsel %vm7225, %v7227, %v7223
    %v7229 = vmul.f32 1.0, %v7228
    %v7230 = vxor.u32 %v7208, 2147483648
    %v7231 = vmul.f32 %v7230, 1.442695
    %v7232 = vpow.pop %v7231
    %v7233 = vadd.f32 %v7232, 1.0
    %v7234 = vrcp.pop %v7233
    %v7235 = vmul.f32 %v7233, %v7234
    %v7236 = vsub.f32 1.0, %v7235
    %v7237 = vmul.f32 %v7234, %v7236
    %v7238 = vadd.f32 %v7234, %v7237
    %vm7239 = vweird.f32 %v7233
    %vm7240 = vweird.f32 %v7234
    %vm7241 = vmor %vm7239, %vm7240
    %v7242 = vsel %vm7241, %v7234, %v7238
    %v7243 = vand.u32 2147483647, %v7233
    %vm7244 = vcmp.eq.f32.partialorder %v7243, 8.507059e+37
    %v7245 = vand.u32 %v7233, 2147483648
    %v7246 = vor.u32 1.1754944e-38, %v7245
    %v7247 = vsel %vm7244, %v7246, %v7242
    %v7248 = vmul.f32 1.0, %v7247
    %v7249 = vtanh.pop %v7209
    %v7250 = vxor.u32 %v7210, 2147483648
    %v7251 = vmul.f32 %v7250, 1.442695
    %v7252 = vpow.pop %v7251
    %v7253 = vadd.f32 %v7252, 1.0
    %v7254 = vrcp.pop %v7253
    %v7255 = vmul.f32 %v7253, %v7254
    %v7256 = vsub.f32 1.0, %v7255
    %v7257 = vmul.f32 %v7254, %v7256
    %v7258 = vadd.f32 %v7254, %v7257
    %vm7259 = vweird.f32 %v7253
    %vm7260 = vweird.f32 %v7254
    %vm7261 = vmor %vm7259, %vm7260
    %v7262 = vsel %vm7261, %v7254, %v7258
    %v7263 = vand.u32 2147483647, %v7253
    %vm7264 = vcmp.eq.f32.partialorder %v7263, 8.507059e+37
    %v7265 = vand.u32 %v7253, 2147483648
    %v7266 = vor.u32 1.1754944e-38, %v7265
    %v7267 = vsel %vm7264, %v7266, %v7262
    %v7268 = vmul.f32 1.0, %v7267
    %v7269 = vmul.f32 %v7248, %v6953
    %v7270 = vmul.f32 %v7229, %v7249
    %v7271 = vadd.f32 %v7269, %v7270
    %v7272 = vtanh.pop %v7271
    %v7273 = vmul.f32 %v7268, %v7272
    %s7274 = scalar_lea.vmem [#allocation21], 16
    %7275 = vst [vmem:[%s7274] sm:$0xff] %v7273
    %v7276 = vld [vmem:[%s1446] sm:$0xff]
    %v7277 = vld [vmem:[%s1446 + $0x8] sm:$0xff]
    %v7278 = vld [vmem:[%s1446 + $0x10] sm:$0xff]
    %v7279 = vld [vmem:[%s1446 + $0x18] sm:$0xff]
    %v7280 = vpack.c.bf16 %v7273, %v7273
    %v7281 = vld [vmem:[#allocation19] sm:$0xff]
    %v7282 = vld [vmem:[#allocation19 + $0x8] sm:$0xff]
    %v7283 = vld [vmem:[#allocation19 + $0x10] sm:$0xff]
    %v7284 = vld [vmem:[#allocation19 + $0x18] sm:$0xff]
    %v7285 = vld [vmem:[#allocation19 + $0x20] sm:$0xff]
    %v7286 = vld [vmem:[#allocation19 + $0x28] sm:$0xff]
    %v7287 = vld [vmem:[#allocation19 + $0x30] sm:$0xff]
    %v7288 = vld [vmem:[#allocation19 + $0x38] sm:$0xff]
    %v7289 = vld [vmem:[#allocation19 + $0x40] sm:$0xff]
    %v7290 = vld [vmem:[#allocation19 + $0x48] sm:$0xff]
    %v7291 = vld [vmem:[#allocation19 + $0x50] sm:$0xff]
    %v7292 = vld [vmem:[#allocation19 + $0x58] sm:$0xff]
    %v7293 = vld [vmem:[#allocation19 + $0x60] sm:$0xff]
    %v7294 = vld [vmem:[#allocation19 + $0x68] sm:$0xff]
    %v7295 = vld [vmem:[#allocation19 + $0x70] sm:$0xff]
    %v7296 = vld [vmem:[#allocation19 + $0x78] sm:$0xff]
    %v7297 = vld [vmem:[#allocation19 + $0x80] sm:$0xff]
    %v7298 = vld [vmem:[#allocation19 + $0x88] sm:$0xff]
    %v7299 = vld [vmem:[#allocation19 + $0x90] sm:$0xff]
    %v7300 = vld [vmem:[#allocation19 + $0x98] sm:$0xff]
    %v7301 = vld [vmem:[#allocation19 + $0xa0] sm:$0xff]
    %v7302 = vld [vmem:[#allocation19 + $0xa8] sm:$0xff]
    %v7303 = vld [vmem:[#allocation19 + $0xb0] sm:$0xff]
    %v7304 = vld [vmem:[#allocation19 + $0xb8] sm:$0xff]
    %v7305 = vld [vmem:[#allocation19 + $0xc0] sm:$0xff]
    %v7306 = vld [vmem:[#allocation19 + $0xc8] sm:$0xff]
    %v7307 = vld [vmem:[#allocation19 + $0xd0] sm:$0xff]
    %v7308 = vld [vmem:[#allocation19 + $0xd8] sm:$0xff]
    %v7309 = vld [vmem:[#allocation19 + $0xe0] sm:$0xff]
    %v7310 = vld [vmem:[#allocation19 + $0xe8] sm:$0xff]
    %v7311 = vld [vmem:[#allocation19 + $0xf0] sm:$0xff]
    %v7312 = vld [vmem:[#allocation19 + $0xf8] sm:$0xff]
    %v7345 = vunpack.c.l.b16 %v7281
    %v7346 = vunpack.c.h.b16 %v7281
    %v7347 = vunpack.c.l.b16 %v7282
    %v7348 = vunpack.c.h.b16 %v7282
    %v7349 = vunpack.c.l.b16 %v7283
    %v7350 = vunpack.c.h.b16 %v7283
    %v7351 = vunpack.c.l.b16 %v7284
    %v7352 = vunpack.c.h.b16 %v7284
    %v7353 = vunpack.c.l.b16 %v7285
    %v7354 = vunpack.c.h.b16 %v7285
    %v7355 = vunpack.c.l.b16 %v7286
    %v7356 = vunpack.c.h.b16 %v7286
    %v7357 = vunpack.c.l.b16 %v7287
    %v7358 = vunpack.c.h.b16 %v7287
    %v7359 = vunpack.c.l.b16 %v7288
    %v7360 = vunpack.c.h.b16 %v7288
    %v7361 = vunpack.c.l.b16 %v7289
    %v7362 = vunpack.c.h.b16 %v7289
    %v7363 = vunpack.c.l.b16 %v7290
    %v7364 = vunpack.c.h.b16 %v7290
    %v7365 = vunpack.c.l.b16 %v7291
    %v7366 = vunpack.c.h.b16 %v7291
    %v7367 = vunpack.c.l.b16 %v7292
    %v7368 = vunpack.c.h.b16 %v7292
    %v7369 = vunpack.c.l.b16 %v7293
    %v7370 = vunpack.c.h.b16 %v7293
    %v7371 = vunpack.c.l.b16 %v7294
    %v7372 = vunpack.c.h.b16 %v7294
    %v7373 = vunpack.c.l.b16 %v7295
    %v7374 = vunpack.c.h.b16 %v7295
    %v7375 = vunpack.c.l.b16 %v7296
    %v7376 = vunpack.c.h.b16 %v7296
    %v7377 = vunpack.c.l.b16 %v7297
    %v7378 = vunpack.c.h.b16 %v7297
    %v7379 = vunpack.c.l.b16 %v7298
    %v7380 = vunpack.c.h.b16 %v7298
    %v7381 = vunpack.c.l.b16 %v7299
    %v7382 = vunpack.c.h.b16 %v7299
    %v7383 = vunpack.c.l.b16 %v7300
    %v7384 = vunpack.c.h.b16 %v7300
    %v7385 = vunpack.c.l.b16 %v7301
    %v7386 = vunpack.c.h.b16 %v7301
    %v7387 = vunpack.c.l.b16 %v7302
    %v7388 = vunpack.c.h.b16 %v7302
    %v7389 = vunpack.c.l.b16 %v7303
    %v7390 = vunpack.c.h.b16 %v7303
    %v7391 = vunpack.c.l.b16 %v7304
    %v7392 = vunpack.c.h.b16 %v7304
    %v7393 = vunpack.c.l.b16 %v7305
    %v7394 = vunpack.c.h.b16 %v7305
    %v7395 = vunpack.c.l.b16 %v7306
    %v7396 = vunpack.c.h.b16 %v7306
    %v7397 = vunpack.c.l.b16 %v7307
    %v7398 = vunpack.c.h.b16 %v7307
    %v7399 = vunpack.c.l.b16 %v7308
    %v7400 = vunpack.c.h.b16 %v7308
    %v7401 = vunpack.c.l.b16 %v7309
    %v7402 = vunpack.c.h.b16 %v7309
    %v7403 = vunpack.c.l.b16 %v7310
    %v7404 = vunpack.c.h.b16 %v7310
    %v7405 = vunpack.c.l.b16 %v7311
    %v7406 = vunpack.c.h.b16 %v7311
    %v7407 = vunpack.c.l.b16 %v7312
    %v7408 = vunpack.c.h.b16 %v7312
    %v7409 = vpack.c.b16 %v7349, %v7345
    %v7410 = vpack.c.b16 %v7350, %v7346
    %v7411 = vpack.c.b16 %v7351, %v7347
    %v7412 = vpack.c.b16 %v7352, %v7348
    %v7413 = vpack.c.b16 %v7357, %v7353
    %v7414 = vpack.c.b16 %v7358, %v7354
    %v7415 = vpack.c.b16 %v7359, %v7355
    %v7416 = vpack.c.b16 %v7360, %v7356
    %v7417 = vpack.c.b16 %v7365, %v7361
    %v7418 = vpack.c.b16 %v7366, %v7362
    %v7419 = vpack.c.b16 %v7367, %v7363
    %v7420 = vpack.c.b16 %v7368, %v7364
    %v7421 = vpack.c.b16 %v7373, %v7369
    %v7422 = vpack.c.b16 %v7374, %v7370
    %v7423 = vpack.c.b16 %v7375, %v7371
    %v7424 = vpack.c.b16 %v7376, %v7372
    %v7425 = vpack.c.b16 %v7381, %v7377
    %v7426 = vpack.c.b16 %v7382, %v7378
    %v7427 = vpack.c.b16 %v7383, %v7379
    %v7428 = vpack.c.b16 %v7384, %v7380
    %v7429 = vpack.c.b16 %v7389, %v7385
    %v7430 = vpack.c.b16 %v7390, %v7386
    %v7431 = vpack.c.b16 %v7391, %v7387
    %v7432 = vpack.c.b16 %v7392, %v7388
    %v7433 = vpack.c.b16 %v7397, %v7393
    %v7434 = vpack.c.b16 %v7398, %v7394
    %v7435 = vpack.c.b16 %v7399, %v7395
    %v7436 = vpack.c.b16 %v7400, %v7396
    %v7437 = vpack.c.b16 %v7405, %v7401
    %v7438 = vpack.c.b16 %v7406, %v7402
    %v7439 = vpack.c.b16 %v7407, %v7403
    %v7440 = vpack.c.b16 %v7408, %v7404
    %7473 = vmatpush.bf16.msra.mxu0 %v7437
    %7474 = vmatpush.bf16.msra.mxu0 %v7433
    %7475 = vmatpush.bf16.msra.mxu0 %v7429
    %7476 = vmatpush.bf16.msra.mxu0 %v7425
    %7477 = vmatpush.bf16.msra.mxu0 %v7421
    %7478 = vmatpush.bf16.msra.mxu0 %v7417
    %7479 = vmatpush.bf16.msra.mxu0 %v7413
    %7480 = vmatpush.bf16.msra.mxu0 %v7409
    %7481 = vmatmul.bf16.gmra.mxu0 %v7280
    %v7482 = vpop.f32.mrf.mxu0
    %v7483 = vadd.f32 0.0, %v7482
    %v7484 = vpop.f32.mrf.mxu0
    %7485 = vdwg.mxu0
    %7486 = vmatpush.bf16.msra.mxu0 %v7438
    %7487 = vmatpush.bf16.msra.mxu0 %v7434
    %7488 = vmatpush.bf16.msra.mxu0 %v7430
    %7489 = vmatpush.bf16.msra.mxu0 %v7426
    %7490 = vmatpush.bf16.msra.mxu0 %v7422
    %7491 = vmatpush.bf16.msra.mxu0 %v7418
    %7492 = vmatpush.bf16.msra.mxu0 %v7414
    %7493 = vmatpush.bf16.msra.mxu0 %v7410
    %7494 = vmatmul.bf16.gmra.mxu0 %v7280
    %v7495 = vpop.f32.mrf.mxu0
    %v7496 = vadd.f32 0.0, %v7495
    %v7497 = vpop.f32.mrf.mxu0
    %7498 = vdwg.mxu0
    %7499 = vmatpush.bf16.msra.mxu0 %v7439
    %7500 = vmatpush.bf16.msra.mxu0 %v7435
    %7501 = vmatpush.bf16.msra.mxu0 %v7431
    %7502 = vmatpush.bf16.msra.mxu0 %v7427
    %7503 = vmatpush.bf16.msra.mxu0 %v7423
    %7504 = vmatpush.bf16.msra.mxu0 %v7419
    %7505 = vmatpush.bf16.msra.mxu0 %v7415
    %7506 = vmatpush.bf16.msra.mxu0 %v7411
    %7507 = vmatmul.bf16.gmra.mxu0 %v7280
    %v7508 = vpop.f32.mrf.mxu0
    %v7509 = vadd.f32 0.0, %v7508
    %v7510 = vpop.f32.mrf.mxu0
    %7511 = vdwg.mxu0
    %7512 = vmatpush.bf16.msra.mxu0 %v7440
    %7513 = vmatpush.bf16.msra.mxu0 %v7436
    %7514 = vmatpush.bf16.msra.mxu0 %v7432
    %7515 = vmatpush.bf16.msra.mxu0 %v7428
    %7516 = vmatpush.bf16.msra.mxu0 %v7424
    %7517 = vmatpush.bf16.msra.mxu0 %v7420
    %7518 = vmatpush.bf16.msra.mxu0 %v7416
    %7519 = vmatpush.bf16.msra.mxu0 %v7412
    %7520 = vmatmul.bf16.gmra.mxu0 %v7280
    %v7521 = vpop.f32.mrf.mxu0
    %v7522 = vadd.f32 0.0, %v7521
    %v7523 = vpop.f32.mrf.mxu0
    %7524 = vdwg.mxu0
    %v7525 = vadd.f32 %v7276, %v7483
    %v7526 = vadd.f32 %v7277, %v7496
    %v7527 = vadd.f32 %v7278, %v7509
    %v7528 = vadd.f32 %v7279, %v7522
    %v7529 = vxor.u32 %v7525, 2147483648
    %v7530 = vmul.f32 %v7529, 1.442695
    %v7531 = vpow.pop %v7530
    %v7532 = vadd.f32 %v7531, 1.0
    %v7533 = vrcp.pop %v7532
    %v7534 = vmul.f32 %v7532, %v7533
    %v7535 = vsub.f32 1.0, %v7534
    %v7536 = vmul.f32 %v7533, %v7535
    %v7537 = vadd.f32 %v7533, %v7536
    %vm7538 = vweird.f32 %v7532
    %vm7539 = vweird.f32 %v7533
    %vm7540 = vmor %vm7538, %vm7539
    %v7541 = vsel %vm7540, %v7533, %v7537
    %v7542 = vand.u32 2147483647, %v7532
    %vm7543 = vcmp.eq.f32.partialorder %v7542, 8.507059e+37
    %v7544 = vand.u32 %v7532, 2147483648
    %v7545 = vor.u32 1.1754944e-38, %v7544
    %v7546 = vsel %vm7543, %v7545, %v7541
    %v7547 = vmul.f32 1.0, %v7546
    %v7548 = vxor.u32 %v7526, 2147483648
    %v7549 = vmul.f32 %v7548, 1.442695
    %v7550 = vpow.pop %v7549
    %v7551 = vadd.f32 %v7550, 1.0
    %v7552 = vrcp.pop %v7551
    %v7553 = vmul.f32 %v7551, %v7552
    %v7554 = vsub.f32 1.0, %v7553
    %v7555 = vmul.f32 %v7552, %v7554
    %v7556 = vadd.f32 %v7552, %v7555
    %vm7557 = vweird.f32 %v7551
    %vm7558 = vweird.f32 %v7552
    %vm7559 = vmor %vm7557, %vm7558
    %v7560 = vsel %vm7559, %v7552, %v7556
    %v7561 = vand.u32 2147483647, %v7551
    %vm7562 = vcmp.eq.f32.partialorder %v7561, 8.507059e+37
    %v7563 = vand.u32 %v7551, 2147483648
    %v7564 = vor.u32 1.1754944e-38, %v7563
    %v7565 = vsel %vm7562, %v7564, %v7560
    %v7566 = vmul.f32 1.0, %v7565
    %v7567 = vtanh.pop %v7527
    %v7568 = vxor.u32 %v7528, 2147483648
    %v7569 = vmul.f32 %v7568, 1.442695
    %v7570 = vpow.pop %v7569
    %v7571 = vadd.f32 %v7570, 1.0
    %v7572 = vrcp.pop %v7571
    %v7573 = vmul.f32 %v7571, %v7572
    %v7574 = vsub.f32 1.0, %v7573
    %v7575 = vmul.f32 %v7572, %v7574
    %v7576 = vadd.f32 %v7572, %v7575
    %vm7577 = vweird.f32 %v7571
    %vm7578 = vweird.f32 %v7572
    %vm7579 = vmor %vm7577, %vm7578
    %v7580 = vsel %vm7579, %v7572, %v7576
    %v7581 = vand.u32 2147483647, %v7571
    %vm7582 = vcmp.eq.f32.partialorder %v7581, 8.507059e+37
    %v7583 = vand.u32 %v7571, 2147483648
    %v7584 = vor.u32 1.1754944e-38, %v7583
    %v7585 = vsel %vm7582, %v7584, %v7580
    %v7586 = vmul.f32 1.0, %v7585
    %v7587 = vmul.f32 %v7566, %v7271
    %v7588 = vmul.f32 %v7547, %v7567
    %v7589 = vadd.f32 %v7587, %v7588
    %v7590 = vtanh.pop %v7589
    %v7591 = vmul.f32 %v7586, %v7590
    %s7592 = scalar_lea.vmem [#allocation21], 24
    %7593 = vst [vmem:[%s7592] sm:$0xff] %v7591
    %v7594 = vld [vmem:[%s1767] sm:$0xff]
    %v7595 = vld [vmem:[%s1767 + $0x8] sm:$0xff]
    %v7596 = vld [vmem:[%s1767 + $0x10] sm:$0xff]
    %v7597 = vld [vmem:[%s1767 + $0x18] sm:$0xff]
    %v7598 = vpack.c.bf16 %v7591, %v7591
    %v7599 = vld [vmem:[#allocation19] sm:$0xff]
    %v7600 = vld [vmem:[#allocation19 + $0x8] sm:$0xff]
    %v7601 = vld [vmem:[#allocation19 + $0x10] sm:$0xff]
    %v7602 = vld [vmem:[#allocation19 + $0x18] sm:$0xff]
    %v7603 = vld [vmem:[#allocation19 + $0x20] sm:$0xff]
    %v7604 = vld [vmem:[#allocation19 + $0x28] sm:$0xff]
    %v7605 = vld [vmem:[#allocation19 + $0x30] sm:$0xff]
    %v7606 = vld [vmem:[#allocation19 + $0x38] sm:$0xff]
    %v7607 = vld [vmem:[#allocation19 + $0x40] sm:$0xff]
    %v7608 = vld [vmem:[#allocation19 + $0x48] sm:$0xff]
    %v7609 = vld [vmem:[#allocation19 + $0x50] sm:$0xff]
    %v7610 = vld [vmem:[#allocation19 + $0x58] sm:$0xff]
    %v7611 = vld [vmem:[#allocation19 + $0x60] sm:$0xff]
    %v7612 = vld [vmem:[#allocation19 + $0x68] sm:$0xff]
    %v7613 = vld [vmem:[#allocation19 + $0x70] sm:$0xff]
    %v7614 = vld [vmem:[#allocation19 + $0x78] sm:$0xff]
    %v7615 = vld [vmem:[#allocation19 + $0x80] sm:$0xff]
    %v7616 = vld [vmem:[#allocation19 + $0x88] sm:$0xff]
    %v7617 = vld [vmem:[#allocation19 + $0x90] sm:$0xff]
    %v7618 = vld [vmem:[#allocation19 + $0x98] sm:$0xff]
    %v7619 = vld [vmem:[#allocation19 + $0xa0] sm:$0xff]
    %v7620 = vld [vmem:[#allocation19 + $0xa8] sm:$0xff]
    %v7621 = vld [vmem:[#allocation19 + $0xb0] sm:$0xff]
    %v7622 = vld [vmem:[#allocation19 + $0xb8] sm:$0xff]
    %v7623 = vld [vmem:[#allocation19 + $0xc0] sm:$0xff]
    %v7624 = vld [vmem:[#allocation19 + $0xc8] sm:$0xff]
    %v7625 = vld [vmem:[#allocation19 + $0xd0] sm:$0xff]
    %v7626 = vld [vmem:[#allocation19 + $0xd8] sm:$0xff]
    %v7627 = vld [vmem:[#allocation19 + $0xe0] sm:$0xff]
    %v7628 = vld [vmem:[#allocation19 + $0xe8] sm:$0xff]
    %v7629 = vld [vmem:[#allocation19 + $0xf0] sm:$0xff]
    %v7630 = vld [vmem:[#allocation19 + $0xf8] sm:$0xff]
    %v7663 = vunpack.c.l.b16 %v7599
    %v7664 = vunpack.c.h.b16 %v7599
    %v7665 = vunpack.c.l.b16 %v7600
    %v7666 = vunpack.c.h.b16 %v7600
    %v7667 = vunpack.c.l.b16 %v7601
    %v7668 = vunpack.c.h.b16 %v7601
    %v7669 = vunpack.c.l.b16 %v7602
    %v7670 = vunpack.c.h.b16 %v7602
    %v7671 = vunpack.c.l.b16 %v7603
    %v7672 = vunpack.c.h.b16 %v7603
    %v7673 = vunpack.c.l.b16 %v7604
    %v7674 = vunpack.c.h.b16 %v7604
    %v7675 = vunpack.c.l.b16 %v7605
    %v7676 = vunpack.c.h.b16 %v7605
    %v7677 = vunpack.c.l.b16 %v7606
    %v7678 = vunpack.c.h.b16 %v7606
    %v7679 = vunpack.c.l.b16 %v7607
    %v7680 = vunpack.c.h.b16 %v7607
    %v7681 = vunpack.c.l.b16 %v7608
    %v7682 = vunpack.c.h.b16 %v7608
    %v7683 = vunpack.c.l.b16 %v7609
    %v7684 = vunpack.c.h.b16 %v7609
    %v7685 = vunpack.c.l.b16 %v7610
    %v7686 = vunpack.c.h.b16 %v7610
    %v7687 = vunpack.c.l.b16 %v7611
    %v7688 = vunpack.c.h.b16 %v7611
    %v7689 = vunpack.c.l.b16 %v7612
    %v7690 = vunpack.c.h.b16 %v7612
    %v7691 = vunpack.c.l.b16 %v7613
    %v7692 = vunpack.c.h.b16 %v7613
    %v7693 = vunpack.c.l.b16 %v7614
    %v7694 = vunpack.c.h.b16 %v7614
    %v7695 = vunpack.c.l.b16 %v7615
    %v7696 = vunpack.c.h.b16 %v7615
    %v7697 = vunpack.c.l.b16 %v7616
    %v7698 = vunpack.c.h.b16 %v7616
    %v7699 = vunpack.c.l.b16 %v7617
    %v7700 = vunpack.c.h.b16 %v7617
    %v7701 = vunpack.c.l.b16 %v7618
    %v7702 = vunpack.c.h.b16 %v7618
    %v7703 = vunpack.c.l.b16 %v7619
    %v7704 = vunpack.c.h.b16 %v7619
    %v7705 = vunpack.c.l.b16 %v7620
    %v7706 = vunpack.c.h.b16 %v7620
    %v7707 = vunpack.c.l.b16 %v7621
    %v7708 = vunpack.c.h.b16 %v7621
    %v7709 = vunpack.c.l.b16 %v7622
    %v7710 = vunpack.c.h.b16 %v7622
    %v7711 = vunpack.c.l.b16 %v7623
    %v7712 = vunpack.c.h.b16 %v7623
    %v7713 = vunpack.c.l.b16 %v7624
    %v7714 = vunpack.c.h.b16 %v7624
    %v7715 = vunpack.c.l.b16 %v7625
    %v7716 = vunpack.c.h.b16 %v7625
    %v7717 = vunpack.c.l.b16 %v7626
    %v7718 = vunpack.c.h.b16 %v7626
    %v7719 = vunpack.c.l.b16 %v7627
    %v7720 = vunpack.c.h.b16 %v7627
    %v7721 = vunpack.c.l.b16 %v7628
    %v7722 = vunpack.c.h.b16 %v7628
    %v7723 = vunpack.c.l.b16 %v7629
    %v7724 = vunpack.c.h.b16 %v7629
    %v7725 = vunpack.c.l.b16 %v7630
    %v7726 = vunpack.c.h.b16 %v7630
    %v7727 = vpack.c.b16 %v7667, %v7663
    %v7728 = vpack.c.b16 %v7668, %v7664
    %v7729 = vpack.c.b16 %v7669, %v7665
    %v7730 = vpack.c.b16 %v7670, %v7666
    %v7731 = vpack.c.b16 %v7675, %v7671
    %v7732 = vpack.c.b16 %v7676, %v7672
    %v7733 = vpack.c.b16 %v7677, %v7673
    %v7734 = vpack.c.b16 %v7678, %v7674
    %v7735 = vpack.c.b16 %v7683, %v7679
    %v7736 = vpack.c.b16 %v7684, %v7680
    %v7737 = vpack.c.b16 %v7685, %v7681
    %v7738 = vpack.c.b16 %v7686, %v7682
    %v7739 = vpack.c.b16 %v7691, %v7687
    %v7740 = vpack.c.b16 %v7692, %v7688
    %v7741 = vpack.c.b16 %v7693, %v7689
    %v7742 = vpack.c.b16 %v7694, %v7690
    %v7743 = vpack.c.b16 %v7699, %v7695
    %v7744 = vpack.c.b16 %v7700, %v7696
    %v7745 = vpack.c.b16 %v7701, %v7697
    %v7746 = vpack.c.b16 %v7702, %v7698
    %v7747 = vpack.c.b16 %v7707, %v7703
    %v7748 = vpack.c.b16 %v7708, %v7704
    %v7749 = vpack.c.b16 %v7709, %v7705
    %v7750 = vpack.c.b16 %v7710, %v7706
    %v7751 = vpack.c.b16 %v7715, %v7711
    %v7752 = vpack.c.b16 %v7716, %v7712
    %v7753 = vpack.c.b16 %v7717, %v7713
    %v7754 = vpack.c.b16 %v7718, %v7714
    %v7755 = vpack.c.b16 %v7723, %v7719
    %v7756 = vpack.c.b16 %v7724, %v7720
    %v7757 = vpack.c.b16 %v7725, %v7721
    %v7758 = vpack.c.b16 %v7726, %v7722
    %7791 = vmatpush.bf16.msra.mxu0 %v7755
    %7792 = vmatpush.bf16.msra.mxu0 %v7751
    %7793 = vmatpush.bf16.msra.mxu0 %v7747
    %7794 = vmatpush.bf16.msra.mxu0 %v7743
    %7795 = vmatpush.bf16.msra.mxu0 %v7739
    %7796 = vmatpush.bf16.msra.mxu0 %v7735
    %7797 = vmatpush.bf16.msra.mxu0 %v7731
    %7798 = vmatpush.bf16.msra.mxu0 %v7727
    %7799 = vmatmul.bf16.gmra.mxu0 %v7598
    %v7800 = vpop.f32.mrf.mxu0
    %v7801 = vadd.f32 0.0, %v7800
    %v7802 = vpop.f32.mrf.mxu0
    %7803 = vdwg.mxu0
    %7804 = vmatpush.bf16.msra.mxu0 %v7756
    %7805 = vmatpush.bf16.msra.mxu0 %v7752
    %7806 = vmatpush.bf16.msra.mxu0 %v7748
    %7807 = vmatpush.bf16.msra.mxu0 %v7744
    %7808 = vmatpush.bf16.msra.mxu0 %v7740
    %7809 = vmatpush.bf16.msra.mxu0 %v7736
    %7810 = vmatpush.bf16.msra.mxu0 %v7732
    %7811 = vmatpush.bf16.msra.mxu0 %v7728
    %7812 = vmatmul.bf16.gmra.mxu0 %v7598
    %v7813 = vpop.f32.mrf.mxu0
    %v7814 = vadd.f32 0.0, %v7813
    %v7815 = vpop.f32.mrf.mxu0
    %7816 = vdwg.mxu0
    %7817 = vmatpush.bf16.msra.mxu0 %v7757
    %7818 = vmatpush.bf16.msra.mxu0 %v7753
    %7819 = vmatpush.bf16.msra.mxu0 %v7749
    %7820 = vmatpush.bf16.msra.mxu0 %v7745
    %7821 = vmatpush.bf16.msra.mxu0 %v7741
    %7822 = vmatpush.bf16.msra.mxu0 %v7737
    %7823 = vmatpush.bf16.msra.mxu0 %v7733
    %7824 = vmatpush.bf16.msra.mxu0 %v7729
    %7825 = vmatmul.bf16.gmra.mxu0 %v7598
    %v7826 = vpop.f32.mrf.mxu0
    %v7827 = vadd.f32 0.0, %v7826
    %v7828 = vpop.f32.mrf.mxu0
    %7829 = vdwg.mxu0
    %7830 = vmatpush.bf16.msra.mxu0 %v7758
    %7831 = vmatpush.bf16.msra.mxu0 %v7754
    %7832 = vmatpush.bf16.msra.mxu0 %v7750
    %7833 = vmatpush.bf16.msra.mxu0 %v7746
    %7834 = vmatpush.bf16.msra.mxu0 %v7742
    %7835 = vmatpush.bf16.msra.mxu0 %v7738
    %7836 = vmatpush.bf16.msra.mxu0 %v7734
    %7837 = vmatpush.bf16.msra.mxu0 %v7730
    %7838 = vmatmul.bf16.gmra.mxu0 %v7598
    %v7839 = vpop.f32.mrf.mxu0
    %v7840 = vadd.f32 0.0, %v7839
    %v7841 = vpop.f32.mrf.mxu0
    %7842 = vdwg.mxu0
    %v7843 = vadd.f32 %v7594, %v7801
    %v7844 = vadd.f32 %v7595, %v7814
    %v7845 = vadd.f32 %v7596, %v7827
    %v7846 = vadd.f32 %v7597, %v7840
    %v7847 = vxor.u32 %v7843, 2147483648
    %v7848 = vmul.f32 %v7847, 1.442695
    %v7849 = vpow.pop %v7848
    %v7850 = vadd.f32 %v7849, 1.0
    %v7851 = vrcp.pop %v7850
    %v7852 = vmul.f32 %v7850, %v7851
    %v7853 = vsub.f32 1.0, %v7852
    %v7854 = vmul.f32 %v7851, %v7853
    %v7855 = vadd.f32 %v7851, %v7854
    %vm7856 = vweird.f32 %v7850
    %vm7857 = vweird.f32 %v7851
    %vm7858 = vmor %vm7856, %vm7857
    %v7859 = vsel %vm7858, %v7851, %v7855
    %v7860 = vand.u32 2147483647, %v7850
    %vm7861 = vcmp.eq.f32.partialorder %v7860, 8.507059e+37
    %v7862 = vand.u32 %v7850, 2147483648
    %v7863 = vor.u32 1.1754944e-38, %v7862
    %v7864 = vsel %vm7861, %v7863, %v7859
    %v7865 = vmul.f32 1.0, %v7864
    %v7866 = vxor.u32 %v7844, 2147483648
    %v7867 = vmul.f32 %v7866, 1.442695
    %v7868 = vpow.pop %v7867
    %v7869 = vadd.f32 %v7868, 1.0
    %v7870 = vrcp.pop %v7869
    %v7871 = vmul.f32 %v7869, %v7870
    %v7872 = vsub.f32 1.0, %v7871
    %v7873 = vmul.f32 %v7870, %v7872
    %v7874 = vadd.f32 %v7870, %v7873
    %vm7875 = vweird.f32 %v7869
    %vm7876 = vweird.f32 %v7870
    %vm7877 = vmor %vm7875, %vm7876
    %v7878 = vsel %vm7877, %v7870, %v7874
    %v7879 = vand.u32 2147483647, %v7869
    %vm7880 = vcmp.eq.f32.partialorder %v7879, 8.507059e+37
    %v7881 = vand.u32 %v7869, 2147483648
    %v7882 = vor.u32 1.1754944e-38, %v7881
    %v7883 = vsel %vm7880, %v7882, %v7878
    %v7884 = vmul.f32 1.0, %v7883
    %v7885 = vtanh.pop %v7845
    %v7886 = vxor.u32 %v7846, 2147483648
    %v7887 = vmul.f32 %v7886, 1.442695
    %v7888 = vpow.pop %v7887
    %v7889 = vadd.f32 %v7888, 1.0
    %v7890 = vrcp.pop %v7889
    %v7891 = vmul.f32 %v7889, %v7890
    %v7892 = vsub.f32 1.0, %v7891
    %v7893 = vmul.f32 %v7890, %v7892
    %v7894 = vadd.f32 %v7890, %v7893
    %vm7895 = vweird.f32 %v7889
    %vm7896 = vweird.f32 %v7890
    %vm7897 = vmor %vm7895, %vm7896
    %v7898 = vsel %vm7897, %v7890, %v7894
    %v7899 = vand.u32 2147483647, %v7889
    %vm7900 = vcmp.eq.f32.partialorder %v7899, 8.507059e+37
    %v7901 = vand.u32 %v7889, 2147483648
    %v7902 = vor.u32 1.1754944e-38, %v7901
    %v7903 = vsel %vm7900, %v7902, %v7898
    %v7904 = vmul.f32 1.0, %v7903
    %v7905 = vmul.f32 %v7884, %v7589
    %v7906 = vmul.f32 %v7865, %v7885
    %v7907 = vadd.f32 %v7905, %v7906
    %v7908 = vtanh.pop %v7907
    %v7909 = vmul.f32 %v7904, %v7908
    %s7910 = scalar_lea.vmem [#allocation21], 32
    %7911 = vst [vmem:[%s7910] sm:$0xff] %v7909
    %v7912 = vld [vmem:[%s2088] sm:$0xff]
    %v7913 = vld [vmem:[%s2088 + $0x8] sm:$0xff]
    %v7914 = vld [vmem:[%s2088 + $0x10] sm:$0xff]
    %v7915 = vld [vmem:[%s2088 + $0x18] sm:$0xff]
    %v7916 = vpack.c.bf16 %v7909, %v7909
    %v7917 = vld [vmem:[#allocation19] sm:$0xff]
    %v7918 = vld [vmem:[#allocation19 + $0x8] sm:$0xff]
    %v7919 = vld [vmem:[#allocation19 + $0x10] sm:$0xff]
    %v7920 = vld [vmem:[#allocation19 + $0x18] sm:$0xff]
    %v7921 = vld [vmem:[#allocation19 + $0x20] sm:$0xff]
    %v7922 = vld [vmem:[#allocation19 + $0x28] sm:$0xff]
    %v7923 = vld [vmem:[#allocation19 + $0x30] sm:$0xff]
    %v7924 = vld [vmem:[#allocation19 + $0x38] sm:$0xff]
    %v7925 = vld [vmem:[#allocation19 + $0x40] sm:$0xff]
    %v7926 = vld [vmem:[#allocation19 + $0x48] sm:$0xff]
    %v7927 = vld [vmem:[#allocation19 + $0x50] sm:$0xff]
    %v7928 = vld [vmem:[#allocation19 + $0x58] sm:$0xff]
    %v7929 = vld [vmem:[#allocation19 + $0x60] sm:$0xff]
    %v7930 = vld [vmem:[#allocation19 + $0x68] sm:$0xff]
    %v7931 = vld [vmem:[#allocation19 + $0x70] sm:$0xff]
    %v7932 = vld [vmem:[#allocation19 + $0x78] sm:$0xff]
    %v7933 = vld [vmem:[#allocation19 + $0x80] sm:$0xff]
    %v7934 = vld [vmem:[#allocation19 + $0x88] sm:$0xff]
    %v7935 = vld [vmem:[#allocation19 + $0x90] sm:$0xff]
    %v7936 = vld [vmem:[#allocation19 + $0x98] sm:$0xff]
    %v7937 = vld [vmem:[#allocation19 + $0xa0] sm:$0xff]
    %v7938 = vld [vmem:[#allocation19 + $0xa8] sm:$0xff]
    %v7939 = vld [vmem:[#allocation19 + $0xb0] sm:$0xff]
    %v7940 = vld [vmem:[#allocation19 + $0xb8] sm:$0xff]
    %v7941 = vld [vmem:[#allocation19 + $0xc0] sm:$0xff]
    %v7942 = vld [vmem:[#allocation19 + $0xc8] sm:$0xff]
    %v7943 = vld [vmem:[#allocation19 + $0xd0] sm:$0xff]
    %v7944 = vld [vmem:[#allocation19 + $0xd8] sm:$0xff]
    %v7945 = vld [vmem:[#allocation19 + $0xe0] sm:$0xff]
    %v7946 = vld [vmem:[#allocation19 + $0xe8] sm:$0xff]
    %v7947 = vld [vmem:[#allocation19 + $0xf0] sm:$0xff]
    %v7948 = vld [vmem:[#allocation19 + $0xf8] sm:$0xff]
    %v7981 = vunpack.c.l.b16 %v7917
    %v7982 = vunpack.c.h.b16 %v7917
    %v7983 = vunpack.c.l.b16 %v7918
    %v7984 = vunpack.c.h.b16 %v7918
    %v7985 = vunpack.c.l.b16 %v7919
    %v7986 = vunpack.c.h.b16 %v7919
    %v7987 = vunpack.c.l.b16 %v7920
    %v7988 = vunpack.c.h.b16 %v7920
    %v7989 = vunpack.c.l.b16 %v7921
    %v7990 = vunpack.c.h.b16 %v7921
    %v7991 = vunpack.c.l.b16 %v7922
    %v7992 = vunpack.c.h.b16 %v7922
    %v7993 = vunpack.c.l.b16 %v7923
    %v7994 = vunpack.c.h.b16 %v7923
    %v7995 = vunpack.c.l.b16 %v7924
    %v7996 = vunpack.c.h.b16 %v7924
    %v7997 = vunpack.c.l.b16 %v7925
    %v7998 = vunpack.c.h.b16 %v7925
    %v7999 = vunpack.c.l.b16 %v7926
    %v8000 = vunpack.c.h.b16 %v7926
    %v8001 = vunpack.c.l.b16 %v7927
    %v8002 = vunpack.c.h.b16 %v7927
    %v8003 = vunpack.c.l.b16 %v7928
    %v8004 = vunpack.c.h.b16 %v7928
    %v8005 = vunpack.c.l.b16 %v7929
    %v8006 = vunpack.c.h.b16 %v7929
    %v8007 = vunpack.c.l.b16 %v7930
    %v8008 = vunpack.c.h.b16 %v7930
    %v8009 = vunpack.c.l.b16 %v7931
    %v8010 = vunpack.c.h.b16 %v7931
    %v8011 = vunpack.c.l.b16 %v7932
    %v8012 = vunpack.c.h.b16 %v7932
    %v8013 = vunpack.c.l.b16 %v7933
    %v8014 = vunpack.c.h.b16 %v7933
    %v8015 = vunpack.c.l.b16 %v7934
    %v8016 = vunpack.c.h.b16 %v7934
    %v8017 = vunpack.c.l.b16 %v7935
    %v8018 = vunpack.c.h.b16 %v7935
    %v8019 = vunpack.c.l.b16 %v7936
    %v8020 = vunpack.c.h.b16 %v7936
    %v8021 = vunpack.c.l.b16 %v7937
    %v8022 = vunpack.c.h.b16 %v7937
    %v8023 = vunpack.c.l.b16 %v7938
    %v8024 = vunpack.c.h.b16 %v7938
    %v8025 = vunpack.c.l.b16 %v7939
    %v8026 = vunpack.c.h.b16 %v7939
    %v8027 = vunpack.c.l.b16 %v7940
    %v8028 = vunpack.c.h.b16 %v7940
    %v8029 = vunpack.c.l.b16 %v7941
    %v8030 = vunpack.c.h.b16 %v7941
    %v8031 = vunpack.c.l.b16 %v7942
    %v8032 = vunpack.c.h.b16 %v7942
    %v8033 = vunpack.c.l.b16 %v7943
    %v8034 = vunpack.c.h.b16 %v7943
    %v8035 = vunpack.c.l.b16 %v7944
    %v8036 = vunpack.c.h.b16 %v7944
    %v8037 = vunpack.c.l.b16 %v7945
    %v8038 = vunpack.c.h.b16 %v7945
    %v8039 = vunpack.c.l.b16 %v7946
    %v8040 = vunpack.c.h.b16 %v7946
    %v8041 = vunpack.c.l.b16 %v7947
    %v8042 = vunpack.c.h.b16 %v7947
    %v8043 = vunpack.c.l.b16 %v7948
    %v8044 = vunpack.c.h.b16 %v7948
    %v8045 = vpack.c.b16 %v7985, %v7981
    %v8046 = vpack.c.b16 %v7986, %v7982
    %v8047 = vpack.c.b16 %v7987, %v7983
    %v8048 = vpack.c.b16 %v7988, %v7984
    %v8049 = vpack.c.b16 %v7993, %v7989
    %v8050 = vpack.c.b16 %v7994, %v7990
    %v8051 = vpack.c.b16 %v7995, %v7991
    %v8052 = vpack.c.b16 %v7996, %v7992
    %v8053 = vpack.c.b16 %v8001, %v7997
    %v8054 = vpack.c.b16 %v8002, %v7998
    %v8055 = vpack.c.b16 %v8003, %v7999
    %v8056 = vpack.c.b16 %v8004, %v8000
    %v8057 = vpack.c.b16 %v8009, %v8005
    %v8058 = vpack.c.b16 %v8010, %v8006
    %v8059 = vpack.c.b16 %v8011, %v8007
    %v8060 = vpack.c.b16 %v8012, %v8008
    %v8061 = vpack.c.b16 %v8017, %v8013
    %v8062 = vpack.c.b16 %v8018, %v8014
    %v8063 = vpack.c.b16 %v8019, %v8015
    %v8064 = vpack.c.b16 %v8020, %v8016
    %v8065 = vpack.c.b16 %v8025, %v8021
    %v8066 = vpack.c.b16 %v8026, %v8022
    %v8067 = vpack.c.b16 %v8027, %v8023
    %v8068 = vpack.c.b16 %v8028, %v8024
    %v8069 = vpack.c.b16 %v8033, %v8029
    %v8070 = vpack.c.b16 %v8034, %v8030
    %v8071 = vpack.c.b16 %v8035, %v8031
    %v8072 = vpack.c.b16 %v8036, %v8032
    %v8073 = vpack.c.b16 %v8041, %v8037
    %v8074 = vpack.c.b16 %v8042, %v8038
    %v8075 = vpack.c.b16 %v8043, %v8039
    %v8076 = vpack.c.b16 %v8044, %v8040
    %8109 = vmatpush.bf16.msra.mxu0 %v8073
    %8110 = vmatpush.bf16.msra.mxu0 %v8069
    %8111 = vmatpush.bf16.msra.mxu0 %v8065
    %8112 = vmatpush.bf16.msra.mxu0 %v8061
    %8113 = vmatpush.bf16.msra.mxu0 %v8057
    %8114 = vmatpush.bf16.msra.mxu0 %v8053
    %8115 = vmatpush.bf16.msra.mxu0 %v8049
    %8116 = vmatpush.bf16.msra.mxu0 %v8045
    %8117 = vmatmul.bf16.gmra.mxu0 %v7916
    %v8118 = vpop.f32.mrf.mxu0
    %v8119 = vadd.f32 0.0, %v8118
    %v8120 = vpop.f32.mrf.mxu0
    %8121 = vdwg.mxu0
    %8122 = vmatpush.bf16.msra.mxu0 %v8074
    %8123 = vmatpush.bf16.msra.mxu0 %v8070
    %8124 = vmatpush.bf16.msra.mxu0 %v8066
    %8125 = vmatpush.bf16.msra.mxu0 %v8062
    %8126 = vmatpush.bf16.msra.mxu0 %v8058
    %8127 = vmatpush.bf16.msra.mxu0 %v8054
    %8128 = vmatpush.bf16.msra.mxu0 %v8050
    %8129 = vmatpush.bf16.msra.mxu0 %v8046
    %8130 = vmatmul.bf16.gmra.mxu0 %v7916
    %v8131 = vpop.f32.mrf.mxu0
    %v8132 = vadd.f32 0.0, %v8131
    %v8133 = vpop.f32.mrf.mxu0
    %8134 = vdwg.mxu0
    %8135 = vmatpush.bf16.msra.mxu0 %v8075
    %8136 = vmatpush.bf16.msra.mxu0 %v8071
    %8137 = vmatpush.bf16.msra.mxu0 %v8067
    %8138 = vmatpush.bf16.msra.mxu0 %v8063
    %8139 = vmatpush.bf16.msra.mxu0 %v8059
    %8140 = vmatpush.bf16.msra.mxu0 %v8055
    %8141 = vmatpush.bf16.msra.mxu0 %v8051
    %8142 = vmatpush.bf16.msra.mxu0 %v8047
    %8143 = vmatmul.bf16.gmra.mxu0 %v7916
    %v8144 = vpop.f32.mrf.mxu0
    %v8145 = vadd.f32 0.0, %v8144
    %v8146 = vpop.f32.mrf.mxu0
    %8147 = vdwg.mxu0
    %8148 = vmatpush.bf16.msra.mxu0 %v8076
    %8149 = vmatpush.bf16.msra.mxu0 %v8072
    %8150 = vmatpush.bf16.msra.mxu0 %v8068
    %8151 = vmatpush.bf16.msra.mxu0 %v8064
    %8152 = vmatpush.bf16.msra.mxu0 %v8060
    %8153 = vmatpush.bf16.msra.mxu0 %v8056
    %8154 = vmatpush.bf16.msra.mxu0 %v8052
    %8155 = vmatpush.bf16.msra.mxu0 %v8048
    %8156 = vmatmul.bf16.gmra.mxu0 %v7916
    %v8157 = vpop.f32.mrf.mxu0
    %v8158 = vadd.f32 0.0, %v8157
    %v8159 = vpop.f32.mrf.mxu0
    %8160 = vdwg.mxu0
    %v8161 = vadd.f32 %v7912, %v8119
    %v8162 = vadd.f32 %v7913, %v8132
    %v8163 = vadd.f32 %v7914, %v8145
    %v8164 = vadd.f32 %v7915, %v8158
    %v8165 = vxor.u32 %v8161, 2147483648
    %v8166 = vmul.f32 %v8165, 1.442695
    %v8167 = vpow.pop %v8166
    %v8168 = vadd.f32 %v8167, 1.0
    %v8169 = vrcp.pop %v8168
    %v8170 = vmul.f32 %v8168, %v8169
    %v8171 = vsub.f32 1.0, %v8170
    %v8172 = vmul.f32 %v8169, %v8171
    %v8173 = vadd.f32 %v8169, %v8172
    %vm8174 = vweird.f32 %v8168
    %vm8175 = vweird.f32 %v8169
    %vm8176 = vmor %vm8174, %vm8175
    %v8177 = vsel %vm8176, %v8169, %v8173
    %v8178 = vand.u32 2147483647, %v8168
    %vm8179 = vcmp.eq.f32.partialorder %v8178, 8.507059e+37
    %v8180 = vand.u32 %v8168, 2147483648
    %v8181 = vor.u32 1.1754944e-38, %v8180
    %v8182 = vsel %vm8179, %v8181, %v8177
    %v8183 = vmul.f32 1.0, %v8182
    %v8184 = vxor.u32 %v8162, 2147483648
    %v8185 = vmul.f32 %v8184, 1.442695
    %v8186 = vpow.pop %v8185
    %v8187 = vadd.f32 %v8186, 1.0
    %v8188 = vrcp.pop %v8187
    %v8189 = vmul.f32 %v8187, %v8188
    %v8190 = vsub.f32 1.0, %v8189
    %v8191 = vmul.f32 %v8188, %v8190
    %v8192 = vadd.f32 %v8188, %v8191
    %vm8193 = vweird.f32 %v8187
    %vm8194 = vweird.f32 %v8188
    %vm8195 = vmor %vm8193, %vm8194
    %v8196 = vsel %vm8195, %v8188, %v8192
    %v8197 = vand.u32 2147483647, %v8187
    %vm8198 = vcmp.eq.f32.partialorder %v8197, 8.507059e+37
    %v8199 = vand.u32 %v8187, 2147483648
    %v8200 = vor.u32 1.1754944e-38, %v8199
    %v8201 = vsel %vm8198, %v8200, %v8196
    %v8202 = vmul.f32 1.0, %v8201
    %v8203 = vtanh.pop %v8163
    %v8204 = vxor.u32 %v8164, 2147483648
    %v8205 = vmul.f32 %v8204, 1.442695
    %v8206 = vpow.pop %v8205
    %v8207 = vadd.f32 %v8206, 1.0
    %v8208 = vrcp.pop %v8207
    %v8209 = vmul.f32 %v8207, %v8208
    %v8210 = vsub.f32 1.0, %v8209
    %v8211 = vmul.f32 %v8208, %v8210
    %v8212 = vadd.f32 %v8208, %v8211
    %vm8213 = vweird.f32 %v8207
    %vm8214 = vweird.f32 %v8208
    %vm8215 = vmor %vm8213, %vm8214
    %v8216 = vsel %vm8215, %v8208, %v8212
    %v8217 = vand.u32 2147483647, %v8207
    %vm8218 = vcmp.eq.f32.partialorder %v8217, 8.507059e+37
    %v8219 = vand.u32 %v8207, 2147483648
    %v8220 = vor.u32 1.1754944e-38, %v8219
    %v8221 = vsel %vm8218, %v8220, %v8216
    %v8222 = vmul.f32 1.0, %v8221
    %v8223 = vmul.f32 %v8202, %v7907
    %v8224 = vmul.f32 %v8183, %v8203
    %v8225 = vadd.f32 %v8223, %v8224
    %v8226 = vtanh.pop %v8225
    %v8227 = vmul.f32 %v8222, %v8226
    %s8228 = scalar_lea.vmem [#allocation21], 40
    %8229 = vst [vmem:[%s8228] sm:$0xff] %v8227
    %v8230 = vld [vmem:[%s2409] sm:$0xff]
    %v8231 = vld [vmem:[%s2409 + $0x8] sm:$0xff]
    %v8232 = vld [vmem:[%s2409 + $0x10] sm:$0xff]
    %v8233 = vld [vmem:[%s2409 + $0x18] sm:$0xff]
    %v8234 = vpack.c.bf16 %v8227, %v8227
    %v8235 = vld [vmem:[#allocation19] sm:$0xff]
    %v8236 = vld [vmem:[#allocation19 + $0x8] sm:$0xff]
    %v8237 = vld [vmem:[#allocation19 + $0x10] sm:$0xff]
    %v8238 = vld [vmem:[#allocation19 + $0x18] sm:$0xff]
    %v8239 = vld [vmem:[#allocation19 + $0x20] sm:$0xff]
    %v8240 = vld [vmem:[#allocation19 + $0x28] sm:$0xff]
    %v8241 = vld [vmem:[#allocation19 + $0x30] sm:$0xff]
    %v8242 = vld [vmem:[#allocation19 + $0x38] sm:$0xff]
    %v8243 = vld [vmem:[#allocation19 + $0x40] sm:$0xff]
    %v8244 = vld [vmem:[#allocation19 + $0x48] sm:$0xff]
    %v8245 = vld [vmem:[#allocation19 + $0x50] sm:$0xff]
    %v8246 = vld [vmem:[#allocation19 + $0x58] sm:$0xff]
    %v8247 = vld [vmem:[#allocation19 + $0x60] sm:$0xff]
    %v8248 = vld [vmem:[#allocation19 + $0x68] sm:$0xff]
    %v8249 = vld [vmem:[#allocation19 + $0x70] sm:$0xff]
    %v8250 = vld [vmem:[#allocation19 + $0x78] sm:$0xff]
    %v8251 = vld [vmem:[#allocation19 + $0x80] sm:$0xff]
    %v8252 = vld [vmem:[#allocation19 + $0x88] sm:$0xff]
    %v8253 = vld [vmem:[#allocation19 + $0x90] sm:$0xff]
    %v8254 = vld [vmem:[#allocation19 + $0x98] sm:$0xff]
    %v8255 = vld [vmem:[#allocation19 + $0xa0] sm:$0xff]
    %v8256 = vld [vmem:[#allocation19 + $0xa8] sm:$0xff]
    %v8257 = vld [vmem:[#allocation19 + $0xb0] sm:$0xff]
    %v8258 = vld [vmem:[#allocation19 + $0xb8] sm:$0xff]
    %v8259 = vld [vmem:[#allocation19 + $0xc0] sm:$0xff]
    %v8260 = vld [vmem:[#allocation19 + $0xc8] sm:$0xff]
    %v8261 = vld [vmem:[#allocation19 + $0xd0] sm:$0xff]
    %v8262 = vld [vmem:[#allocation19 + $0xd8] sm:$0xff]
    %v8263 = vld [vmem:[#allocation19 + $0xe0] sm:$0xff]
    %v8264 = vld [vmem:[#allocation19 + $0xe8] sm:$0xff]
    %v8265 = vld [vmem:[#allocation19 + $0xf0] sm:$0xff]
    %v8266 = vld [vmem:[#allocation19 + $0xf8] sm:$0xff]
    %v8299 = vunpack.c.l.b16 %v8235
    %v8300 = vunpack.c.h.b16 %v8235
    %v8301 = vunpack.c.l.b16 %v8236
    %v8302 = vunpack.c.h.b16 %v8236
    %v8303 = vunpack.c.l.b16 %v8237
    %v8304 = vunpack.c.h.b16 %v8237
    %v8305 = vunpack.c.l.b16 %v8238
    %v8306 = vunpack.c.h.b16 %v8238
    %v8307 = vunpack.c.l.b16 %v8239
    %v8308 = vunpack.c.h.b16 %v8239
    %v8309 = vunpack.c.l.b16 %v8240
    %v8310 = vunpack.c.h.b16 %v8240
    %v8311 = vunpack.c.l.b16 %v8241
    %v8312 = vunpack.c.h.b16 %v8241
    %v8313 = vunpack.c.l.b16 %v8242
    %v8314 = vunpack.c.h.b16 %v8242
    %v8315 = vunpack.c.l.b16 %v8243
    %v8316 = vunpack.c.h.b16 %v8243
    %v8317 = vunpack.c.l.b16 %v8244
    %v8318 = vunpack.c.h.b16 %v8244
    %v8319 = vunpack.c.l.b16 %v8245
    %v8320 = vunpack.c.h.b16 %v8245
    %v8321 = vunpack.c.l.b16 %v8246
    %v8322 = vunpack.c.h.b16 %v8246
    %v8323 = vunpack.c.l.b16 %v8247
    %v8324 = vunpack.c.h.b16 %v8247
    %v8325 = vunpack.c.l.b16 %v8248
    %v8326 = vunpack.c.h.b16 %v8248
    %v8327 = vunpack.c.l.b16 %v8249
    %v8328 = vunpack.c.h.b16 %v8249
    %v8329 = vunpack.c.l.b16 %v8250
    %v8330 = vunpack.c.h.b16 %v8250
    %v8331 = vunpack.c.l.b16 %v8251
    %v8332 = vunpack.c.h.b16 %v8251
    %v8333 = vunpack.c.l.b16 %v8252
    %v8334 = vunpack.c.h.b16 %v8252
    %v8335 = vunpack.c.l.b16 %v8253
    %v8336 = vunpack.c.h.b16 %v8253
    %v8337 = vunpack.c.l.b16 %v8254
    %v8338 = vunpack.c.h.b16 %v8254
    %v8339 = vunpack.c.l.b16 %v8255
    %v8340 = vunpack.c.h.b16 %v8255
    %v8341 = vunpack.c.l.b16 %v8256
    %v8342 = vunpack.c.h.b16 %v8256
    %v8343 = vunpack.c.l.b16 %v8257
    %v8344 = vunpack.c.h.b16 %v8257
    %v8345 = vunpack.c.l.b16 %v8258
    %v8346 = vunpack.c.h.b16 %v8258
    %v8347 = vunpack.c.l.b16 %v8259
    %v8348 = vunpack.c.h.b16 %v8259
    %v8349 = vunpack.c.l.b16 %v8260
    %v8350 = vunpack.c.h.b16 %v8260
    %v8351 = vunpack.c.l.b16 %v8261
    %v8352 = vunpack.c.h.b16 %v8261
    %v8353 = vunpack.c.l.b16 %v8262
    %v8354 = vunpack.c.h.b16 %v8262
    %v8355 = vunpack.c.l.b16 %v8263
    %v8356 = vunpack.c.h.b16 %v8263
    %v8357 = vunpack.c.l.b16 %v8264
    %v8358 = vunpack.c.h.b16 %v8264
    %v8359 = vunpack.c.l.b16 %v8265
    %v8360 = vunpack.c.h.b16 %v8265
    %v8361 = vunpack.c.l.b16 %v8266
    %v8362 = vunpack.c.h.b16 %v8266
    %v8363 = vpack.c.b16 %v8303, %v8299
    %v8364 = vpack.c.b16 %v8304, %v8300
    %v8365 = vpack.c.b16 %v8305, %v8301
    %v8366 = vpack.c.b16 %v8306, %v8302
    %v8367 = vpack.c.b16 %v8311, %v8307
    %v8368 = vpack.c.b16 %v8312, %v8308
    %v8369 = vpack.c.b16 %v8313, %v8309
    %v8370 = vpack.c.b16 %v8314, %v8310
    %v8371 = vpack.c.b16 %v8319, %v8315
    %v8372 = vpack.c.b16 %v8320, %v8316
    %v8373 = vpack.c.b16 %v8321, %v8317
    %v8374 = vpack.c.b16 %v8322, %v8318
    %v8375 = vpack.c.b16 %v8327, %v8323
    %v8376 = vpack.c.b16 %v8328, %v8324
    %v8377 = vpack.c.b16 %v8329, %v8325
    %v8378 = vpack.c.b16 %v8330, %v8326
    %v8379 = vpack.c.b16 %v8335, %v8331
    %v8380 = vpack.c.b16 %v8336, %v8332
    %v8381 = vpack.c.b16 %v8337, %v8333
    %v8382 = vpack.c.b16 %v8338, %v8334
    %v8383 = vpack.c.b16 %v8343, %v8339
    %v8384 = vpack.c.b16 %v8344, %v8340
    %v8385 = vpack.c.b16 %v8345, %v8341
    %v8386 = vpack.c.b16 %v8346, %v8342
    %v8387 = vpack.c.b16 %v8351, %v8347
    %v8388 = vpack.c.b16 %v8352, %v8348
    %v8389 = vpack.c.b16 %v8353, %v8349
    %v8390 = vpack.c.b16 %v8354, %v8350
    %v8391 = vpack.c.b16 %v8359, %v8355
    %v8392 = vpack.c.b16 %v8360, %v8356
    %v8393 = vpack.c.b16 %v8361, %v8357
    %v8394 = vpack.c.b16 %v8362, %v8358
    %8427 = vmatpush.bf16.msra.mxu0 %v8391
    %8428 = vmatpush.bf16.msra.mxu0 %v8387
    %8429 = vmatpush.bf16.msra.mxu0 %v8383
    %8430 = vmatpush.bf16.msra.mxu0 %v8379
    %8431 = vmatpush.bf16.msra.mxu0 %v8375
    %8432 = vmatpush.bf16.msra.mxu0 %v8371
    %8433 = vmatpush.bf16.msra.mxu0 %v8367
    %8434 = vmatpush.bf16.msra.mxu0 %v8363
    %8435 = vmatmul.bf16.gmra.mxu0 %v8234
    %v8436 = vpop.f32.mrf.mxu0
    %v8437 = vadd.f32 0.0, %v8436
    %v8438 = vpop.f32.mrf.mxu0
    %8439 = vdwg.mxu0
    %8440 = vmatpush.bf16.msra.mxu0 %v8392
    %8441 = vmatpush.bf16.msra.mxu0 %v8388
    %8442 = vmatpush.bf16.msra.mxu0 %v8384
    %8443 = vmatpush.bf16.msra.mxu0 %v8380
    %8444 = vmatpush.bf16.msra.mxu0 %v8376
    %8445 = vmatpush.bf16.msra.mxu0 %v8372
    %8446 = vmatpush.bf16.msra.mxu0 %v8368
    %8447 = vmatpush.bf16.msra.mxu0 %v8364
    %8448 = vmatmul.bf16.gmra.mxu0 %v8234
    %v8449 = vpop.f32.mrf.mxu0
    %v8450 = vadd.f32 0.0, %v8449
    %v8451 = vpop.f32.mrf.mxu0
    %8452 = vdwg.mxu0
    %8453 = vmatpush.bf16.msra.mxu0 %v8393
    %8454 = vmatpush.bf16.msra.mxu0 %v8389
    %8455 = vmatpush.bf16.msra.mxu0 %v8385
    %8456 = vmatpush.bf16.msra.mxu0 %v8381
    %8457 = vmatpush.bf16.msra.mxu0 %v8377
    %8458 = vmatpush.bf16.msra.mxu0 %v8373
    %8459 = vmatpush.bf16.msra.mxu0 %v8369
    %8460 = vmatpush.bf16.msra.mxu0 %v8365
    %8461 = vmatmul.bf16.gmra.mxu0 %v8234
    %v8462 = vpop.f32.mrf.mxu0
    %v8463 = vadd.f32 0.0, %v8462
    %v8464 = vpop.f32.mrf.mxu0
    %8465 = vdwg.mxu0
    %8466 = vmatpush.bf16.msra.mxu0 %v8394
    %8467 = vmatpush.bf16.msra.mxu0 %v8390
    %8468 = vmatpush.bf16.msra.mxu0 %v8386
    %8469 = vmatpush.bf16.msra.mxu0 %v8382
    %8470 = vmatpush.bf16.msra.mxu0 %v8378
    %8471 = vmatpush.bf16.msra.mxu0 %v8374
    %8472 = vmatpush.bf16.msra.mxu0 %v8370
    %8473 = vmatpush.bf16.msra.mxu0 %v8366
    %8474 = vmatmul.bf16.gmra.mxu0 %v8234
    %v8475 = vpop.f32.mrf.mxu0
    %v8476 = vadd.f32 0.0, %v8475
    %v8477 = vpop.f32.mrf.mxu0
    %8478 = vdwg.mxu0
    %v8479 = vadd.f32 %v8230, %v8437
    %v8480 = vadd.f32 %v8231, %v8450
    %v8481 = vadd.f32 %v8232, %v8463
    %v8482 = vadd.f32 %v8233, %v8476
    %v8483 = vxor.u32 %v8479, 2147483648
    %v8484 = vmul.f32 %v8483, 1.442695
    %v8485 = vpow.pop %v8484
    %v8486 = vadd.f32 %v8485, 1.0
    %v8487 = vrcp.pop %v8486
    %v8488 = vmul.f32 %v8486, %v8487
    %v8489 = vsub.f32 1.0, %v8488
    %v8490 = vmul.f32 %v8487, %v8489
    %v8491 = vadd.f32 %v8487, %v8490
    %vm8492 = vweird.f32 %v8486
    %vm8493 = vweird.f32 %v8487
    %vm8494 = vmor %vm8492, %vm8493
    %v8495 = vsel %vm8494, %v8487, %v8491
    %v8496 = vand.u32 2147483647, %v8486
    %vm8497 = vcmp.eq.f32.partialorder %v8496, 8.507059e+37
    %v8498 = vand.u32 %v8486, 2147483648
    %v8499 = vor.u32 1.1754944e-38, %v8498
    %v8500 = vsel %vm8497, %v8499, %v8495
    %v8501 = vmul.f32 1.0, %v8500
    %v8502 = vxor.u32 %v8480, 2147483648
    %v8503 = vmul.f32 %v8502, 1.442695
    %v8504 = vpow.pop %v8503
    %v8505 = vadd.f32 %v8504, 1.0
    %v8506 = vrcp.pop %v8505
    %v8507 = vmul.f32 %v8505, %v8506
    %v8508 = vsub.f32 1.0, %v8507
    %v8509 = vmul.f32 %v8506, %v8508
    %v8510 = vadd.f32 %v8506, %v8509
    %vm8511 = vweird.f32 %v8505
    %vm8512 = vweird.f32 %v8506
    %vm8513 = vmor %vm8511, %vm8512
    %v8514 = vsel %vm8513, %v8506, %v8510
    %v8515 = vand.u32 2147483647, %v8505
    %vm8516 = vcmp.eq.f32.partialorder %v8515, 8.507059e+37
    %v8517 = vand.u32 %v8505, 2147483648
    %v8518 = vor.u32 1.1754944e-38, %v8517
    %v8519 = vsel %vm8516, %v8518, %v8514
    %v8520 = vmul.f32 1.0, %v8519
    %v8521 = vtanh.pop %v8481
    %v8522 = vxor.u32 %v8482, 2147483648
    %v8523 = vmul.f32 %v8522, 1.442695
    %v8524 = vpow.pop %v8523
    %v8525 = vadd.f32 %v8524, 1.0
    %v8526 = vrcp.pop %v8525
    %v8527 = vmul.f32 %v8525, %v8526
    %v8528 = vsub.f32 1.0, %v8527
    %v8529 = vmul.f32 %v8526, %v8528
    %v8530 = vadd.f32 %v8526, %v8529
    %vm8531 = vweird.f32 %v8525
    %vm8532 = vweird.f32 %v8526
    %vm8533 = vmor %vm8531, %vm8532
    %v8534 = vsel %vm8533, %v8526, %v8530
    %v8535 = vand.u32 2147483647, %v8525
    %vm8536 = vcmp.eq.f32.partialorder %v8535, 8.507059e+37
    %v8537 = vand.u32 %v8525, 2147483648
    %v8538 = vor.u32 1.1754944e-38, %v8537
    %v8539 = vsel %vm8536, %v8538, %v8534
    %v8540 = vmul.f32 1.0, %v8539
    %v8541 = vmul.f32 %v8520, %v8225
    %v8542 = vmul.f32 %v8501, %v8521
    %v8543 = vadd.f32 %v8541, %v8542
    %v8544 = vtanh.pop %v8543
    %v8545 = vmul.f32 %v8540, %v8544
    %s8546 = scalar_lea.vmem [#allocation21], 48
    %8547 = vst [vmem:[%s8546] sm:$0xff] %v8545
    %v8548 = vld [vmem:[%s2730] sm:$0xff]
    %v8549 = vld [vmem:[%s2730 + $0x8] sm:$0xff]
    %v8550 = vld [vmem:[%s2730 + $0x10] sm:$0xff]
    %v8551 = vld [vmem:[%s2730 + $0x18] sm:$0xff]
    %v8552 = vpack.c.bf16 %v8545, %v8545
    %v8553 = vld [vmem:[#allocation19] sm:$0xff]
    %v8554 = vld [vmem:[#allocation19 + $0x8] sm:$0xff]
    %v8555 = vld [vmem:[#allocation19 + $0x10] sm:$0xff]
    %v8556 = vld [vmem:[#allocation19 + $0x18] sm:$0xff]
    %v8557 = vld [vmem:[#allocation19 + $0x20] sm:$0xff]
    %v8558 = vld [vmem:[#allocation19 + $0x28] sm:$0xff]
    %v8559 = vld [vmem:[#allocation19 + $0x30] sm:$0xff]
    %v8560 = vld [vmem:[#allocation19 + $0x38] sm:$0xff]
    %v8561 = vld [vmem:[#allocation19 + $0x40] sm:$0xff]
    %v8562 = vld [vmem:[#allocation19 + $0x48] sm:$0xff]
    %v8563 = vld [vmem:[#allocation19 + $0x50] sm:$0xff]
    %v8564 = vld [vmem:[#allocation19 + $0x58] sm:$0xff]
    %v8565 = vld [vmem:[#allocation19 + $0x60] sm:$0xff]
    %v8566 = vld [vmem:[#allocation19 + $0x68] sm:$0xff]
    %v8567 = vld [vmem:[#allocation19 + $0x70] sm:$0xff]
    %v8568 = vld [vmem:[#allocation19 + $0x78] sm:$0xff]
    %v8569 = vld [vmem:[#allocation19 + $0x80] sm:$0xff]
    %v8570 = vld [vmem:[#allocation19 + $0x88] sm:$0xff]
    %v8571 = vld [vmem:[#allocation19 + $0x90] sm:$0xff]
    %v8572 = vld [vmem:[#allocation19 + $0x98] sm:$0xff]
    %v8573 = vld [vmem:[#allocation19 + $0xa0] sm:$0xff]
    %v8574 = vld [vmem:[#allocation19 + $0xa8] sm:$0xff]
    %v8575 = vld [vmem:[#allocation19 + $0xb0] sm:$0xff]
    %v8576 = vld [vmem:[#allocation19 + $0xb8] sm:$0xff]
    %v8577 = vld [vmem:[#allocation19 + $0xc0] sm:$0xff]
    %v8578 = vld [vmem:[#allocation19 + $0xc8] sm:$0xff]
    %v8579 = vld [vmem:[#allocation19 + $0xd0] sm:$0xff]
    %v8580 = vld [vmem:[#allocation19 + $0xd8] sm:$0xff]
    %v8581 = vld [vmem:[#allocation19 + $0xe0] sm:$0xff]
    %v8582 = vld [vmem:[#allocation19 + $0xe8] sm:$0xff]
    %v8583 = vld [vmem:[#allocation19 + $0xf0] sm:$0xff]
    %v8584 = vld [vmem:[#allocation19 + $0xf8] sm:$0xff]
    %v8617 = vunpack.c.l.b16 %v8553
    %v8618 = vunpack.c.h.b16 %v8553
    %v8619 = vunpack.c.l.b16 %v8554
    %v8620 = vunpack.c.h.b16 %v8554
    %v8621 = vunpack.c.l.b16 %v8555
    %v8622 = vunpack.c.h.b16 %v8555
    %v8623 = vunpack.c.l.b16 %v8556
    %v8624 = vunpack.c.h.b16 %v8556
    %v8625 = vunpack.c.l.b16 %v8557
    %v8626 = vunpack.c.h.b16 %v8557
    %v8627 = vunpack.c.l.b16 %v8558
    %v8628 = vunpack.c.h.b16 %v8558
    %v8629 = vunpack.c.l.b16 %v8559
    %v8630 = vunpack.c.h.b16 %v8559
    %v8631 = vunpack.c.l.b16 %v8560
    %v8632 = vunpack.c.h.b16 %v8560
    %v8633 = vunpack.c.l.b16 %v8561
    %v8634 = vunpack.c.h.b16 %v8561
    %v8635 = vunpack.c.l.b16 %v8562
    %v8636 = vunpack.c.h.b16 %v8562
    %v8637 = vunpack.c.l.b16 %v8563
    %v8638 = vunpack.c.h.b16 %v8563
    %v8639 = vunpack.c.l.b16 %v8564
    %v8640 = vunpack.c.h.b16 %v8564
    %v8641 = vunpack.c.l.b16 %v8565
    %v8642 = vunpack.c.h.b16 %v8565
    %v8643 = vunpack.c.l.b16 %v8566
    %v8644 = vunpack.c.h.b16 %v8566
    %v8645 = vunpack.c.l.b16 %v8567
    %v8646 = vunpack.c.h.b16 %v8567
    %v8647 = vunpack.c.l.b16 %v8568
    %v8648 = vunpack.c.h.b16 %v8568
    %v8649 = vunpack.c.l.b16 %v8569
    %v8650 = vunpack.c.h.b16 %v8569
    %v8651 = vunpack.c.l.b16 %v8570
    %v8652 = vunpack.c.h.b16 %v8570
    %v8653 = vunpack.c.l.b16 %v8571
    %v8654 = vunpack.c.h.b16 %v8571
    %v8655 = vunpack.c.l.b16 %v8572
    %v8656 = vunpack.c.h.b16 %v8572
    %v8657 = vunpack.c.l.b16 %v8573
    %v8658 = vunpack.c.h.b16 %v8573
    %v8659 = vunpack.c.l.b16 %v8574
    %v8660 = vunpack.c.h.b16 %v8574
    %v8661 = vunpack.c.l.b16 %v8575
    %v8662 = vunpack.c.h.b16 %v8575
    %v8663 = vunpack.c.l.b16 %v8576
    %v8664 = vunpack.c.h.b16 %v8576
    %v8665 = vunpack.c.l.b16 %v8577
    %v8666 = vunpack.c.h.b16 %v8577
    %v8667 = vunpack.c.l.b16 %v8578
    %v8668 = vunpack.c.h.b16 %v8578
    %v8669 = vunpack.c.l.b16 %v8579
    %v8670 = vunpack.c.h.b16 %v8579
    %v8671 = vunpack.c.l.b16 %v8580
    %v8672 = vunpack.c.h.b16 %v8580
    %v8673 = vunpack.c.l.b16 %v8581
    %v8674 = vunpack.c.h.b16 %v8581
    %v8675 = vunpack.c.l.b16 %v8582
    %v8676 = vunpack.c.h.b16 %v8582
    %v8677 = vunpack.c.l.b16 %v8583
    %v8678 = vunpack.c.h.b16 %v8583
    %v8679 = vunpack.c.l.b16 %v8584
    %v8680 = vunpack.c.h.b16 %v8584
    %v8681 = vpack.c.b16 %v8621, %v8617
    %v8682 = vpack.c.b16 %v8622, %v8618
    %v8683 = vpack.c.b16 %v8623, %v8619
    %v8684 = vpack.c.b16 %v8624, %v8620
    %v8685 = vpack.c.b16 %v8629, %v8625
    %v8686 = vpack.c.b16 %v8630, %v8626
    %v8687 = vpack.c.b16 %v8631, %v8627
    %v8688 = vpack.c.b16 %v8632, %v8628
    %v8689 = vpack.c.b16 %v8637, %v8633
    %v8690 = vpack.c.b16 %v8638, %v8634
    %v8691 = vpack.c.b16 %v8639, %v8635
    %v8692 = vpack.c.b16 %v8640, %v8636
    %v8693 = vpack.c.b16 %v8645, %v8641
    %v8694 = vpack.c.b16 %v8646, %v8642
    %v8695 = vpack.c.b16 %v8647, %v8643
    %v8696 = vpack.c.b16 %v8648, %v8644
    %v8697 = vpack.c.b16 %v8653, %v8649
    %v8698 = vpack.c.b16 %v8654, %v8650
    %v8699 = vpack.c.b16 %v8655, %v8651
    %v8700 = vpack.c.b16 %v8656, %v8652
    %v8701 = vpack.c.b16 %v8661, %v8657
    %v8702 = vpack.c.b16 %v8662, %v8658
    %v8703 = vpack.c.b16 %v8663, %v8659
    %v8704 = vpack.c.b16 %v8664, %v8660
    %v8705 = vpack.c.b16 %v8669, %v8665
    %v8706 = vpack.c.b16 %v8670, %v8666
    %v8707 = vpack.c.b16 %v8671, %v8667
    %v8708 = vpack.c.b16 %v8672, %v8668
    %v8709 = vpack.c.b16 %v8677, %v8673
    %v8710 = vpack.c.b16 %v8678, %v8674
    %v8711 = vpack.c.b16 %v8679, %v8675
    %v8712 = vpack.c.b16 %v8680, %v8676
    %8745 = vmatpush.bf16.msra.mxu0 %v8709
    %8746 = vmatpush.bf16.msra.mxu0 %v8705
    %8747 = vmatpush.bf16.msra.mxu0 %v8701
    %8748 = vmatpush.bf16.msra.mxu0 %v8697
    %8749 = vmatpush.bf16.msra.mxu0 %v8693
    %8750 = vmatpush.bf16.msra.mxu0 %v8689
    %8751 = vmatpush.bf16.msra.mxu0 %v8685
    %8752 = vmatpush.bf16.msra.mxu0 %v8681
    %8753 = vmatmul.bf16.gmra.mxu0 %v8552
    %v8754 = vpop.f32.mrf.mxu0
    %v8755 = vadd.f32 0.0, %v8754
    %v8756 = vpop.f32.mrf.mxu0
    %8757 = vdwg.mxu0
    %8758 = vmatpush.bf16.msra.mxu0 %v8710
    %8759 = vmatpush.bf16.msra.mxu0 %v8706
    %8760 = vmatpush.bf16.msra.mxu0 %v8702
    %8761 = vmatpush.bf16.msra.mxu0 %v8698
    %8762 = vmatpush.bf16.msra.mxu0 %v8694
    %8763 = vmatpush.bf16.msra.mxu0 %v8690
    %8764 = vmatpush.bf16.msra.mxu0 %v8686
    %8765 = vmatpush.bf16.msra.mxu0 %v8682
    %8766 = vmatmul.bf16.gmra.mxu0 %v8552
    %v8767 = vpop.f32.mrf.mxu0
    %v8768 = vadd.f32 0.0, %v8767
    %v8769 = vpop.f32.mrf.mxu0
    %8770 = vdwg.mxu0
    %8771 = vmatpush.bf16.msra.mxu0 %v8711
    %8772 = vmatpush.bf16.msra.mxu0 %v8707
    %8773 = vmatpush.bf16.msra.mxu0 %v8703
    %8774 = vmatpush.bf16.msra.mxu0 %v8699
    %8775 = vmatpush.bf16.msra.mxu0 %v8695
    %8776 = vmatpush.bf16.msra.mxu0 %v8691
    %8777 = vmatpush.bf16.msra.mxu0 %v8687
    %8778 = vmatpush.bf16.msra.mxu0 %v8683
    %8779 = vmatmul.bf16.gmra.mxu0 %v8552
    %v8780 = vpop.f32.mrf.mxu0
    %v8781 = vadd.f32 0.0, %v8780
    %v8782 = vpop.f32.mrf.mxu0
    %8783 = vdwg.mxu0
    %8784 = vmatpush.bf16.msra.mxu0 %v8712
    %8785 = vmatpush.bf16.msra.mxu0 %v8708
    %8786 = vmatpush.bf16.msra.mxu0 %v8704
    %8787 = vmatpush.bf16.msra.mxu0 %v8700
    %8788 = vmatpush.bf16.msra.mxu0 %v8696
    %8789 = vmatpush.bf16.msra.mxu0 %v8692
    %8790 = vmatpush.bf16.msra.mxu0 %v8688
    %8791 = vmatpush.bf16.msra.mxu0 %v8684
    %8792 = vmatmul.bf16.gmra.mxu0 %v8552
    %v8793 = vpop.f32.mrf.mxu0
    %v8794 = vadd.f32 0.0, %v8793
    %v8795 = vpop.f32.mrf.mxu0
    %8796 = vdwg.mxu0
    %v8797 = vadd.f32 %v8548, %v8755
    %v8798 = vadd.f32 %v8549, %v8768
    %v8799 = vadd.f32 %v8550, %v8781
    %v8800 = vadd.f32 %v8551, %v8794
    %v8801 = vxor.u32 %v8797, 2147483648
    %v8802 = vmul.f32 %v8801, 1.442695
    %v8803 = vpow.pop %v8802
    %v8804 = vadd.f32 %v8803, 1.0
    %v8805 = vrcp.pop %v8804
    %v8806 = vmul.f32 %v8804, %v8805
    %v8807 = vsub.f32 1.0, %v8806
    %v8808 = vmul.f32 %v8805, %v8807
    %v8809 = vadd.f32 %v8805, %v8808
    %vm8810 = vweird.f32 %v8804
    %vm8811 = vweird.f32 %v8805
    %vm8812 = vmor %vm8810, %vm8811
    %v8813 = vsel %vm8812, %v8805, %v8809
    %v8814 = vand.u32 2147483647, %v8804
    %vm8815 = vcmp.eq.f32.partialorder %v8814, 8.507059e+37
    %v8816 = vand.u32 %v8804, 2147483648
    %v8817 = vor.u32 1.1754944e-38, %v8816
    %v8818 = vsel %vm8815, %v8817, %v8813
    %v8819 = vmul.f32 1.0, %v8818
    %v8820 = vxor.u32 %v8798, 2147483648
    %v8821 = vmul.f32 %v8820, 1.442695
    %v8822 = vpow.pop %v8821
    %v8823 = vadd.f32 %v8822, 1.0
    %v8824 = vrcp.pop %v8823
    %v8825 = vmul.f32 %v8823, %v8824
    %v8826 = vsub.f32 1.0, %v8825
    %v8827 = vmul.f32 %v8824, %v8826
    %v8828 = vadd.f32 %v8824, %v8827
    %vm8829 = vweird.f32 %v8823
    %vm8830 = vweird.f32 %v8824
    %vm8831 = vmor %vm8829, %vm8830
    %v8832 = vsel %vm8831, %v8824, %v8828
    %v8833 = vand.u32 2147483647, %v8823
    %vm8834 = vcmp.eq.f32.partialorder %v8833, 8.507059e+37
    %v8835 = vand.u32 %v8823, 2147483648
    %v8836 = vor.u32 1.1754944e-38, %v8835
    %v8837 = vsel %vm8834, %v8836, %v8832
    %v8838 = vmul.f32 1.0, %v8837
    %v8839 = vtanh.pop %v8799
    %v8840 = vxor.u32 %v8800, 2147483648
    %v8841 = vmul.f32 %v8840, 1.442695
    %v8842 = vpow.pop %v8841
    %v8843 = vadd.f32 %v8842, 1.0
    %v8844 = vrcp.pop %v8843
    %v8845 = vmul.f32 %v8843, %v8844
    %v8846 = vsub.f32 1.0, %v8845
    %v8847 = vmul.f32 %v8844, %v8846
    %v8848 = vadd.f32 %v8844, %v8847
    %vm8849 = vweird.f32 %v8843
    %vm8850 = vweird.f32 %v8844
    %vm8851 = vmor %vm8849, %vm8850
    %v8852 = vsel %vm8851, %v8844, %v8848
    %v8853 = vand.u32 2147483647, %v8843
    %vm8854 = vcmp.eq.f32.partialorder %v8853, 8.507059e+37
    %v8855 = vand.u32 %v8843, 2147483648
    %v8856 = vor.u32 1.1754944e-38, %v8855
    %v8857 = vsel %vm8854, %v8856, %v8852
    %v8858 = vmul.f32 1.0, %v8857
    %v8859 = vmul.f32 %v8838, %v8543
    %v8860 = vmul.f32 %v8819, %v8839
    %v8861 = vadd.f32 %v8859, %v8860
    %v8862 = vtanh.pop %v8861
    %v8863 = vmul.f32 %v8858, %v8862
    %s8864 = scalar_lea.vmem [#allocation21], 56
    %8865 = vst [vmem:[%s8864] sm:$0xff] %v8863
    %s8866 = scalar_lea.vmem [#allocation22], 16
    %8867 = vst [vmem:[%s8866] sm:$0xff] %v8863
    %s8868 = scalar_lea.vmem [#allocation24], 16
    %8869 = vst [vmem:[%s8868] sm:$0xff] %v8861
    // Predicated region
    $region90: #{tpu_custom_call.1} parent=1 // pred_check
      _
    $region91: #{tpu_custom_call.1} parent=1 // pred_check_branch
      %8871 = sbr.rel (0) target = $region93
    $region92: #{tpu_custom_call.1} parent=1 // pred_region
      %8873 = vsyncadd [#allocation6], 0
      %s8874 = sshll.u32 [#allocation21], 4
      %s8875 = int_to_ptr.vmem [resolvable:$true] %s8874
      %s8876 = sshll.u32 %s12, 4
      %s8877 = int_to_ptr.hbm [resolvable:$true] %s8876
      %8882 = dma.vmem_to_hbm [thread:$0]  %s8875, 1024, %s8877, [#allocation6], 128, 128, 8
    $region93: #{tpu_custom_call.1} parent=1 // pred_fallthru
      _
    // Predicated region
    $region94: #{tpu_custom_call.1} parent=1 // pred_check
      _
    $region95: #{tpu_custom_call.1} parent=1 // pred_check_branch
      %8884 = sbr.rel (0) target = $region97
    $region96: #{tpu_custom_call.1} parent=1 // pred_region
      %8886 = vsyncadd [#allocation23], 0
      %s8887 = sshll.u32 [#allocation22], 4
      %s8888 = int_to_ptr.vmem [resolvable:$true] %s8887
      %s8889 = sshll.u32 %s13, 4
      %s8890 = int_to_ptr.hbm [resolvable:$true] %s8889
      %8895 = dma.vmem_to_hbm [thread:$0]  %s8888, 384, %s8890, [#allocation23], 128, 128, 8
    $region97: #{tpu_custom_call.1} parent=1 // pred_fallthru
      _
    // Predicated region
    $region98: #{tpu_custom_call.1} parent=1 // pred_check
      _
    $region99: #{tpu_custom_call.1} parent=1 // pred_check_branch
      %8897 = sbr.rel (0) target = $region101
    $region100: #{tpu_custom_call.1} parent=1 // pred_region
      %8899 = vsyncadd [#allocation23], 0
      %s8900 = sshll.u32 [#allocation24], 4
      %s8901 = int_to_ptr.vmem [resolvable:$true] %s8900
      %s8902 = sshll.u32 %s14, 4
      %s8903 = int_to_ptr.hbm [resolvable:$true] %s8902
      %8908 = dma.vmem_to_hbm [thread:$0]  %s8901, 384, %s8903, [#allocation23], 128, 128, 8
    $region101: #{tpu_custom_call.1} parent=1 // pred_fallthru
      _
    // Predicated region
    $region102: #{tpu_custom_call.1} parent=1 // pred_check
      _
    $region103: #{tpu_custom_call.1} parent=1 // pred_check_branch
      %8910 = sbr.rel (0) target = $region105
    $region104: #{tpu_custom_call.1} parent=1 // pred_region
      %8912 = dma.done [#allocation6], 1024
    $region105: #{tpu_custom_call.1} parent=1 // pred_fallthru
      _
    // Predicated region
    $region106: #{tpu_custom_call.1} parent=1 // pred_check
      _
    $region107: #{tpu_custom_call.1} parent=1 // pred_check_branch
      %8914 = sbr.rel (0) target = $region109
    $region108: #{tpu_custom_call.1} parent=1 // pred_region
      %8916 = dma.done [#allocation23], 384
    $region109: #{tpu_custom_call.1} parent=1 // pred_fallthru
      _
    // Predicated region
    $region110: #{tpu_custom_call.1} parent=1 // pred_check
      _
    $region111: #{tpu_custom_call.1} parent=1 // pred_check_branch
      %8918 = sbr.rel (0) target = $region113
    $region112: #{tpu_custom_call.1} parent=1 // pred_region
      %8920 = dma.done [#allocation23], 384
    $region113: #{tpu_custom_call.1} parent=1 // pred_fallthru
      _
    %8921 = vsyncpa [#allocation5], 1
    %8922 = vsyncpa [#allocation8], 1
    %8923 = vsyncpa [#allocation11], 1
    %8924 = vsyncpa [#allocation14], 1
    %8925 = vsyncpa [#allocation17], 1
    %8926 = vsyncpa [#allocation20], 1
    %8927 = vsyncpa [#allocation6], 1
    %8928 = vsyncpa [#allocation23], 1

</llo_original>
